<compile_context>
chip_gen: v6e
topology: v6e:2x2x1
jax: 0.10.0
libtpu: 0.0.40
codegen_flags: <defaults>
</compile_context>

<pallas_src>
import jax
import jax.numpy as jnp
from jax.experimental import pallas as pl
from jax.experimental.pallas import tpu as pltpu

F32 = jnp.float32
BF16 = jnp.bfloat16

# Fixed dimensions implied by the module.
HANDCRAFTED_DIM = 6373      # OpenSMILE ComParE feature vector
HC_PAD = 6400               # 50 * 128 (lane-aligned padded feature dim)
HC_K_TILE = 3200            # K tile for the handcrafted matmul (grid of 2)
BRANCH_DIM = 256            # per-branch embedding (gated fusion at 256)
NUM_CLASSES = 2
CONV_CH = 16                # simplified ResNet stem width
CONV_PAD = 128              # stem width padded to a full lane group
PATCH_PAD = 128             # im2col K (9*Cin + 1 bias column) padded to 128
XLSR_FRAME = 320            # wav2vec2 / XLS-R samples per frame
FRAME_PAD = 384             # 3 * 128 (padded frame dim, col 320 = bias ones)
XLSR_HIDDEN = 1024          # XLS-R hidden size

# Constant-slab row offsets (all 8-aligned section starts).
SLAB_WFC = 0                # (128, 256) CNN fc weight (Cout padded to 128)
SLAB_WG_C = 128             # (3, 256)   gate weight for CNN branch (transposed)
SLAB_WG_H = 136             # (3, 256)   gate weight for handcrafted branch
SLAB_WG_X = 144             # (3, 256)   gate weight for XLS-R branch
SLAB_WCT = 152              # (2, 256)   classifier weight (transposed)
SLAB_BFC = 160              # (1, 256)   CNN fc bias
SLAB_B2 = 161               # (1, 256)   XLS-R fc bias
SLAB_BG = 162               # (1, 3)     gate bias (lanes 0:3)
SLAB_BC = 163               # (1, 2)     classifier bias (lanes 0:2)
SLAB_ROWS = 168


def _dot_nt(a, b):
  """a @ b.T with f32 accumulation (contract last dims of both)."""
  return jax.lax.dot_general(a, b, (((1,), (1,)), ((), ())),
                             preferred_element_type=F32)


# ----------------------------------------------------------------------------
# Single fused kernel.  Grid = (2,) over the handcrafted K dimension.
#   k == 0   : init hc accumulator, run CNN + XLS-R branches into scratch
#              (overlaps the second hc_w block's DMA), accumulate hc block 0.
#   k == last: accumulate hc block 1, gated fusion + classifier -> logits.
# TODO(synk): full pretrained ResNet-18 / XLS-R transformer backbones have no
# compact Pallas equivalent; compact stand-ins keep the interface shapes.
# ----------------------------------------------------------------------------
def fused_spoofnet_kernel(
    hc_x_ref, hc_w_ref,
    patches_ref, wconv_ref, pool_c_ref,
    frames_ref, w1_ref, pool_x_ref, w2_ref,
    slab_ref,
    logits_ref,
    hc_acc_ref, c_ref, xl_ref):
  k = pl.program_id(0)

  @pl.when(k == 0)
  def _branches():
    hc_acc_ref[...] = jnp.zeros_like(hc_acc_ref)

    # CNN branch: im2col conv-as-matmul (bconv folded via ones column) +
    # ReLU + global-average-pool (pooling matmul) + FC.
    h = jnp.dot(patches_ref[...], wconv_ref[...], preferred_element_type=F32)
    h = jnp.maximum(h, 0.0)                                     # (n*hw, 128)
    gap = jnp.dot(pool_c_ref[...], h, preferred_element_type=F32)  # (n, 128)
    wfc = slab_ref[SLAB_WFC:SLAB_WFC + CONV_PAD, :]
    bfc = slab_ref[SLAB_BFC:SLAB_BFC + 1, :]
    c_ref[...] = jnp.maximum(
        jnp.dot(gap, wfc, preferred_element_type=F32) + bfc, 0.0)  # (n, 256)

    # XLS-R branch: linear frame encoder (b1 folded via ones column) + ReLU +
    # temporal mean (pooling matmul) + FC, keeping the L // 320 frame rate.
    hx = jnp.dot(frames_ref[...], w1_ref[...], preferred_element_type=F32)
    hx = jnp.maximum(hx, 0.0)                                   # (n*t, 1024)
    pooled = jnp.dot(pool_x_ref[...], hx, preferred_element_type=F32)
    b2 = slab_ref[SLAB_B2:SLAB_B2 + 1, :]
    xl_ref[...] = jnp.maximum(
        jnp.dot(pooled.astype(BF16), w2_ref[...], preferred_element_type=F32)
        + b2, 0.0)                                              # (n, 256)

  # Handcrafted branch: K-tiled bf16 matmul (fixed importance weighting and
  # the fc bias already folded into the weight at prep time).
  hc_acc_ref[...] += jnp.dot(hc_x_ref[...], hc_w_ref[...],
                             preferred_element_type=F32)

  @pl.when(k == pl.num_programs(0) - 1)
  def _fuse():
    hc = jnp.maximum(hc_acc_ref[...], 0.0)                      # (n, 256)
    c = c_ref[...]
    xl = xl_ref[...]

    # Gated fusion head: gate weight pre-split per branch (no concatenate),
    # per-branch scalar gates, gated sum, linear classifier.
    wg_c = slab_ref[SLAB_WG_C:SLAB_WG_C + 3, :]
    wg_h = slab_ref[SLAB_WG_H:SLAB_WG_H + 3, :]
    wg_x = slab_ref[SLAB_WG_X:SLAB_WG_X + 3, :]
    bg = slab_ref[SLAB_BG:SLAB_BG + 1, 0:3]
    g_lin = _dot_nt(c, wg_c) + _dot_nt(hc, wg_h) + _dot_nt(xl, wg_x) + bg
    gates = jax.nn.sigmoid(g_lin)                               # (n, 3)
    fused = gates[:, 0:1] * c + gates[:, 1:2] * hc + gates[:, 2:3] * xl

    wct = slab_ref[SLAB_WCT:SLAB_WCT + 2, :]
    bc = slab_ref[SLAB_BC:SLAB_BC + 1, 0:NUM_CLASSES]
    logits_ref[...] = _dot_nt(fused, wct) + bc                  # (n, 2)


# ----------------------------------------------------------------------------
# Parameter construction (deterministic, synthetic) + kernel-ready prep.
# ----------------------------------------------------------------------------
def init_params(key, cin=4):
  ks = jax.random.split(key, 8)

  def dense(k, fan_in, shape):
    return jax.random.normal(k, shape, F32) / jnp.sqrt(jnp.asarray(fan_in, F32))

  return {
      # CNN branch (PyTorch conv weight layout: (Cout, Cin, kh, kw))
      "conv_w": dense(ks[0], cin * 9, (CONV_CH, cin, 3, 3)),
      "conv_b": jnp.zeros((CONV_CH,), F32),
      "cnn_fc_w": dense(ks[1], CONV_CH, (CONV_CH, BRANCH_DIM)),
      "cnn_fc_b": jnp.zeros((BRANCH_DIM,), F32),
      # Handcrafted branch (fixed importance weights from 'output_weights.npy'
      # are synthesized deterministically here)
      "hc_fixed_w": jax.nn.sigmoid(
          jax.random.normal(ks[2], (HANDCRAFTED_DIM,), F32)),
      "hc_fc_w": dense(ks[3], HANDCRAFTED_DIM, (HANDCRAFTED_DIM, BRANCH_DIM)),
      "hc_fc_b": jnp.zeros((BRANCH_DIM,), F32),
      # XLS-R branch
      "xlsr_w1": dense(ks[4], XLSR_FRAME, (XLSR_FRAME, XLSR_HIDDEN)),
      "xlsr_b1": jnp.zeros((XLSR_HIDDEN,), F32),
      "xlsr_w2": dense(ks[5], XLSR_HIDDEN, (XLSR_HIDDEN, BRANCH_DIM)),
      "xlsr_b2": jnp.zeros((BRANCH_DIM,), F32),
      # Gated fusion head (concat order: [cnn, handcrafted, xlsr])
      "gate_w": dense(ks[6], 3 * BRANCH_DIM, (3 * BRANCH_DIM, 3)),
      "gate_b": jnp.zeros((3,), F32),
      "cls_w": dense(ks[7], BRANCH_DIM, (BRANCH_DIM, NUM_CLASSES)),
      "cls_b": jnp.zeros((NUM_CLASSES,), F32),
  }


def prepare_params(params, cin=4):
  """Fold / pad / cast raw params into kernel-ready layouts (one-time)."""
  patch_k = 9 * cin
  assert patch_k + 1 <= PATCH_PAD

  # CNN stem: (Cout,Cin,kh,kw) -> (kh*kw*Cin, Cout) matching im2col tap order,
  # pad K to 128 and Cout 16 -> 128; fold bconv into the ones-column row.
  wconv = jnp.transpose(params["conv_w"], (2, 3, 1, 0)).reshape(patch_k, CONV_CH)
  wconv = jnp.pad(wconv, ((0, PATCH_PAD - patch_k), (0, CONV_PAD - CONV_CH)))
  wconv = wconv.at[patch_k, :CONV_CH].set(params["conv_b"])

  # Handcrafted: fold the fixed importance weighting into the FC weight
  # (diag pre-scale commutes with the linear layer), pad K 6373 -> 6400,
  # fold the fc bias into the ones-column row, cast bf16.
  hc_w = params["hc_fc_w"] * params["hc_fixed_w"][:, None]
  hc_w = jnp.pad(hc_w, ((0, HC_PAD - HANDCRAFTED_DIM), (0, 0)))
  hc_w = hc_w.at[HANDCRAFTED_DIM, :].set(params["hc_fc_b"]).astype(BF16)

  # XLS-R: pad frame dim 320 -> 384, fold b1 into the ones-column row, bf16.
  w1 = jnp.pad(params["xlsr_w1"], ((0, FRAME_PAD - XLSR_FRAME), (0, 0)))
  w1 = w1.at[XLSR_FRAME, :].set(params["xlsr_b1"]).astype(BF16)
  w2 = params["xlsr_w2"].astype(BF16)

  # Constant slab: all remaining small operands packed into one (168, 256)
  # f32 array, sliced in-kernel at static 8-aligned offsets.
  wfc = jnp.pad(params["cnn_fc_w"], ((0, CONV_PAD - CONV_CH), (0, 0)))
  wg = params["gate_w"]                                    # (768, 3)
  slab = jnp.zeros((SLAB_ROWS, BRANCH_DIM), F32)
  slab = slab.at[SLAB_WFC:SLAB_WFC + CONV_PAD, :].set(wfc)
  slab = slab.at[SLAB_WG_C:SLAB_WG_C + 3, :].set(wg[:BRANCH_DIM].T)
  slab = slab.at[SLAB_WG_H:SLAB_WG_H + 3, :].set(wg[BRANCH_DIM:2 * BRANCH_DIM].T)
  slab = slab.at[SLAB_WG_X:SLAB_WG_X + 3, :].set(wg[2 * BRANCH_DIM:].T)
  slab = slab.at[SLAB_WCT:SLAB_WCT + 2, :].set(params["cls_w"].T)
  slab = slab.at[SLAB_BFC, :].set(params["cnn_fc_b"])
  slab = slab.at[SLAB_B2, :].set(params["xlsr_b2"])
  slab = slab.at[SLAB_BG, :3].set(params["gate_b"])
  slab = slab.at[SLAB_BC, :NUM_CLASSES].set(params["cls_b"])

  return {"hc_w": hc_w, "wconv": wconv, "w1": w1, "w2": w2, "slab": slab}


def _pool_matrix(n, t):
  """(n, n*t) block-diagonal mean-pooling matrix: row i averages its t rows."""
  rows = jnp.arange(n, dtype=jnp.int32)[:, None]
  cols = jnp.arange(n * t, dtype=jnp.int32)[None, :] // t
  return (rows == cols).astype(F32) / jnp.asarray(t, F32)


# ----------------------------------------------------------------------------
# Forward wrapper (glue in plain JAX, one fused Pallas kernel for everything).
# ----------------------------------------------------------------------------
@jax.jit
def multimodal_spoof_net(spectrogram, handcrafted_features, waveform, kparams):
  N, C, H, W = spectrogram.shape
  HWsz = H * W
  patch_k = 9 * C

  # -------- CNN branch glue: NCHW -> NHWC -> im2col (3x3, pad=1) --------
  # TODO(synk): for real spectrogram sizes the conv should be computed
  # in-kernel as 9 shifted accumulating matmuls to avoid the 9x im2col HBM
  # blow-up; at toy H=W=16 the im2col tensor is tiny.
  x = jnp.transpose(spectrogram, (0, 2, 3, 1))                    # NHWC
  xp = jnp.pad(x, ((0, 0), (1, 1), (1, 1), (0, 0)))
  taps = [xp[:, dy:dy + H, dx:dx + W, :] for dy in range(3) for dx in range(3)]
  patches = jnp.stack(taps, axis=3).reshape(N * HWsz, patch_k)    # (N*HW, 36)
  patches = jnp.pad(patches, ((0, 0), (0, PATCH_PAD - patch_k)))
  patches = patches.at[:, patch_k].set(1.0)                       # bconv fold

  # -------- Handcrafted branch glue: pad 6373 -> 6400, ones col, bf16 ------
  hc_x = jnp.pad(handcrafted_features,
                 ((0, 0), (0, HC_PAD - HANDCRAFTED_DIM)))
  hc_x = hc_x.at[:, HANDCRAFTED_DIM].set(1.0).astype(BF16)        # hc_b fold

  # -------- XLS-R branch glue: frame at the wav2vec2 rate, pad 320->384 ----
  L = waveform.shape[1]
  T = L // XLSR_FRAME                    # == xlsr_branch.get_sequence_length
  frames = waveform[:, : T * XLSR_FRAME].reshape(N * T, XLSR_FRAME)
  frames = jnp.pad(frames, ((0, 0), (0, FRAME_PAD - XLSR_FRAME)))
  frames = frames.at[:, XLSR_FRAME].set(1.0).astype(BF16)         # b1 fold

  pool_c = _pool_matrix(N, HWsz)                                  # (N, N*HW)
  pool_x = _pool_matrix(N, T)                                     # (N, N*T)

  n_k = HC_PAD // HC_K_TILE                                       # = 2

  def full(shape):
    return pl.BlockSpec(shape, lambda k: (0, 0))

  grid_spec = pltpu.PrefetchScalarGridSpec(
      num_scalar_prefetch=0,
      grid=(n_k,),
      in_specs=[
          pl.BlockSpec((N, HC_K_TILE), lambda k: (0, k)),           # hc_x
          pl.BlockSpec((HC_K_TILE, BRANCH_DIM), lambda k: (k, 0)),  # hc_w
          full((N * HWsz, PATCH_PAD)),                              # patches
          full((PATCH_PAD, CONV_PAD)),                              # wconv
          full((N, N * HWsz)),                                      # pool_c
          full((N * T, FRAME_PAD)),                                 # frames
          full((FRAME_PAD, XLSR_HIDDEN)),                           # w1
          full((N, N * T)),                                         # pool_x
          full((XLSR_HIDDEN, BRANCH_DIM)),                          # w2
          full((SLAB_ROWS, BRANCH_DIM)),                            # slab
      ],
      out_specs=pl.BlockSpec((N, NUM_CLASSES), lambda k: (0, 0)),
      scratch_shapes=[pltpu.VMEM((N, BRANCH_DIM), F32),   # hc accumulator
                      pltpu.VMEM((N, BRANCH_DIM), F32),   # cnn embedding
                      pltpu.VMEM((N, BRANCH_DIM), F32)],  # xlsr embedding
  )

  logits = pl.pallas_call(
      fused_spoofnet_kernel,
      out_shape=jax.ShapeDtypeStruct((N, NUM_CLASSES), F32),
      grid_spec=grid_spec,
      compiler_params=pltpu.CompilerParams(
          dimension_semantics=("arbitrary",),
          vmem_limit_bytes=32 * 1024 * 1024),
  )(hc_x, kparams["hc_w"],
    patches, kparams["wconv"], pool_c,
    frames, kparams["w1"], pool_x, kparams["w2"],
    kparams["slab"])
  return logits


if __name__ == "__main__":
  key = jax.random.PRNGKey(0)
  k_spec, k_hc, k_wav, k_par = jax.random.split(key, 4)

  # Small but shape-consistent inputs:
  #   spectrogram (N, 4, H, W), handcrafted (N, 6373),
  #   waveform (N, L) with L = 8 * 320 -> sequence_length 8.
  N, Cin, H, W = 2, 4, 16, 16
  L = 8 * XLSR_FRAME

  spectrogram = jax.random.normal(k_spec, (N, Cin, H, W), F32)
  handcrafted = jax.random.normal(k_hc, (N, HANDCRAFTED_DIM), F32)
  waveform = jax.random.normal(k_wav, (N, L), F32)

  raw_params = init_params(k_par, cin=Cin)
  kparams = prepare_params(raw_params, cin=Cin)

  logits = multimodal_spoof_net(spectrogram, handcrafted, waveform, kparams)
  logits = jax.block_until_ready(logits)
  assert logits.shape == (N, NUM_CLASSES) and logits.dtype == F32
  print("KERNEL_OK")
</pallas_src>

<mosaic_0001>
module attributes {stable_mosaic.version = 11 : i64} {
  func.func @fused_spoofnet_kernel(%arg0: i32, %arg1: memref<2x3200xbf16, #tpu.memory_space<vmem>>, %arg2: memref<3200x256xbf16, #tpu.memory_space<vmem>>, %arg3: memref<512x128xf32, #tpu.memory_space<vmem>>, %arg4: memref<128x128xf32, #tpu.memory_space<vmem>>, %arg5: memref<2x512xf32, #tpu.memory_space<vmem>>, %arg6: memref<16x384xbf16, #tpu.memory_space<vmem>>, %arg7: memref<384x1024xbf16, #tpu.memory_space<vmem>>, %arg8: memref<2x16xf32, #tpu.memory_space<vmem>>, %arg9: memref<1024x256xbf16, #tpu.memory_space<vmem>>, %arg10: memref<168x256xf32, #tpu.memory_space<vmem>>, %arg11: memref<2x2xf32, #tpu.memory_space<vmem>>, %arg12: memref<2x256xf32, #tpu.memory_space<vmem>>, %arg13: memref<2x256xf32, #tpu.memory_space<vmem>>, %arg14: memref<2x256xf32, #tpu.memory_space<vmem>>) attributes {dimension_semantics = [#tpu.dimension_semantics<arbitrary>], iteration_bounds = array<i64: 2>, scalar_prefetch = 0 : i64, scratch_operands = 3 : i64, tpu.core_type = #tpu.core_type<tc>, window_params = [{transform_indices = @transform_0, window_bounds = array<i64: 2, 3200>}, {transform_indices = @transform_1, window_bounds = array<i64: 3200, 256>}, {pipeline_mode = #tpu.pipeline_mode<synchronous>, transform_indices = @transform_2, window_bounds = array<i64: 512, 128>}, {pipeline_mode = #tpu.pipeline_mode<synchronous>, transform_indices = @transform_3, window_bounds = array<i64: 128, 128>}, {pipeline_mode = #tpu.pipeline_mode<synchronous>, transform_indices = @transform_4, window_bounds = array<i64: 2, 512>}, {pipeline_mode = #tpu.pipeline_mode<synchronous>, transform_indices = @transform_5, window_bounds = array<i64: 16, 384>}, {pipeline_mode = #tpu.pipeline_mode<synchronous>, transform_indices = @transform_6, window_bounds = array<i64: 384, 1024>}, {pipeline_mode = #tpu.pipeline_mode<synchronous>, transform_indices = @transform_7, window_bounds = array<i64: 2, 16>}, {pipeline_mode = #tpu.pipeline_mode<synchronous>, transform_indices = @transform_8, window_bounds = array<i64: 1024, 256>}, {pipeline_mode = #tpu.pipeline_mode<synchronous>, transform_indices = @transform_9, window_bounds = array<i64: 168, 256>}, {pipeline_mode = #tpu.pipeline_mode<synchronous>, transform_indices = @transform_10, window_bounds = array<i64: 2, 2>}]} {
    %c0_i32 = arith.constant 0 : i32
    %0 = arith.cmpi eq, %arg0, %c0_i32 : i32
    %1 = arith.extui %0 : i1 to i32
    %c0_i32_0 = arith.constant 0 : i32
    %2 = arith.cmpi ne, %1, %c0_i32_0 : i32
    scf.if %2 {
      %cst_9 = arith.constant 0.000000e+00 : f32
      %12 = vector.broadcast %cst_9 : f32 to vector<2x256xf32>
      %c0_10 = arith.constant 0 : index
      %c0_11 = arith.constant 0 : index
      %13 = vector.load %arg12[%c0_10, %c0_11] : memref<2x256xf32, #tpu.memory_space<vmem>>, vector<2x256xf32>
      tpu.vector_store %arg12[%c0_10, %c0_11], %12 {strides = array<i32>} : memref<2x256xf32, #tpu.memory_space<vmem>>, vector<2x256xf32>,
      %c0_12 = arith.constant 0 : index
      %c0_13 = arith.constant 0 : index
      %14 = vector.load %arg3[%c0_12, %c0_13] : memref<512x128xf32, #tpu.memory_space<vmem>>, vector<512x128xf32>
      %c0_14 = arith.constant 0 : index
      %c0_15 = arith.constant 0 : index
      %15 = vector.load %arg4[%c0_14, %c0_15] : memref<128x128xf32, #tpu.memory_space<vmem>>, vector<128x128xf32>
      %cst_16 = arith.constant dense<0.000000e+00> : vector<512x128xf32>
      %16 = tpu.matmul %14, %15, %cst_16 {dimension_numbers = #tpu.dot_dimension_numbers<[1], [0], [0], [1], [0, 0, 1, 1], [], []>} : vector<512x128xf32>, vector<128x128xf32>, vector<512x128xf32> -> vector<512x128xf32>
      %cst_17 = arith.constant 0.000000e+00 : f32
      %17 = vector.broadcast %cst_17 : f32 to vector<512x128xf32>
      %18 = arith.maximumf %16, %17 : vector<512x128xf32>
      %c0_18 = arith.constant 0 : index
      %c0_19 = arith.constant 0 : index
      %19 = vector.load %arg5[%c0_18, %c0_19] : memref<2x512xf32, #tpu.memory_space<vmem>>, vector<2x512xf32>
      %cst_20 = arith.constant dense<0.000000e+00> : vector<2x128xf32>
      %20 = tpu.matmul %19, %18, %cst_20 {dimension_numbers = #tpu.dot_dimension_numbers<[1], [0], [0], [1], [0, 0, 1, 1], [], []>} : vector<2x512xf32>, vector<512x128xf32>, vector<2x128xf32> -> vector<2x128xf32>
      %c0_21 = arith.constant 0 : index
      %c0_22 = arith.constant 0 : index
      %21 = vector.load %arg10[%c0_21, %c0_22] : memref<168x256xf32, #tpu.memory_space<vmem>>, vector<128x256xf32>
      %c160 = arith.constant 160 : index
      %c0_23 = arith.constant 0 : index
      %22 = vector.load %arg10[%c160, %c0_23] : memref<168x256xf32, #tpu.memory_space<vmem>>, vector<1x256xf32>
      %cst_24 = arith.constant dense<0.000000e+00> : vector<2x256xf32>
      %23 = tpu.matmul %20, %21, %cst_24 {dimension_numbers = #tpu.dot_dimension_numbers<[1], [0], [0], [1], [0, 0, 1, 1], [], []>} : vector<2x128xf32>, vector<128x256xf32>, vector<2x256xf32> -> vector<2x256xf32>
      %24 = vector.broadcast %22 : vector<1x256xf32> to vector<2x256xf32>
      %25 = arith.addf %23, %24 : vector<2x256xf32>
      %cst_25 = arith.constant 0.000000e+00 : f32
      %26 = vector.broadcast %cst_25 : f32 to vector<2x256xf32>
      %27 = arith.maximumf %25, %26 : vector<2x256xf32>
      %c0_26 = arith.constant 0 : index
      %c0_27 = arith.constant 0 : index
      %28 = vector.load %arg13[%c0_26, %c0_27] : memref<2x256xf32, #tpu.memory_space<vmem>>, vector<2x256xf32>
      tpu.vector_store %arg13[%c0_26, %c0_27], %27 {strides = array<i32>} : memref<2x256xf32, #tpu.memory_space<vmem>>, vector<2x256xf32>,
      %c0_28 = arith.constant 0 : index
      %c0_29 = arith.constant 0 : index
      %29 = vector.load %arg6[%c0_28, %c0_29] : memref<16x384xbf16, #tpu.memory_space<vmem>>, vector<16x384xbf16>
      %c0_30 = arith.constant 0 : index
      %c0_31 = arith.constant 0 : index
      %30 = vector.load %arg7[%c0_30, %c0_31] : memref<384x1024xbf16, #tpu.memory_space<vmem>>, vector<384x1024xbf16>
      %cst_32 = arith.constant dense<0.000000e+00> : vector<16x1024xf32>
      %31 = tpu.matmul %29, %30, %cst_32 {dimension_numbers = #tpu.dot_dimension_numbers<[1], [0], [0], [1], [0, 0, 1, 1], [], []>} : vector<16x384xbf16>, vector<384x1024xbf16>, vector<16x1024xf32> -> vector<16x1024xf32>
      %cst_33 = arith.constant 0.000000e+00 : f32
      %32 = vector.broadcast %cst_33 : f32 to vector<16x1024xf32>
      %33 = arith.maximumf %31, %32 : vector<16x1024xf32>
      %c0_34 = arith.constant 0 : index
      %c0_35 = arith.constant 0 : index
      %34 = vector.load %arg8[%c0_34, %c0_35] : memref<2x16xf32, #tpu.memory_space<vmem>>, vector<2x16xf32>
      %cst_36 = arith.constant dense<0.000000e+00> : vector<2x1024xf32>
      %35 = tpu.matmul %34, %33, %cst_36 {dimension_numbers = #tpu.dot_dimension_numbers<[1], [0], [0], [1], [0, 0, 1, 1], [], []>} : vector<2x16xf32>, vector<16x1024xf32>, vector<2x1024xf32> -> vector<2x1024xf32>
      %c161 = arith.constant 161 : index
      %c0_37 = arith.constant 0 : index
      %36 = vector.load %arg10[%c161, %c0_37] : memref<168x256xf32, #tpu.memory_space<vmem>>, vector<1x256xf32>
      %37 = arith.truncf %35 : vector<2x1024xf32> to vector<2x1024xbf16>
      %c0_38 = arith.constant 0 : index
      %c0_39 = arith.constant 0 : index
      %38 = vector.load %arg9[%c0_38, %c0_39] : memref<1024x256xbf16, #tpu.memory_space<vmem>>, vector<1024x256xbf16>
      %cst_40 = arith.constant dense<0.000000e+00> : vector<2x256xf32>
      %39 = tpu.matmul %37, %38, %cst_40 {dimension_numbers = #tpu.dot_dimension_numbers<[1], [0], [0], [1], [0, 0, 1, 1], [], []>} : vector<2x1024xbf16>, vector<1024x256xbf16>, vector<2x256xf32> -> vector<2x256xf32>
      %40 = vector.broadcast %36 : vector<1x256xf32> to vector<2x256xf32>
      %41 = arith.addf %39, %40 : vector<2x256xf32>
      %cst_41 = arith.constant 0.000000e+00 : f32
      %42 = vector.broadcast %cst_41 : f32 to vector<2x256xf32>
      %43 = arith.maximumf %41, %42 : vector<2x256xf32>
      %c0_42 = arith.constant 0 : index
      %c0_43 = arith.constant 0 : index
      %44 = vector.load %arg14[%c0_42, %c0_43] : memref<2x256xf32, #tpu.memory_space<vmem>>, vector<2x256xf32>
      tpu.vector_store %arg14[%c0_42, %c0_43], %43 {strides = array<i32>} : memref<2x256xf32, #tpu.memory_space<vmem>>, vector<2x256xf32>,
    } else {
    }
    %c0 = arith.constant 0 : index
    %c0_1 = arith.constant 0 : index
    %3 = vector.load %arg12[%c0, %c0_1] : memref<2x256xf32, #tpu.memory_space<vmem>>, vector<2x256xf32>
    %c0_2 = arith.constant 0 : index
    %c0_3 = arith.constant 0 : index
    %4 = vector.load %arg1[%c0_2, %c0_3] : memref<2x3200xbf16, #tpu.memory_space<vmem>>, vector<2x3200xbf16>
    %c0_4 = arith.constant 0 : index
    %c0_5 = arith.constant 0 : index
    %5 = vector.load %arg2[%c0_4, %c0_5] : memref<3200x256xbf16, #tpu.memory_space<vmem>>, vector<3200x256xbf16>
    %cst = arith.constant dense<0.000000e+00> : vector<2x256xf32>
    %6 = tpu.matmul %4, %5, %cst {dimension_numbers = #tpu.dot_dimension_numbers<[1], [0], [0], [1], [0, 0, 1, 1], [], []>} : vector<2x3200xbf16>, vector<3200x256xbf16>, vector<2x256xf32> -> vector<2x256xf32>
    %7 = arith.addf %3, %6 : vector<2x256xf32>
    %c0_6 = arith.constant 0 : index
    %c0_7 = arith.constant 0 : index
    %8 = vector.load %arg12[%c0_6, %c0_7] : memref<2x256xf32, #tpu.memory_space<vmem>>, vector<2x256xf32>
    tpu.vector_store %arg12[%c0_6, %c0_7], %7 {strides = array<i32>} : memref<2x256xf32, #tpu.memory_space<vmem>>, vector<2x256xf32>,
    %c1_i32 = arith.constant 1 : i32
    %9 = arith.cmpi eq, %arg0, %c1_i32 : i32
    %10 = arith.extui %9 : i1 to i32
    %c0_i32_8 = arith.constant 0 : i32
    %11 = arith.cmpi ne, %10, %c0_i32_8 : i32
    scf.if %11 {
      %c0_9 = arith.constant 0 : index
      %c0_10 = arith.constant 0 : index
      %12 = vector.load %arg12[%c0_9, %c0_10] : memref<2x256xf32, #tpu.memory_space<vmem>>, vector<2x256xf32>
      %cst_11 = arith.constant 0.000000e+00 : f32
      %13 = vector.broadcast %cst_11 : f32 to vector<2x256xf32>
      %14 = arith.maximumf %12, %13 : vector<2x256xf32>
      %c0_12 = arith.constant 0 : index
      %c0_13 = arith.constant 0 : index
      %15 = vector.load %arg13[%c0_12, %c0_13] : memref<2x256xf32, #tpu.memory_space<vmem>>, vector<2x256xf32>
      %c0_14 = arith.constant 0 : index
      %c0_15 = arith.constant 0 : index
      %16 = vector.load %arg14[%c0_14, %c0_15] : memref<2x256xf32, #tpu.memory_space<vmem>>, vector<2x256xf32>
      %c128 = arith.constant 128 : index
      %c0_16 = arith.constant 0 : index
      %17 = vector.load %arg10[%c128, %c0_16] : memref<168x256xf32, #tpu.memory_space<vmem>>, vector<3x256xf32>
      %c136 = arith.constant 136 : index
      %c0_17 = arith.constant 0 : index
      %18 = vector.load %arg10[%c136, %c0_17] : memref<168x256xf32, #tpu.memory_space<vmem>>, vector<3x256xf32>
      %c144 = arith.constant 144 : index
      %c0_18 = arith.constant 0 : index
      %19 = vector.load %arg10[%c144, %c0_18] : memref<168x256xf32, #tpu.memory_space<vmem>>, vector<3x256xf32>
      %c162 = arith.constant 162 : index
      %c0_19 = arith.constant 0 : index
      %20 = vector.load %arg10[%c162, %c0_19] : memref<168x256xf32, #tpu.memory_space<vmem>>, vector<1x3xf32>
      %cst_20 = arith.constant dense<0.000000e+00> : vector<2x3xf32>
      %21 = tpu.matmul %15, %17, %cst_20 {dimension_numbers = #tpu.dot_dimension_numbers<[1], [1], [0], [0], [0, 0, 1, 0], [], []>} : vector<2x256xf32>, vector<3x256xf32>, vector<2x3xf32> -> vector<2x3xf32>
      %cst_21 = arith.constant dense<0.000000e+00> : vector<2x3xf32>
      %22 = tpu.matmul %14, %18, %cst_21 {dimension_numbers = #tpu.dot_dimension_numbers<[1], [1], [0], [0], [0, 0, 1, 0], [], []>} : vector<2x256xf32>, vector<3x256xf32>, vector<2x3xf32> -> vector<2x3xf32>
      %23 = arith.addf %21, %22 : vector<2x3xf32>
      %cst_22 = arith.constant dense<0.000000e+00> : vector<2x3xf32>
      %24 = tpu.matmul %16, %19, %cst_22 {dimension_numbers = #tpu.dot_dimension_numbers<[1], [1], [0], [0], [0, 0, 1, 0], [], []>} : vector<2x256xf32>, vector<3x256xf32>, vector<2x3xf32> -> vector<2x3xf32>
      %25 = arith.addf %23, %24 : vector<2x3xf32>
      %26 = vector.broadcast %20 : vector<1x3xf32> to vector<2x3xf32>
      %27 = arith.addf %25, %26 : vector<2x3xf32>
      %28 = arith.negf %27 : vector<2x3xf32>
      %29 = math.exp %28 : vector<2x3xf32>
      %cst_23 = arith.constant 1.000000e+00 : f32
      %30 = vector.broadcast %cst_23 : f32 to vector<2x3xf32>
      %31 = arith.addf %30, %29 : vector<2x3xf32>
      %32 = arith.divf %30, %31 : vector<2x3xf32>
      %33 = vector.extract_strided_slice %32 {offsets = [0, 0], sizes = [2, 1], strides = [1, 1]} : vector<2x3xf32> to vector<2x1xf32>
      %34 = vector.broadcast %33 : vector<2x1xf32> to vector<2x256xf32>
      %35 = arith.mulf %34, %15 : vector<2x256xf32>
      %36 = vector.extract_strided_slice %32 {offsets = [0, 1], sizes = [2, 1], strides = [1, 1]} : vector<2x3xf32> to vector<2x1xf32>
      %37 = vector.broadcast %36 : vector<2x1xf32> to vector<2x256xf32>
      %38 = arith.mulf %37, %14 : vector<2x256xf32>
      %39 = arith.addf %35, %38 : vector<2x256xf32>
      %40 = vector.extract_strided_slice %32 {offsets = [0, 2], sizes = [2, 1], strides = [1, 1]} : vector<2x3xf32> to vector<2x1xf32>
      %41 = vector.broadcast %40 : vector<2x1xf32> to vector<2x256xf32>
      %42 = arith.mulf %41, %16 : vector<2x256xf32>
      %43 = arith.addf %39, %42 : vector<2x256xf32>
      %c152 = arith.constant 152 : index
      %c0_24 = arith.constant 0 : index
      %44 = vector.load %arg10[%c152, %c0_24] : memref<168x256xf32, #tpu.memory_space<vmem>>, vector<2x256xf32>
      %c163 = arith.constant 163 : index
      %c0_25 = arith.constant 0 : index
      %45 = vector.load %arg10[%c163, %c0_25] : memref<168x256xf32, #tpu.memory_space<vmem>>, vector<1x2xf32>
      %cst_26 = arith.constant dense<0.000000e+00> : vector<2x2xf32>
      %46 = tpu.matmul %43, %44, %cst_26 {dimension_numbers = #tpu.dot_dimension_numbers<[1], [1], [0], [0], [0, 0, 1, 0], [], []>} : vector<2x256xf32>, vector<2x256xf32>, vector<2x2xf32> -> vector<2x2xf32>
      %47 = vector.broadcast %45 : vector<1x2xf32> to vector<2x2xf32>
      %48 = arith.addf %46, %47 : vector<2x2xf32>
      %c0_27 = arith.constant 0 : index
      %c0_28 = arith.constant 0 : index
      %49 = vector.load %arg11[%c0_27, %c0_28] : memref<2x2xf32, #tpu.memory_space<vmem>>, vector<2x2xf32>
      tpu.vector_store %arg11[%c0_27, %c0_28], %48 {strides = array<i32>} : memref<2x2xf32, #tpu.memory_space<vmem>>, vector<2x2xf32>,
    } else {
    }
    return
  }
  func.func @transform_0(%arg0: i32) -> (i32, i32) {
    %c0_i32 = arith.constant 0 : i32
    %c0_i32_0 = arith.constant 0 : i32
    return %c0_i32, %arg0 : i32, i32
  }
  func.func @transform_1(%arg0: i32) -> (i32, i32) {
    %c0_i32 = arith.constant 0 : i32
    %c0_i32_0 = arith.constant 0 : i32
    return %arg0, %c0_i32 : i32, i32
  }
  func.func @transform_2(%arg0: i32) -> (i32, i32) {
    %c0_i32 = arith.constant 0 : i32
    %c0_i32_0 = arith.constant 0 : i32
    %c0_i32_1 = arith.constant 0 : i32
    return %c0_i32, %c0_i32_0 : i32, i32
  }
  func.func @transform_3(%arg0: i32) -> (i32, i32) {
    %c0_i32 = arith.constant 0 : i32
    %c0_i32_0 = arith.constant 0 : i32
    %c0_i32_1 = arith.constant 0 : i32
    return %c0_i32, %c0_i32_0 : i32, i32
  }
  func.func @transform_4(%arg0: i32) -> (i32, i32) {
    %c0_i32 = arith.constant 0 : i32
    %c0_i32_0 = arith.constant 0 : i32
    %c0_i32_1 = arith.constant 0 : i32
    return %c0_i32, %c0_i32_0 : i32, i32
  }
  func.func @transform_5(%arg0: i32) -> (i32, i32) {
    %c0_i32 = arith.constant 0 : i32
    %c0_i32_0 = arith.constant 0 : i32
    %c0_i32_1 = arith.constant 0 : i32
    return %c0_i32, %c0_i32_0 : i32, i32
  }
  func.func @transform_6(%arg0: i32) -> (i32, i32) {
    %c0_i32 = arith.constant 0 : i32
    %c0_i32_0 = arith.constant 0 : i32
    %c0_i32_1 = arith.constant 0 : i32
    return %c0_i32, %c0_i32_0 : i32, i32
  }
  func.func @transform_7(%arg0: i32) -> (i32, i32) {
    %c0_i32 = arith.constant 0 : i32
    %c0_i32_0 = arith.constant 0 : i32
    %c0_i32_1 = arith.constant 0 : i32
    return %c0_i32, %c0_i32_0 : i32, i32
  }
  func.func @transform_8(%arg0: i32) -> (i32, i32) {
    %c0_i32 = arith.constant 0 : i32
    %c0_i32_0 = arith.constant 0 : i32
    %c0_i32_1 = arith.constant 0 : i32
    return %c0_i32, %c0_i32_0 : i32, i32
  }
  func.func @transform_9(%arg0: i32) -> (i32, i32) {
    %c0_i32 = arith.constant 0 : i32
    %c0_i32_0 = arith.constant 0 : i32
    %c0_i32_1 = arith.constant 0 : i32
    return %c0_i32, %c0_i32_0 : i32, i32
  }
  func.func @transform_10(%arg0: i32) -> (i32, i32) {
    %c0_i32 = arith.constant 0 : i32
    %c0_i32_0 = arith.constant 0 : i32
    %c0_i32_1 = arith.constant 0 : i32
    return %c0_i32, %c0_i32_0 : i32, i32
  }
}

</mosaic_0001>

<llo_original>
// kernel: multimodal_spoof_net.1
$region0: #{multimodal_spoof_net.1}
  #allocation0 [shape = 'u32[]', space=smem, size = 0x4, offset = 0x4, fixed_abs, tag = 'smem constant byte address 0x4 - core index']
  #allocation1 [shape = 'u32[144,128]{1,0:T(1,128)}', space=vmem, size = 0x12000, scoped, tag = 'internal scratch']
  #allocation2 [shape = 'f32[2,256]{1,0:T(2,128)}', space=vmem, size = 0x800, scoped, tag = 'scratch operand']
  #allocation3 [shape = 'f32[2,256]{1,0:T(2,128)}', space=vmem, size = 0x800, scoped, tag = 'scratch operand']
  #allocation4 [shape = 'f32[2,256]{1,0:T(2,128)}', space=vmem, size = 0x800, scoped, tag = 'scratch operand']
  %s0 = inlined_call_operand.vmem [shape: bf16[2,6400], index: 0, kind: input, shape index: {}]
  %s1 = inlined_call_operand.vmem [shape: bf16[6400,256], index: 1, kind: input, shape index: {}]
  %s2 = inlined_call_operand.vmem [shape: f32[512,128], index: 2, kind: input, shape index: {}]
  %s3 = inlined_call_operand.vmem [shape: f32[128,128], index: 3, kind: input, shape index: {}]
  %s4 = inlined_call_operand.vmem [shape: f32[2,512], index: 4, kind: input, shape index: {}]
  %s5 = inlined_call_operand.vmem [shape: bf16[16,384], index: 5, kind: input, shape index: {}]
  %s6 = inlined_call_operand.vmem [shape: bf16[384,1024], index: 6, kind: input, shape index: {}]
  %s7 = inlined_call_operand.vmem [shape: f32[2,16], index: 7, kind: input, shape index: {}]
  %s8 = inlined_call_operand.vmem [shape: bf16[1024,256], index: 8, kind: input, shape index: {}]
  %s9 = inlined_call_operand.vmem [shape: f32[168,256], index: 9, kind: input, shape index: {}]
  %s10 = inlined_call_operand.hbm [shape: f32[2,2], index: 10, kind: output, shape index: {}]
  %s11 = sld [smem:[#allocation0]]
  $region81: #{multimodal_spoof_net.1} parent=0
    _
  %s13 = ssub.s32 1, %s11
  %s14 = scalar_select 0, %s13, %s11
  $region1: #{multimodal_spoof_net.1} parent=0
    #allocation5 [shape = 'u8[1024]{0}', space=vmem, size = 0x400, scoped, tag = 'output window, operand 0, single buffered']
    #allocation6 [shape = 's32[2]{0}', space=sflag, size = 0x8, scoped, tag = 'scoped memory for multimodal_spoof_net.1']
    %15 = vsyncpa [#allocation6], 0
    loop: start=0, step=1, limit=4
    $region2: #{multimodal_spoof_net.1} parent=1 // loop_pre_header
      _
    $region3: #{multimodal_spoof_net.1} parent=1 // loop_header
      %s17 = sphi 0, %s21
      %p18 = scmp.ge.s32.totalorder %s17, 4
      %s27 = sphi 0, %s29
      %s30 = sphi 0, %s27
      %s31 = sphi 0, %s30
      %s47 = sphi 0, %s31
      %s53 = sphi 0, %s55
      %s56 = sphi 0, %s53
      %s57 = sphi 0, %s56
      %s73 = sphi 0, %s57
      %s77 = sphi 0, %s77
      %s79 = sphi 0, %s77
      %s80 = sphi 0, %s79
      %s94 = sphi 0, %s80
      %s98 = sphi 0, %s98
      %s100 = sphi 0, %s98
      %s101 = sphi 0, %s100
      %s115 = sphi 0, %s101
      %s119 = sphi 0, %s119
      %s121 = sphi 0, %s119
      %s122 = sphi 0, %s121
      %s136 = sphi 0, %s122
      %s140 = sphi 0, %s140
      %s142 = sphi 0, %s140
      %s143 = sphi 0, %s142
      %s157 = sphi 0, %s143
      %s161 = sphi 0, %s161
      %s163 = sphi 0, %s161
      %s164 = sphi 0, %s163
      %s178 = sphi 0, %s164
      %s182 = sphi 0, %s182
      %s184 = sphi 0, %s182
      %s185 = sphi 0, %s184
      %s199 = sphi 0, %s185
      %s203 = sphi 0, %s203
      %s205 = sphi 0, %s203
      %s206 = sphi 0, %s205
      %s220 = sphi 0, %s206
      %s224 = sphi 0, %s224
      %s226 = sphi 0, %s224
      %s227 = sphi 0, %s226
      %s241 = sphi 0, %s227
      %s245 = sphi 0, %s245
      %s247 = sphi 0, %s245
      %s248 = sphi 0, %s247
      %s262 = sphi 0, %s248
    $region4: #{multimodal_spoof_net.1} parent=1 // loop_header_branch
      %20 = sbr.rel (%p18) target = $region8
    $region5: #{multimodal_spoof_net.1} parent=1 // loop_body
      %s22 = ssub.s32 %s17, 1
      %s23 = ssub.s32 %s17, 2
      %s24 = sadd.s32 %s17, 1
      %s25 = ssub.s32 %s17, %s24
      %p26 = scmp.eq.s32.totalorder %s25, 0
      %s28 = sadd.s32 %s27, 1
      %s29 = scalar_select %p26, %s27, %s28
      %p32 = pneg %p26
      %p33 = scmp.eq.s32.totalorder %s17, 1
      %p34 = por %p32, %p33
      %p35 = scmp.ne.s32.totalorder %s27, %s30
      %p36 = scmp.eq.s32.totalorder %s17, 0
      %p37 = por %p35, %p36
      %p38 = scmp.ne.s32.totalorder %s27, %s30
      %p39 = scmp.eq.s32.totalorder %s22, 1
      %p40 = por %p38, %p39
      %p41 = scmp.ne.s32.totalorder %s30, %s31
      %p42 = scmp.eq.s32.totalorder %s22, 0
      %p43 = por %p41, %p42
      %p44 = scmp.ne.s32.totalorder %s30, %s31
      %p45 = scmp.eq.s32.totalorder %s23, 1
      %p46 = por %p44, %p45
      %p48 = scmp.ne.s32.totalorder %s31, %s47
      %p49 = scmp.eq.s32.totalorder %s23, 0
      %p50 = por %p48, %p49
      %s51 = ssub.s32 %s17, %s24
      %p52 = scmp.eq.s32.totalorder %s51, 0
      %s54 = sadd.s32 %s53, 1
      %s55 = scalar_select %p52, %s53, %s54
      %p58 = pneg %p52
      %p59 = scmp.eq.s32.totalorder %s17, 1
      %p60 = por %p58, %p59
      %p61 = scmp.ne.s32.totalorder %s53, %s56
      %p62 = scmp.eq.s32.totalorder %s17, 0
      %p63 = por %p61, %p62
      %p64 = scmp.ne.s32.totalorder %s53, %s56
      %p65 = scmp.eq.s32.totalorder %s22, 1
      %p66 = por %p64, %p65
      %p67 = scmp.ne.s32.totalorder %s56, %s57
      %p68 = scmp.eq.s32.totalorder %s22, 0
      %p69 = por %p67, %p68
      %p70 = scmp.ne.s32.totalorder %s56, %s57
      %p71 = scmp.eq.s32.totalorder %s23, 1
      %p72 = por %p70, %p71
      %p74 = scmp.ne.s32.totalorder %s57, %s73
      %p75 = scmp.eq.s32.totalorder %s23, 0
      %p76 = por %p74, %p75
      %s78 = sadd.s32 %s77, 1
      %p81 = scmp.eq.s32.totalorder %s17, 1
      %p82 = scmp.ne.s32.totalorder %s77, %s79
      %p83 = scmp.eq.s32.totalorder %s17, 0
      %p84 = por %p82, %p83
      %p85 = scmp.ne.s32.totalorder %s77, %s79
      %p86 = scmp.eq.s32.totalorder %s22, 1
      %p87 = por %p85, %p86
      %p88 = scmp.ne.s32.totalorder %s79, %s80
      %p89 = scmp.eq.s32.totalorder %s22, 0
      %p90 = por %p88, %p89
      %p91 = scmp.ne.s32.totalorder %s79, %s80
      %p92 = scmp.eq.s32.totalorder %s23, 1
      %p93 = por %p91, %p92
      %p95 = scmp.ne.s32.totalorder %s80, %s94
      %p96 = scmp.eq.s32.totalorder %s23, 0
      %p97 = por %p95, %p96
      %s99 = sadd.s32 %s98, 1
      %p102 = scmp.eq.s32.totalorder %s17, 1
      %p103 = scmp.ne.s32.totalorder %s98, %s100
      %p104 = scmp.eq.s32.totalorder %s17, 0
      %p105 = por %p103, %p104
      %p106 = scmp.ne.s32.totalorder %s98, %s100
      %p107 = scmp.eq.s32.totalorder %s22, 1
      %p108 = por %p106, %p107
      %p109 = scmp.ne.s32.totalorder %s100, %s101
      %p110 = scmp.eq.s32.totalorder %s22, 0
      %p111 = por %p109, %p110
      %p112 = scmp.ne.s32.totalorder %s100, %s101
      %p113 = scmp.eq.s32.totalorder %s23, 1
      %p114 = por %p112, %p113
      %p116 = scmp.ne.s32.totalorder %s101, %s115
      %p117 = scmp.eq.s32.totalorder %s23, 0
      %p118 = por %p116, %p117
      %s120 = sadd.s32 %s119, 1
      %p123 = scmp.eq.s32.totalorder %s17, 1
      %p124 = scmp.ne.s32.totalorder %s119, %s121
      %p125 = scmp.eq.s32.totalorder %s17, 0
      %p126 = por %p124, %p125
      %p127 = scmp.ne.s32.totalorder %s119, %s121
      %p128 = scmp.eq.s32.totalorder %s22, 1
      %p129 = por %p127, %p128
      %p130 = scmp.ne.s32.totalorder %s121, %s122
      %p131 = scmp.eq.s32.totalorder %s22, 0
      %p132 = por %p130, %p131
      %p133 = scmp.ne.s32.totalorder %s121, %s122
      %p134 = scmp.eq.s32.totalorder %s23, 1
      %p135 = por %p133, %p134
      %p137 = scmp.ne.s32.totalorder %s122, %s136
      %p138 = scmp.eq.s32.totalorder %s23, 0
      %p139 = por %p137, %p138
      %s141 = sadd.s32 %s140, 1
      %p144 = scmp.eq.s32.totalorder %s17, 1
      %p145 = scmp.ne.s32.totalorder %s140, %s142
      %p146 = scmp.eq.s32.totalorder %s17, 0
      %p147 = por %p145, %p146
      %p148 = scmp.ne.s32.totalorder %s140, %s142
      %p149 = scmp.eq.s32.totalorder %s22, 1
      %p150 = por %p148, %p149
      %p151 = scmp.ne.s32.totalorder %s142, %s143
      %p152 = scmp.eq.s32.totalorder %s22, 0
      %p153 = por %p151, %p152
      %p154 = scmp.ne.s32.totalorder %s142, %s143
      %p155 = scmp.eq.s32.totalorder %s23, 1
      %p156 = por %p154, %p155
      %p158 = scmp.ne.s32.totalorder %s143, %s157
      %p159 = scmp.eq.s32.totalorder %s23, 0
      %p160 = por %p158, %p159
      %s162 = sadd.s32 %s161, 1
      %p165 = scmp.eq.s32.totalorder %s17, 1
      %p166 = scmp.ne.s32.totalorder %s161, %s163
      %p167 = scmp.eq.s32.totalorder %s17, 0
      %p168 = por %p166, %p167
      %p169 = scmp.ne.s32.totalorder %s161, %s163
      %p170 = scmp.eq.s32.totalorder %s22, 1
      %p171 = por %p169, %p170
      %p172 = scmp.ne.s32.totalorder %s163, %s164
      %p173 = scmp.eq.s32.totalorder %s22, 0
      %p174 = por %p172, %p173
      %p175 = scmp.ne.s32.totalorder %s163, %s164
      %p176 = scmp.eq.s32.totalorder %s23, 1
      %p177 = por %p175, %p176
      %p179 = scmp.ne.s32.totalorder %s164, %s178
      %p180 = scmp.eq.s32.totalorder %s23, 0
      %p181 = por %p179, %p180
      %s183 = sadd.s32 %s182, 1
      %p186 = scmp.eq.s32.totalorder %s17, 1
      %p187 = scmp.ne.s32.totalorder %s182, %s184
      %p188 = scmp.eq.s32.totalorder %s17, 0
      %p189 = por %p187, %p188
      %p190 = scmp.ne.s32.totalorder %s182, %s184
      %p191 = scmp.eq.s32.totalorder %s22, 1
      %p192 = por %p190, %p191
      %p193 = scmp.ne.s32.totalorder %s184, %s185
      %p194 = scmp.eq.s32.totalorder %s22, 0
      %p195 = por %p193, %p194
      %p196 = scmp.ne.s32.totalorder %s184, %s185
      %p197 = scmp.eq.s32.totalorder %s23, 1
      %p198 = por %p196, %p197
      %p200 = scmp.ne.s32.totalorder %s185, %s199
      %p201 = scmp.eq.s32.totalorder %s23, 0
      %p202 = por %p200, %p201
      %s204 = sadd.s32 %s203, 1
      %p207 = scmp.eq.s32.totalorder %s17, 1
      %p208 = scmp.ne.s32.totalorder %s203, %s205
      %p209 = scmp.eq.s32.totalorder %s17, 0
      %p210 = por %p208, %p209
      %p211 = scmp.ne.s32.totalorder %s203, %s205
      %p212 = scmp.eq.s32.totalorder %s22, 1
      %p213 = por %p211, %p212
      %p214 = scmp.ne.s32.totalorder %s205, %s206
      %p215 = scmp.eq.s32.totalorder %s22, 0
      %p216 = por %p214, %p215
      %p217 = scmp.ne.s32.totalorder %s205, %s206
      %p218 = scmp.eq.s32.totalorder %s23, 1
      %p219 = por %p217, %p218
      %p221 = scmp.ne.s32.totalorder %s206, %s220
      %p222 = scmp.eq.s32.totalorder %s23, 0
      %p223 = por %p221, %p222
      %s225 = sadd.s32 %s224, 1
      %p228 = scmp.eq.s32.totalorder %s17, 1
      %p229 = scmp.ne.s32.totalorder %s224, %s226
      %p230 = scmp.eq.s32.totalorder %s17, 0
      %p231 = por %p229, %p230
      %p232 = scmp.ne.s32.totalorder %s224, %s226
      %p233 = scmp.eq.s32.totalorder %s22, 1
      %p234 = por %p232, %p233
      %p235 = scmp.ne.s32.totalorder %s226, %s227
      %p236 = scmp.eq.s32.totalorder %s22, 0
      %p237 = por %p235, %p236
      %p238 = scmp.ne.s32.totalorder %s226, %s227
      %p239 = scmp.eq.s32.totalorder %s23, 1
      %p240 = por %p238, %p239
      %p242 = scmp.ne.s32.totalorder %s227, %s241
      %p243 = scmp.eq.s32.totalorder %s23, 0
      %p244 = por %p242, %p243
      %s246 = sadd.s32 %s245, 1
      %p249 = scmp.eq.s32.totalorder %s17, 1
      %p250 = scmp.ne.s32.totalorder %s245, %s247
      %p251 = scmp.eq.s32.totalorder %s17, 0
      %p252 = por %p250, %p251
      %p253 = scmp.ne.s32.totalorder %s245, %s247
      %p254 = scmp.eq.s32.totalorder %s22, 1
      %p255 = por %p253, %p254
      %p256 = scmp.ne.s32.totalorder %s247, %s248
      %p257 = scmp.eq.s32.totalorder %s22, 0
      %p258 = por %p256, %p257
      %p259 = scmp.ne.s32.totalorder %s247, %s248
      %p260 = scmp.eq.s32.totalorder %s23, 1
      %p261 = por %p259, %p260
      %p263 = scmp.ne.s32.totalorder %s248, %s262
      %p264 = scmp.eq.s32.totalorder %s23, 0
      %p265 = por %p263, %p264
      %p266 = scmp.le.s32.totalorder 1, %s17
      %p267 = scmp.lt.s32.totalorder %s17, 3
      %p268 = pnand %p266, %p267
      %p269 = pneg %p268
      // Predicated region
      $region9: #{multimodal_spoof_net.1} parent=5 // pred_check
        _
      $region10: #{multimodal_spoof_net.1} parent=5 // pred_check_branch
        %271 = sbr.rel (%p268) target = $region12
      $region11: #{multimodal_spoof_net.1} parent=5 // pred_region
        %s272 = ssub.s32 %s17, 1
        // Predicated region
        $region13: #{multimodal_spoof_net.1} parent=11 // pred_check
          %p273 = pneg %p90
        $region14: #{multimodal_spoof_net.1} parent=11 // pred_check_branch
          %275 = sbr.rel (%p273) target = $region16
        $region15: #{multimodal_spoof_net.1} parent=11 // pred_region
          _
        $region16: #{multimodal_spoof_net.1} parent=11 // pred_fallthru
          _
        // Predicated region
        $region17: #{multimodal_spoof_net.1} parent=11 // pred_check
          %p276 = pneg %p111
        $region18: #{multimodal_spoof_net.1} parent=11 // pred_check_branch
          %278 = sbr.rel (%p276) target = $region20
        $region19: #{multimodal_spoof_net.1} parent=11 // pred_region
          _
        $region20: #{multimodal_spoof_net.1} parent=11 // pred_fallthru
          _
        // Predicated region
        $region21: #{multimodal_spoof_net.1} parent=11 // pred_check
          %p279 = pneg %p132
        $region22: #{multimodal_spoof_net.1} parent=11 // pred_check_branch
          %281 = sbr.rel (%p279) target = $region24
        $region23: #{multimodal_spoof_net.1} parent=11 // pred_region
          _
        $region24: #{multimodal_spoof_net.1} parent=11 // pred_fallthru
          _
        // Predicated region
        $region25: #{multimodal_spoof_net.1} parent=11 // pred_check
          %p282 = pneg %p153
        $region26: #{multimodal_spoof_net.1} parent=11 // pred_check_branch
          %284 = sbr.rel (%p282) target = $region28
        $region27: #{multimodal_spoof_net.1} parent=11 // pred_region
          _
        $region28: #{multimodal_spoof_net.1} parent=11 // pred_fallthru
          _
        // Predicated region
        $region29: #{multimodal_spoof_net.1} parent=11 // pred_check
          %p285 = pneg %p174
        $region30: #{multimodal_spoof_net.1} parent=11 // pred_check_branch
          %287 = sbr.rel (%p285) target = $region32
        $region31: #{multimodal_spoof_net.1} parent=11 // pred_region
          _
        $region32: #{multimodal_spoof_net.1} parent=11 // pred_fallthru
          _
        // Predicated region
        $region33: #{multimodal_spoof_net.1} parent=11 // pred_check
          %p288 = pneg %p195
        $region34: #{multimodal_spoof_net.1} parent=11 // pred_check_branch
          %290 = sbr.rel (%p288) target = $region36
        $region35: #{multimodal_spoof_net.1} parent=11 // pred_region
          _
        $region36: #{multimodal_spoof_net.1} parent=11 // pred_fallthru
          _
        // Predicated region
        $region37: #{multimodal_spoof_net.1} parent=11 // pred_check
          %p291 = pneg %p216
        $region38: #{multimodal_spoof_net.1} parent=11 // pred_check_branch
          %293 = sbr.rel (%p291) target = $region40
        $region39: #{multimodal_spoof_net.1} parent=11 // pred_region
          _
        $region40: #{multimodal_spoof_net.1} parent=11 // pred_fallthru
          _
        // Predicated region
        $region41: #{multimodal_spoof_net.1} parent=11 // pred_check
          %p294 = pneg %p237
        $region42: #{multimodal_spoof_net.1} parent=11 // pred_check_branch
          %296 = sbr.rel (%p294) target = $region44
        $region43: #{multimodal_spoof_net.1} parent=11 // pred_region
          _
        $region44: #{multimodal_spoof_net.1} parent=11 // pred_fallthru
          _
      $region12: #{multimodal_spoof_net.1} parent=5 // pred_fallthru
        _
      %p297 = scmp.lt.s32.totalorder %s17, 2
      // Predicated region
      $region45: #{multimodal_spoof_net.1} parent=5 // pred_check
        %p298 = pneg %p297
      $region46: #{multimodal_spoof_net.1} parent=5 // pred_check_branch
        %300 = sbr.rel (%p298) target = $region48
      $region47: #{multimodal_spoof_net.1} parent=5 // pred_region
        // Predicated region
        $region49: #{multimodal_spoof_net.1} parent=47 // pred_check
          %p301 = pneg %p37
        $region50: #{multimodal_spoof_net.1} parent=47 // pred_check_branch
          %303 = sbr.rel (%p301) target = $region52
        $region51: #{multimodal_spoof_net.1} parent=47 // pred_region
          %s304 = smul.u32 25, %s17
          %p305 = scmp.lt.s32.totalorder %s304, 49
          %s306 = scalar_select %p305, %s304, 49
          %s307 = scalar_lea.vmem %s0, %s306
          %s308 = smul.u32 25, %s17
        $region52: #{multimodal_spoof_net.1} parent=47 // pred_fallthru
          _
        // Predicated region
        $region53: #{multimodal_spoof_net.1} parent=47 // pred_check
          %p309 = pneg %p63
        $region54: #{multimodal_spoof_net.1} parent=47 // pred_check_branch
          %311 = sbr.rel (%p309) target = $region56
        $region55: #{multimodal_spoof_net.1} parent=47 // pred_region
          %s312 = smul.u32 400, %s17
          %p313 = scmp.lt.s32.totalorder %s312, 799
          %s314 = scalar_select %p313, %s312, 799
          %s315 = smul.addr %s314, 2
          %s316 = smul.addr %s315, 4
          %s317 = scalar_lea.vmem %s1, %s316
          %s318 = smul.u32 400, %s17
        $region56: #{multimodal_spoof_net.1} parent=47 // pred_fallthru
          _
      $region48: #{multimodal_spoof_net.1} parent=5 // pred_fallthru
        _
      %p319 = scmp.le.s32.totalorder 1, %s17
      %p320 = scmp.lt.s32.totalorder %s17, 3
      %p321 = pnand %p319, %p320
      %p322 = pneg %p321
      // Predicated region
      $region57: #{multimodal_spoof_net.1} parent=5 // pred_check
        _
      $region58: #{multimodal_spoof_net.1} parent=5 // pred_check_branch
        %324 = sbr.rel (%p321) target = $region60
      $region59: #{multimodal_spoof_net.1} parent=5 // pred_region
        %s325 = ssub.s32 %s17, 1
        %s326 = smul.u32 25, %s22
        %p327 = scmp.lt.s32.totalorder %s326, 49
        %s328 = scalar_select %p327, %s326, 49
        %s329 = scalar_lea.vmem %s0, %s328
        %p330 = pneg %p43
        %p331 = pneg %p40
        %s332 = smul.u32 400, %s22
        %p333 = scmp.lt.s32.totalorder %s332, 799
        %s334 = scalar_select %p333, %s332, 799
        %s335 = smul.addr %s334, 2
        %s336 = smul.addr %s335, 4
        %s337 = scalar_lea.vmem %s1, %s336
        %p338 = pneg %p69
        %p339 = pneg %p66
        %p340 = pneg %p90
        %p341 = pneg %p87
        %p342 = pneg %p111
        %p343 = pneg %p108
        %p344 = pneg %p132
        %p345 = pneg %p129
        %p346 = pneg %p153
        %p347 = pneg %p150
        %p348 = pneg %p174
        %p349 = pneg %p171
        %p350 = pneg %p195
        %p351 = pneg %p192
        %p352 = pneg %p216
        %p353 = pneg %p213
        %p354 = pneg %p237
        %p355 = pneg %p234
        %p356 = pneg %p258
        %p357 = pneg %p255
        %s358 = smul.u32 25, %s22
        %p359 = scmp.lt.s32.totalorder %s358, 49
        %s360 = scalar_select %p359, %s358, 49
        %s361 = scalar_lea.vmem %s0, %s360
        %s362 = smul.u32 25, %s22
        %s363 = smul.u32 400, %s22
        %p364 = scmp.lt.s32.totalorder %s363, 799
        %s365 = scalar_select %p364, %s363, 799
        %s366 = smul.addr %s365, 2
        %s367 = smul.addr %s366, 4
        %s368 = scalar_lea.vmem %s1, %s367
        %s369 = smul.u32 400, %s22
        %p371 = scmp.eq.s32.totalorder %s22, 0
        // Predicated region
        $region61: #{multimodal_spoof_net.1} parent=59 // pred_check
          %p372 = pneg %p371
        $region62: #{multimodal_spoof_net.1} parent=59 // pred_check_branch
          %374 = sbr.rel (%p372) target = $region64
        $region63: #{multimodal_spoof_net.1} parent=59 // pred_region
          %375 = vst [vmem:[#allocation2] sm:$0xf] 0.0
          %v376 = vld [vmem:[%s2] sm:$0xff]
          %v377 = vld [vmem:[%s2 + $0x8] sm:$0xff]
          %v378 = vld [vmem:[%s2 + $0x10] sm:$0xff]
          %v379 = vld [vmem:[%s2 + $0x18] sm:$0xff]
          %v380 = vld [vmem:[%s2 + $0x20] sm:$0xff]
          %v381 = vld [vmem:[%s2 + $0x28] sm:$0xff]
          %v382 = vld [vmem:[%s2 + $0x30] sm:$0xff]
          %v383 = vld [vmem:[%s2 + $0x38] sm:$0xff]
          %v384 = vld [vmem:[%s2 + $0x40] sm:$0xff]
          %v385 = vld [vmem:[%s2 + $0x48] sm:$0xff]
          %v386 = vld [vmem:[%s2 + $0x50] sm:$0xff]
          %v387 = vld [vmem:[%s2 + $0x58] sm:$0xff]
          %v388 = vld [vmem:[%s2 + $0x60] sm:$0xff]
          %v389 = vld [vmem:[%s2 + $0x68] sm:$0xff]
          %v390 = vld [vmem:[%s2 + $0x70] sm:$0xff]
          %v391 = vld [vmem:[%s2 + $0x78] sm:$0xff]
          %v392 = vld [vmem:[%s2 + $0x80] sm:$0xff]
          %v393 = vld [vmem:[%s2 + $0x88] sm:$0xff]
          %v394 = vld [vmem:[%s2 + $0x90] sm:$0xff]
          %v395 = vld [vmem:[%s2 + $0x98] sm:$0xff]
          %v396 = vld [vmem:[%s2 + $0xa0] sm:$0xff]
          %v397 = vld [vmem:[%s2 + $0xa8] sm:$0xff]
          %v398 = vld [vmem:[%s2 + $0xb0] sm:$0xff]
          %v399 = vld [vmem:[%s2 + $0xb8] sm:$0xff]
          %v400 = vld [vmem:[%s2 + $0xc0] sm:$0xff]
          %v401 = vld [vmem:[%s2 + $0xc8] sm:$0xff]
          %v402 = vld [vmem:[%s2 + $0xd0] sm:$0xff]
          %v403 = vld [vmem:[%s2 + $0xd8] sm:$0xff]
          %v404 = vld [vmem:[%s2 + $0xe0] sm:$0xff]
          %v405 = vld [vmem:[%s2 + $0xe8] sm:$0xff]
          %v406 = vld [vmem:[%s2 + $0xf0] sm:$0xff]
          %v407 = vld [vmem:[%s2 + $0xf8] sm:$0xff]
          %v408 = vld [vmem:[%s2 + $0x100] sm:$0xff]
          %v409 = vld [vmem:[%s2 + $0x108] sm:$0xff]
          %v410 = vld [vmem:[%s2 + $0x110] sm:$0xff]
          %v411 = vld [vmem:[%s2 + $0x118] sm:$0xff]
          %v412 = vld [vmem:[%s2 + $0x120] sm:$0xff]
          %v413 = vld [vmem:[%s2 + $0x128] sm:$0xff]
          %v414 = vld [vmem:[%s2 + $0x130] sm:$0xff]
          %v415 = vld [vmem:[%s2 + $0x138] sm:$0xff]
          %v416 = vld [vmem:[%s2 + $0x140] sm:$0xff]
          %v417 = vld [vmem:[%s2 + $0x148] sm:$0xff]
          %v418 = vld [vmem:[%s2 + $0x150] sm:$0xff]
          %v419 = vld [vmem:[%s2 + $0x158] sm:$0xff]
          %v420 = vld [vmem:[%s2 + $0x160] sm:$0xff]
          %v421 = vld [vmem:[%s2 + $0x168] sm:$0xff]
          %v422 = vld [vmem:[%s2 + $0x170] sm:$0xff]
          %v423 = vld [vmem:[%s2 + $0x178] sm:$0xff]
          %v424 = vld [vmem:[%s2 + $0x180] sm:$0xff]
          %v425 = vld [vmem:[%s2 + $0x188] sm:$0xff]
          %v426 = vld [vmem:[%s2 + $0x190] sm:$0xff]
          %v427 = vld [vmem:[%s2 + $0x198] sm:$0xff]
          %v428 = vld [vmem:[%s2 + $0x1a0] sm:$0xff]
          %v429 = vld [vmem:[%s2 + $0x1a8] sm:$0xff]
          %v430 = vld [vmem:[%s2 + $0x1b0] sm:$0xff]
          %v431 = vld [vmem:[%s2 + $0x1b8] sm:$0xff]
          %v432 = vld [vmem:[%s2 + $0x1c0] sm:$0xff]
          %v433 = vld [vmem:[%s2 + $0x1c8] sm:$0xff]
          %v434 = vld [vmem:[%s2 + $0x1d0] sm:$0xff]
          %v435 = vld [vmem:[%s2 + $0x1d8] sm:$0xff]
          %v436 = vld [vmem:[%s2 + $0x1e0] sm:$0xff]
          %v437 = vld [vmem:[%s2 + $0x1e8] sm:$0xff]
          %v438 = vld [vmem:[%s2 + $0x1f0] sm:$0xff]
          %v439 = vld [vmem:[%s2 + $0x1f8] sm:$0xff]
          %v440 = vld [vmem:[%s3] sm:$0xff]
          %v441 = vld [vmem:[%s3 + $0x8] sm:$0xff]
          %v442 = vld [vmem:[%s3 + $0x10] sm:$0xff]
          %v443 = vld [vmem:[%s3 + $0x18] sm:$0xff]
          %v444 = vld [vmem:[%s3 + $0x20] sm:$0xff]
          %v445 = vld [vmem:[%s3 + $0x28] sm:$0xff]
          %v446 = vld [vmem:[%s3 + $0x30] sm:$0xff]
          %v447 = vld [vmem:[%s3 + $0x38] sm:$0xff]
          %v448 = vld [vmem:[%s3 + $0x40] sm:$0xff]
          %v449 = vld [vmem:[%s3 + $0x48] sm:$0xff]
          %v450 = vld [vmem:[%s3 + $0x50] sm:$0xff]
          %v451 = vld [vmem:[%s3 + $0x58] sm:$0xff]
          %v452 = vld [vmem:[%s3 + $0x60] sm:$0xff]
          %v453 = vld [vmem:[%s3 + $0x68] sm:$0xff]
          %v454 = vld [vmem:[%s3 + $0x70] sm:$0xff]
          %v455 = vld [vmem:[%s3 + $0x78] sm:$0xff]
          %456 = vmatprep.subr.mxu0 0.0
          %457 = vmatpush1.msra.mxu0 %v455
          %458 = vmatprep.subr.mxu0 0.0
          %459 = vmatpush1.msra.mxu0 %v454
          %460 = vmatprep.subr.mxu0 0.0
          %461 = vmatpush1.msra.mxu0 %v453
          %462 = vmatprep.subr.mxu0 0.0
          %463 = vmatpush1.msra.mxu0 %v452
          %464 = vmatprep.subr.mxu0 0.0
          %465 = vmatpush1.msra.mxu0 %v451
          %466 = vmatprep.subr.mxu0 0.0
          %467 = vmatpush1.msra.mxu0 %v450
          %468 = vmatprep.subr.mxu0 0.0
          %469 = vmatpush1.msra.mxu0 %v449
          %470 = vmatprep.subr.mxu0 0.0
          %471 = vmatpush1.msra.mxu0 %v448
          %472 = vmatprep.subr.mxu0 0.0
          %473 = vmatpush1.msra.mxu0 %v447
          %474 = vmatprep.subr.mxu0 0.0
          %475 = vmatpush1.msra.mxu0 %v446
          %476 = vmatprep.subr.mxu0 0.0
          %477 = vmatpush1.msra.mxu0 %v445
          %478 = vmatprep.subr.mxu0 0.0
          %479 = vmatpush1.msra.mxu0 %v444
          %480 = vmatprep.subr.mxu0 0.0
          %481 = vmatpush1.msra.mxu0 %v443
          %482 = vmatprep.subr.mxu0 0.0
          %483 = vmatpush1.msra.mxu0 %v442
          %484 = vmatprep.subr.mxu0 0.0
          %485 = vmatpush1.msra.mxu0 %v441
          %486 = vmatprep.subr.mxu0 0.0
          %487 = vmatpush1.msra.mxu0 %v440
          %488 = vmatprep.subr.mxu0 0.0
          %489 = vmatpush2.msra.mxu0 0.0
          %490 = vmatprep.subr.mxu0 0.0
          %491 = vmatpush2.msra.mxu0 0.0
          %492 = vmatprep.subr.mxu0 0.0
          %493 = vmatpush2.msra.mxu0 0.0
          %494 = vmatprep.subr.mxu0 0.0
          %495 = vmatpush2.msra.mxu0 0.0
          %496 = vmatprep.subr.mxu0 0.0
          %497 = vmatpush2.msra.mxu0 0.0
          %498 = vmatprep.subr.mxu0 0.0
          %499 = vmatpush2.msra.mxu0 0.0
          %500 = vmatprep.subr.mxu0 0.0
          %501 = vmatpush2.msra.mxu0 0.0
          %502 = vmatprep.subr.mxu0 0.0
          %503 = vmatpush2.msra.mxu0 0.0
          %504 = vmatprep.subr.mxu0 0.0
          %505 = vmatpush2.msra.mxu0 0.0
          %506 = vmatprep.subr.mxu0 0.0
          %507 = vmatpush2.msra.mxu0 0.0
          %508 = vmatprep.subr.mxu0 0.0
          %509 = vmatpush2.msra.mxu0 0.0
          %510 = vmatprep.subr.mxu0 0.0
          %511 = vmatpush2.msra.mxu0 0.0
          %512 = vmatprep.subr.mxu0 0.0
          %513 = vmatpush2.msra.mxu0 0.0
          %514 = vmatprep.subr.mxu0 0.0
          %515 = vmatpush2.msra.mxu0 0.0
          %516 = vmatprep.subr.mxu0 0.0
          %517 = vmatpush2.msra.mxu0 0.0
          %518 = vmatprep.subr.mxu0 0.0
          %519 = vmatpush2.msra.mxu0 0.0
          %520 = vmatprep.mubr.f32.mxu0 0.0
          %521 = vmatmul.mubr.f32.gmra.mxu0 %v376
          %v522 = vpop.f32.mrf.mxu0
          %v523 = vadd.f32 0.0, %v522
          %v524 = vpop.f32.mrf.mxu0
          %525 = vmatprep.mubr.f32.mxu0 0.0
          %526 = vmatmul.mubr.f32.gmra.mxu0 %v377
          %v527 = vpop.f32.mrf.mxu0
          %v528 = vadd.f32 0.0, %v527
          %v529 = vpop.f32.mrf.mxu0
          %530 = vmatprep.mubr.f32.mxu0 0.0
          %531 = vmatmul.mubr.f32.gmra.mxu0 %v378
          %v532 = vpop.f32.mrf.mxu0
          %v533 = vadd.f32 0.0, %v532
          %v534 = vpop.f32.mrf.mxu0
          %535 = vmatprep.mubr.f32.mxu0 0.0
          %536 = vmatmul.mubr.f32.gmra.mxu0 %v379
          %v537 = vpop.f32.mrf.mxu0
          %v538 = vadd.f32 0.0, %v537
          %v539 = vpop.f32.mrf.mxu0
          %540 = vmatprep.mubr.f32.mxu0 0.0
          %541 = vmatmul.mubr.f32.gmra.mxu0 %v380
          %v542 = vpop.f32.mrf.mxu0
          %v543 = vadd.f32 0.0, %v542
          %v544 = vpop.f32.mrf.mxu0
          %545 = vmatprep.mubr.f32.mxu0 0.0
          %546 = vmatmul.mubr.f32.gmra.mxu0 %v381
          %v547 = vpop.f32.mrf.mxu0
          %v548 = vadd.f32 0.0, %v547
          %v549 = vpop.f32.mrf.mxu0
          %550 = vmatprep.mubr.f32.mxu0 0.0
          %551 = vmatmul.mubr.f32.gmra.mxu0 %v382
          %v552 = vpop.f32.mrf.mxu0
          %v553 = vadd.f32 0.0, %v552
          %v554 = vpop.f32.mrf.mxu0
          %555 = vmatprep.mubr.f32.mxu0 0.0
          %556 = vmatmul.mubr.f32.gmra.mxu0 %v383
          %v557 = vpop.f32.mrf.mxu0
          %v558 = vadd.f32 0.0, %v557
          %v559 = vpop.f32.mrf.mxu0
          %560 = vmatprep.mubr.f32.mxu0 0.0
          %561 = vmatmul.mubr.f32.gmra.mxu0 %v384
          %v562 = vpop.f32.mrf.mxu0
          %v563 = vadd.f32 0.0, %v562
          %v564 = vpop.f32.mrf.mxu0
          %565 = vmatprep.mubr.f32.mxu0 0.0
          %566 = vmatmul.mubr.f32.gmra.mxu0 %v385
          %v567 = vpop.f32.mrf.mxu0
          %v568 = vadd.f32 0.0, %v567
          %v569 = vpop.f32.mrf.mxu0
          %570 = vmatprep.mubr.f32.mxu0 0.0
          %571 = vmatmul.mubr.f32.gmra.mxu0 %v386
          %v572 = vpop.f32.mrf.mxu0
          %v573 = vadd.f32 0.0, %v572
          %v574 = vpop.f32.mrf.mxu0
          %575 = vmatprep.mubr.f32.mxu0 0.0
          %576 = vmatmul.mubr.f32.gmra.mxu0 %v387
          %v577 = vpop.f32.mrf.mxu0
          %v578 = vadd.f32 0.0, %v577
          %v579 = vpop.f32.mrf.mxu0
          %580 = vmatprep.mubr.f32.mxu0 0.0
          %581 = vmatmul.mubr.f32.gmra.mxu0 %v388
          %v582 = vpop.f32.mrf.mxu0
          %v583 = vadd.f32 0.0, %v582
          %v584 = vpop.f32.mrf.mxu0
          %585 = vmatprep.mubr.f32.mxu0 0.0
          %586 = vmatmul.mubr.f32.gmra.mxu0 %v389
          %v587 = vpop.f32.mrf.mxu0
          %v588 = vadd.f32 0.0, %v587
          %v589 = vpop.f32.mrf.mxu0
          %590 = vmatprep.mubr.f32.mxu0 0.0
          %591 = vmatmul.mubr.f32.gmra.mxu0 %v390
          %v592 = vpop.f32.mrf.mxu0
          %v593 = vadd.f32 0.0, %v592
          %v594 = vpop.f32.mrf.mxu0
          %595 = vmatprep.mubr.f32.mxu0 0.0
          %596 = vmatmul.mubr.f32.gmra.mxu0 %v391
          %v597 = vpop.f32.mrf.mxu0
          %v598 = vadd.f32 0.0, %v597
          %v599 = vpop.f32.mrf.mxu0
          %600 = vmatprep.mubr.f32.mxu0 0.0
          %601 = vmatmul.mubr.f32.gmra.mxu0 %v392
          %v602 = vpop.f32.mrf.mxu0
          %v603 = vadd.f32 0.0, %v602
          %v604 = vpop.f32.mrf.mxu0
          %605 = vmatprep.mubr.f32.mxu0 0.0
          %606 = vmatmul.mubr.f32.gmra.mxu0 %v393
          %v607 = vpop.f32.mrf.mxu0
          %v608 = vadd.f32 0.0, %v607
          %v609 = vpop.f32.mrf.mxu0
          %610 = vmatprep.mubr.f32.mxu0 0.0
          %611 = vmatmul.mubr.f32.gmra.mxu0 %v394
          %v612 = vpop.f32.mrf.mxu0
          %v613 = vadd.f32 0.0, %v612
          %v614 = vpop.f32.mrf.mxu0
          %615 = vmatprep.mubr.f32.mxu0 0.0
          %616 = vmatmul.mubr.f32.gmra.mxu0 %v395
          %v617 = vpop.f32.mrf.mxu0
          %v618 = vadd.f32 0.0, %v617
          %v619 = vpop.f32.mrf.mxu0
          %620 = vmatprep.mubr.f32.mxu0 0.0
          %621 = vmatmul.mubr.f32.gmra.mxu0 %v396
          %v622 = vpop.f32.mrf.mxu0
          %v623 = vadd.f32 0.0, %v622
          %v624 = vpop.f32.mrf.mxu0
          %625 = vmatprep.mubr.f32.mxu0 0.0
          %626 = vmatmul.mubr.f32.gmra.mxu0 %v397
          %v627 = vpop.f32.mrf.mxu0
          %v628 = vadd.f32 0.0, %v627
          %v629 = vpop.f32.mrf.mxu0
          %630 = vmatprep.mubr.f32.mxu0 0.0
          %631 = vmatmul.mubr.f32.gmra.mxu0 %v398
          %v632 = vpop.f32.mrf.mxu0
          %v633 = vadd.f32 0.0, %v632
          %v634 = vpop.f32.mrf.mxu0
          %635 = vmatprep.mubr.f32.mxu0 0.0
          %636 = vmatmul.mubr.f32.gmra.mxu0 %v399
          %v637 = vpop.f32.mrf.mxu0
          %v638 = vadd.f32 0.0, %v637
          %v639 = vpop.f32.mrf.mxu0
          %640 = vmatprep.mubr.f32.mxu0 0.0
          %641 = vmatmul.mubr.f32.gmra.mxu0 %v400
          %v642 = vpop.f32.mrf.mxu0
          %v643 = vadd.f32 0.0, %v642
          %v644 = vpop.f32.mrf.mxu0
          %645 = vmatprep.mubr.f32.mxu0 0.0
          %646 = vmatmul.mubr.f32.gmra.mxu0 %v401
          %v647 = vpop.f32.mrf.mxu0
          %v648 = vadd.f32 0.0, %v647
          %v649 = vpop.f32.mrf.mxu0
          %650 = vmatprep.mubr.f32.mxu0 0.0
          %651 = vmatmul.mubr.f32.gmra.mxu0 %v402
          %v652 = vpop.f32.mrf.mxu0
          %v653 = vadd.f32 0.0, %v652
          %v654 = vpop.f32.mrf.mxu0
          %655 = vmatprep.mubr.f32.mxu0 0.0
          %656 = vmatmul.mubr.f32.gmra.mxu0 %v403
          %v657 = vpop.f32.mrf.mxu0
          %v658 = vadd.f32 0.0, %v657
          %v659 = vpop.f32.mrf.mxu0
          %660 = vmatprep.mubr.f32.mxu0 0.0
          %661 = vmatmul.mubr.f32.gmra.mxu0 %v404
          %v662 = vpop.f32.mrf.mxu0
          %v663 = vadd.f32 0.0, %v662
          %v664 = vpop.f32.mrf.mxu0
          %665 = vmatprep.mubr.f32.mxu0 0.0
          %666 = vmatmul.mubr.f32.gmra.mxu0 %v405
          %v667 = vpop.f32.mrf.mxu0
          %v668 = vadd.f32 0.0, %v667
          %v669 = vpop.f32.mrf.mxu0
          %670 = vmatprep.mubr.f32.mxu0 0.0
          %671 = vmatmul.mubr.f32.gmra.mxu0 %v406
          %v672 = vpop.f32.mrf.mxu0
          %v673 = vadd.f32 0.0, %v672
          %v674 = vpop.f32.mrf.mxu0
          %675 = vmatprep.mubr.f32.mxu0 0.0
          %676 = vmatmul.mubr.f32.gmra.mxu0 %v407
          %v677 = vpop.f32.mrf.mxu0
          %v678 = vadd.f32 0.0, %v677
          %v679 = vpop.f32.mrf.mxu0
          %680 = vmatprep.mubr.f32.mxu0 0.0
          %681 = vmatmul.mubr.f32.gmra.mxu0 %v408
          %v682 = vpop.f32.mrf.mxu0
          %v683 = vadd.f32 0.0, %v682
          %v684 = vpop.f32.mrf.mxu0
          %685 = vmatprep.mubr.f32.mxu0 0.0
          %686 = vmatmul.mubr.f32.gmra.mxu0 %v409
          %v687 = vpop.f32.mrf.mxu0
          %v688 = vadd.f32 0.0, %v687
          %v689 = vpop.f32.mrf.mxu0
          %690 = vmatprep.mubr.f32.mxu0 0.0
          %691 = vmatmul.mubr.f32.gmra.mxu0 %v410
          %v692 = vpop.f32.mrf.mxu0
          %v693 = vadd.f32 0.0, %v692
          %v694 = vpop.f32.mrf.mxu0
          %695 = vmatprep.mubr.f32.mxu0 0.0
          %696 = vmatmul.mubr.f32.gmra.mxu0 %v411
          %v697 = vpop.f32.mrf.mxu0
          %v698 = vadd.f32 0.0, %v697
          %v699 = vpop.f32.mrf.mxu0
          %700 = vmatprep.mubr.f32.mxu0 0.0
          %701 = vmatmul.mubr.f32.gmra.mxu0 %v412
          %v702 = vpop.f32.mrf.mxu0
          %v703 = vadd.f32 0.0, %v702
          %v704 = vpop.f32.mrf.mxu0
          %705 = vmatprep.mubr.f32.mxu0 0.0
          %706 = vmatmul.mubr.f32.gmra.mxu0 %v413
          %v707 = vpop.f32.mrf.mxu0
          %v708 = vadd.f32 0.0, %v707
          %v709 = vpop.f32.mrf.mxu0
          %710 = vmatprep.mubr.f32.mxu0 0.0
          %711 = vmatmul.mubr.f32.gmra.mxu0 %v414
          %v712 = vpop.f32.mrf.mxu0
          %v713 = vadd.f32 0.0, %v712
          %v714 = vpop.f32.mrf.mxu0
          %715 = vmatprep.mubr.f32.mxu0 0.0
          %716 = vmatmul.mubr.f32.gmra.mxu0 %v415
          %v717 = vpop.f32.mrf.mxu0
          %v718 = vadd.f32 0.0, %v717
          %v719 = vpop.f32.mrf.mxu0
          %720 = vmatprep.mubr.f32.mxu0 0.0
          %721 = vmatmul.mubr.f32.gmra.mxu0 %v416
          %v722 = vpop.f32.mrf.mxu0
          %v723 = vadd.f32 0.0, %v722
          %v724 = vpop.f32.mrf.mxu0
          %725 = vmatprep.mubr.f32.mxu0 0.0
          %726 = vmatmul.mubr.f32.gmra.mxu0 %v417
          %v727 = vpop.f32.mrf.mxu0
          %v728 = vadd.f32 0.0, %v727
          %v729 = vpop.f32.mrf.mxu0
          %730 = vmatprep.mubr.f32.mxu0 0.0
          %731 = vmatmul.mubr.f32.gmra.mxu0 %v418
          %v732 = vpop.f32.mrf.mxu0
          %v733 = vadd.f32 0.0, %v732
          %v734 = vpop.f32.mrf.mxu0
          %735 = vmatprep.mubr.f32.mxu0 0.0
          %736 = vmatmul.mubr.f32.gmra.mxu0 %v419
          %v737 = vpop.f32.mrf.mxu0
          %v738 = vadd.f32 0.0, %v737
          %v739 = vpop.f32.mrf.mxu0
          %740 = vmatprep.mubr.f32.mxu0 0.0
          %741 = vmatmul.mubr.f32.gmra.mxu0 %v420
          %v742 = vpop.f32.mrf.mxu0
          %v743 = vadd.f32 0.0, %v742
          %v744 = vpop.f32.mrf.mxu0
          %745 = vmatprep.mubr.f32.mxu0 0.0
          %746 = vmatmul.mubr.f32.gmra.mxu0 %v421
          %v747 = vpop.f32.mrf.mxu0
          %v748 = vadd.f32 0.0, %v747
          %v749 = vpop.f32.mrf.mxu0
          %750 = vmatprep.mubr.f32.mxu0 0.0
          %751 = vmatmul.mubr.f32.gmra.mxu0 %v422
          %v752 = vpop.f32.mrf.mxu0
          %v753 = vadd.f32 0.0, %v752
          %v754 = vpop.f32.mrf.mxu0
          %755 = vmatprep.mubr.f32.mxu0 0.0
          %756 = vmatmul.mubr.f32.gmra.mxu0 %v423
          %v757 = vpop.f32.mrf.mxu0
          %v758 = vadd.f32 0.0, %v757
          %v759 = vpop.f32.mrf.mxu0
          %760 = vmatprep.mubr.f32.mxu0 0.0
          %761 = vmatmul.mubr.f32.gmra.mxu0 %v424
          %v762 = vpop.f32.mrf.mxu0
          %v763 = vadd.f32 0.0, %v762
          %v764 = vpop.f32.mrf.mxu0
          %765 = vmatprep.mubr.f32.mxu0 0.0
          %766 = vmatmul.mubr.f32.gmra.mxu0 %v425
          %v767 = vpop.f32.mrf.mxu0
          %v768 = vadd.f32 0.0, %v767
          %v769 = vpop.f32.mrf.mxu0
          %770 = vmatprep.mubr.f32.mxu0 0.0
          %771 = vmatmul.mubr.f32.gmra.mxu0 %v426
          %v772 = vpop.f32.mrf.mxu0
          %v773 = vadd.f32 0.0, %v772
          %v774 = vpop.f32.mrf.mxu0
          %775 = vmatprep.mubr.f32.mxu0 0.0
          %776 = vmatmul.mubr.f32.gmra.mxu0 %v427
          %v777 = vpop.f32.mrf.mxu0
          %v778 = vadd.f32 0.0, %v777
          %v779 = vpop.f32.mrf.mxu0
          %780 = vmatprep.mubr.f32.mxu0 0.0
          %781 = vmatmul.mubr.f32.gmra.mxu0 %v428
          %v782 = vpop.f32.mrf.mxu0
          %v783 = vadd.f32 0.0, %v782
          %v784 = vpop.f32.mrf.mxu0
          %785 = vmatprep.mubr.f32.mxu0 0.0
          %786 = vmatmul.mubr.f32.gmra.mxu0 %v429
          %v787 = vpop.f32.mrf.mxu0
          %v788 = vadd.f32 0.0, %v787
          %v789 = vpop.f32.mrf.mxu0
          %790 = vmatprep.mubr.f32.mxu0 0.0
          %791 = vmatmul.mubr.f32.gmra.mxu0 %v430
          %v792 = vpop.f32.mrf.mxu0
          %v793 = vadd.f32 0.0, %v792
          %v794 = vpop.f32.mrf.mxu0
          %795 = vmatprep.mubr.f32.mxu0 0.0
          %796 = vmatmul.mubr.f32.gmra.mxu0 %v431
          %v797 = vpop.f32.mrf.mxu0
          %v798 = vadd.f32 0.0, %v797
          %v799 = vpop.f32.mrf.mxu0
          %800 = vmatprep.mubr.f32.mxu0 0.0
          %801 = vmatmul.mubr.f32.gmra.mxu0 %v432
          %v802 = vpop.f32.mrf.mxu0
          %v803 = vadd.f32 0.0, %v802
          %v804 = vpop.f32.mrf.mxu0
          %805 = vmatprep.mubr.f32.mxu0 0.0
          %806 = vmatmul.mubr.f32.gmra.mxu0 %v433
          %v807 = vpop.f32.mrf.mxu0
          %v808 = vadd.f32 0.0, %v807
          %v809 = vpop.f32.mrf.mxu0
          %810 = vmatprep.mubr.f32.mxu0 0.0
          %811 = vmatmul.mubr.f32.gmra.mxu0 %v434
          %v812 = vpop.f32.mrf.mxu0
          %v813 = vadd.f32 0.0, %v812
          %v814 = vpop.f32.mrf.mxu0
          %815 = vmatprep.mubr.f32.mxu0 0.0
          %816 = vmatmul.mubr.f32.gmra.mxu0 %v435
          %v817 = vpop.f32.mrf.mxu0
          %v818 = vadd.f32 0.0, %v817
          %v819 = vpop.f32.mrf.mxu0
          %820 = vmatprep.mubr.f32.mxu0 0.0
          %821 = vmatmul.mubr.f32.gmra.mxu0 %v436
          %v822 = vpop.f32.mrf.mxu0
          %v823 = vadd.f32 0.0, %v822
          %v824 = vpop.f32.mrf.mxu0
          %825 = vmatprep.mubr.f32.mxu0 0.0
          %826 = vmatmul.mubr.f32.gmra.mxu0 %v437
          %v827 = vpop.f32.mrf.mxu0
          %v828 = vadd.f32 0.0, %v827
          %v829 = vpop.f32.mrf.mxu0
          %830 = vmatprep.mubr.f32.mxu0 0.0
          %831 = vmatmul.mubr.f32.gmra.mxu0 %v438
          %v832 = vpop.f32.mrf.mxu0
          %v833 = vadd.f32 0.0, %v832
          %v834 = vpop.f32.mrf.mxu0
          %835 = vmatprep.mubr.f32.mxu0 0.0
          %836 = vmatmul.mubr.f32.gmra.mxu0 %v439
          %v837 = vpop.f32.mrf.mxu0
          %v838 = vadd.f32 0.0, %v837
          %v839 = vpop.f32.mrf.mxu0
          %840 = vdwg.mxu0
          %v841 = vmax.f32 %v523, 0.0
          %v842 = vmax.f32 %v528, 0.0
          %v843 = vmax.f32 %v533, 0.0
          %v844 = vmax.f32 %v538, 0.0
          %v845 = vmax.f32 %v543, 0.0
          %v846 = vmax.f32 %v548, 0.0
          %v847 = vmax.f32 %v553, 0.0
          %v848 = vmax.f32 %v558, 0.0
          %v849 = vmax.f32 %v563, 0.0
          %v850 = vmax.f32 %v568, 0.0
          %v851 = vmax.f32 %v573, 0.0
          %v852 = vmax.f32 %v578, 0.0
          %v853 = vmax.f32 %v583, 0.0
          %v854 = vmax.f32 %v588, 0.0
          %v855 = vmax.f32 %v593, 0.0
          %v856 = vmax.f32 %v598, 0.0
          %v857 = vmax.f32 %v603, 0.0
          %v858 = vmax.f32 %v608, 0.0
          %v859 = vmax.f32 %v613, 0.0
          %v860 = vmax.f32 %v618, 0.0
          %v861 = vmax.f32 %v623, 0.0
          %v862 = vmax.f32 %v628, 0.0
          %v863 = vmax.f32 %v633, 0.0
          %v864 = vmax.f32 %v638, 0.0
          %v865 = vmax.f32 %v643, 0.0
          %v866 = vmax.f32 %v648, 0.0
          %v867 = vmax.f32 %v653, 0.0
          %v868 = vmax.f32 %v658, 0.0
          %v869 = vmax.f32 %v663, 0.0
          %v870 = vmax.f32 %v668, 0.0
          %v871 = vmax.f32 %v673, 0.0
          %v872 = vmax.f32 %v678, 0.0
          %v873 = vmax.f32 %v683, 0.0
          %v874 = vmax.f32 %v688, 0.0
          %v875 = vmax.f32 %v693, 0.0
          %v876 = vmax.f32 %v698, 0.0
          %v877 = vmax.f32 %v703, 0.0
          %v878 = vmax.f32 %v708, 0.0
          %v879 = vmax.f32 %v713, 0.0
          %v880 = vmax.f32 %v718, 0.0
          %v881 = vmax.f32 %v723, 0.0
          %v882 = vmax.f32 %v728, 0.0
          %v883 = vmax.f32 %v733, 0.0
          %v884 = vmax.f32 %v738, 0.0
          %v885 = vmax.f32 %v743, 0.0
          %v886 = vmax.f32 %v748, 0.0
          %v887 = vmax.f32 %v753, 0.0
          %v888 = vmax.f32 %v758, 0.0
          %v889 = vmax.f32 %v763, 0.0
          %v890 = vmax.f32 %v768, 0.0
          %v891 = vmax.f32 %v773, 0.0
          %v892 = vmax.f32 %v778, 0.0
          %v893 = vmax.f32 %v783, 0.0
          %v894 = vmax.f32 %v788, 0.0
          %v895 = vmax.f32 %v793, 0.0
          %v896 = vmax.f32 %v798, 0.0
          %v897 = vmax.f32 %v803, 0.0
          %v898 = vmax.f32 %v808, 0.0
          %v899 = vmax.f32 %v813, 0.0
          %v900 = vmax.f32 %v818, 0.0
          %v901 = vmax.f32 %v823, 0.0
          %v902 = vmax.f32 %v828, 0.0
          %v903 = vmax.f32 %v833, 0.0
          %v904 = vmax.f32 %v838, 0.0
          %v905 = vld [vmem:[%s4] sm:$0xff]
          %v907 = vcombine.high %v905, %v905
          %v909 = vunpack.c.l.s4 1983009808
          %v910 = vunpack.c.0.s8 %v909
          %v911 = vlaneseq
          %v912 = vshrl.u32 %v911, 7
          %v913 = vsub.s32 %v910, %v912
          %v914 = vrot.slane %v905, %v913
          %v916 = vunpack.c.l.s4 1983009808
          %v917 = vunpack.c.0.s8 %v916
          %v918 = vlaneseq
          %v919 = vshrl.u32 %v918, 7
          %v920 = vsub.s32 %v917, %v919
          %v921 = vrot.slane %v907, %v920
          %v922 = vcombine.high %v914, %v914
          %v923 = vcombine.high %v921, %v921
          %928 = vmatprep.subr.mxu0 0.0
          %929 = vmatpush1.msra.mxu0 %v856
          %930 = vmatprep.subr.mxu0 0.0
          %931 = vmatpush1.msra.mxu0 %v855
          %932 = vmatprep.subr.mxu0 0.0
          %933 = vmatpush1.msra.mxu0 %v854
          %934 = vmatprep.subr.mxu0 0.0
          %935 = vmatpush1.msra.mxu0 %v853
          %936 = vmatprep.subr.mxu0 0.0
          %937 = vmatpush1.msra.mxu0 %v852
          %938 = vmatprep.subr.mxu0 0.0
          %939 = vmatpush1.msra.mxu0 %v851
          %940 = vmatprep.subr.mxu0 0.0
          %941 = vmatpush1.msra.mxu0 %v850
          %942 = vmatprep.subr.mxu0 0.0
          %943 = vmatpush1.msra.mxu0 %v849
          %944 = vmatprep.subr.mxu0 0.0
          %945 = vmatpush1.msra.mxu0 %v848
          %946 = vmatprep.subr.mxu0 0.0
          %947 = vmatpush1.msra.mxu0 %v847
          %948 = vmatprep.subr.mxu0 0.0
          %949 = vmatpush1.msra.mxu0 %v846
          %950 = vmatprep.subr.mxu0 0.0
          %951 = vmatpush1.msra.mxu0 %v845
          %952 = vmatprep.subr.mxu0 0.0
          %953 = vmatpush1.msra.mxu0 %v844
          %954 = vmatprep.subr.mxu0 0.0
          %955 = vmatpush1.msra.mxu0 %v843
          %956 = vmatprep.subr.mxu0 0.0
          %957 = vmatpush1.msra.mxu0 %v842
          %958 = vmatprep.subr.mxu0 0.0
          %959 = vmatpush1.msra.mxu0 %v841
          %960 = vmatprep.subr.mxu0 0.0
          %961 = vmatpush2.msra.mxu0 %v872
          %962 = vmatprep.subr.mxu0 0.0
          %963 = vmatpush2.msra.mxu0 %v871
          %964 = vmatprep.subr.mxu0 0.0
          %965 = vmatpush2.msra.mxu0 %v870
          %966 = vmatprep.subr.mxu0 0.0
          %967 = vmatpush2.msra.mxu0 %v869
          %968 = vmatprep.subr.mxu0 0.0
          %969 = vmatpush2.msra.mxu0 %v868
          %970 = vmatprep.subr.mxu0 0.0
          %971 = vmatpush2.msra.mxu0 %v867
          %972 = vmatprep.subr.mxu0 0.0
          %973 = vmatpush2.msra.mxu0 %v866
          %974 = vmatprep.subr.mxu0 0.0
          %975 = vmatpush2.msra.mxu0 %v865
          %976 = vmatprep.subr.mxu0 0.0
          %977 = vmatpush2.msra.mxu0 %v864
          %978 = vmatprep.subr.mxu0 0.0
          %979 = vmatpush2.msra.mxu0 %v863
          %980 = vmatprep.subr.mxu0 0.0
          %981 = vmatpush2.msra.mxu0 %v862
          %982 = vmatprep.subr.mxu0 0.0
          %983 = vmatpush2.msra.mxu0 %v861
          %984 = vmatprep.subr.mxu0 0.0
          %985 = vmatpush2.msra.mxu0 %v860
          %986 = vmatprep.subr.mxu0 0.0
          %987 = vmatpush2.msra.mxu0 %v859
          %988 = vmatprep.subr.mxu0 0.0
          %989 = vmatpush2.msra.mxu0 %v858
          %990 = vmatprep.subr.mxu0 0.0
          %991 = vmatpush2.msra.mxu0 %v857
          %992 = vmatprep.mubr.f32.mxu0 %v922
          %993 = vmatmul.mubr.f32.gmra.mxu0 %v914
          %v994 = vpop.f32.mrf.mxu0
          %v995 = vadd.f32 0.0, %v994
          %v996 = vpop.f32.mrf.mxu0
          %997 = vdwg.mxu0
          %998 = vmatprep.subr.mxu0 0.0
          %999 = vmatpush1.msra.mxu0 %v888
          %1000 = vmatprep.subr.mxu0 0.0
          %1001 = vmatpush1.msra.mxu0 %v887
          %1002 = vmatprep.subr.mxu0 0.0
          %1003 = vmatpush1.msra.mxu0 %v886
          %1004 = vmatprep.subr.mxu0 0.0
          %1005 = vmatpush1.msra.mxu0 %v885
          %1006 = vmatprep.subr.mxu0 0.0
          %1007 = vmatpush1.msra.mxu0 %v884
          %1008 = vmatprep.subr.mxu0 0.0
          %1009 = vmatpush1.msra.mxu0 %v883
          %1010 = vmatprep.subr.mxu0 0.0
          %1011 = vmatpush1.msra.mxu0 %v882
          %1012 = vmatprep.subr.mxu0 0.0
          %1013 = vmatpush1.msra.mxu0 %v881
          %1014 = vmatprep.subr.mxu0 0.0
          %1015 = vmatpush1.msra.mxu0 %v880
          %1016 = vmatprep.subr.mxu0 0.0
          %1017 = vmatpush1.msra.mxu0 %v879
          %1018 = vmatprep.subr.mxu0 0.0
          %1019 = vmatpush1.msra.mxu0 %v878
          %1020 = vmatprep.subr.mxu0 0.0
          %1021 = vmatpush1.msra.mxu0 %v877
          %1022 = vmatprep.subr.mxu0 0.0
          %1023 = vmatpush1.msra.mxu0 %v876
          %1024 = vmatprep.subr.mxu0 0.0
          %1025 = vmatpush1.msra.mxu0 %v875
          %1026 = vmatprep.subr.mxu0 0.0
          %1027 = vmatpush1.msra.mxu0 %v874
          %1028 = vmatprep.subr.mxu0 0.0
          %1029 = vmatpush1.msra.mxu0 %v873
          %1030 = vmatprep.subr.mxu0 0.0
          %1031 = vmatpush2.msra.mxu0 %v904
          %1032 = vmatprep.subr.mxu0 0.0
          %1033 = vmatpush2.msra.mxu0 %v903
          %1034 = vmatprep.subr.mxu0 0.0
          %1035 = vmatpush2.msra.mxu0 %v902
          %1036 = vmatprep.subr.mxu0 0.0
          %1037 = vmatpush2.msra.mxu0 %v901
          %1038 = vmatprep.subr.mxu0 0.0
          %1039 = vmatpush2.msra.mxu0 %v900
          %1040 = vmatprep.subr.mxu0 0.0
          %1041 = vmatpush2.msra.mxu0 %v899
          %1042 = vmatprep.subr.mxu0 0.0
          %1043 = vmatpush2.msra.mxu0 %v898
          %1044 = vmatprep.subr.mxu0 0.0
          %1045 = vmatpush2.msra.mxu0 %v897
          %1046 = vmatprep.subr.mxu0 0.0
          %1047 = vmatpush2.msra.mxu0 %v896
          %1048 = vmatprep.subr.mxu0 0.0
          %1049 = vmatpush2.msra.mxu0 %v895
          %1050 = vmatprep.subr.mxu0 0.0
          %1051 = vmatpush2.msra.mxu0 %v894
          %1052 = vmatprep.subr.mxu0 0.0
          %1053 = vmatpush2.msra.mxu0 %v893
          %1054 = vmatprep.subr.mxu0 0.0
          %1055 = vmatpush2.msra.mxu0 %v892
          %1056 = vmatprep.subr.mxu0 0.0
          %1057 = vmatpush2.msra.mxu0 %v891
          %1058 = vmatprep.subr.mxu0 0.0
          %1059 = vmatpush2.msra.mxu0 %v890
          %1060 = vmatprep.subr.mxu0 0.0
          %1061 = vmatpush2.msra.mxu0 %v889
          %1062 = vmatprep.mubr.f32.mxu0 %v923
          %1063 = vmatmul.mubr.f32.gmra.mxu0 %v921
          %v1064 = vpop.f32.mrf.mxu0
          %v1065 = vadd.f32 %v995, %v1064
          %v1066 = vpop.f32.mrf.mxu0
          %1067 = vdwg.mxu0
          %v1068 = vld [vmem:[%s9] sm:$0xff]
          %v1069 = vld [vmem:[%s9 + $0x8] sm:$0xff]
          %v1070 = vld [vmem:[%s9 + $0x10] sm:$0xff]
          %v1071 = vld [vmem:[%s9 + $0x18] sm:$0xff]
          %v1072 = vld [vmem:[%s9 + $0x20] sm:$0xff]
          %v1073 = vld [vmem:[%s9 + $0x28] sm:$0xff]
          %v1074 = vld [vmem:[%s9 + $0x30] sm:$0xff]
          %v1075 = vld [vmem:[%s9 + $0x38] sm:$0xff]
          %v1076 = vld [vmem:[%s9 + $0x40] sm:$0xff]
          %v1077 = vld [vmem:[%s9 + $0x48] sm:$0xff]
          %v1078 = vld [vmem:[%s9 + $0x50] sm:$0xff]
          %v1079 = vld [vmem:[%s9 + $0x58] sm:$0xff]
          %v1080 = vld [vmem:[%s9 + $0x60] sm:$0xff]
          %v1081 = vld [vmem:[%s9 + $0x68] sm:$0xff]
          %v1082 = vld [vmem:[%s9 + $0x70] sm:$0xff]
          %v1083 = vld [vmem:[%s9 + $0x78] sm:$0xff]
          %v1084 = vld [vmem:[%s9 + $0x80] sm:$0xff]
          %v1085 = vld [vmem:[%s9 + $0x88] sm:$0xff]
          %v1086 = vld [vmem:[%s9 + $0x90] sm:$0xff]
          %v1087 = vld [vmem:[%s9 + $0x98] sm:$0xff]
          %v1088 = vld [vmem:[%s9 + $0xa0] sm:$0xff]
          %v1089 = vld [vmem:[%s9 + $0xa8] sm:$0xff]
          %v1090 = vld [vmem:[%s9 + $0xb0] sm:$0xff]
          %v1091 = vld [vmem:[%s9 + $0xb8] sm:$0xff]
          %v1092 = vld [vmem:[%s9 + $0xc0] sm:$0xff]
          %v1093 = vld [vmem:[%s9 + $0xc8] sm:$0xff]
          %v1094 = vld [vmem:[%s9 + $0xd0] sm:$0xff]
          %v1095 = vld [vmem:[%s9 + $0xd8] sm:$0xff]
          %v1096 = vld [vmem:[%s9 + $0xe0] sm:$0xff]
          %v1097 = vld [vmem:[%s9 + $0xe8] sm:$0xff]
          %v1098 = vld [vmem:[%s9 + $0xf0] sm:$0xff]
          %v1099 = vld [vmem:[%s9 + $0xf8] sm:$0xff]
          %s1100 = scalar_lea.vmem %s9, 320
          %v1101 = vld [vmem:[%s1100] ss:$8 sm:$0x3]
          %v1103 = vlaneseq
          %v1104 = vshrl.u32 %v1103, 7
          %v1105 = vsub.s32 0, %v1104
          %v1106 = vrot.slane %v1101, %v1105
          %v1107 = vlaneseq
          %v1108 = vshrl.u32 %v1107, 7
          %v1109 = vsub.s32 1, %v1108
          %v1110 = vrot.slane %v1101, %v1109
          %1113 = vmatprep.subr.mxu0 %v1099
          %1114 = vmatpush1.msra.mxu0 %v1098
          %1115 = vmatprep.subr.mxu0 %v1097
          %1116 = vmatpush1.msra.mxu0 %v1096
          %1117 = vmatprep.subr.mxu0 %v1095
          %1118 = vmatpush1.msra.mxu0 %v1094
          %1119 = vmatprep.subr.mxu0 %v1093
          %1120 = vmatpush1.msra.mxu0 %v1092
          %1121 = vmatprep.subr.mxu0 %v1091
          %1122 = vmatpush1.msra.mxu0 %v1090
          %1123 = vmatprep.subr.mxu0 %v1089
          %1124 = vmatpush1.msra.mxu0 %v1088
          %1125 = vmatprep.subr.mxu0 %v1087
          %1126 = vmatpush1.msra.mxu0 %v1086
          %1127 = vmatprep.subr.mxu0 %v1085
          %1128 = vmatpush1.msra.mxu0 %v1084
          %1129 = vmatprep.subr.mxu0 %v1083
          %1130 = vmatpush1.msra.mxu0 %v1082
          %1131 = vmatprep.subr.mxu0 %v1081
          %1132 = vmatpush1.msra.mxu0 %v1080
          %1133 = vmatprep.subr.mxu0 %v1079
          %1134 = vmatpush1.msra.mxu0 %v1078
          %1135 = vmatprep.subr.mxu0 %v1077
          %1136 = vmatpush1.msra.mxu0 %v1076
          %1137 = vmatprep.subr.mxu0 %v1075
          %1138 = vmatpush1.msra.mxu0 %v1074
          %1139 = vmatprep.subr.mxu0 %v1073
          %1140 = vmatpush1.msra.mxu0 %v1072
          %1141 = vmatprep.subr.mxu0 %v1071
          %1142 = vmatpush1.msra.mxu0 %v1070
          %1143 = vmatprep.subr.mxu0 %v1069
          %1144 = vmatpush1.msra.mxu0 %v1068
          %1145 = vmatprep.subr.mxu0 0.0
          %1146 = vmatpush2.msra.mxu0 0.0
          %1147 = vmatprep.subr.mxu0 0.0
          %1148 = vmatpush2.msra.mxu0 0.0
          %1149 = vmatprep.subr.mxu0 0.0
          %1150 = vmatpush2.msra.mxu0 0.0
          %1151 = vmatprep.subr.mxu0 0.0
          %1152 = vmatpush2.msra.mxu0 0.0
          %1153 = vmatprep.subr.mxu0 0.0
          %1154 = vmatpush2.msra.mxu0 0.0
          %1155 = vmatprep.subr.mxu0 0.0
          %1156 = vmatpush2.msra.mxu0 0.0
          %1157 = vmatprep.subr.mxu0 0.0
          %1158 = vmatpush2.msra.mxu0 0.0
          %1159 = vmatprep.subr.mxu0 0.0
          %1160 = vmatpush2.msra.mxu0 0.0
          %1161 = vmatprep.subr.mxu0 0.0
          %1162 = vmatpush2.msra.mxu0 0.0
          %1163 = vmatprep.subr.mxu0 0.0
          %1164 = vmatpush2.msra.mxu0 0.0
          %1165 = vmatprep.subr.mxu0 0.0
          %1166 = vmatpush2.msra.mxu0 0.0
          %1167 = vmatprep.subr.mxu0 0.0
          %1168 = vmatpush2.msra.mxu0 0.0
          %1169 = vmatprep.subr.mxu0 0.0
          %1170 = vmatpush2.msra.mxu0 0.0
          %1171 = vmatprep.subr.mxu0 0.0
          %1172 = vmatpush2.msra.mxu0 0.0
          %1173 = vmatprep.subr.mxu0 0.0
          %1174 = vmatpush2.msra.mxu0 0.0
          %1175 = vmatprep.subr.mxu0 0.0
          %1176 = vmatpush2.msra.mxu0 0.0
          %1177 = vmatprep.mubr.f32.mxu0 0.0
          %1178 = vmatmul.mubr.f32.gmra.mxu0 %v1065
          %v1179 = vpop.f32.mrf.mxu0
          %v1180 = vadd.f32 %v1106, %v1179
          %v1181 = vpop.f32.mrf.mxu0
          %v1182 = vadd.f32 %v1110, %v1181
          %1183 = vdwg.mxu0
          %v1184 = vmax.f32 %v1180, 0.0
          %v1185 = vmax.f32 %v1182, 0.0
          %v1188 = vcombine.low %v1184, %v1185
          %v1190 = vunpack.c.l.s4 1983009808
          %v1191 = vunpack.c.0.s8 %v1190
          %v1192 = vlaneseq
          %v1193 = vshrl.u32 %v1192, 7
          %v1194 = vsub.s32 %v1191, %v1193
          %v1195 = vrot.slane %v1188, %v1194
          %1197 = vst [vmem:[#allocation3] sm:$0xf] %v1195
          %v1198 = vld [vmem:[%s5] sm:$0xff]
          %v1199 = vld [vmem:[%s5 + $0x8] sm:$0xf]
          %v1200 = vld [vmem:[%s5 + $0xc] sm:$0xff]
          %v1201 = vld [vmem:[%s5 + $0x14] sm:$0xf]
          %v1202 = vld [vmem:[%s6] sm:$0xff]
          %v1203 = vld [vmem:[%s6 + $0x8] sm:$0xff]
          %v1204 = vld [vmem:[%s6 + $0x10] sm:$0xff]
          %v1205 = vld [vmem:[%s6 + $0x18] sm:$0xff]
          %v1206 = vld [vmem:[%s6 + $0x20] sm:$0xff]
          %v1207 = vld [vmem:[%s6 + $0x28] sm:$0xff]
          %v1208 = vld [vmem:[%s6 + $0x30] sm:$0xff]
          %v1209 = vld [vmem:[%s6 + $0x38] sm:$0xff]
          %v1210 = vld [vmem:[%s6 + $0x40] sm:$0xff]
          %v1211 = vld [vmem:[%s6 + $0x48] sm:$0xff]
          %v1212 = vld [vmem:[%s6 + $0x50] sm:$0xff]
          %v1213 = vld [vmem:[%s6 + $0x58] sm:$0xff]
          %v1214 = vld [vmem:[%s6 + $0x60] sm:$0xff]
          %v1215 = vld [vmem:[%s6 + $0x68] sm:$0xff]
          %v1216 = vld [vmem:[%s6 + $0x70] sm:$0xff]
          %v1217 = vld [vmem:[%s6 + $0x78] sm:$0xff]
          %v1218 = vld [vmem:[%s6 + $0x80] sm:$0xff]
          %v1219 = vld [vmem:[%s6 + $0x88] sm:$0xff]
          %v1220 = vld [vmem:[%s6 + $0x90] sm:$0xff]
          %v1221 = vld [vmem:[%s6 + $0x98] sm:$0xff]
          %v1222 = vld [vmem:[%s6 + $0xa0] sm:$0xff]
          %v1223 = vld [vmem:[%s6 + $0xa8] sm:$0xff]
          %v1224 = vld [vmem:[%s6 + $0xb0] sm:$0xff]
          %v1225 = vld [vmem:[%s6 + $0xb8] sm:$0xff]
          %v1226 = vld [vmem:[%s6 + $0xc0] sm:$0xff]
          %v1227 = vld [vmem:[%s6 + $0xc8] sm:$0xff]
          %v1228 = vld [vmem:[%s6 + $0xd0] sm:$0xff]
          %v1229 = vld [vmem:[%s6 + $0xd8] sm:$0xff]
          %v1230 = vld [vmem:[%s6 + $0xe0] sm:$0xff]
          %v1231 = vld [vmem:[%s6 + $0xe8] sm:$0xff]
          %v1232 = vld [vmem:[%s6 + $0xf0] sm:$0xff]
          %v1233 = vld [vmem:[%s6 + $0xf8] sm:$0xff]
          %v1234 = vld [vmem:[%s6 + $0x100] sm:$0xff]
          %v1235 = vld [vmem:[%s6 + $0x108] sm:$0xff]
          %v1236 = vld [vmem:[%s6 + $0x110] sm:$0xff]
          %v1237 = vld [vmem:[%s6 + $0x118] sm:$0xff]
          %v1238 = vld [vmem:[%s6 + $0x120] sm:$0xff]
          %v1239 = vld [vmem:[%s6 + $0x128] sm:$0xff]
          %v1240 = vld [vmem:[%s6 + $0x130] sm:$0xff]
          %v1241 = vld [vmem:[%s6 + $0x138] sm:$0xff]
          %v1242 = vld [vmem:[%s6 + $0x140] sm:$0xff]
          %v1243 = vld [vmem:[%s6 + $0x148] sm:$0xff]
          %v1244 = vld [vmem:[%s6 + $0x150] sm:$0xff]
          %v1245 = vld [vmem:[%s6 + $0x158] sm:$0xff]
          %v1246 = vld [vmem:[%s6 + $0x160] sm:$0xff]
          %v1247 = vld [vmem:[%s6 + $0x168] sm:$0xff]
          %v1248 = vld [vmem:[%s6 + $0x170] sm:$0xff]
          %v1249 = vld [vmem:[%s6 + $0x178] sm:$0xff]
          %v1250 = vld [vmem:[%s6 + $0x180] sm:$0xff]
          %v1251 = vld [vmem:[%s6 + $0x188] sm:$0xff]
          %v1252 = vld [vmem:[%s6 + $0x190] sm:$0xff]
          %v1253 = vld [vmem:[%s6 + $0x198] sm:$0xff]
          %v1254 = vld [vmem:[%s6 + $0x1a0] sm:$0xff]
          %v1255 = vld [vmem:[%s6 + $0x1a8] sm:$0xff]
          %v1256 = vld [vmem:[%s6 + $0x1b0] sm:$0xff]
          %v1257 = vld [vmem:[%s6 + $0x1b8] sm:$0xff]
          %v1258 = vld [vmem:[%s6 + $0x1c0] sm:$0xff]
          %v1259 = vld [vmem:[%s6 + $0x1c8] sm:$0xff]
          %v1260 = vld [vmem:[%s6 + $0x1d0] sm:$0xff]
          %v1261 = vld [vmem:[%s6 + $0x1d8] sm:$0xff]
          %v1262 = vld [vmem:[%s6 + $0x1e0] sm:$0xff]
          %v1263 = vld [vmem:[%s6 + $0x1e8] sm:$0xff]
          %v1264 = vld [vmem:[%s6 + $0x1f0] sm:$0xff]
          %v1265 = vld [vmem:[%s6 + $0x1f8] sm:$0xff]
          %v1266 = vld [vmem:[%s6 + $0x200] sm:$0xff]
          %v1267 = vld [vmem:[%s6 + $0x208] sm:$0xff]
          %v1268 = vld [vmem:[%s6 + $0x210] sm:$0xff]
          %v1269 = vld [vmem:[%s6 + $0x218] sm:$0xff]
          %v1270 = vld [vmem:[%s6 + $0x220] sm:$0xff]
          %v1271 = vld [vmem:[%s6 + $0x228] sm:$0xff]
          %v1272 = vld [vmem:[%s6 + $0x230] sm:$0xff]
          %v1273 = vld [vmem:[%s6 + $0x238] sm:$0xff]
          %v1274 = vld [vmem:[%s6 + $0x240] sm:$0xff]
          %v1275 = vld [vmem:[%s6 + $0x248] sm:$0xff]
          %v1276 = vld [vmem:[%s6 + $0x250] sm:$0xff]
          %v1277 = vld [vmem:[%s6 + $0x258] sm:$0xff]
          %v1278 = vld [vmem:[%s6 + $0x260] sm:$0xff]
          %v1279 = vld [vmem:[%s6 + $0x268] sm:$0xff]
          %v1280 = vld [vmem:[%s6 + $0x270] sm:$0xff]
          %v1281 = vld [vmem:[%s6 + $0x278] sm:$0xff]
          %v1282 = vld [vmem:[%s6 + $0x280] sm:$0xff]
          %v1283 = vld [vmem:[%s6 + $0x288] sm:$0xff]
          %v1284 = vld [vmem:[%s6 + $0x290] sm:$0xff]
          %v1285 = vld [vmem:[%s6 + $0x298] sm:$0xff]
          %v1286 = vld [vmem:[%s6 + $0x2a0] sm:$0xff]
          %v1287 = vld [vmem:[%s6 + $0x2a8] sm:$0xff]
          %v1288 = vld [vmem:[%s6 + $0x2b0] sm:$0xff]
          %v1289 = vld [vmem:[%s6 + $0x2b8] sm:$0xff]
          %v1290 = vld [vmem:[%s6 + $0x2c0] sm:$0xff]
          %v1291 = vld [vmem:[%s6 + $0x2c8] sm:$0xff]
          %v1292 = vld [vmem:[%s6 + $0x2d0] sm:$0xff]
          %v1293 = vld [vmem:[%s6 + $0x2d8] sm:$0xff]
          %v1294 = vld [vmem:[%s6 + $0x2e0] sm:$0xff]
          %v1295 = vld [vmem:[%s6 + $0x2e8] sm:$0xff]
          %v1296 = vld [vmem:[%s6 + $0x2f0] sm:$0xff]
          %v1297 = vld [vmem:[%s6 + $0x2f8] sm:$0xff]
          %v1298 = vld [vmem:[%s6 + $0x300] sm:$0xff]
          %v1299 = vld [vmem:[%s6 + $0x308] sm:$0xff]
          %v1300 = vld [vmem:[%s6 + $0x310] sm:$0xff]
          %v1301 = vld [vmem:[%s6 + $0x318] sm:$0xff]
          %v1302 = vld [vmem:[%s6 + $0x320] sm:$0xff]
          %v1303 = vld [vmem:[%s6 + $0x328] sm:$0xff]
          %v1304 = vld [vmem:[%s6 + $0x330] sm:$0xff]
          %v1305 = vld [vmem:[%s6 + $0x338] sm:$0xff]
          %v1306 = vld [vmem:[%s6 + $0x340] sm:$0xff]
          %v1307 = vld [vmem:[%s6 + $0x348] sm:$0xff]
          %v1308 = vld [vmem:[%s6 + $0x350] sm:$0xff]
          %v1309 = vld [vmem:[%s6 + $0x358] sm:$0xff]
          %v1310 = vld [vmem:[%s6 + $0x360] sm:$0xff]
          %v1311 = vld [vmem:[%s6 + $0x368] sm:$0xff]
          %v1312 = vld [vmem:[%s6 + $0x370] sm:$0xff]
          %v1313 = vld [vmem:[%s6 + $0x378] sm:$0xff]
          %v1314 = vld [vmem:[%s6 + $0x380] sm:$0xff]
          %v1315 = vld [vmem:[%s6 + $0x388] sm:$0xff]
          %v1316 = vld [vmem:[%s6 + $0x390] sm:$0xff]
          %v1317 = vld [vmem:[%s6 + $0x398] sm:$0xff]
          %v1318 = vld [vmem:[%s6 + $0x3a0] sm:$0xff]
          %v1319 = vld [vmem:[%s6 + $0x3a8] sm:$0xff]
          %v1320 = vld [vmem:[%s6 + $0x3b0] sm:$0xff]
          %v1321 = vld [vmem:[%s6 + $0x3b8] sm:$0xff]
          %v1322 = vld [vmem:[%s6 + $0x3c0] sm:$0xff]
          %v1323 = vld [vmem:[%s6 + $0x3c8] sm:$0xff]
          %v1324 = vld [vmem:[%s6 + $0x3d0] sm:$0xff]
          %v1325 = vld [vmem:[%s6 + $0x3d8] sm:$0xff]
          %v1326 = vld [vmem:[%s6 + $0x3e0] sm:$0xff]
          %v1327 = vld [vmem:[%s6 + $0x3e8] sm:$0xff]
          %v1328 = vld [vmem:[%s6 + $0x3f0] sm:$0xff]
          %v1329 = vld [vmem:[%s6 + $0x3f8] sm:$0xff]
          %v1330 = vld [vmem:[%s6 + $0x400] sm:$0xff]
          %v1331 = vld [vmem:[%s6 + $0x408] sm:$0xff]
          %v1332 = vld [vmem:[%s6 + $0x410] sm:$0xff]
          %v1333 = vld [vmem:[%s6 + $0x418] sm:$0xff]
          %v1334 = vld [vmem:[%s6 + $0x420] sm:$0xff]
          %v1335 = vld [vmem:[%s6 + $0x428] sm:$0xff]
          %v1336 = vld [vmem:[%s6 + $0x430] sm:$0xff]
          %v1337 = vld [vmem:[%s6 + $0x438] sm:$0xff]
          %v1338 = vld [vmem:[%s6 + $0x440] sm:$0xff]
          %v1339 = vld [vmem:[%s6 + $0x448] sm:$0xff]
          %v1340 = vld [vmem:[%s6 + $0x450] sm:$0xff]
          %v1341 = vld [vmem:[%s6 + $0x458] sm:$0xff]
          %v1342 = vld [vmem:[%s6 + $0x460] sm:$0xff]
          %v1343 = vld [vmem:[%s6 + $0x468] sm:$0xff]
          %v1344 = vld [vmem:[%s6 + $0x470] sm:$0xff]
          %v1345 = vld [vmem:[%s6 + $0x478] sm:$0xff]
          %v1346 = vld [vmem:[%s6 + $0x480] sm:$0xff]
          %v1347 = vld [vmem:[%s6 + $0x488] sm:$0xff]
          %v1348 = vld [vmem:[%s6 + $0x490] sm:$0xff]
          %v1349 = vld [vmem:[%s6 + $0x498] sm:$0xff]
          %v1350 = vld [vmem:[%s6 + $0x4a0] sm:$0xff]
          %v1351 = vld [vmem:[%s6 + $0x4a8] sm:$0xff]
          %v1352 = vld [vmem:[%s6 + $0x4b0] sm:$0xff]
          %v1353 = vld [vmem:[%s6 + $0x4b8] sm:$0xff]
          %v1354 = vld [vmem:[%s6 + $0x4c0] sm:$0xff]
          %v1355 = vld [vmem:[%s6 + $0x4c8] sm:$0xff]
          %v1356 = vld [vmem:[%s6 + $0x4d0] sm:$0xff]
          %v1357 = vld [vmem:[%s6 + $0x4d8] sm:$0xff]
          %v1358 = vld [vmem:[%s6 + $0x4e0] sm:$0xff]
          %v1359 = vld [vmem:[%s6 + $0x4e8] sm:$0xff]
          %v1360 = vld [vmem:[%s6 + $0x4f0] sm:$0xff]
          %v1361 = vld [vmem:[%s6 + $0x4f8] sm:$0xff]
          %v1362 = vld [vmem:[%s6 + $0x500] sm:$0xff]
          %v1363 = vld [vmem:[%s6 + $0x508] sm:$0xff]
          %v1364 = vld [vmem:[%s6 + $0x510] sm:$0xff]
          %v1365 = vld [vmem:[%s6 + $0x518] sm:$0xff]
          %v1366 = vld [vmem:[%s6 + $0x520] sm:$0xff]
          %v1367 = vld [vmem:[%s6 + $0x528] sm:$0xff]
          %v1368 = vld [vmem:[%s6 + $0x530] sm:$0xff]
          %v1369 = vld [vmem:[%s6 + $0x538] sm:$0xff]
          %v1370 = vld [vmem:[%s6 + $0x540] sm:$0xff]
          %v1371 = vld [vmem:[%s6 + $0x548] sm:$0xff]
          %v1372 = vld [vmem:[%s6 + $0x550] sm:$0xff]
          %v1373 = vld [vmem:[%s6 + $0x558] sm:$0xff]
          %v1374 = vld [vmem:[%s6 + $0x560] sm:$0xff]
          %v1375 = vld [vmem:[%s6 + $0x568] sm:$0xff]
          %v1376 = vld [vmem:[%s6 + $0x570] sm:$0xff]
          %v1377 = vld [vmem:[%s6 + $0x578] sm:$0xff]
          %v1378 = vld [vmem:[%s6 + $0x580] sm:$0xff]
          %v1379 = vld [vmem:[%s6 + $0x588] sm:$0xff]
          %v1380 = vld [vmem:[%s6 + $0x590] sm:$0xff]
          %v1381 = vld [vmem:[%s6 + $0x598] sm:$0xff]
          %v1382 = vld [vmem:[%s6 + $0x5a0] sm:$0xff]
          %v1383 = vld [vmem:[%s6 + $0x5a8] sm:$0xff]
          %v1384 = vld [vmem:[%s6 + $0x5b0] sm:$0xff]
          %v1385 = vld [vmem:[%s6 + $0x5b8] sm:$0xff]
          %v1386 = vld [vmem:[%s6 + $0x5c0] sm:$0xff]
          %v1387 = vld [vmem:[%s6 + $0x5c8] sm:$0xff]
          %v1388 = vld [vmem:[%s6 + $0x5d0] sm:$0xff]
          %v1389 = vld [vmem:[%s6 + $0x5d8] sm:$0xff]
          %v1390 = vld [vmem:[%s6 + $0x5e0] sm:$0xff]
          %v1391 = vld [vmem:[%s6 + $0x5e8] sm:$0xff]
          %v1392 = vld [vmem:[%s6 + $0x5f0] sm:$0xff]
          %v1393 = vld [vmem:[%s6 + $0x5f8] sm:$0xff]
          %v1398 = vunpack.c.l.b16 %v1198
          %v1399 = vunpack.c.h.b16 %v1198
          %v1400 = vunpack.c.l.b16 %v1199
          %v1401 = vunpack.c.l.b16 %v1200
          %v1402 = vunpack.c.h.b16 %v1200
          %v1403 = vunpack.c.l.b16 %v1201
          %v1404 = vpack.c.b16 %v1401, %v1398
          %v1405 = vpack.c.b16 %v1402, %v1399
          %v1406 = vpack.c.b16 %v1403, %v1400
          %v1602 = vunpack.c.l.b16 %v1202
          %v1603 = vunpack.c.h.b16 %v1202
          %v1604 = vunpack.c.l.b16 %v1203
          %v1605 = vunpack.c.h.b16 %v1203
          %v1606 = vunpack.c.l.b16 %v1204
          %v1607 = vunpack.c.h.b16 %v1204
          %v1608 = vunpack.c.l.b16 %v1205
          %v1609 = vunpack.c.h.b16 %v1205
          %v1610 = vunpack.c.l.b16 %v1206
          %v1611 = vunpack.c.h.b16 %v1206
          %v1612 = vunpack.c.l.b16 %v1207
          %v1613 = vunpack.c.h.b16 %v1207
          %v1614 = vunpack.c.l.b16 %v1208
          %v1615 = vunpack.c.h.b16 %v1208
          %v1616 = vunpack.c.l.b16 %v1209
          %v1617 = vunpack.c.h.b16 %v1209
          %v1618 = vunpack.c.l.b16 %v1210
          %v1619 = vunpack.c.h.b16 %v1210
          %v1620 = vunpack.c.l.b16 %v1211
          %v1621 = vunpack.c.h.b16 %v1211
          %v1622 = vunpack.c.l.b16 %v1212
          %v1623 = vunpack.c.h.b16 %v1212
          %v1624 = vunpack.c.l.b16 %v1213
          %v1625 = vunpack.c.h.b16 %v1213
          %v1626 = vunpack.c.l.b16 %v1214
          %v1627 = vunpack.c.h.b16 %v1214
          %v1628 = vunpack.c.l.b16 %v1215
          %v1629 = vunpack.c.h.b16 %v1215
          %v1630 = vunpack.c.l.b16 %v1216
          %v1631 = vunpack.c.h.b16 %v1216
          %v1632 = vunpack.c.l.b16 %v1217
          %v1633 = vunpack.c.h.b16 %v1217
          %v1634 = vunpack.c.l.b16 %v1218
          %v1635 = vunpack.c.h.b16 %v1218
          %v1636 = vunpack.c.l.b16 %v1219
          %v1637 = vunpack.c.h.b16 %v1219
          %v1638 = vunpack.c.l.b16 %v1220
          %v1639 = vunpack.c.h.b16 %v1220
          %v1640 = vunpack.c.l.b16 %v1221
          %v1641 = vunpack.c.h.b16 %v1221
          %v1642 = vunpack.c.l.b16 %v1222
          %v1643 = vunpack.c.h.b16 %v1222
          %v1644 = vunpack.c.l.b16 %v1223
          %v1645 = vunpack.c.h.b16 %v1223
          %v1646 = vunpack.c.l.b16 %v1224
          %v1647 = vunpack.c.h.b16 %v1224
          %v1648 = vunpack.c.l.b16 %v1225
          %v1649 = vunpack.c.h.b16 %v1225
          %v1650 = vunpack.c.l.b16 %v1226
          %v1651 = vunpack.c.h.b16 %v1226
          %v1652 = vunpack.c.l.b16 %v1227
          %v1653 = vunpack.c.h.b16 %v1227
          %v1654 = vunpack.c.l.b16 %v1228
          %v1655 = vunpack.c.h.b16 %v1228
          %v1656 = vunpack.c.l.b16 %v1229
          %v1657 = vunpack.c.h.b16 %v1229
          %v1658 = vunpack.c.l.b16 %v1230
          %v1659 = vunpack.c.h.b16 %v1230
          %v1660 = vunpack.c.l.b16 %v1231
          %v1661 = vunpack.c.h.b16 %v1231
          %v1662 = vunpack.c.l.b16 %v1232
          %v1663 = vunpack.c.h.b16 %v1232
          %v1664 = vunpack.c.l.b16 %v1233
          %v1665 = vunpack.c.h.b16 %v1233
          %v1666 = vunpack.c.l.b16 %v1234
          %v1667 = vunpack.c.h.b16 %v1234
          %v1668 = vunpack.c.l.b16 %v1235
          %v1669 = vunpack.c.h.b16 %v1235
          %v1670 = vunpack.c.l.b16 %v1236
          %v1671 = vunpack.c.h.b16 %v1236
          %v1672 = vunpack.c.l.b16 %v1237
          %v1673 = vunpack.c.h.b16 %v1237
          %v1674 = vunpack.c.l.b16 %v1238
          %v1675 = vunpack.c.h.b16 %v1238
          %v1676 = vunpack.c.l.b16 %v1239
          %v1677 = vunpack.c.h.b16 %v1239
          %v1678 = vunpack.c.l.b16 %v1240
          %v1679 = vunpack.c.h.b16 %v1240
          %v1680 = vunpack.c.l.b16 %v1241
          %v1681 = vunpack.c.h.b16 %v1241
          %v1682 = vunpack.c.l.b16 %v1242
          %v1683 = vunpack.c.h.b16 %v1242
          %v1684 = vunpack.c.l.b16 %v1243
          %v1685 = vunpack.c.h.b16 %v1243
          %v1686 = vunpack.c.l.b16 %v1244
          %v1687 = vunpack.c.h.b16 %v1244
          %v1688 = vunpack.c.l.b16 %v1245
          %v1689 = vunpack.c.h.b16 %v1245
          %v1690 = vunpack.c.l.b16 %v1246
          %v1691 = vunpack.c.h.b16 %v1246
          %v1692 = vunpack.c.l.b16 %v1247
          %v1693 = vunpack.c.h.b16 %v1247
          %v1694 = vunpack.c.l.b16 %v1248
          %v1695 = vunpack.c.h.b16 %v1248
          %v1696 = vunpack.c.l.b16 %v1249
          %v1697 = vunpack.c.h.b16 %v1249
          %v1698 = vunpack.c.l.b16 %v1250
          %v1699 = vunpack.c.h.b16 %v1250
          %v1700 = vunpack.c.l.b16 %v1251
          %v1701 = vunpack.c.h.b16 %v1251
          %v1702 = vunpack.c.l.b16 %v1252
          %v1703 = vunpack.c.h.b16 %v1252
          %v1704 = vunpack.c.l.b16 %v1253
          %v1705 = vunpack.c.h.b16 %v1253
          %v1706 = vunpack.c.l.b16 %v1254
          %v1707 = vunpack.c.h.b16 %v1254
          %v1708 = vunpack.c.l.b16 %v1255
          %v1709 = vunpack.c.h.b16 %v1255
          %v1710 = vunpack.c.l.b16 %v1256
          %v1711 = vunpack.c.h.b16 %v1256
          %v1712 = vunpack.c.l.b16 %v1257
          %v1713 = vunpack.c.h.b16 %v1257
          %v1714 = vunpack.c.l.b16 %v1258
          %v1715 = vunpack.c.h.b16 %v1258
          %v1716 = vunpack.c.l.b16 %v1259
          %v1717 = vunpack.c.h.b16 %v1259
          %v1718 = vunpack.c.l.b16 %v1260
          %v1719 = vunpack.c.h.b16 %v1260
          %v1720 = vunpack.c.l.b16 %v1261
          %v1721 = vunpack.c.h.b16 %v1261
          %v1722 = vunpack.c.l.b16 %v1262
          %v1723 = vunpack.c.h.b16 %v1262
          %v1724 = vunpack.c.l.b16 %v1263
          %v1725 = vunpack.c.h.b16 %v1263
          %v1726 = vunpack.c.l.b16 %v1264
          %v1727 = vunpack.c.h.b16 %v1264
          %v1728 = vunpack.c.l.b16 %v1265
          %v1729 = vunpack.c.h.b16 %v1265
          %v1730 = vunpack.c.l.b16 %v1266
          %v1731 = vunpack.c.h.b16 %v1266
          %v1732 = vunpack.c.l.b16 %v1267
          %v1733 = vunpack.c.h.b16 %v1267
          %v1734 = vunpack.c.l.b16 %v1268
          %v1735 = vunpack.c.h.b16 %v1268
          %v1736 = vunpack.c.l.b16 %v1269
          %v1737 = vunpack.c.h.b16 %v1269
          %v1738 = vunpack.c.l.b16 %v1270
          %v1739 = vunpack.c.h.b16 %v1270
          %v1740 = vunpack.c.l.b16 %v1271
          %v1741 = vunpack.c.h.b16 %v1271
          %v1742 = vunpack.c.l.b16 %v1272
          %v1743 = vunpack.c.h.b16 %v1272
          %v1744 = vunpack.c.l.b16 %v1273
          %v1745 = vunpack.c.h.b16 %v1273
          %v1746 = vunpack.c.l.b16 %v1274
          %v1747 = vunpack.c.h.b16 %v1274
          %v1748 = vunpack.c.l.b16 %v1275
          %v1749 = vunpack.c.h.b16 %v1275
          %v1750 = vunpack.c.l.b16 %v1276
          %v1751 = vunpack.c.h.b16 %v1276
          %v1752 = vunpack.c.l.b16 %v1277
          %v1753 = vunpack.c.h.b16 %v1277
          %v1754 = vunpack.c.l.b16 %v1278
          %v1755 = vunpack.c.h.b16 %v1278
          %v1756 = vunpack.c.l.b16 %v1279
          %v1757 = vunpack.c.h.b16 %v1279
          %v1758 = vunpack.c.l.b16 %v1280
          %v1759 = vunpack.c.h.b16 %v1280
          %v1760 = vunpack.c.l.b16 %v1281
          %v1761 = vunpack.c.h.b16 %v1281
          %v1762 = vunpack.c.l.b16 %v1282
          %v1763 = vunpack.c.h.b16 %v1282
          %v1764 = vunpack.c.l.b16 %v1283
          %v1765 = vunpack.c.h.b16 %v1283
          %v1766 = vunpack.c.l.b16 %v1284
          %v1767 = vunpack.c.h.b16 %v1284
          %v1768 = vunpack.c.l.b16 %v1285
          %v1769 = vunpack.c.h.b16 %v1285
          %v1770 = vunpack.c.l.b16 %v1286
          %v1771 = vunpack.c.h.b16 %v1286
          %v1772 = vunpack.c.l.b16 %v1287
          %v1773 = vunpack.c.h.b16 %v1287
          %v1774 = vunpack.c.l.b16 %v1288
          %v1775 = vunpack.c.h.b16 %v1288
          %v1776 = vunpack.c.l.b16 %v1289
          %v1777 = vunpack.c.h.b16 %v1289
          %v1778 = vunpack.c.l.b16 %v1290
          %v1779 = vunpack.c.h.b16 %v1290
          %v1780 = vunpack.c.l.b16 %v1291
          %v1781 = vunpack.c.h.b16 %v1291
          %v1782 = vunpack.c.l.b16 %v1292
          %v1783 = vunpack.c.h.b16 %v1292
          %v1784 = vunpack.c.l.b16 %v1293
          %v1785 = vunpack.c.h.b16 %v1293
          %v1786 = vunpack.c.l.b16 %v1294
          %v1787 = vunpack.c.h.b16 %v1294
          %v1788 = vunpack.c.l.b16 %v1295
          %v1789 = vunpack.c.h.b16 %v1295
          %v1790 = vunpack.c.l.b16 %v1296
          %v1791 = vunpack.c.h.b16 %v1296
          %v1792 = vunpack.c.l.b16 %v1297
          %v1793 = vunpack.c.h.b16 %v1297
          %v1794 = vunpack.c.l.b16 %v1298
          %v1795 = vunpack.c.h.b16 %v1298
          %v1796 = vunpack.c.l.b16 %v1299
          %v1797 = vunpack.c.h.b16 %v1299
          %v1798 = vunpack.c.l.b16 %v1300
          %v1799 = vunpack.c.h.b16 %v1300
          %v1800 = vunpack.c.l.b16 %v1301
          %v1801 = vunpack.c.h.b16 %v1301
          %v1802 = vunpack.c.l.b16 %v1302
          %v1803 = vunpack.c.h.b16 %v1302
          %v1804 = vunpack.c.l.b16 %v1303
          %v1805 = vunpack.c.h.b16 %v1303
          %v1806 = vunpack.c.l.b16 %v1304
          %v1807 = vunpack.c.h.b16 %v1304
          %v1808 = vunpack.c.l.b16 %v1305
          %v1809 = vunpack.c.h.b16 %v1305
          %v1810 = vunpack.c.l.b16 %v1306
          %v1811 = vunpack.c.h.b16 %v1306
          %v1812 = vunpack.c.l.b16 %v1307
          %v1813 = vunpack.c.h.b16 %v1307
          %v1814 = vunpack.c.l.b16 %v1308
          %v1815 = vunpack.c.h.b16 %v1308
          %v1816 = vunpack.c.l.b16 %v1309
          %v1817 = vunpack.c.h.b16 %v1309
          %v1818 = vunpack.c.l.b16 %v1310
          %v1819 = vunpack.c.h.b16 %v1310
          %v1820 = vunpack.c.l.b16 %v1311
          %v1821 = vunpack.c.h.b16 %v1311
          %v1822 = vunpack.c.l.b16 %v1312
          %v1823 = vunpack.c.h.b16 %v1312
          %v1824 = vunpack.c.l.b16 %v1313
          %v1825 = vunpack.c.h.b16 %v1313
          %v1826 = vunpack.c.l.b16 %v1314
          %v1827 = vunpack.c.h.b16 %v1314
          %v1828 = vunpack.c.l.b16 %v1315
          %v1829 = vunpack.c.h.b16 %v1315
          %v1830 = vunpack.c.l.b16 %v1316
          %v1831 = vunpack.c.h.b16 %v1316
          %v1832 = vunpack.c.l.b16 %v1317
          %v1833 = vunpack.c.h.b16 %v1317
          %v1834 = vunpack.c.l.b16 %v1318
          %v1835 = vunpack.c.h.b16 %v1318
          %v1836 = vunpack.c.l.b16 %v1319
          %v1837 = vunpack.c.h.b16 %v1319
          %v1838 = vunpack.c.l.b16 %v1320
          %v1839 = vunpack.c.h.b16 %v1320
          %v1840 = vunpack.c.l.b16 %v1321
          %v1841 = vunpack.c.h.b16 %v1321
          %v1842 = vunpack.c.l.b16 %v1322
          %v1843 = vunpack.c.h.b16 %v1322
          %v1844 = vunpack.c.l.b16 %v1323
          %v1845 = vunpack.c.h.b16 %v1323
          %v1846 = vunpack.c.l.b16 %v1324
          %v1847 = vunpack.c.h.b16 %v1324
          %v1848 = vunpack.c.l.b16 %v1325
          %v1849 = vunpack.c.h.b16 %v1325
          %v1850 = vunpack.c.l.b16 %v1326
          %v1851 = vunpack.c.h.b16 %v1326
          %v1852 = vunpack.c.l.b16 %v1327
          %v1853 = vunpack.c.h.b16 %v1327
          %v1854 = vunpack.c.l.b16 %v1328
          %v1855 = vunpack.c.h.b16 %v1328
          %v1856 = vunpack.c.l.b16 %v1329
          %v1857 = vunpack.c.h.b16 %v1329
          %v1858 = vunpack.c.l.b16 %v1330
          %v1859 = vunpack.c.h.b16 %v1330
          %v1860 = vunpack.c.l.b16 %v1331
          %v1861 = vunpack.c.h.b16 %v1331
          %v1862 = vunpack.c.l.b16 %v1332
          %v1863 = vunpack.c.h.b16 %v1332
          %v1864 = vunpack.c.l.b16 %v1333
          %v1865 = vunpack.c.h.b16 %v1333
          %v1866 = vunpack.c.l.b16 %v1334
          %v1867 = vunpack.c.h.b16 %v1334
          %v1868 = vunpack.c.l.b16 %v1335
          %v1869 = vunpack.c.h.b16 %v1335
          %v1870 = vunpack.c.l.b16 %v1336
          %v1871 = vunpack.c.h.b16 %v1336
          %v1872 = vunpack.c.l.b16 %v1337
          %v1873 = vunpack.c.h.b16 %v1337
          %v1874 = vunpack.c.l.b16 %v1338
          %v1875 = vunpack.c.h.b16 %v1338
          %v1876 = vunpack.c.l.b16 %v1339
          %v1877 = vunpack.c.h.b16 %v1339
          %v1878 = vunpack.c.l.b16 %v1340
          %v1879 = vunpack.c.h.b16 %v1340
          %v1880 = vunpack.c.l.b16 %v1341
          %v1881 = vunpack.c.h.b16 %v1341
          %v1882 = vunpack.c.l.b16 %v1342
          %v1883 = vunpack.c.h.b16 %v1342
          %v1884 = vunpack.c.l.b16 %v1343
          %v1885 = vunpack.c.h.b16 %v1343
          %v1886 = vunpack.c.l.b16 %v1344
          %v1887 = vunpack.c.h.b16 %v1344
          %v1888 = vunpack.c.l.b16 %v1345
          %v1889 = vunpack.c.h.b16 %v1345
          %v1890 = vunpack.c.l.b16 %v1346
          %v1891 = vunpack.c.h.b16 %v1346
          %v1892 = vunpack.c.l.b16 %v1347
          %v1893 = vunpack.c.h.b16 %v1347
          %v1894 = vunpack.c.l.b16 %v1348
          %v1895 = vunpack.c.h.b16 %v1348
          %v1896 = vunpack.c.l.b16 %v1349
          %v1897 = vunpack.c.h.b16 %v1349
          %v1898 = vunpack.c.l.b16 %v1350
          %v1899 = vunpack.c.h.b16 %v1350
          %v1900 = vunpack.c.l.b16 %v1351
          %v1901 = vunpack.c.h.b16 %v1351
          %v1902 = vunpack.c.l.b16 %v1352
          %v1903 = vunpack.c.h.b16 %v1352
          %v1904 = vunpack.c.l.b16 %v1353
          %v1905 = vunpack.c.h.b16 %v1353
          %v1906 = vunpack.c.l.b16 %v1354
          %v1907 = vunpack.c.h.b16 %v1354
          %v1908 = vunpack.c.l.b16 %v1355
          %v1909 = vunpack.c.h.b16 %v1355
          %v1910 = vunpack.c.l.b16 %v1356
          %v1911 = vunpack.c.h.b16 %v1356
          %v1912 = vunpack.c.l.b16 %v1357
          %v1913 = vunpack.c.h.b16 %v1357
          %v1914 = vunpack.c.l.b16 %v1358
          %v1915 = vunpack.c.h.b16 %v1358
          %v1916 = vunpack.c.l.b16 %v1359
          %v1917 = vunpack.c.h.b16 %v1359
          %v1918 = vunpack.c.l.b16 %v1360
          %v1919 = vunpack.c.h.b16 %v1360
          %v1920 = vunpack.c.l.b16 %v1361
          %v1921 = vunpack.c.h.b16 %v1361
          %v1922 = vunpack.c.l.b16 %v1362
          %v1923 = vunpack.c.h.b16 %v1362
          %v1924 = vunpack.c.l.b16 %v1363
          %v1925 = vunpack.c.h.b16 %v1363
          %v1926 = vunpack.c.l.b16 %v1364
          %v1927 = vunpack.c.h.b16 %v1364
          %v1928 = vunpack.c.l.b16 %v1365
          %v1929 = vunpack.c.h.b16 %v1365
          %v1930 = vunpack.c.l.b16 %v1366
          %v1931 = vunpack.c.h.b16 %v1366
          %v1932 = vunpack.c.l.b16 %v1367
          %v1933 = vunpack.c.h.b16 %v1367
          %v1934 = vunpack.c.l.b16 %v1368
          %v1935 = vunpack.c.h.b16 %v1368
          %v1936 = vunpack.c.l.b16 %v1369
          %v1937 = vunpack.c.h.b16 %v1369
          %v1938 = vunpack.c.l.b16 %v1370
          %v1939 = vunpack.c.h.b16 %v1370
          %v1940 = vunpack.c.l.b16 %v1371
          %v1941 = vunpack.c.h.b16 %v1371
          %v1942 = vunpack.c.l.b16 %v1372
          %v1943 = vunpack.c.h.b16 %v1372
          %v1944 = vunpack.c.l.b16 %v1373
          %v1945 = vunpack.c.h.b16 %v1373
          %v1946 = vunpack.c.l.b16 %v1374
          %v1947 = vunpack.c.h.b16 %v1374
          %v1948 = vunpack.c.l.b16 %v1375
          %v1949 = vunpack.c.h.b16 %v1375
          %v1950 = vunpack.c.l.b16 %v1376
          %v1951 = vunpack.c.h.b16 %v1376
          %v1952 = vunpack.c.l.b16 %v1377
          %v1953 = vunpack.c.h.b16 %v1377
          %v1954 = vunpack.c.l.b16 %v1378
          %v1955 = vunpack.c.h.b16 %v1378
          %v1956 = vunpack.c.l.b16 %v1379
          %v1957 = vunpack.c.h.b16 %v1379
          %v1958 = vunpack.c.l.b16 %v1380
          %v1959 = vunpack.c.h.b16 %v1380
          %v1960 = vunpack.c.l.b16 %v1381
          %v1961 = vunpack.c.h.b16 %v1381
          %v1962 = vunpack.c.l.b16 %v1382
          %v1963 = vunpack.c.h.b16 %v1382
          %v1964 = vunpack.c.l.b16 %v1383
          %v1965 = vunpack.c.h.b16 %v1383
          %v1966 = vunpack.c.l.b16 %v1384
          %v1967 = vunpack.c.h.b16 %v1384
          %v1968 = vunpack.c.l.b16 %v1385
          %v1969 = vunpack.c.h.b16 %v1385
          %v1970 = vunpack.c.l.b16 %v1386
          %v1971 = vunpack.c.h.b16 %v1386
          %v1972 = vunpack.c.l.b16 %v1387
          %v1973 = vunpack.c.h.b16 %v1387
          %v1974 = vunpack.c.l.b16 %v1388
          %v1975 = vunpack.c.h.b16 %v1388
          %v1976 = vunpack.c.l.b16 %v1389
          %v1977 = vunpack.c.h.b16 %v1389
          %v1978 = vunpack.c.l.b16 %v1390
          %v1979 = vunpack.c.h.b16 %v1390
          %v1980 = vunpack.c.l.b16 %v1391
          %v1981 = vunpack.c.h.b16 %v1391
          %v1982 = vunpack.c.l.b16 %v1392
          %v1983 = vunpack.c.h.b16 %v1392
          %v1984 = vunpack.c.l.b16 %v1393
          %v1985 = vunpack.c.h.b16 %v1393
          %v1986 = vpack.c.b16 %v1610, %v1602
          %v1987 = vpack.c.b16 %v1611, %v1603
          %v1988 = vpack.c.b16 %v1612, %v1604
          %v1989 = vpack.c.b16 %v1613, %v1605
          %v1990 = vpack.c.b16 %v1614, %v1606
          %v1991 = vpack.c.b16 %v1615, %v1607
          %v1992 = vpack.c.b16 %v1616, %v1608
          %v1993 = vpack.c.b16 %v1617, %v1609
          %v1994 = vpack.c.b16 %v1626, %v1618
          %v1995 = vpack.c.b16 %v1627, %v1619
          %v1996 = vpack.c.b16 %v1628, %v1620
          %v1997 = vpack.c.b16 %v1629, %v1621
          %v1998 = vpack.c.b16 %v1630, %v1622
          %v1999 = vpack.c.b16 %v1631, %v1623
          %v2000 = vpack.c.b16 %v1632, %v1624
          %v2001 = vpack.c.b16 %v1633, %v1625
          %v2002 = vpack.c.b16 %v1642, %v1634
          %v2003 = vpack.c.b16 %v1643, %v1635
          %v2004 = vpack.c.b16 %v1644, %v1636
          %v2005 = vpack.c.b16 %v1645, %v1637
          %v2006 = vpack.c.b16 %v1646, %v1638
          %v2007 = vpack.c.b16 %v1647, %v1639
          %v2008 = vpack.c.b16 %v1648, %v1640
          %v2009 = vpack.c.b16 %v1649, %v1641
          %v2010 = vpack.c.b16 %v1658, %v1650
          %v2011 = vpack.c.b16 %v1659, %v1651
          %v2012 = vpack.c.b16 %v1660, %v1652
          %v2013 = vpack.c.b16 %v1661, %v1653
          %v2014 = vpack.c.b16 %v1662, %v1654
          %v2015 = vpack.c.b16 %v1663, %v1655
          %v2016 = vpack.c.b16 %v1664, %v1656
          %v2017 = vpack.c.b16 %v1665, %v1657
          %v2018 = vpack.c.b16 %v1674, %v1666
          %v2019 = vpack.c.b16 %v1675, %v1667
          %v2020 = vpack.c.b16 %v1676, %v1668
          %v2021 = vpack.c.b16 %v1677, %v1669
          %v2022 = vpack.c.b16 %v1678, %v1670
          %v2023 = vpack.c.b16 %v1679, %v1671
          %v2024 = vpack.c.b16 %v1680, %v1672
          %v2025 = vpack.c.b16 %v1681, %v1673
          %v2026 = vpack.c.b16 %v1690, %v1682
          %v2027 = vpack.c.b16 %v1691, %v1683
          %v2028 = vpack.c.b16 %v1692, %v1684
          %v2029 = vpack.c.b16 %v1693, %v1685
          %v2030 = vpack.c.b16 %v1694, %v1686
          %v2031 = vpack.c.b16 %v1695, %v1687
          %v2032 = vpack.c.b16 %v1696, %v1688
          %v2033 = vpack.c.b16 %v1697, %v1689
          %v2034 = vpack.c.b16 %v1706, %v1698
          %v2035 = vpack.c.b16 %v1707, %v1699
          %v2036 = vpack.c.b16 %v1708, %v1700
          %v2037 = vpack.c.b16 %v1709, %v1701
          %v2038 = vpack.c.b16 %v1710, %v1702
          %v2039 = vpack.c.b16 %v1711, %v1703
          %v2040 = vpack.c.b16 %v1712, %v1704
          %v2041 = vpack.c.b16 %v1713, %v1705
          %v2042 = vpack.c.b16 %v1722, %v1714
          %v2043 = vpack.c.b16 %v1723, %v1715
          %v2044 = vpack.c.b16 %v1724, %v1716
          %v2045 = vpack.c.b16 %v1725, %v1717
          %v2046 = vpack.c.b16 %v1726, %v1718
          %v2047 = vpack.c.b16 %v1727, %v1719
          %v2048 = vpack.c.b16 %v1728, %v1720
          %v2049 = vpack.c.b16 %v1729, %v1721
          %v2050 = vpack.c.b16 %v1738, %v1730
          %v2051 = vpack.c.b16 %v1739, %v1731
          %v2052 = vpack.c.b16 %v1740, %v1732
          %v2053 = vpack.c.b16 %v1741, %v1733
          %v2054 = vpack.c.b16 %v1742, %v1734
          %v2055 = vpack.c.b16 %v1743, %v1735
          %v2056 = vpack.c.b16 %v1744, %v1736
          %v2057 = vpack.c.b16 %v1745, %v1737
          %v2058 = vpack.c.b16 %v1754, %v1746
          %v2059 = vpack.c.b16 %v1755, %v1747
          %v2060 = vpack.c.b16 %v1756, %v1748
          %v2061 = vpack.c.b16 %v1757, %v1749
          %v2062 = vpack.c.b16 %v1758, %v1750
          %v2063 = vpack.c.b16 %v1759, %v1751
          %v2064 = vpack.c.b16 %v1760, %v1752
          %v2065 = vpack.c.b16 %v1761, %v1753
          %v2066 = vpack.c.b16 %v1770, %v1762
          %v2067 = vpack.c.b16 %v1771, %v1763
          %v2068 = vpack.c.b16 %v1772, %v1764
          %v2069 = vpack.c.b16 %v1773, %v1765
          %v2070 = vpack.c.b16 %v1774, %v1766
          %v2071 = vpack.c.b16 %v1775, %v1767
          %v2072 = vpack.c.b16 %v1776, %v1768
          %v2073 = vpack.c.b16 %v1777, %v1769
          %v2074 = vpack.c.b16 %v1786, %v1778
          %v2075 = vpack.c.b16 %v1787, %v1779
          %v2076 = vpack.c.b16 %v1788, %v1780
          %v2077 = vpack.c.b16 %v1789, %v1781
          %v2078 = vpack.c.b16 %v1790, %v1782
          %v2079 = vpack.c.b16 %v1791, %v1783
          %v2080 = vpack.c.b16 %v1792, %v1784
          %v2081 = vpack.c.b16 %v1793, %v1785
          %v2082 = vpack.c.b16 %v1802, %v1794
          %v2083 = vpack.c.b16 %v1803, %v1795
          %v2084 = vpack.c.b16 %v1804, %v1796
          %v2085 = vpack.c.b16 %v1805, %v1797
          %v2086 = vpack.c.b16 %v1806, %v1798
          %v2087 = vpack.c.b16 %v1807, %v1799
          %v2088 = vpack.c.b16 %v1808, %v1800
          %v2089 = vpack.c.b16 %v1809, %v1801
          %v2090 = vpack.c.b16 %v1818, %v1810
          %v2091 = vpack.c.b16 %v1819, %v1811
          %v2092 = vpack.c.b16 %v1820, %v1812
          %v2093 = vpack.c.b16 %v1821, %v1813
          %v2094 = vpack.c.b16 %v1822, %v1814
          %v2095 = vpack.c.b16 %v1823, %v1815
          %v2096 = vpack.c.b16 %v1824, %v1816
          %v2097 = vpack.c.b16 %v1825, %v1817
          %v2098 = vpack.c.b16 %v1834, %v1826
          %v2099 = vpack.c.b16 %v1835, %v1827
          %v2100 = vpack.c.b16 %v1836, %v1828
          %v2101 = vpack.c.b16 %v1837, %v1829
          %v2102 = vpack.c.b16 %v1838, %v1830
          %v2103 = vpack.c.b16 %v1839, %v1831
          %v2104 = vpack.c.b16 %v1840, %v1832
          %v2105 = vpack.c.b16 %v1841, %v1833
          %v2106 = vpack.c.b16 %v1850, %v1842
          %v2107 = vpack.c.b16 %v1851, %v1843
          %v2108 = vpack.c.b16 %v1852, %v1844
          %v2109 = vpack.c.b16 %v1853, %v1845
          %v2110 = vpack.c.b16 %v1854, %v1846
          %v2111 = vpack.c.b16 %v1855, %v1847
          %v2112 = vpack.c.b16 %v1856, %v1848
          %v2113 = vpack.c.b16 %v1857, %v1849
          %v2114 = vpack.c.b16 %v1866, %v1858
          %v2115 = vpack.c.b16 %v1867, %v1859
          %v2116 = vpack.c.b16 %v1868, %v1860
          %v2117 = vpack.c.b16 %v1869, %v1861
          %v2118 = vpack.c.b16 %v1870, %v1862
          %v2119 = vpack.c.b16 %v1871, %v1863
          %v2120 = vpack.c.b16 %v1872, %v1864
          %v2121 = vpack.c.b16 %v1873, %v1865
          %v2122 = vpack.c.b16 %v1882, %v1874
          %v2123 = vpack.c.b16 %v1883, %v1875
          %v2124 = vpack.c.b16 %v1884, %v1876
          %v2125 = vpack.c.b16 %v1885, %v1877
          %v2126 = vpack.c.b16 %v1886, %v1878
          %v2127 = vpack.c.b16 %v1887, %v1879
          %v2128 = vpack.c.b16 %v1888, %v1880
          %v2129 = vpack.c.b16 %v1889, %v1881
          %v2130 = vpack.c.b16 %v1898, %v1890
          %v2131 = vpack.c.b16 %v1899, %v1891
          %v2132 = vpack.c.b16 %v1900, %v1892
          %v2133 = vpack.c.b16 %v1901, %v1893
          %v2134 = vpack.c.b16 %v1902, %v1894
          %v2135 = vpack.c.b16 %v1903, %v1895
          %v2136 = vpack.c.b16 %v1904, %v1896
          %v2137 = vpack.c.b16 %v1905, %v1897
          %v2138 = vpack.c.b16 %v1914, %v1906
          %v2139 = vpack.c.b16 %v1915, %v1907
          %v2140 = vpack.c.b16 %v1916, %v1908
          %v2141 = vpack.c.b16 %v1917, %v1909
          %v2142 = vpack.c.b16 %v1918, %v1910
          %v2143 = vpack.c.b16 %v1919, %v1911
          %v2144 = vpack.c.b16 %v1920, %v1912
          %v2145 = vpack.c.b16 %v1921, %v1913
          %v2146 = vpack.c.b16 %v1930, %v1922
          %v2147 = vpack.c.b16 %v1931, %v1923
          %v2148 = vpack.c.b16 %v1932, %v1924
          %v2149 = vpack.c.b16 %v1933, %v1925
          %v2150 = vpack.c.b16 %v1934, %v1926
          %v2151 = vpack.c.b16 %v1935, %v1927
          %v2152 = vpack.c.b16 %v1936, %v1928
          %v2153 = vpack.c.b16 %v1937, %v1929
          %v2154 = vpack.c.b16 %v1946, %v1938
          %v2155 = vpack.c.b16 %v1947, %v1939
          %v2156 = vpack.c.b16 %v1948, %v1940
          %v2157 = vpack.c.b16 %v1949, %v1941
          %v2158 = vpack.c.b16 %v1950, %v1942
          %v2159 = vpack.c.b16 %v1951, %v1943
          %v2160 = vpack.c.b16 %v1952, %v1944
          %v2161 = vpack.c.b16 %v1953, %v1945
          %v2162 = vpack.c.b16 %v1962, %v1954
          %v2163 = vpack.c.b16 %v1963, %v1955
          %v2164 = vpack.c.b16 %v1964, %v1956
          %v2165 = vpack.c.b16 %v1965, %v1957
          %v2166 = vpack.c.b16 %v1966, %v1958
          %v2167 = vpack.c.b16 %v1967, %v1959
          %v2168 = vpack.c.b16 %v1968, %v1960
          %v2169 = vpack.c.b16 %v1969, %v1961
          %v2170 = vpack.c.b16 %v1978, %v1970
          %v2171 = vpack.c.b16 %v1979, %v1971
          %v2172 = vpack.c.b16 %v1980, %v1972
          %v2173 = vpack.c.b16 %v1981, %v1973
          %v2174 = vpack.c.b16 %v1982, %v1974
          %v2175 = vpack.c.b16 %v1983, %v1975
          %v2176 = vpack.c.b16 %v1984, %v1976
          %v2177 = vpack.c.b16 %v1985, %v1977
          %2370 = vmatprep.subr.bf16.mxu0 %v2043
          %2371 = vmatpush1.bf16.msra.mxu0 %v2042
          %2372 = vmatprep.subr.bf16.mxu0 %v2035
          %2373 = vmatpush1.bf16.msra.mxu0 %v2034
          %2374 = vmatprep.subr.bf16.mxu0 %v2027
          %2375 = vmatpush1.bf16.msra.mxu0 %v2026
          %2376 = vmatprep.subr.bf16.mxu0 %v2019
          %2377 = vmatpush1.bf16.msra.mxu0 %v2018
          %2378 = vmatprep.subr.bf16.mxu0 %v2011
          %2379 = vmatpush1.bf16.msra.mxu0 %v2010
          %2380 = vmatprep.subr.bf16.mxu0 %v2003
          %2381 = vmatpush1.bf16.msra.mxu0 %v2002
          %2382 = vmatprep.subr.bf16.mxu0 %v1995
          %2383 = vmatpush1.bf16.msra.mxu0 %v1994
          %2384 = vmatprep.subr.bf16.mxu0 %v1987
          %2385 = vmatpush1.bf16.msra.mxu0 %v1986
          %2386 = vmatprep.subr.bf16.mxu0 %v2107
          %2387 = vmatpush2.bf16.msra.mxu0 %v2106
          %2388 = vmatprep.subr.bf16.mxu0 %v2099
          %2389 = vmatpush2.bf16.msra.mxu0 %v2098
          %2390 = vmatprep.subr.bf16.mxu0 %v2091
          %2391 = vmatpush2.bf16.msra.mxu0 %v2090
          %2392 = vmatprep.subr.bf16.mxu0 %v2083
          %2393 = vmatpush2.bf16.msra.mxu0 %v2082
          %2394 = vmatprep.subr.bf16.mxu0 %v2075
          %2395 = vmatpush2.bf16.msra.mxu0 %v2074
          %2396 = vmatprep.subr.bf16.mxu0 %v2067
          %2397 = vmatpush2.bf16.msra.mxu0 %v2066
          %2398 = vmatprep.subr.bf16.mxu0 %v2059
          %2399 = vmatpush2.bf16.msra.mxu0 %v2058
          %2400 = vmatprep.subr.bf16.mxu0 %v2051
          %2401 = vmatpush2.bf16.msra.mxu0 %v2050
          %2402 = vmatprep.mubr.bf16.mxu0 %v1405
          %2403 = vmatmul.mubr.bf16.gmra.mxu0 %v1404
          %v2404 = vpop.f32.mrf.mxu0
          %v2405 = vadd.f32 0.0, %v2404
          %v2406 = vpop.f32.mrf.mxu0
          %v2407 = vadd.f32 0.0, %v2406
          %v2408 = vpop.f32.mrf.mxu0
          %v2409 = vadd.f32 0.0, %v2408
          %v2410 = vpop.f32.mrf.mxu0
          %v2411 = vadd.f32 0.0, %v2410
          %2412 = vdwg.mxu0
          %2413 = vmatprep.subr.bf16.mxu0 %v2171
          %2414 = vmatpush1.bf16.msra.mxu0 %v2170
          %2415 = vmatprep.subr.bf16.mxu0 %v2163
          %2416 = vmatpush1.bf16.msra.mxu0 %v2162
          %2417 = vmatprep.subr.bf16.mxu0 %v2155
          %2418 = vmatpush1.bf16.msra.mxu0 %v2154
          %2419 = vmatprep.subr.bf16.mxu0 %v2147
          %2420 = vmatpush1.bf16.msra.mxu0 %v2146
          %2421 = vmatprep.subr.bf16.mxu0 %v2139
          %2422 = vmatpush1.bf16.msra.mxu0 %v2138
          %2423 = vmatprep.subr.bf16.mxu0 %v2131
          %2424 = vmatpush1.bf16.msra.mxu0 %v2130
          %2425 = vmatprep.subr.bf16.mxu0 %v2123
          %2426 = vmatpush1.bf16.msra.mxu0 %v2122
          %2427 = vmatprep.subr.bf16.mxu0 %v2115
          %2428 = vmatpush1.bf16.msra.mxu0 %v2114
          %2429 = vmatprep.subr.bf16.mxu0 0
          %2430 = vmatpush2.bf16.msra.mxu0 0
          %2431 = vmatprep.subr.bf16.mxu0 0
          %2432 = vmatpush2.bf16.msra.mxu0 0
          %2433 = vmatprep.subr.bf16.mxu0 0
          %2434 = vmatpush2.bf16.msra.mxu0 0
          %2435 = vmatprep.subr.bf16.mxu0 0
          %2436 = vmatpush2.bf16.msra.mxu0 0
          %2437 = vmatprep.subr.bf16.mxu0 0
          %2438 = vmatpush2.bf16.msra.mxu0 0
          %2439 = vmatprep.subr.bf16.mxu0 0
          %2440 = vmatpush2.bf16.msra.mxu0 0
          %2441 = vmatprep.subr.bf16.mxu0 0
          %2442 = vmatpush2.bf16.msra.mxu0 0
          %2443 = vmatprep.subr.bf16.mxu0 0
          %2444 = vmatpush2.bf16.msra.mxu0 0
          %2445 = vmatprep.mubr.bf16.mxu0 0
          %2446 = vmatmul.mubr.bf16.gmra.mxu0 %v1406
          %v2447 = vpop.f32.mrf.mxu0
          %v2448 = vadd.f32 %v2405, %v2447
          %v2449 = vpop.f32.mrf.mxu0
          %v2450 = vadd.f32 %v2407, %v2449
          %v2451 = vpop.f32.mrf.mxu0
          %v2452 = vadd.f32 %v2409, %v2451
          %v2453 = vpop.f32.mrf.mxu0
          %v2454 = vadd.f32 %v2411, %v2453
          %2455 = vdwg.mxu0
          %2456 = vmatprep.subr.bf16.mxu0 %v2045
          %2457 = vmatpush1.bf16.msra.mxu0 %v2044
          %2458 = vmatprep.subr.bf16.mxu0 %v2037
          %2459 = vmatpush1.bf16.msra.mxu0 %v2036
          %2460 = vmatprep.subr.bf16.mxu0 %v2029
          %2461 = vmatpush1.bf16.msra.mxu0 %v2028
          %2462 = vmatprep.subr.bf16.mxu0 %v2021
          %2463 = vmatpush1.bf16.msra.mxu0 %v2020
          %2464 = vmatprep.subr.bf16.mxu0 %v2013
          %2465 = vmatpush1.bf16.msra.mxu0 %v2012
          %2466 = vmatprep.subr.bf16.mxu0 %v2005
          %2467 = vmatpush1.bf16.msra.mxu0 %v2004
          %2468 = vmatprep.subr.bf16.mxu0 %v1997
          %2469 = vmatpush1.bf16.msra.mxu0 %v1996
          %2470 = vmatprep.subr.bf16.mxu0 %v1989
          %2471 = vmatpush1.bf16.msra.mxu0 %v1988
          %2472 = vmatprep.subr.bf16.mxu0 %v2109
          %2473 = vmatpush2.bf16.msra.mxu0 %v2108
          %2474 = vmatprep.subr.bf16.mxu0 %v2101
          %2475 = vmatpush2.bf16.msra.mxu0 %v2100
          %2476 = vmatprep.subr.bf16.mxu0 %v2093
          %2477 = vmatpush2.bf16.msra.mxu0 %v2092
          %2478 = vmatprep.subr.bf16.mxu0 %v2085
          %2479 = vmatpush2.bf16.msra.mxu0 %v2084
          %2480 = vmatprep.subr.bf16.mxu0 %v2077
          %2481 = vmatpush2.bf16.msra.mxu0 %v2076
          %2482 = vmatprep.subr.bf16.mxu0 %v2069
          %2483 = vmatpush2.bf16.msra.mxu0 %v2068
          %2484 = vmatprep.subr.bf16.mxu0 %v2061
          %2485 = vmatpush2.bf16.msra.mxu0 %v2060
          %2486 = vmatprep.subr.bf16.mxu0 %v2053
          %2487 = vmatpush2.bf16.msra.mxu0 %v2052
          %2488 = vmatprep.mubr.bf16.mxu0 %v1405
          %2489 = vmatmul.mubr.bf16.gmra.mxu0 %v1404
          %v2490 = vpop.f32.mrf.mxu0
          %v2491 = vadd.f32 0.0, %v2490
          %v2492 = vpop.f32.mrf.mxu0
          %v2493 = vadd.f32 0.0, %v2492
          %v2494 = vpop.f32.mrf.mxu0
          %v2495 = vadd.f32 0.0, %v2494
          %v2496 = vpop.f32.mrf.mxu0
          %v2497 = vadd.f32 0.0, %v2496
          %2498 = vdwg.mxu0
          %2499 = vmatprep.subr.bf16.mxu0 %v2173
          %2500 = vmatpush1.bf16.msra.mxu0 %v2172
          %2501 = vmatprep.subr.bf16.mxu0 %v2165
          %2502 = vmatpush1.bf16.msra.mxu0 %v2164
          %2503 = vmatprep.subr.bf16.mxu0 %v2157
          %2504 = vmatpush1.bf16.msra.mxu0 %v2156
          %2505 = vmatprep.subr.bf16.mxu0 %v2149
          %2506 = vmatpush1.bf16.msra.mxu0 %v2148
          %2507 = vmatprep.subr.bf16.mxu0 %v2141
          %2508 = vmatpush1.bf16.msra.mxu0 %v2140
          %2509 = vmatprep.subr.bf16.mxu0 %v2133
          %2510 = vmatpush1.bf16.msra.mxu0 %v2132
          %2511 = vmatprep.subr.bf16.mxu0 %v2125
          %2512 = vmatpush1.bf16.msra.mxu0 %v2124
          %2513 = vmatprep.subr.bf16.mxu0 %v2117
          %2514 = vmatpush1.bf16.msra.mxu0 %v2116
          %2515 = vmatprep.subr.bf16.mxu0 0
          %2516 = vmatpush2.bf16.msra.mxu0 0
          %2517 = vmatprep.subr.bf16.mxu0 0
          %2518 = vmatpush2.bf16.msra.mxu0 0
          %2519 = vmatprep.subr.bf16.mxu0 0
          %2520 = vmatpush2.bf16.msra.mxu0 0
          %2521 = vmatprep.subr.bf16.mxu0 0
          %2522 = vmatpush2.bf16.msra.mxu0 0
          %2523 = vmatprep.subr.bf16.mxu0 0
          %2524 = vmatpush2.bf16.msra.mxu0 0
          %2525 = vmatprep.subr.bf16.mxu0 0
          %2526 = vmatpush2.bf16.msra.mxu0 0
          %2527 = vmatprep.subr.bf16.mxu0 0
          %2528 = vmatpush2.bf16.msra.mxu0 0
          %2529 = vmatprep.subr.bf16.mxu0 0
          %2530 = vmatpush2.bf16.msra.mxu0 0
          %2531 = vmatprep.mubr.bf16.mxu0 0
          %2532 = vmatmul.mubr.bf16.gmra.mxu0 %v1406
          %v2533 = vpop.f32.mrf.mxu0
          %v2534 = vadd.f32 %v2491, %v2533
          %v2535 = vpop.f32.mrf.mxu0
          %v2536 = vadd.f32 %v2493, %v2535
          %v2537 = vpop.f32.mrf.mxu0
          %v2538 = vadd.f32 %v2495, %v2537
          %v2539 = vpop.f32.mrf.mxu0
          %v2540 = vadd.f32 %v2497, %v2539
          %2541 = vdwg.mxu0
          %2542 = vmatprep.subr.bf16.mxu0 %v2047
          %2543 = vmatpush1.bf16.msra.mxu0 %v2046
          %2544 = vmatprep.subr.bf16.mxu0 %v2039
          %2545 = vmatpush1.bf16.msra.mxu0 %v2038
          %2546 = vmatprep.subr.bf16.mxu0 %v2031
          %2547 = vmatpush1.bf16.msra.mxu0 %v2030
          %2548 = vmatprep.subr.bf16.mxu0 %v2023
          %2549 = vmatpush1.bf16.msra.mxu0 %v2022
          %2550 = vmatprep.subr.bf16.mxu0 %v2015
          %2551 = vmatpush1.bf16.msra.mxu0 %v2014
          %2552 = vmatprep.subr.bf16.mxu0 %v2007
          %2553 = vmatpush1.bf16.msra.mxu0 %v2006
          %2554 = vmatprep.subr.bf16.mxu0 %v1999
          %2555 = vmatpush1.bf16.msra.mxu0 %v1998
          %2556 = vmatprep.subr.bf16.mxu0 %v1991
          %2557 = vmatpush1.bf16.msra.mxu0 %v1990
          %2558 = vmatprep.subr.bf16.mxu0 %v2111
          %2559 = vmatpush2.bf16.msra.mxu0 %v2110
          %2560 = vmatprep.subr.bf16.mxu0 %v2103
          %2561 = vmatpush2.bf16.msra.mxu0 %v2102
          %2562 = vmatprep.subr.bf16.mxu0 %v2095
          %2563 = vmatpush2.bf16.msra.mxu0 %v2094
          %2564 = vmatprep.subr.bf16.mxu0 %v2087
          %2565 = vmatpush2.bf16.msra.mxu0 %v2086
          %2566 = vmatprep.subr.bf16.mxu0 %v2079
          %2567 = vmatpush2.bf16.msra.mxu0 %v2078
          %2568 = vmatprep.subr.bf16.mxu0 %v2071
          %2569 = vmatpush2.bf16.msra.mxu0 %v2070
          %2570 = vmatprep.subr.bf16.mxu0 %v2063
          %2571 = vmatpush2.bf16.msra.mxu0 %v2062
          %2572 = vmatprep.subr.bf16.mxu0 %v2055
          %2573 = vmatpush2.bf16.msra.mxu0 %v2054
          %2574 = vmatprep.mubr.bf16.mxu0 %v1405
          %2575 = vmatmul.mubr.bf16.gmra.mxu0 %v1404
          %v2576 = vpop.f32.mrf.mxu0
          %v2577 = vadd.f32 0.0, %v2576
          %v2578 = vpop.f32.mrf.mxu0
          %v2579 = vadd.f32 0.0, %v2578
          %v2580 = vpop.f32.mrf.mxu0
          %v2581 = vadd.f32 0.0, %v2580
          %v2582 = vpop.f32.mrf.mxu0
          %v2583 = vadd.f32 0.0, %v2582
          %2584 = vdwg.mxu0
          %2585 = vmatprep.subr.bf16.mxu0 %v2175
          %2586 = vmatpush1.bf16.msra.mxu0 %v2174
          %2587 = vmatprep.subr.bf16.mxu0 %v2167
          %2588 = vmatpush1.bf16.msra.mxu0 %v2166
          %2589 = vmatprep.subr.bf16.mxu0 %v2159
          %2590 = vmatpush1.bf16.msra.mxu0 %v2158
          %2591 = vmatprep.subr.bf16.mxu0 %v2151
          %2592 = vmatpush1.bf16.msra.mxu0 %v2150
          %2593 = vmatprep.subr.bf16.mxu0 %v2143
          %2594 = vmatpush1.bf16.msra.mxu0 %v2142
          %2595 = vmatprep.subr.bf16.mxu0 %v2135
          %2596 = vmatpush1.bf16.msra.mxu0 %v2134
          %2597 = vmatprep.subr.bf16.mxu0 %v2127
          %2598 = vmatpush1.bf16.msra.mxu0 %v2126
          %2599 = vmatprep.subr.bf16.mxu0 %v2119
          %2600 = vmatpush1.bf16.msra.mxu0 %v2118
          %2601 = vmatprep.subr.bf16.mxu0 0
          %2602 = vmatpush2.bf16.msra.mxu0 0
          %2603 = vmatprep.subr.bf16.mxu0 0
          %2604 = vmatpush2.bf16.msra.mxu0 0
          %2605 = vmatprep.subr.bf16.mxu0 0
          %2606 = vmatpush2.bf16.msra.mxu0 0
          %2607 = vmatprep.subr.bf16.mxu0 0
          %2608 = vmatpush2.bf16.msra.mxu0 0
          %2609 = vmatprep.subr.bf16.mxu0 0
          %2610 = vmatpush2.bf16.msra.mxu0 0
          %2611 = vmatprep.subr.bf16.mxu0 0
          %2612 = vmatpush2.bf16.msra.mxu0 0
          %2613 = vmatprep.subr.bf16.mxu0 0
          %2614 = vmatpush2.bf16.msra.mxu0 0
          %2615 = vmatprep.subr.bf16.mxu0 0
          %2616 = vmatpush2.bf16.msra.mxu0 0
          %2617 = vmatprep.mubr.bf16.mxu0 0
          %2618 = vmatmul.mubr.bf16.gmra.mxu0 %v1406
          %v2619 = vpop.f32.mrf.mxu0
          %v2620 = vadd.f32 %v2577, %v2619
          %v2621 = vpop.f32.mrf.mxu0
          %v2622 = vadd.f32 %v2579, %v2621
          %v2623 = vpop.f32.mrf.mxu0
          %v2624 = vadd.f32 %v2581, %v2623
          %v2625 = vpop.f32.mrf.mxu0
          %v2626 = vadd.f32 %v2583, %v2625
          %2627 = vdwg.mxu0
          %2628 = vmatprep.subr.bf16.mxu0 %v2049
          %2629 = vmatpush1.bf16.msra.mxu0 %v2048
          %2630 = vmatprep.subr.bf16.mxu0 %v2041
          %2631 = vmatpush1.bf16.msra.mxu0 %v2040
          %2632 = vmatprep.subr.bf16.mxu0 %v2033
          %2633 = vmatpush1.bf16.msra.mxu0 %v2032
          %2634 = vmatprep.subr.bf16.mxu0 %v2025
          %2635 = vmatpush1.bf16.msra.mxu0 %v2024
          %2636 = vmatprep.subr.bf16.mxu0 %v2017
          %2637 = vmatpush1.bf16.msra.mxu0 %v2016
          %2638 = vmatprep.subr.bf16.mxu0 %v2009
          %2639 = vmatpush1.bf16.msra.mxu0 %v2008
          %2640 = vmatprep.subr.bf16.mxu0 %v2001
          %2641 = vmatpush1.bf16.msra.mxu0 %v2000
          %2642 = vmatprep.subr.bf16.mxu0 %v1993
          %2643 = vmatpush1.bf16.msra.mxu0 %v1992
          %2644 = vmatprep.subr.bf16.mxu0 %v2113
          %2645 = vmatpush2.bf16.msra.mxu0 %v2112
          %2646 = vmatprep.subr.bf16.mxu0 %v2105
          %2647 = vmatpush2.bf16.msra.mxu0 %v2104
          %2648 = vmatprep.subr.bf16.mxu0 %v2097
          %2649 = vmatpush2.bf16.msra.mxu0 %v2096
          %2650 = vmatprep.subr.bf16.mxu0 %v2089
          %2651 = vmatpush2.bf16.msra.mxu0 %v2088
          %2652 = vmatprep.subr.bf16.mxu0 %v2081
          %2653 = vmatpush2.bf16.msra.mxu0 %v2080
          %2654 = vmatprep.subr.bf16.mxu0 %v2073
          %2655 = vmatpush2.bf16.msra.mxu0 %v2072
          %2656 = vmatprep.subr.bf16.mxu0 %v2065
          %2657 = vmatpush2.bf16.msra.mxu0 %v2064
          %2658 = vmatprep.subr.bf16.mxu0 %v2057
          %2659 = vmatpush2.bf16.msra.mxu0 %v2056
          %2660 = vmatprep.mubr.bf16.mxu0 %v1405
          %2661 = vmatmul.mubr.bf16.gmra.mxu0 %v1404
          %v2662 = vpop.f32.mrf.mxu0
          %v2663 = vadd.f32 0.0, %v2662
          %v2664 = vpop.f32.mrf.mxu0
          %v2665 = vadd.f32 0.0, %v2664
          %v2666 = vpop.f32.mrf.mxu0
          %v2667 = vadd.f32 0.0, %v2666
          %v2668 = vpop.f32.mrf.mxu0
          %v2669 = vadd.f32 0.0, %v2668
          %2670 = vdwg.mxu0
          %2671 = vmatprep.subr.bf16.mxu0 %v2177
          %2672 = vmatpush1.bf16.msra.mxu0 %v2176
          %2673 = vmatprep.subr.bf16.mxu0 %v2169
          %2674 = vmatpush1.bf16.msra.mxu0 %v2168
          %2675 = vmatprep.subr.bf16.mxu0 %v2161
          %2676 = vmatpush1.bf16.msra.mxu0 %v2160
          %2677 = vmatprep.subr.bf16.mxu0 %v2153
          %2678 = vmatpush1.bf16.msra.mxu0 %v2152
          %2679 = vmatprep.subr.bf16.mxu0 %v2145
          %2680 = vmatpush1.bf16.msra.mxu0 %v2144
          %2681 = vmatprep.subr.bf16.mxu0 %v2137
          %2682 = vmatpush1.bf16.msra.mxu0 %v2136
          %2683 = vmatprep.subr.bf16.mxu0 %v2129
          %2684 = vmatpush1.bf16.msra.mxu0 %v2128
          %2685 = vmatprep.subr.bf16.mxu0 %v2121
          %2686 = vmatpush1.bf16.msra.mxu0 %v2120
          %2687 = vmatprep.subr.bf16.mxu0 0
          %2688 = vmatpush2.bf16.msra.mxu0 0
          %2689 = vmatprep.subr.bf16.mxu0 0
          %2690 = vmatpush2.bf16.msra.mxu0 0
          %2691 = vmatprep.subr.bf16.mxu0 0
          %2692 = vmatpush2.bf16.msra.mxu0 0
          %2693 = vmatprep.subr.bf16.mxu0 0
          %2694 = vmatpush2.bf16.msra.mxu0 0
          %2695 = vmatprep.subr.bf16.mxu0 0
          %2696 = vmatpush2.bf16.msra.mxu0 0
          %2697 = vmatprep.subr.bf16.mxu0 0
          %2698 = vmatpush2.bf16.msra.mxu0 0
          %2699 = vmatprep.subr.bf16.mxu0 0
          %2700 = vmatpush2.bf16.msra.mxu0 0
          %2701 = vmatprep.subr.bf16.mxu0 0
          %2702 = vmatpush2.bf16.msra.mxu0 0
          %2703 = vmatprep.mubr.bf16.mxu0 0
          %2704 = vmatmul.mubr.bf16.gmra.mxu0 %v1406
          %v2705 = vpop.f32.mrf.mxu0
          %v2706 = vadd.f32 %v2663, %v2705
          %v2707 = vpop.f32.mrf.mxu0
          %v2708 = vadd.f32 %v2665, %v2707
          %v2709 = vpop.f32.mrf.mxu0
          %v2710 = vadd.f32 %v2667, %v2709
          %v2711 = vpop.f32.mrf.mxu0
          %v2712 = vadd.f32 %v2669, %v2711
          %2713 = vdwg.mxu0
          %v2714 = vmax.f32 %v2448, 0.0
          %v2715 = vmax.f32 %v2450, 0.0
          %v2716 = vmax.f32 %v2534, 0.0
          %v2717 = vmax.f32 %v2536, 0.0
          %v2718 = vmax.f32 %v2620, 0.0
          %v2719 = vmax.f32 %v2622, 0.0
          %v2720 = vmax.f32 %v2706, 0.0
          %v2721 = vmax.f32 %v2708, 0.0
          %v2722 = vmax.f32 %v2452, 0.0
          %v2723 = vmax.f32 %v2454, 0.0
          %v2724 = vmax.f32 %v2538, 0.0
          %v2725 = vmax.f32 %v2540, 0.0
          %v2726 = vmax.f32 %v2624, 0.0
          %v2727 = vmax.f32 %v2626, 0.0
          %v2728 = vmax.f32 %v2710, 0.0
          %v2729 = vmax.f32 %v2712, 0.0
          %v2730 = vld [vmem:[%s7] sm:$0x3]
          %vm2731 = vcmask 130048
          %v2733 = vsel %vm2731, %v2730, 0
          %2735 = vmatprep.subr.mxu0 0.0
          %2736 = vmatpush1.msra.mxu0 0.0
          %2737 = vmatprep.subr.mxu0 0.0
          %2738 = vmatpush1.msra.mxu0 0.0
          %2739 = vmatprep.subr.mxu0 0.0
          %2740 = vmatpush1.msra.mxu0 0.0
          %2741 = vmatprep.subr.mxu0 0.0
          %2742 = vmatpush1.msra.mxu0 0.0
          %2743 = vmatprep.subr.mxu0 0.0
          %2744 = vmatpush1.msra.mxu0 0.0
          %2745 = vmatprep.subr.mxu0 0.0
          %2746 = vmatpush1.msra.mxu0 0.0
          %2747 = vmatprep.subr.mxu0 0.0
          %2748 = vmatpush1.msra.mxu0 0.0
          %2749 = vmatprep.subr.mxu0 0.0
          %2750 = vmatpush1.msra.mxu0 0.0
          %2751 = vmatprep.subr.mxu0 0.0
          %2752 = vmatpush1.msra.mxu0 0.0
          %2753 = vmatprep.subr.mxu0 0.0
          %2754 = vmatpush1.msra.mxu0 0.0
          %2755 = vmatprep.subr.mxu0 0.0
          %2756 = vmatpush1.msra.mxu0 0.0
          %2757 = vmatprep.subr.mxu0 0.0
          %2758 = vmatpush1.msra.mxu0 0.0
          %2759 = vmatprep.subr.mxu0 0.0
          %2760 = vmatpush1.msra.mxu0 0.0
          %2761 = vmatprep.subr.mxu0 0.0
          %2762 = vmatpush1.msra.mxu0 0.0
          %2763 = vmatprep.subr.mxu0 %v2723
          %2764 = vmatpush1.msra.mxu0 %v2722
          %2765 = vmatprep.subr.mxu0 %v2715
          %2766 = vmatpush1.msra.mxu0 %v2714
          %2767 = vmatprep.subr.mxu0 0.0
          %2768 = vmatpush2.msra.mxu0 0.0
          %2769 = vmatprep.subr.mxu0 0.0
          %2770 = vmatpush2.msra.mxu0 0.0
          %2771 = vmatprep.subr.mxu0 0.0
          %2772 = vmatpush2.msra.mxu0 0.0
          %2773 = vmatprep.subr.mxu0 0.0
          %2774 = vmatpush2.msra.mxu0 0.0
          %2775 = vmatprep.subr.mxu0 0.0
          %2776 = vmatpush2.msra.mxu0 0.0
          %2777 = vmatprep.subr.mxu0 0.0
          %2778 = vmatpush2.msra.mxu0 0.0
          %2779 = vmatprep.subr.mxu0 0.0
          %2780 = vmatpush2.msra.mxu0 0.0
          %2781 = vmatprep.subr.mxu0 0.0
          %2782 = vmatpush2.msra.mxu0 0.0
          %2783 = vmatprep.subr.mxu0 0.0
          %2784 = vmatpush2.msra.mxu0 0.0
          %2785 = vmatprep.subr.mxu0 0.0
          %2786 = vmatpush2.msra.mxu0 0.0
          %2787 = vmatprep.subr.mxu0 0.0
          %2788 = vmatpush2.msra.mxu0 0.0
          %2789 = vmatprep.subr.mxu0 0.0
          %2790 = vmatpush2.msra.mxu0 0.0
          %2791 = vmatprep.subr.mxu0 0.0
          %2792 = vmatpush2.msra.mxu0 0.0
          %2793 = vmatprep.subr.mxu0 0.0
          %2794 = vmatpush2.msra.mxu0 0.0
          %2795 = vmatprep.subr.mxu0 0.0
          %2796 = vmatpush2.msra.mxu0 0.0
          %2797 = vmatprep.subr.mxu0 0.0
          %2798 = vmatpush2.msra.mxu0 0.0
          %2799 = vmatprep.mubr.f32.mxu0 0.0
          %2800 = vmatmul.mubr.f32.gmra.mxu0 %v2733
          %v2801 = vpop.f32.mrf.mxu0
          %v2802 = vadd.f32 0.0, %v2801
          %v2803 = vpop.f32.mrf.mxu0
          %v2804 = vadd.f32 0.0, %v2803
          %2805 = vdwg.mxu0
          %2806 = vmatprep.subr.mxu0 0.0
          %2807 = vmatpush1.msra.mxu0 0.0
          %2808 = vmatprep.subr.mxu0 0.0
          %2809 = vmatpush1.msra.mxu0 0.0
          %2810 = vmatprep.subr.mxu0 0.0
          %2811 = vmatpush1.msra.mxu0 0.0
          %2812 = vmatprep.subr.mxu0 0.0
          %2813 = vmatpush1.msra.mxu0 0.0
          %2814 = vmatprep.subr.mxu0 0.0
          %2815 = vmatpush1.msra.mxu0 0.0
          %2816 = vmatprep.subr.mxu0 0.0
          %2817 = vmatpush1.msra.mxu0 0.0
          %2818 = vmatprep.subr.mxu0 0.0
          %2819 = vmatpush1.msra.mxu0 0.0
          %2820 = vmatprep.subr.mxu0 0.0
          %2821 = vmatpush1.msra.mxu0 0.0
          %2822 = vmatprep.subr.mxu0 0.0
          %2823 = vmatpush1.msra.mxu0 0.0
          %2824 = vmatprep.subr.mxu0 0.0
          %2825 = vmatpush1.msra.mxu0 0.0
          %2826 = vmatprep.subr.mxu0 0.0
          %2827 = vmatpush1.msra.mxu0 0.0
          %2828 = vmatprep.subr.mxu0 0.0
          %2829 = vmatpush1.msra.mxu0 0.0
          %2830 = vmatprep.subr.mxu0 0.0
          %2831 = vmatpush1.msra.mxu0 0.0
          %2832 = vmatprep.subr.mxu0 0.0
          %2833 = vmatpush1.msra.mxu0 0.0
          %2834 = vmatprep.subr.mxu0 %v2725
          %2835 = vmatpush1.msra.mxu0 %v2724
          %2836 = vmatprep.subr.mxu0 %v2717
          %2837 = vmatpush1.msra.mxu0 %v2716
          %2838 = vmatprep.subr.mxu0 0.0
          %2839 = vmatpush2.msra.mxu0 0.0
          %2840 = vmatprep.subr.mxu0 0.0
          %2841 = vmatpush2.msra.mxu0 0.0
          %2842 = vmatprep.subr.mxu0 0.0
          %2843 = vmatpush2.msra.mxu0 0.0
          %2844 = vmatprep.subr.mxu0 0.0
          %2845 = vmatpush2.msra.mxu0 0.0
          %2846 = vmatprep.subr.mxu0 0.0
          %2847 = vmatpush2.msra.mxu0 0.0
          %2848 = vmatprep.subr.mxu0 0.0
          %2849 = vmatpush2.msra.mxu0 0.0
          %2850 = vmatprep.subr.mxu0 0.0
          %2851 = vmatpush2.msra.mxu0 0.0
          %2852 = vmatprep.subr.mxu0 0.0
          %2853 = vmatpush2.msra.mxu0 0.0
          %2854 = vmatprep.subr.mxu0 0.0
          %2855 = vmatpush2.msra.mxu0 0.0
          %2856 = vmatprep.subr.mxu0 0.0
          %2857 = vmatpush2.msra.mxu0 0.0
          %2858 = vmatprep.subr.mxu0 0.0
          %2859 = vmatpush2.msra.mxu0 0.0
          %2860 = vmatprep.subr.mxu0 0.0
          %2861 = vmatpush2.msra.mxu0 0.0
          %2862 = vmatprep.subr.mxu0 0.0
          %2863 = vmatpush2.msra.mxu0 0.0
          %2864 = vmatprep.subr.mxu0 0.0
          %2865 = vmatpush2.msra.mxu0 0.0
          %2866 = vmatprep.subr.mxu0 0.0
          %2867 = vmatpush2.msra.mxu0 0.0
          %2868 = vmatprep.subr.mxu0 0.0
          %2869 = vmatpush2.msra.mxu0 0.0
          %2870 = vmatprep.mubr.f32.mxu0 0.0
          %2871 = vmatmul.mubr.f32.gmra.mxu0 %v2733
          %v2872 = vpop.f32.mrf.mxu0
          %v2873 = vadd.f32 0.0, %v2872
          %v2874 = vpop.f32.mrf.mxu0
          %v2875 = vadd.f32 0.0, %v2874
          %2876 = vdwg.mxu0
          %2877 = vmatprep.subr.mxu0 0.0
          %2878 = vmatpush1.msra.mxu0 0.0
          %2879 = vmatprep.subr.mxu0 0.0
          %2880 = vmatpush1.msra.mxu0 0.0
          %2881 = vmatprep.subr.mxu0 0.0
          %2882 = vmatpush1.msra.mxu0 0.0
          %2883 = vmatprep.subr.mxu0 0.0
          %2884 = vmatpush1.msra.mxu0 0.0
          %2885 = vmatprep.subr.mxu0 0.0
          %2886 = vmatpush1.msra.mxu0 0.0
          %2887 = vmatprep.subr.mxu0 0.0
          %2888 = vmatpush1.msra.mxu0 0.0
          %2889 = vmatprep.subr.mxu0 0.0
          %2890 = vmatpush1.msra.mxu0 0.0
          %2891 = vmatprep.subr.mxu0 0.0
          %2892 = vmatpush1.msra.mxu0 0.0
          %2893 = vmatprep.subr.mxu0 0.0
          %2894 = vmatpush1.msra.mxu0 0.0
          %2895 = vmatprep.subr.mxu0 0.0
          %2896 = vmatpush1.msra.mxu0 0.0
          %2897 = vmatprep.subr.mxu0 0.0
          %2898 = vmatpush1.msra.mxu0 0.0
          %2899 = vmatprep.subr.mxu0 0.0
          %2900 = vmatpush1.msra.mxu0 0.0
          %2901 = vmatprep.subr.mxu0 0.0
          %2902 = vmatpush1.msra.mxu0 0.0
          %2903 = vmatprep.subr.mxu0 0.0
          %2904 = vmatpush1.msra.mxu0 0.0
          %2905 = vmatprep.subr.mxu0 %v2727
          %2906 = vmatpush1.msra.mxu0 %v2726
          %2907 = vmatprep.subr.mxu0 %v2719
          %2908 = vmatpush1.msra.mxu0 %v2718
          %2909 = vmatprep.subr.mxu0 0.0
          %2910 = vmatpush2.msra.mxu0 0.0
          %2911 = vmatprep.subr.mxu0 0.0
          %2912 = vmatpush2.msra.mxu0 0.0
          %2913 = vmatprep.subr.mxu0 0.0
          %2914 = vmatpush2.msra.mxu0 0.0
          %2915 = vmatprep.subr.mxu0 0.0
          %2916 = vmatpush2.msra.mxu0 0.0
          %2917 = vmatprep.subr.mxu0 0.0
          %2918 = vmatpush2.msra.mxu0 0.0
          %2919 = vmatprep.subr.mxu0 0.0
          %2920 = vmatpush2.msra.mxu0 0.0
          %2921 = vmatprep.subr.mxu0 0.0
          %2922 = vmatpush2.msra.mxu0 0.0
          %2923 = vmatprep.subr.mxu0 0.0
          %2924 = vmatpush2.msra.mxu0 0.0
          %2925 = vmatprep.subr.mxu0 0.0
          %2926 = vmatpush2.msra.mxu0 0.0
          %2927 = vmatprep.subr.mxu0 0.0
          %2928 = vmatpush2.msra.mxu0 0.0
          %2929 = vmatprep.subr.mxu0 0.0
          %2930 = vmatpush2.msra.mxu0 0.0
          %2931 = vmatprep.subr.mxu0 0.0
          %2932 = vmatpush2.msra.mxu0 0.0
          %2933 = vmatprep.subr.mxu0 0.0
          %2934 = vmatpush2.msra.mxu0 0.0
          %2935 = vmatprep.subr.mxu0 0.0
          %2936 = vmatpush2.msra.mxu0 0.0
          %2937 = vmatprep.subr.mxu0 0.0
          %2938 = vmatpush2.msra.mxu0 0.0
          %2939 = vmatprep.subr.mxu0 0.0
          %2940 = vmatpush2.msra.mxu0 0.0
          %2941 = vmatprep.mubr.f32.mxu0 0.0
          %2942 = vmatmul.mubr.f32.gmra.mxu0 %v2733
          %v2943 = vpop.f32.mrf.mxu0
          %v2944 = vadd.f32 0.0, %v2943
          %v2945 = vpop.f32.mrf.mxu0
          %v2946 = vadd.f32 0.0, %v2945
          %2947 = vdwg.mxu0
          %2948 = vmatprep.subr.mxu0 0.0
          %2949 = vmatpush1.msra.mxu0 0.0
          %2950 = vmatprep.subr.mxu0 0.0
          %2951 = vmatpush1.msra.mxu0 0.0
          %2952 = vmatprep.subr.mxu0 0.0
          %2953 = vmatpush1.msra.mxu0 0.0
          %2954 = vmatprep.subr.mxu0 0.0
          %2955 = vmatpush1.msra.mxu0 0.0
          %2956 = vmatprep.subr.mxu0 0.0
          %2957 = vmatpush1.msra.mxu0 0.0
          %2958 = vmatprep.subr.mxu0 0.0
          %2959 = vmatpush1.msra.mxu0 0.0
          %2960 = vmatprep.subr.mxu0 0.0
          %2961 = vmatpush1.msra.mxu0 0.0
          %2962 = vmatprep.subr.mxu0 0.0
          %2963 = vmatpush1.msra.mxu0 0.0
          %2964 = vmatprep.subr.mxu0 0.0
          %2965 = vmatpush1.msra.mxu0 0.0
          %2966 = vmatprep.subr.mxu0 0.0
          %2967 = vmatpush1.msra.mxu0 0.0
          %2968 = vmatprep.subr.mxu0 0.0
          %2969 = vmatpush1.msra.mxu0 0.0
          %2970 = vmatprep.subr.mxu0 0.0
          %2971 = vmatpush1.msra.mxu0 0.0
          %2972 = vmatprep.subr.mxu0 0.0
          %2973 = vmatpush1.msra.mxu0 0.0
          %2974 = vmatprep.subr.mxu0 0.0
          %2975 = vmatpush1.msra.mxu0 0.0
          %2976 = vmatprep.subr.mxu0 %v2729
          %2977 = vmatpush1.msra.mxu0 %v2728
          %2978 = vmatprep.subr.mxu0 %v2721
          %2979 = vmatpush1.msra.mxu0 %v2720
          %2980 = vmatprep.subr.mxu0 0.0
          %2981 = vmatpush2.msra.mxu0 0.0
          %2982 = vmatprep.subr.mxu0 0.0
          %2983 = vmatpush2.msra.mxu0 0.0
          %2984 = vmatprep.subr.mxu0 0.0
          %2985 = vmatpush2.msra.mxu0 0.0
          %2986 = vmatprep.subr.mxu0 0.0
          %2987 = vmatpush2.msra.mxu0 0.0
          %2988 = vmatprep.subr.mxu0 0.0
          %2989 = vmatpush2.msra.mxu0 0.0
          %2990 = vmatprep.subr.mxu0 0.0
          %2991 = vmatpush2.msra.mxu0 0.0
          %2992 = vmatprep.subr.mxu0 0.0
          %2993 = vmatpush2.msra.mxu0 0.0
          %2994 = vmatprep.subr.mxu0 0.0
          %2995 = vmatpush2.msra.mxu0 0.0
          %2996 = vmatprep.subr.mxu0 0.0
          %2997 = vmatpush2.msra.mxu0 0.0
          %2998 = vmatprep.subr.mxu0 0.0
          %2999 = vmatpush2.msra.mxu0 0.0
          %3000 = vmatprep.subr.mxu0 0.0
          %3001 = vmatpush2.msra.mxu0 0.0
          %3002 = vmatprep.subr.mxu0 0.0
          %3003 = vmatpush2.msra.mxu0 0.0
          %3004 = vmatprep.subr.mxu0 0.0
          %3005 = vmatpush2.msra.mxu0 0.0
          %3006 = vmatprep.subr.mxu0 0.0
          %3007 = vmatpush2.msra.mxu0 0.0
          %3008 = vmatprep.subr.mxu0 0.0
          %3009 = vmatpush2.msra.mxu0 0.0
          %3010 = vmatprep.subr.mxu0 0.0
          %3011 = vmatpush2.msra.mxu0 0.0
          %3012 = vmatprep.mubr.f32.mxu0 0.0
          %3013 = vmatmul.mubr.f32.gmra.mxu0 %v2733
          %v3014 = vpop.f32.mrf.mxu0
          %v3015 = vadd.f32 0.0, %v3014
          %v3016 = vpop.f32.mrf.mxu0
          %v3017 = vadd.f32 0.0, %v3016
          %3018 = vdwg.mxu0
          %s3019 = scalar_lea.vmem %s9, 321
          %v3020 = vld [vmem:[%s3019] ss:$8 sm:$0x3]
          %v3021 = vpack.c.bf16 %v2802, %v2802
          %v3022 = vpack.c.bf16 %v2804, %v2804
          %v3023 = vpack.c.bf16 %v2873, %v2873
          %v3024 = vpack.c.bf16 %v2875, %v2875
          %v3025 = vpack.c.bf16 %v2944, %v2944
          %v3026 = vpack.c.bf16 %v2946, %v2946
          %v3027 = vpack.c.bf16 %v3015, %v3015
          %v3028 = vpack.c.bf16 %v3017, %v3017
          %v3029 = vld [vmem:[%s8] sm:$0xff]
          %v3030 = vld [vmem:[%s8 + $0x8] sm:$0xff]
          %v3031 = vld [vmem:[%s8 + $0x10] sm:$0xff]
          %v3032 = vld [vmem:[%s8 + $0x18] sm:$0xff]
          %v3033 = vld [vmem:[%s8 + $0x20] sm:$0xff]
          %v3034 = vld [vmem:[%s8 + $0x28] sm:$0xff]
          %v3035 = vld [vmem:[%s8 + $0x30] sm:$0xff]
          %v3036 = vld [vmem:[%s8 + $0x38] sm:$0xff]
          %v3037 = vld [vmem:[%s8 + $0x40] sm:$0xff]
          %v3038 = vld [vmem:[%s8 + $0x48] sm:$0xff]
          %v3039 = vld [vmem:[%s8 + $0x50] sm:$0xff]
          %v3040 = vld [vmem:[%s8 + $0x58] sm:$0xff]
          %v3041 = vld [vmem:[%s8 + $0x60] sm:$0xff]
          %v3042 = vld [vmem:[%s8 + $0x68] sm:$0xff]
          %v3043 = vld [vmem:[%s8 + $0x70] sm:$0xff]
          %v3044 = vld [vmem:[%s8 + $0x78] sm:$0xff]
          %v3045 = vld [vmem:[%s8 + $0x80] sm:$0xff]
          %v3046 = vld [vmem:[%s8 + $0x88] sm:$0xff]
          %v3047 = vld [vmem:[%s8 + $0x90] sm:$0xff]
          %v3048 = vld [vmem:[%s8 + $0x98] sm:$0xff]
          %v3049 = vld [vmem:[%s8 + $0xa0] sm:$0xff]
          %v3050 = vld [vmem:[%s8 + $0xa8] sm:$0xff]
          %v3051 = vld [vmem:[%s8 + $0xb0] sm:$0xff]
          %v3052 = vld [vmem:[%s8 + $0xb8] sm:$0xff]
          %v3053 = vld [vmem:[%s8 + $0xc0] sm:$0xff]
          %v3054 = vld [vmem:[%s8 + $0xc8] sm:$0xff]
          %v3055 = vld [vmem:[%s8 + $0xd0] sm:$0xff]
          %v3056 = vld [vmem:[%s8 + $0xd8] sm:$0xff]
          %v3057 = vld [vmem:[%s8 + $0xe0] sm:$0xff]
          %v3058 = vld [vmem:[%s8 + $0xe8] sm:$0xff]
          %v3059 = vld [vmem:[%s8 + $0xf0] sm:$0xff]
          %v3060 = vld [vmem:[%s8 + $0xf8] sm:$0xff]
          %v3061 = vld [vmem:[%s8 + $0x100] sm:$0xff]
          %v3062 = vld [vmem:[%s8 + $0x108] sm:$0xff]
          %v3063 = vld [vmem:[%s8 + $0x110] sm:$0xff]
          %v3064 = vld [vmem:[%s8 + $0x118] sm:$0xff]
          %v3065 = vld [vmem:[%s8 + $0x120] sm:$0xff]
          %v3066 = vld [vmem:[%s8 + $0x128] sm:$0xff]
          %v3067 = vld [vmem:[%s8 + $0x130] sm:$0xff]
          %v3068 = vld [vmem:[%s8 + $0x138] sm:$0xff]
          %v3069 = vld [vmem:[%s8 + $0x140] sm:$0xff]
          %v3070 = vld [vmem:[%s8 + $0x148] sm:$0xff]
          %v3071 = vld [vmem:[%s8 + $0x150] sm:$0xff]
          %v3072 = vld [vmem:[%s8 + $0x158] sm:$0xff]
          %v3073 = vld [vmem:[%s8 + $0x160] sm:$0xff]
          %v3074 = vld [vmem:[%s8 + $0x168] sm:$0xff]
          %v3075 = vld [vmem:[%s8 + $0x170] sm:$0xff]
          %v3076 = vld [vmem:[%s8 + $0x178] sm:$0xff]
          %v3077 = vld [vmem:[%s8 + $0x180] sm:$0xff]
          %v3078 = vld [vmem:[%s8 + $0x188] sm:$0xff]
          %v3079 = vld [vmem:[%s8 + $0x190] sm:$0xff]
          %v3080 = vld [vmem:[%s8 + $0x198] sm:$0xff]
          %v3081 = vld [vmem:[%s8 + $0x1a0] sm:$0xff]
          %v3082 = vld [vmem:[%s8 + $0x1a8] sm:$0xff]
          %v3083 = vld [vmem:[%s8 + $0x1b0] sm:$0xff]
          %v3084 = vld [vmem:[%s8 + $0x1b8] sm:$0xff]
          %v3085 = vld [vmem:[%s8 + $0x1c0] sm:$0xff]
          %v3086 = vld [vmem:[%s8 + $0x1c8] sm:$0xff]
          %v3087 = vld [vmem:[%s8 + $0x1d0] sm:$0xff]
          %v3088 = vld [vmem:[%s8 + $0x1d8] sm:$0xff]
          %v3089 = vld [vmem:[%s8 + $0x1e0] sm:$0xff]
          %v3090 = vld [vmem:[%s8 + $0x1e8] sm:$0xff]
          %v3091 = vld [vmem:[%s8 + $0x1f0] sm:$0xff]
          %v3092 = vld [vmem:[%s8 + $0x1f8] sm:$0xff]
          %v3093 = vld [vmem:[%s8 + $0x200] sm:$0xff]
          %v3094 = vld [vmem:[%s8 + $0x208] sm:$0xff]
          %v3095 = vld [vmem:[%s8 + $0x210] sm:$0xff]
          %v3096 = vld [vmem:[%s8 + $0x218] sm:$0xff]
          %v3097 = vld [vmem:[%s8 + $0x220] sm:$0xff]
          %v3098 = vld [vmem:[%s8 + $0x228] sm:$0xff]
          %v3099 = vld [vmem:[%s8 + $0x230] sm:$0xff]
          %v3100 = vld [vmem:[%s8 + $0x238] sm:$0xff]
          %v3101 = vld [vmem:[%s8 + $0x240] sm:$0xff]
          %v3102 = vld [vmem:[%s8 + $0x248] sm:$0xff]
          %v3103 = vld [vmem:[%s8 + $0x250] sm:$0xff]
          %v3104 = vld [vmem:[%s8 + $0x258] sm:$0xff]
          %v3105 = vld [vmem:[%s8 + $0x260] sm:$0xff]
          %v3106 = vld [vmem:[%s8 + $0x268] sm:$0xff]
          %v3107 = vld [vmem:[%s8 + $0x270] sm:$0xff]
          %v3108 = vld [vmem:[%s8 + $0x278] sm:$0xff]
          %v3109 = vld [vmem:[%s8 + $0x280] sm:$0xff]
          %v3110 = vld [vmem:[%s8 + $0x288] sm:$0xff]
          %v3111 = vld [vmem:[%s8 + $0x290] sm:$0xff]
          %v3112 = vld [vmem:[%s8 + $0x298] sm:$0xff]
          %v3113 = vld [vmem:[%s8 + $0x2a0] sm:$0xff]
          %v3114 = vld [vmem:[%s8 + $0x2a8] sm:$0xff]
          %v3115 = vld [vmem:[%s8 + $0x2b0] sm:$0xff]
          %v3116 = vld [vmem:[%s8 + $0x2b8] sm:$0xff]
          %v3117 = vld [vmem:[%s8 + $0x2c0] sm:$0xff]
          %v3118 = vld [vmem:[%s8 + $0x2c8] sm:$0xff]
          %v3119 = vld [vmem:[%s8 + $0x2d0] sm:$0xff]
          %v3120 = vld [vmem:[%s8 + $0x2d8] sm:$0xff]
          %v3121 = vld [vmem:[%s8 + $0x2e0] sm:$0xff]
          %v3122 = vld [vmem:[%s8 + $0x2e8] sm:$0xff]
          %v3123 = vld [vmem:[%s8 + $0x2f0] sm:$0xff]
          %v3124 = vld [vmem:[%s8 + $0x2f8] sm:$0xff]
          %v3125 = vld [vmem:[%s8 + $0x300] sm:$0xff]
          %v3126 = vld [vmem:[%s8 + $0x308] sm:$0xff]
          %v3127 = vld [vmem:[%s8 + $0x310] sm:$0xff]
          %v3128 = vld [vmem:[%s8 + $0x318] sm:$0xff]
          %v3129 = vld [vmem:[%s8 + $0x320] sm:$0xff]
          %v3130 = vld [vmem:[%s8 + $0x328] sm:$0xff]
          %v3131 = vld [vmem:[%s8 + $0x330] sm:$0xff]
          %v3132 = vld [vmem:[%s8 + $0x338] sm:$0xff]
          %v3133 = vld [vmem:[%s8 + $0x340] sm:$0xff]
          %v3134 = vld [vmem:[%s8 + $0x348] sm:$0xff]
          %v3135 = vld [vmem:[%s8 + $0x350] sm:$0xff]
          %v3136 = vld [vmem:[%s8 + $0x358] sm:$0xff]
          %v3137 = vld [vmem:[%s8 + $0x360] sm:$0xff]
          %v3138 = vld [vmem:[%s8 + $0x368] sm:$0xff]
          %v3139 = vld [vmem:[%s8 + $0x370] sm:$0xff]
          %v3140 = vld [vmem:[%s8 + $0x378] sm:$0xff]
          %v3141 = vld [vmem:[%s8 + $0x380] sm:$0xff]
          %v3142 = vld [vmem:[%s8 + $0x388] sm:$0xff]
          %v3143 = vld [vmem:[%s8 + $0x390] sm:$0xff]
          %v3144 = vld [vmem:[%s8 + $0x398] sm:$0xff]
          %v3145 = vld [vmem:[%s8 + $0x3a0] sm:$0xff]
          %v3146 = vld [vmem:[%s8 + $0x3a8] sm:$0xff]
          %v3147 = vld [vmem:[%s8 + $0x3b0] sm:$0xff]
          %v3148 = vld [vmem:[%s8 + $0x3b8] sm:$0xff]
          %v3149 = vld [vmem:[%s8 + $0x3c0] sm:$0xff]
          %v3150 = vld [vmem:[%s8 + $0x3c8] sm:$0xff]
          %v3151 = vld [vmem:[%s8 + $0x3d0] sm:$0xff]
          %v3152 = vld [vmem:[%s8 + $0x3d8] sm:$0xff]
          %v3153 = vld [vmem:[%s8 + $0x3e0] sm:$0xff]
          %v3154 = vld [vmem:[%s8 + $0x3e8] sm:$0xff]
          %v3155 = vld [vmem:[%s8 + $0x3f0] sm:$0xff]
          %v3156 = vld [vmem:[%s8 + $0x3f8] sm:$0xff]
          %v3158 = vlaneseq
          %v3159 = vshrl.u32 %v3158, 7
          %v3160 = vsub.s32 0, %v3159
          %v3161 = vrot.slane %v3020, %v3160
          %v3162 = vlaneseq
          %v3163 = vshrl.u32 %v3162, 7
          %v3164 = vsub.s32 1, %v3163
          %v3165 = vrot.slane %v3020, %v3164
          %v3296 = vunpack.c.l.b16 %v3029
          %v3297 = vunpack.c.h.b16 %v3029
          %v3298 = vunpack.c.l.b16 %v3030
          %v3299 = vunpack.c.h.b16 %v3030
          %v3300 = vunpack.c.l.b16 %v3031
          %v3301 = vunpack.c.h.b16 %v3031
          %v3302 = vunpack.c.l.b16 %v3032
          %v3303 = vunpack.c.h.b16 %v3032
          %v3304 = vunpack.c.l.b16 %v3033
          %v3305 = vunpack.c.h.b16 %v3033
          %v3306 = vunpack.c.l.b16 %v3034
          %v3307 = vunpack.c.h.b16 %v3034
          %v3308 = vunpack.c.l.b16 %v3035
          %v3309 = vunpack.c.h.b16 %v3035
          %v3310 = vunpack.c.l.b16 %v3036
          %v3311 = vunpack.c.h.b16 %v3036
          %v3312 = vunpack.c.l.b16 %v3037
          %v3313 = vunpack.c.h.b16 %v3037
          %v3314 = vunpack.c.l.b16 %v3038
          %v3315 = vunpack.c.h.b16 %v3038
          %v3316 = vunpack.c.l.b16 %v3039
          %v3317 = vunpack.c.h.b16 %v3039
          %v3318 = vunpack.c.l.b16 %v3040
          %v3319 = vunpack.c.h.b16 %v3040
          %v3320 = vunpack.c.l.b16 %v3041
          %v3321 = vunpack.c.h.b16 %v3041
          %v3322 = vunpack.c.l.b16 %v3042
          %v3323 = vunpack.c.h.b16 %v3042
          %v3324 = vunpack.c.l.b16 %v3043
          %v3325 = vunpack.c.h.b16 %v3043
          %v3326 = vunpack.c.l.b16 %v3044
          %v3327 = vunpack.c.h.b16 %v3044
          %v3328 = vunpack.c.l.b16 %v3045
          %v3329 = vunpack.c.h.b16 %v3045
          %v3330 = vunpack.c.l.b16 %v3046
          %v3331 = vunpack.c.h.b16 %v3046
          %v3332 = vunpack.c.l.b16 %v3047
          %v3333 = vunpack.c.h.b16 %v3047
          %v3334 = vunpack.c.l.b16 %v3048
          %v3335 = vunpack.c.h.b16 %v3048
          %v3336 = vunpack.c.l.b16 %v3049
          %v3337 = vunpack.c.h.b16 %v3049
          %v3338 = vunpack.c.l.b16 %v3050
          %v3339 = vunpack.c.h.b16 %v3050
          %v3340 = vunpack.c.l.b16 %v3051
          %v3341 = vunpack.c.h.b16 %v3051
          %v3342 = vunpack.c.l.b16 %v3052
          %v3343 = vunpack.c.h.b16 %v3052
          %v3344 = vunpack.c.l.b16 %v3053
          %v3345 = vunpack.c.h.b16 %v3053
          %v3346 = vunpack.c.l.b16 %v3054
          %v3347 = vunpack.c.h.b16 %v3054
          %v3348 = vunpack.c.l.b16 %v3055
          %v3349 = vunpack.c.h.b16 %v3055
          %v3350 = vunpack.c.l.b16 %v3056
          %v3351 = vunpack.c.h.b16 %v3056
          %v3352 = vunpack.c.l.b16 %v3057
          %v3353 = vunpack.c.h.b16 %v3057
          %v3354 = vunpack.c.l.b16 %v3058
          %v3355 = vunpack.c.h.b16 %v3058
          %v3356 = vunpack.c.l.b16 %v3059
          %v3357 = vunpack.c.h.b16 %v3059
          %v3358 = vunpack.c.l.b16 %v3060
          %v3359 = vunpack.c.h.b16 %v3060
          %v3360 = vunpack.c.l.b16 %v3061
          %v3361 = vunpack.c.h.b16 %v3061
          %v3362 = vunpack.c.l.b16 %v3062
          %v3363 = vunpack.c.h.b16 %v3062
          %v3364 = vunpack.c.l.b16 %v3063
          %v3365 = vunpack.c.h.b16 %v3063
          %v3366 = vunpack.c.l.b16 %v3064
          %v3367 = vunpack.c.h.b16 %v3064
          %v3368 = vunpack.c.l.b16 %v3065
          %v3369 = vunpack.c.h.b16 %v3065
          %v3370 = vunpack.c.l.b16 %v3066
          %v3371 = vunpack.c.h.b16 %v3066
          %v3372 = vunpack.c.l.b16 %v3067
          %v3373 = vunpack.c.h.b16 %v3067
          %v3374 = vunpack.c.l.b16 %v3068
          %v3375 = vunpack.c.h.b16 %v3068
          %v3376 = vunpack.c.l.b16 %v3069
          %v3377 = vunpack.c.h.b16 %v3069
          %v3378 = vunpack.c.l.b16 %v3070
          %v3379 = vunpack.c.h.b16 %v3070
          %v3380 = vunpack.c.l.b16 %v3071
          %v3381 = vunpack.c.h.b16 %v3071
          %v3382 = vunpack.c.l.b16 %v3072
          %v3383 = vunpack.c.h.b16 %v3072
          %v3384 = vunpack.c.l.b16 %v3073
          %v3385 = vunpack.c.h.b16 %v3073
          %v3386 = vunpack.c.l.b16 %v3074
          %v3387 = vunpack.c.h.b16 %v3074
          %v3388 = vunpack.c.l.b16 %v3075
          %v3389 = vunpack.c.h.b16 %v3075
          %v3390 = vunpack.c.l.b16 %v3076
          %v3391 = vunpack.c.h.b16 %v3076
          %v3392 = vunpack.c.l.b16 %v3077
          %v3393 = vunpack.c.h.b16 %v3077
          %v3394 = vunpack.c.l.b16 %v3078
          %v3395 = vunpack.c.h.b16 %v3078
          %v3396 = vunpack.c.l.b16 %v3079
          %v3397 = vunpack.c.h.b16 %v3079
          %v3398 = vunpack.c.l.b16 %v3080
          %v3399 = vunpack.c.h.b16 %v3080
          %v3400 = vunpack.c.l.b16 %v3081
          %v3401 = vunpack.c.h.b16 %v3081
          %v3402 = vunpack.c.l.b16 %v3082
          %v3403 = vunpack.c.h.b16 %v3082
          %v3404 = vunpack.c.l.b16 %v3083
          %v3405 = vunpack.c.h.b16 %v3083
          %v3406 = vunpack.c.l.b16 %v3084
          %v3407 = vunpack.c.h.b16 %v3084
          %v3408 = vunpack.c.l.b16 %v3085
          %v3409 = vunpack.c.h.b16 %v3085
          %v3410 = vunpack.c.l.b16 %v3086
          %v3411 = vunpack.c.h.b16 %v3086
          %v3412 = vunpack.c.l.b16 %v3087
          %v3413 = vunpack.c.h.b16 %v3087
          %v3414 = vunpack.c.l.b16 %v3088
          %v3415 = vunpack.c.h.b16 %v3088
          %v3416 = vunpack.c.l.b16 %v3089
          %v3417 = vunpack.c.h.b16 %v3089
          %v3418 = vunpack.c.l.b16 %v3090
          %v3419 = vunpack.c.h.b16 %v3090
          %v3420 = vunpack.c.l.b16 %v3091
          %v3421 = vunpack.c.h.b16 %v3091
          %v3422 = vunpack.c.l.b16 %v3092
          %v3423 = vunpack.c.h.b16 %v3092
          %v3424 = vunpack.c.l.b16 %v3093
          %v3425 = vunpack.c.h.b16 %v3093
          %v3426 = vunpack.c.l.b16 %v3094
          %v3427 = vunpack.c.h.b16 %v3094
          %v3428 = vunpack.c.l.b16 %v3095
          %v3429 = vunpack.c.h.b16 %v3095
          %v3430 = vunpack.c.l.b16 %v3096
          %v3431 = vunpack.c.h.b16 %v3096
          %v3432 = vunpack.c.l.b16 %v3097
          %v3433 = vunpack.c.h.b16 %v3097
          %v3434 = vunpack.c.l.b16 %v3098
          %v3435 = vunpack.c.h.b16 %v3098
          %v3436 = vunpack.c.l.b16 %v3099
          %v3437 = vunpack.c.h.b16 %v3099
          %v3438 = vunpack.c.l.b16 %v3100
          %v3439 = vunpack.c.h.b16 %v3100
          %v3440 = vunpack.c.l.b16 %v3101
          %v3441 = vunpack.c.h.b16 %v3101
          %v3442 = vunpack.c.l.b16 %v3102
          %v3443 = vunpack.c.h.b16 %v3102
          %v3444 = vunpack.c.l.b16 %v3103
          %v3445 = vunpack.c.h.b16 %v3103
          %v3446 = vunpack.c.l.b16 %v3104
          %v3447 = vunpack.c.h.b16 %v3104
          %v3448 = vunpack.c.l.b16 %v3105
          %v3449 = vunpack.c.h.b16 %v3105
          %v3450 = vunpack.c.l.b16 %v3106
          %v3451 = vunpack.c.h.b16 %v3106
          %v3452 = vunpack.c.l.b16 %v3107
          %v3453 = vunpack.c.h.b16 %v3107
          %v3454 = vunpack.c.l.b16 %v3108
          %v3455 = vunpack.c.h.b16 %v3108
          %v3456 = vunpack.c.l.b16 %v3109
          %v3457 = vunpack.c.h.b16 %v3109
          %v3458 = vunpack.c.l.b16 %v3110
          %v3459 = vunpack.c.h.b16 %v3110
          %v3460 = vunpack.c.l.b16 %v3111
          %v3461 = vunpack.c.h.b16 %v3111
          %v3462 = vunpack.c.l.b16 %v3112
          %v3463 = vunpack.c.h.b16 %v3112
          %v3464 = vunpack.c.l.b16 %v3113
          %v3465 = vunpack.c.h.b16 %v3113
          %v3466 = vunpack.c.l.b16 %v3114
          %v3467 = vunpack.c.h.b16 %v3114
          %v3468 = vunpack.c.l.b16 %v3115
          %v3469 = vunpack.c.h.b16 %v3115
          %v3470 = vunpack.c.l.b16 %v3116
          %v3471 = vunpack.c.h.b16 %v3116
          %v3472 = vunpack.c.l.b16 %v3117
          %v3473 = vunpack.c.h.b16 %v3117
          %v3474 = vunpack.c.l.b16 %v3118
          %v3475 = vunpack.c.h.b16 %v3118
          %v3476 = vunpack.c.l.b16 %v3119
          %v3477 = vunpack.c.h.b16 %v3119
          %v3478 = vunpack.c.l.b16 %v3120
          %v3479 = vunpack.c.h.b16 %v3120
          %v3480 = vunpack.c.l.b16 %v3121
          %v3481 = vunpack.c.h.b16 %v3121
          %v3482 = vunpack.c.l.b16 %v3122
          %v3483 = vunpack.c.h.b16 %v3122
          %v3484 = vunpack.c.l.b16 %v3123
          %v3485 = vunpack.c.h.b16 %v3123
          %v3486 = vunpack.c.l.b16 %v3124
          %v3487 = vunpack.c.h.b16 %v3124
          %v3488 = vunpack.c.l.b16 %v3125
          %v3489 = vunpack.c.h.b16 %v3125
          %v3490 = vunpack.c.l.b16 %v3126
          %v3491 = vunpack.c.h.b16 %v3126
          %v3492 = vunpack.c.l.b16 %v3127
          %v3493 = vunpack.c.h.b16 %v3127
          %v3494 = vunpack.c.l.b16 %v3128
          %v3495 = vunpack.c.h.b16 %v3128
          %v3496 = vunpack.c.l.b16 %v3129
          %v3497 = vunpack.c.h.b16 %v3129
          %v3498 = vunpack.c.l.b16 %v3130
          %v3499 = vunpack.c.h.b16 %v3130
          %v3500 = vunpack.c.l.b16 %v3131
          %v3501 = vunpack.c.h.b16 %v3131
          %v3502 = vunpack.c.l.b16 %v3132
          %v3503 = vunpack.c.h.b16 %v3132
          %v3504 = vunpack.c.l.b16 %v3133
          %v3505 = vunpack.c.h.b16 %v3133
          %v3506 = vunpack.c.l.b16 %v3134
          %v3507 = vunpack.c.h.b16 %v3134
          %v3508 = vunpack.c.l.b16 %v3135
          %v3509 = vunpack.c.h.b16 %v3135
          %v3510 = vunpack.c.l.b16 %v3136
          %v3511 = vunpack.c.h.b16 %v3136
          %v3512 = vunpack.c.l.b16 %v3137
          %v3513 = vunpack.c.h.b16 %v3137
          %v3514 = vunpack.c.l.b16 %v3138
          %v3515 = vunpack.c.h.b16 %v3138
          %v3516 = vunpack.c.l.b16 %v3139
          %v3517 = vunpack.c.h.b16 %v3139
          %v3518 = vunpack.c.l.b16 %v3140
          %v3519 = vunpack.c.h.b16 %v3140
          %v3520 = vunpack.c.l.b16 %v3141
          %v3521 = vunpack.c.h.b16 %v3141
          %v3522 = vunpack.c.l.b16 %v3142
          %v3523 = vunpack.c.h.b16 %v3142
          %v3524 = vunpack.c.l.b16 %v3143
          %v3525 = vunpack.c.h.b16 %v3143
          %v3526 = vunpack.c.l.b16 %v3144
          %v3527 = vunpack.c.h.b16 %v3144
          %v3528 = vunpack.c.l.b16 %v3145
          %v3529 = vunpack.c.h.b16 %v3145
          %v3530 = vunpack.c.l.b16 %v3146
          %v3531 = vunpack.c.h.b16 %v3146
          %v3532 = vunpack.c.l.b16 %v3147
          %v3533 = vunpack.c.h.b16 %v3147
          %v3534 = vunpack.c.l.b16 %v3148
          %v3535 = vunpack.c.h.b16 %v3148
          %v3536 = vunpack.c.l.b16 %v3149
          %v3537 = vunpack.c.h.b16 %v3149
          %v3538 = vunpack.c.l.b16 %v3150
          %v3539 = vunpack.c.h.b16 %v3150
          %v3540 = vunpack.c.l.b16 %v3151
          %v3541 = vunpack.c.h.b16 %v3151
          %v3542 = vunpack.c.l.b16 %v3152
          %v3543 = vunpack.c.h.b16 %v3152
          %v3544 = vunpack.c.l.b16 %v3153
          %v3545 = vunpack.c.h.b16 %v3153
          %v3546 = vunpack.c.l.b16 %v3154
          %v3547 = vunpack.c.h.b16 %v3154
          %v3548 = vunpack.c.l.b16 %v3155
          %v3549 = vunpack.c.h.b16 %v3155
          %v3550 = vunpack.c.l.b16 %v3156
          %v3551 = vunpack.c.h.b16 %v3156
          %v3552 = vpack.c.b16 %v3298, %v3296
          %v3553 = vpack.c.b16 %v3299, %v3297
          %v3554 = vpack.c.b16 %v3302, %v3300
          %v3555 = vpack.c.b16 %v3303, %v3301
          %v3556 = vpack.c.b16 %v3306, %v3304
          %v3557 = vpack.c.b16 %v3307, %v3305
          %v3558 = vpack.c.b16 %v3310, %v3308
          %v3559 = vpack.c.b16 %v3311, %v3309
          %v3560 = vpack.c.b16 %v3314, %v3312
          %v3561 = vpack.c.b16 %v3315, %v3313
          %v3562 = vpack.c.b16 %v3318, %v3316
          %v3563 = vpack.c.b16 %v3319, %v3317
          %v3564 = vpack.c.b16 %v3322, %v3320
          %v3565 = vpack.c.b16 %v3323, %v3321
          %v3566 = vpack.c.b16 %v3326, %v3324
          %v3567 = vpack.c.b16 %v3327, %v3325
          %v3568 = vpack.c.b16 %v3330, %v3328
          %v3569 = vpack.c.b16 %v3331, %v3329
          %v3570 = vpack.c.b16 %v3334, %v3332
          %v3571 = vpack.c.b16 %v3335, %v3333
          %v3572 = vpack.c.b16 %v3338, %v3336
          %v3573 = vpack.c.b16 %v3339, %v3337
          %v3574 = vpack.c.b16 %v3342, %v3340
          %v3575 = vpack.c.b16 %v3343, %v3341
          %v3576 = vpack.c.b16 %v3346, %v3344
          %v3577 = vpack.c.b16 %v3347, %v3345
          %v3578 = vpack.c.b16 %v3350, %v3348
          %v3579 = vpack.c.b16 %v3351, %v3349
          %v3580 = vpack.c.b16 %v3354, %v3352
          %v3581 = vpack.c.b16 %v3355, %v3353
          %v3582 = vpack.c.b16 %v3358, %v3356
          %v3583 = vpack.c.b16 %v3359, %v3357
          %v3584 = vpack.c.b16 %v3362, %v3360
          %v3585 = vpack.c.b16 %v3363, %v3361
          %v3586 = vpack.c.b16 %v3366, %v3364
          %v3587 = vpack.c.b16 %v3367, %v3365
          %v3588 = vpack.c.b16 %v3370, %v3368
          %v3589 = vpack.c.b16 %v3371, %v3369
          %v3590 = vpack.c.b16 %v3374, %v3372
          %v3591 = vpack.c.b16 %v3375, %v3373
          %v3592 = vpack.c.b16 %v3378, %v3376
          %v3593 = vpack.c.b16 %v3379, %v3377
          %v3594 = vpack.c.b16 %v3382, %v3380
          %v3595 = vpack.c.b16 %v3383, %v3381
          %v3596 = vpack.c.b16 %v3386, %v3384
          %v3597 = vpack.c.b16 %v3387, %v3385
          %v3598 = vpack.c.b16 %v3390, %v3388
          %v3599 = vpack.c.b16 %v3391, %v3389
          %v3600 = vpack.c.b16 %v3394, %v3392
          %v3601 = vpack.c.b16 %v3395, %v3393
          %v3602 = vpack.c.b16 %v3398, %v3396
          %v3603 = vpack.c.b16 %v3399, %v3397
          %v3604 = vpack.c.b16 %v3402, %v3400
          %v3605 = vpack.c.b16 %v3403, %v3401
          %v3606 = vpack.c.b16 %v3406, %v3404
          %v3607 = vpack.c.b16 %v3407, %v3405
          %v3608 = vpack.c.b16 %v3410, %v3408
          %v3609 = vpack.c.b16 %v3411, %v3409
          %v3610 = vpack.c.b16 %v3414, %v3412
          %v3611 = vpack.c.b16 %v3415, %v3413
          %v3612 = vpack.c.b16 %v3418, %v3416
          %v3613 = vpack.c.b16 %v3419, %v3417
          %v3614 = vpack.c.b16 %v3422, %v3420
          %v3615 = vpack.c.b16 %v3423, %v3421
          %v3616 = vpack.c.b16 %v3426, %v3424
          %v3617 = vpack.c.b16 %v3427, %v3425
          %v3618 = vpack.c.b16 %v3430, %v3428
          %v3619 = vpack.c.b16 %v3431, %v3429
          %v3620 = vpack.c.b16 %v3434, %v3432
          %v3621 = vpack.c.b16 %v3435, %v3433
          %v3622 = vpack.c.b16 %v3438, %v3436
          %v3623 = vpack.c.b16 %v3439, %v3437
          %v3624 = vpack.c.b16 %v3442, %v3440
          %v3625 = vpack.c.b16 %v3443, %v3441
          %v3626 = vpack.c.b16 %v3446, %v3444
          %v3627 = vpack.c.b16 %v3447, %v3445
          %v3628 = vpack.c.b16 %v3450, %v3448
          %v3629 = vpack.c.b16 %v3451, %v3449
          %v3630 = vpack.c.b16 %v3454, %v3452
          %v3631 = vpack.c.b16 %v3455, %v3453
          %v3632 = vpack.c.b16 %v3458, %v3456
          %v3633 = vpack.c.b16 %v3459, %v3457
          %v3634 = vpack.c.b16 %v3462, %v3460
          %v3635 = vpack.c.b16 %v3463, %v3461
          %v3636 = vpack.c.b16 %v3466, %v3464
          %v3637 = vpack.c.b16 %v3467, %v3465
          %v3638 = vpack.c.b16 %v3470, %v3468
          %v3639 = vpack.c.b16 %v3471, %v3469
          %v3640 = vpack.c.b16 %v3474, %v3472
          %v3641 = vpack.c.b16 %v3475, %v3473
          %v3642 = vpack.c.b16 %v3478, %v3476
          %v3643 = vpack.c.b16 %v3479, %v3477
          %v3644 = vpack.c.b16 %v3482, %v3480
          %v3645 = vpack.c.b16 %v3483, %v3481
          %v3646 = vpack.c.b16 %v3486, %v3484
          %v3647 = vpack.c.b16 %v3487, %v3485
          %v3648 = vpack.c.b16 %v3490, %v3488
          %v3649 = vpack.c.b16 %v3491, %v3489
          %v3650 = vpack.c.b16 %v3494, %v3492
          %v3651 = vpack.c.b16 %v3495, %v3493
          %v3652 = vpack.c.b16 %v3498, %v3496
          %v3653 = vpack.c.b16 %v3499, %v3497
          %v3654 = vpack.c.b16 %v3502, %v3500
          %v3655 = vpack.c.b16 %v3503, %v3501
          %v3656 = vpack.c.b16 %v3506, %v3504
          %v3657 = vpack.c.b16 %v3507, %v3505
          %v3658 = vpack.c.b16 %v3510, %v3508
          %v3659 = vpack.c.b16 %v3511, %v3509
          %v3660 = vpack.c.b16 %v3514, %v3512
          %v3661 = vpack.c.b16 %v3515, %v3513
          %v3662 = vpack.c.b16 %v3518, %v3516
          %v3663 = vpack.c.b16 %v3519, %v3517
          %v3664 = vpack.c.b16 %v3522, %v3520
          %v3665 = vpack.c.b16 %v3523, %v3521
          %v3666 = vpack.c.b16 %v3526, %v3524
          %v3667 = vpack.c.b16 %v3527, %v3525
          %v3668 = vpack.c.b16 %v3530, %v3528
          %v3669 = vpack.c.b16 %v3531, %v3529
          %v3670 = vpack.c.b16 %v3534, %v3532
          %v3671 = vpack.c.b16 %v3535, %v3533
          %v3672 = vpack.c.b16 %v3538, %v3536
          %v3673 = vpack.c.b16 %v3539, %v3537
          %v3674 = vpack.c.b16 %v3542, %v3540
          %v3675 = vpack.c.b16 %v3543, %v3541
          %v3676 = vpack.c.b16 %v3546, %v3544
          %v3677 = vpack.c.b16 %v3547, %v3545
          %v3678 = vpack.c.b16 %v3550, %v3548
          %v3679 = vpack.c.b16 %v3551, %v3549
          %3808 = vmatprep.subr.bf16.mxu0 %v3567
          %3809 = vmatpush1.bf16.msra.mxu0 %v3566
          %3810 = vmatprep.subr.bf16.mxu0 %v3565
          %3811 = vmatpush1.bf16.msra.mxu0 %v3564
          %3812 = vmatprep.subr.bf16.mxu0 %v3563
          %3813 = vmatpush1.bf16.msra.mxu0 %v3562
          %3814 = vmatprep.subr.bf16.mxu0 %v3561
          %3815 = vmatpush1.bf16.msra.mxu0 %v3560
          %3816 = vmatprep.subr.bf16.mxu0 %v3559
          %3817 = vmatpush1.bf16.msra.mxu0 %v3558
          %3818 = vmatprep.subr.bf16.mxu0 %v3557
          %3819 = vmatpush1.bf16.msra.mxu0 %v3556
          %3820 = vmatprep.subr.bf16.mxu0 %v3555
          %3821 = vmatpush1.bf16.msra.mxu0 %v3554
          %3822 = vmatprep.subr.bf16.mxu0 %v3553
          %3823 = vmatpush1.bf16.msra.mxu0 %v3552
          %3824 = vmatprep.subr.bf16.mxu0 %v3583
          %3825 = vmatpush2.bf16.msra.mxu0 %v3582
          %3826 = vmatprep.subr.bf16.mxu0 %v3581
          %3827 = vmatpush2.bf16.msra.mxu0 %v3580
          %3828 = vmatprep.subr.bf16.mxu0 %v3579
          %3829 = vmatpush2.bf16.msra.mxu0 %v3578
          %3830 = vmatprep.subr.bf16.mxu0 %v3577
          %3831 = vmatpush2.bf16.msra.mxu0 %v3576
          %3832 = vmatprep.subr.bf16.mxu0 %v3575
          %3833 = vmatpush2.bf16.msra.mxu0 %v3574
          %3834 = vmatprep.subr.bf16.mxu0 %v3573
          %3835 = vmatpush2.bf16.msra.mxu0 %v3572
          %3836 = vmatprep.subr.bf16.mxu0 %v3571
          %3837 = vmatpush2.bf16.msra.mxu0 %v3570
          %3838 = vmatprep.subr.bf16.mxu0 %v3569
          %3839 = vmatpush2.bf16.msra.mxu0 %v3568
          %3840 = vmatprep.mubr.bf16.mxu0 %v3022
          %3841 = vmatmul.mubr.bf16.gmra.mxu0 %v3021
          %v3842 = vpop.f32.mrf.mxu0
          %v3843 = vadd.f32 %v3161, %v3842
          %v3844 = vpop.f32.mrf.mxu0
          %v3845 = vadd.f32 %v3165, %v3844
          %v3846 = vpop.f32.mrf.mxu0
          %v3847 = vpop.f32.mrf.mxu0
          %3848 = vdwg.mxu0
          %3849 = vmatprep.subr.bf16.mxu0 %v3599
          %3850 = vmatpush1.bf16.msra.mxu0 %v3598
          %3851 = vmatprep.subr.bf16.mxu0 %v3597
          %3852 = vmatpush1.bf16.msra.mxu0 %v3596
          %3853 = vmatprep.subr.bf16.mxu0 %v3595
          %3854 = vmatpush1.bf16.msra.mxu0 %v3594
          %3855 = vmatprep.subr.bf16.mxu0 %v3593
          %3856 = vmatpush1.bf16.msra.mxu0 %v3592
          %3857 = vmatprep.subr.bf16.mxu0 %v3591
          %3858 = vmatpush1.bf16.msra.mxu0 %v3590
          %3859 = vmatprep.subr.bf16.mxu0 %v3589
          %3860 = vmatpush1.bf16.msra.mxu0 %v3588
          %3861 = vmatprep.subr.bf16.mxu0 %v3587
          %3862 = vmatpush1.bf16.msra.mxu0 %v3586
          %3863 = vmatprep.subr.bf16.mxu0 %v3585
          %3864 = vmatpush1.bf16.msra.mxu0 %v3584
          %3865 = vmatprep.subr.bf16.mxu0 %v3615
          %3866 = vmatpush2.bf16.msra.mxu0 %v3614
          %3867 = vmatprep.subr.bf16.mxu0 %v3613
          %3868 = vmatpush2.bf16.msra.mxu0 %v3612
          %3869 = vmatprep.subr.bf16.mxu0 %v3611
          %3870 = vmatpush2.bf16.msra.mxu0 %v3610
          %3871 = vmatprep.subr.bf16.mxu0 %v3609
          %3872 = vmatpush2.bf16.msra.mxu0 %v3608
          %3873 = vmatprep.subr.bf16.mxu0 %v3607
          %3874 = vmatpush2.bf16.msra.mxu0 %v3606
          %3875 = vmatprep.subr.bf16.mxu0 %v3605
          %3876 = vmatpush2.bf16.msra.mxu0 %v3604
          %3877 = vmatprep.subr.bf16.mxu0 %v3603
          %3878 = vmatpush2.bf16.msra.mxu0 %v3602
          %3879 = vmatprep.subr.bf16.mxu0 %v3601
          %3880 = vmatpush2.bf16.msra.mxu0 %v3600
          %3881 = vmatprep.mubr.bf16.mxu0 %v3024
          %3882 = vmatmul.mubr.bf16.gmra.mxu0 %v3023
          %v3883 = vpop.f32.mrf.mxu0
          %v3884 = vadd.f32 %v3843, %v3883
          %v3885 = vpop.f32.mrf.mxu0
          %v3886 = vadd.f32 %v3845, %v3885
          %v3887 = vpop.f32.mrf.mxu0
          %v3888 = vpop.f32.mrf.mxu0
          %3889 = vdwg.mxu0
          %3890 = vmatprep.subr.bf16.mxu0 %v3631
          %3891 = vmatpush1.bf16.msra.mxu0 %v3630
          %3892 = vmatprep.subr.bf16.mxu0 %v3629
          %3893 = vmatpush1.bf16.msra.mxu0 %v3628
          %3894 = vmatprep.subr.bf16.mxu0 %v3627
          %3895 = vmatpush1.bf16.msra.mxu0 %v3626
          %3896 = vmatprep.subr.bf16.mxu0 %v3625
          %3897 = vmatpush1.bf16.msra.mxu0 %v3624
          %3898 = vmatprep.subr.bf16.mxu0 %v3623
          %3899 = vmatpush1.bf16.msra.mxu0 %v3622
          %3900 = vmatprep.subr.bf16.mxu0 %v3621
          %3901 = vmatpush1.bf16.msra.mxu0 %v3620
          %3902 = vmatprep.subr.bf16.mxu0 %v3619
          %3903 = vmatpush1.bf16.msra.mxu0 %v3618
          %3904 = vmatprep.subr.bf16.mxu0 %v3617
          %3905 = vmatpush1.bf16.msra.mxu0 %v3616
          %3906 = vmatprep.subr.bf16.mxu0 %v3647
          %3907 = vmatpush2.bf16.msra.mxu0 %v3646
          %3908 = vmatprep.subr.bf16.mxu0 %v3645
          %3909 = vmatpush2.bf16.msra.mxu0 %v3644
          %3910 = vmatprep.subr.bf16.mxu0 %v3643
          %3911 = vmatpush2.bf16.msra.mxu0 %v3642
          %3912 = vmatprep.subr.bf16.mxu0 %v3641
          %3913 = vmatpush2.bf16.msra.mxu0 %v3640
          %3914 = vmatprep.subr.bf16.mxu0 %v3639
          %3915 = vmatpush2.bf16.msra.mxu0 %v3638
          %3916 = vmatprep.subr.bf16.mxu0 %v3637
          %3917 = vmatpush2.bf16.msra.mxu0 %v3636
          %3918 = vmatprep.subr.bf16.mxu0 %v3635
          %3919 = vmatpush2.bf16.msra.mxu0 %v3634
          %3920 = vmatprep.subr.bf16.mxu0 %v3633
          %3921 = vmatpush2.bf16.msra.mxu0 %v3632
          %3922 = vmatprep.mubr.bf16.mxu0 %v3026
          %3923 = vmatmul.mubr.bf16.gmra.mxu0 %v3025
          %v3924 = vpop.f32.mrf.mxu0
          %v3925 = vadd.f32 %v3884, %v3924
          %v3926 = vpop.f32.mrf.mxu0
          %v3927 = vadd.f32 %v3886, %v3926
          %v3928 = vpop.f32.mrf.mxu0
          %v3929 = vpop.f32.mrf.mxu0
          %3930 = vdwg.mxu0
          %3931 = vmatprep.subr.bf16.mxu0 %v3663
          %3932 = vmatpush1.bf16.msra.mxu0 %v3662
          %3933 = vmatprep.subr.bf16.mxu0 %v3661
          %3934 = vmatpush1.bf16.msra.mxu0 %v3660
          %3935 = vmatprep.subr.bf16.mxu0 %v3659
          %3936 = vmatpush1.bf16.msra.mxu0 %v3658
          %3937 = vmatprep.subr.bf16.mxu0 %v3657
          %3938 = vmatpush1.bf16.msra.mxu0 %v3656
          %3939 = vmatprep.subr.bf16.mxu0 %v3655
          %3940 = vmatpush1.bf16.msra.mxu0 %v3654
          %3941 = vmatprep.subr.bf16.mxu0 %v3653
          %3942 = vmatpush1.bf16.msra.mxu0 %v3652
          %3943 = vmatprep.subr.bf16.mxu0 %v3651
          %3944 = vmatpush1.bf16.msra.mxu0 %v3650
          %3945 = vmatprep.subr.bf16.mxu0 %v3649
          %3946 = vmatpush1.bf16.msra.mxu0 %v3648
          %3947 = vmatprep.subr.bf16.mxu0 %v3679
          %3948 = vmatpush2.bf16.msra.mxu0 %v3678
          %3949 = vmatprep.subr.bf16.mxu0 %v3677
          %3950 = vmatpush2.bf16.msra.mxu0 %v3676
          %3951 = vmatprep.subr.bf16.mxu0 %v3675
          %3952 = vmatpush2.bf16.msra.mxu0 %v3674
          %3953 = vmatprep.subr.bf16.mxu0 %v3673
          %3954 = vmatpush2.bf16.msra.mxu0 %v3672
          %3955 = vmatprep.subr.bf16.mxu0 %v3671
          %3956 = vmatpush2.bf16.msra.mxu0 %v3670
          %3957 = vmatprep.subr.bf16.mxu0 %v3669
          %3958 = vmatpush2.bf16.msra.mxu0 %v3668
          %3959 = vmatprep.subr.bf16.mxu0 %v3667
          %3960 = vmatpush2.bf16.msra.mxu0 %v3666
          %3961 = vmatprep.subr.bf16.mxu0 %v3665
          %3962 = vmatpush2.bf16.msra.mxu0 %v3664
          %3963 = vmatprep.mubr.bf16.mxu0 %v3028
          %3964 = vmatmul.mubr.bf16.gmra.mxu0 %v3027
          %v3965 = vpop.f32.mrf.mxu0
          %v3966 = vadd.f32 %v3925, %v3965
          %v3967 = vpop.f32.mrf.mxu0
          %v3968 = vadd.f32 %v3927, %v3967
          %v3969 = vpop.f32.mrf.mxu0
          %v3970 = vpop.f32.mrf.mxu0
          %3971 = vdwg.mxu0
          %v3972 = vmax.f32 %v3966, 0.0
          %v3973 = vmax.f32 %v3968, 0.0
          %v3976 = vcombine.low %v3972, %v3973
          %v3978 = vunpack.c.l.s4 1983009808
          %v3979 = vunpack.c.0.s8 %v3978
          %v3980 = vlaneseq
          %v3981 = vshrl.u32 %v3980, 7
          %v3982 = vsub.s32 %v3979, %v3981
          %v3983 = vrot.slane %v3976, %v3982
          %3985 = vst [vmem:[#allocation4] sm:$0xf] %v3983
        $region64: #{multimodal_spoof_net.1} parent=59 // pred_fallthru
          _
        %v3986 = vld [vmem:[#allocation2] sm:$0xf]
        %v3987 = vld [vmem:[%s361] sm:$0xff]
        %v3988 = vld [vmem:[%s361 + $0x8] sm:$0xff]
        %v3989 = vld [vmem:[%s361 + $0x10] sm:$0xff]
        %v3990 = vld [vmem:[%s361 + $0x18] sm:$0x1]
        %v3991 = vld [vmem:[%s368] sm:$0xff]
        %v3992 = vld [vmem:[%s368 + $0x8] sm:$0xff]
        %v3993 = vld [vmem:[%s368 + $0x10] sm:$0xff]
        %v3994 = vld [vmem:[%s368 + $0x18] sm:$0xff]
        %v3995 = vld [vmem:[%s368 + $0x20] sm:$0xff]
        %v3996 = vld [vmem:[%s368 + $0x28] sm:$0xff]
        %v3997 = vld [vmem:[%s368 + $0x30] sm:$0xff]
        %v3998 = vld [vmem:[%s368 + $0x38] sm:$0xff]
        %v3999 = vld [vmem:[%s368 + $0x40] sm:$0xff]
        %v4000 = vld [vmem:[%s368 + $0x48] sm:$0xff]
        %v4001 = vld [vmem:[%s368 + $0x50] sm:$0xff]
        %v4002 = vld [vmem:[%s368 + $0x58] sm:$0xff]
        %v4003 = vld [vmem:[%s368 + $0x60] sm:$0xff]
        %v4004 = vld [vmem:[%s368 + $0x68] sm:$0xff]
        %v4005 = vld [vmem:[%s368 + $0x70] sm:$0xff]
        %v4006 = vld [vmem:[%s368 + $0x78] sm:$0xff]
        %v4007 = vld [vmem:[%s368 + $0x80] sm:$0xff]
        %v4008 = vld [vmem:[%s368 + $0x88] sm:$0xff]
        %v4009 = vld [vmem:[%s368 + $0x90] sm:$0xff]
        %v4010 = vld [vmem:[%s368 + $0x98] sm:$0xff]
        %v4011 = vld [vmem:[%s368 + $0xa0] sm:$0xff]
        %v4012 = vld [vmem:[%s368 + $0xa8] sm:$0xff]
        %v4013 = vld [vmem:[%s368 + $0xb0] sm:$0xff]
        %v4014 = vld [vmem:[%s368 + $0xb8] sm:$0xff]
        %v4015 = vld [vmem:[%s368 + $0xc0] sm:$0xff]
        %v4016 = vld [vmem:[%s368 + $0xc8] sm:$0xff]
        %v4017 = vld [vmem:[%s368 + $0xd0] sm:$0xff]
        %v4018 = vld [vmem:[%s368 + $0xd8] sm:$0xff]
        %v4019 = vld [vmem:[%s368 + $0xe0] sm:$0xff]
        %v4020 = vld [vmem:[%s368 + $0xe8] sm:$0xff]
        %v4021 = vld [vmem:[%s368 + $0xf0] sm:$0xff]
        %v4022 = vld [vmem:[%s368 + $0xf8] sm:$0xff]
        %v4023 = vld [vmem:[%s368 + $0x100] sm:$0xff]
        %v4024 = vld [vmem:[%s368 + $0x108] sm:$0xff]
        %v4025 = vld [vmem:[%s368 + $0x110] sm:$0xff]
        %v4026 = vld [vmem:[%s368 + $0x118] sm:$0xff]
        %v4027 = vld [vmem:[%s368 + $0x120] sm:$0xff]
        %v4028 = vld [vmem:[%s368 + $0x128] sm:$0xff]
        %v4029 = vld [vmem:[%s368 + $0x130] sm:$0xff]
        %v4030 = vld [vmem:[%s368 + $0x138] sm:$0xff]
        %v4031 = vld [vmem:[%s368 + $0x140] sm:$0xff]
        %v4032 = vld [vmem:[%s368 + $0x148] sm:$0xff]
        %v4033 = vld [vmem:[%s368 + $0x150] sm:$0xff]
        %v4034 = vld [vmem:[%s368 + $0x158] sm:$0xff]
        %v4035 = vld [vmem:[%s368 + $0x160] sm:$0xff]
        %v4036 = vld [vmem:[%s368 + $0x168] sm:$0xff]
        %v4037 = vld [vmem:[%s368 + $0x170] sm:$0xff]
        %v4038 = vld [vmem:[%s368 + $0x178] sm:$0xff]
        %v4039 = vld [vmem:[%s368 + $0x180] sm:$0xff]
        %v4040 = vld [vmem:[%s368 + $0x188] sm:$0xff]
        %v4041 = vld [vmem:[%s368 + $0x190] sm:$0xff]
        %v4042 = vld [vmem:[%s368 + $0x198] sm:$0xff]
        %v4043 = vld [vmem:[%s368 + $0x1a0] sm:$0xff]
        %v4044 = vld [vmem:[%s368 + $0x1a8] sm:$0xff]
        %v4045 = vld [vmem:[%s368 + $0x1b0] sm:$0xff]
        %v4046 = vld [vmem:[%s368 + $0x1b8] sm:$0xff]
        %v4047 = vld [vmem:[%s368 + $0x1c0] sm:$0xff]
        %v4048 = vld [vmem:[%s368 + $0x1c8] sm:$0xff]
        %v4049 = vld [vmem:[%s368 + $0x1d0] sm:$0xff]
        %v4050 = vld [vmem:[%s368 + $0x1d8] sm:$0xff]
        %v4051 = vld [vmem:[%s368 + $0x1e0] sm:$0xff]
        %v4052 = vld [vmem:[%s368 + $0x1e8] sm:$0xff]
        %v4053 = vld [vmem:[%s368 + $0x1f0] sm:$0xff]
        %v4054 = vld [vmem:[%s368 + $0x1f8] sm:$0xff]
        %v4055 = vld [vmem:[%s368 + $0x200] sm:$0xff]
        %v4056 = vld [vmem:[%s368 + $0x208] sm:$0xff]
        %v4057 = vld [vmem:[%s368 + $0x210] sm:$0xff]
        %v4058 = vld [vmem:[%s368 + $0x218] sm:$0xff]
        %v4059 = vld [vmem:[%s368 + $0x220] sm:$0xff]
        %v4060 = vld [vmem:[%s368 + $0x228] sm:$0xff]
        %v4061 = vld [vmem:[%s368 + $0x230] sm:$0xff]
        %v4062 = vld [vmem:[%s368 + $0x238] sm:$0xff]
        %v4063 = vld [vmem:[%s368 + $0x240] sm:$0xff]
        %v4064 = vld [vmem:[%s368 + $0x248] sm:$0xff]
        %v4065 = vld [vmem:[%s368 + $0x250] sm:$0xff]
        %v4066 = vld [vmem:[%s368 + $0x258] sm:$0xff]
        %v4067 = vld [vmem:[%s368 + $0x260] sm:$0xff]
        %v4068 = vld [vmem:[%s368 + $0x268] sm:$0xff]
        %v4069 = vld [vmem:[%s368 + $0x270] sm:$0xff]
        %v4070 = vld [vmem:[%s368 + $0x278] sm:$0xff]
        %v4071 = vld [vmem:[%s368 + $0x280] sm:$0xff]
        %v4072 = vld [vmem:[%s368 + $0x288] sm:$0xff]
        %v4073 = vld [vmem:[%s368 + $0x290] sm:$0xff]
        %v4074 = vld [vmem:[%s368 + $0x298] sm:$0xff]
        %v4075 = vld [vmem:[%s368 + $0x2a0] sm:$0xff]
        %v4076 = vld [vmem:[%s368 + $0x2a8] sm:$0xff]
        %v4077 = vld [vmem:[%s368 + $0x2b0] sm:$0xff]
        %v4078 = vld [vmem:[%s368 + $0x2b8] sm:$0xff]
        %v4079 = vld [vmem:[%s368 + $0x2c0] sm:$0xff]
        %v4080 = vld [vmem:[%s368 + $0x2c8] sm:$0xff]
        %v4081 = vld [vmem:[%s368 + $0x2d0] sm:$0xff]
        %v4082 = vld [vmem:[%s368 + $0x2d8] sm:$0xff]
        %v4083 = vld [vmem:[%s368 + $0x2e0] sm:$0xff]
        %v4084 = vld [vmem:[%s368 + $0x2e8] sm:$0xff]
        %v4085 = vld [vmem:[%s368 + $0x2f0] sm:$0xff]
        %v4086 = vld [vmem:[%s368 + $0x2f8] sm:$0xff]
        %v4087 = vld [vmem:[%s368 + $0x300] sm:$0xff]
        %v4088 = vld [vmem:[%s368 + $0x308] sm:$0xff]
        %v4089 = vld [vmem:[%s368 + $0x310] sm:$0xff]
        %v4090 = vld [vmem:[%s368 + $0x318] sm:$0xff]
        %v4091 = vld [vmem:[%s368 + $0x320] sm:$0xff]
        %v4092 = vld [vmem:[%s368 + $0x328] sm:$0xff]
        %v4093 = vld [vmem:[%s368 + $0x330] sm:$0xff]
        %v4094 = vld [vmem:[%s368 + $0x338] sm:$0xff]
        %v4095 = vld [vmem:[%s368 + $0x340] sm:$0xff]
        %v4096 = vld [vmem:[%s368 + $0x348] sm:$0xff]
        %v4097 = vld [vmem:[%s368 + $0x350] sm:$0xff]
        %v4098 = vld [vmem:[%s368 + $0x358] sm:$0xff]
        %v4099 = vld [vmem:[%s368 + $0x360] sm:$0xff]
        %v4100 = vld [vmem:[%s368 + $0x368] sm:$0xff]
        %v4101 = vld [vmem:[%s368 + $0x370] sm:$0xff]
        %v4102 = vld [vmem:[%s368 + $0x378] sm:$0xff]
        %v4103 = vld [vmem:[%s368 + $0x380] sm:$0xff]
        %v4104 = vld [vmem:[%s368 + $0x388] sm:$0xff]
        %v4105 = vld [vmem:[%s368 + $0x390] sm:$0xff]
        %v4106 = vld [vmem:[%s368 + $0x398] sm:$0xff]
        %v4107 = vld [vmem:[%s368 + $0x3a0] sm:$0xff]
        %v4108 = vld [vmem:[%s368 + $0x3a8] sm:$0xff]
        %v4109 = vld [vmem:[%s368 + $0x3b0] sm:$0xff]
        %v4110 = vld [vmem:[%s368 + $0x3b8] sm:$0xff]
        %v4111 = vld [vmem:[%s368 + $0x3c0] sm:$0xff]
        %v4112 = vld [vmem:[%s368 + $0x3c8] sm:$0xff]
        %v4113 = vld [vmem:[%s368 + $0x3d0] sm:$0xff]
        %v4114 = vld [vmem:[%s368 + $0x3d8] sm:$0xff]
        %v4115 = vld [vmem:[%s368 + $0x3e0] sm:$0xff]
        %v4116 = vld [vmem:[%s368 + $0x3e8] sm:$0xff]
        %v4117 = vld [vmem:[%s368 + $0x3f0] sm:$0xff]
        %v4118 = vld [vmem:[%s368 + $0x3f8] sm:$0xff]
        %v4119 = vld [vmem:[%s368 + $0x400] sm:$0xff]
        %v4120 = vld [vmem:[%s368 + $0x408] sm:$0xff]
        %v4121 = vld [vmem:[%s368 + $0x410] sm:$0xff]
        %v4122 = vld [vmem:[%s368 + $0x418] sm:$0xff]
        %v4123 = vld [vmem:[%s368 + $0x420] sm:$0xff]
        %v4124 = vld [vmem:[%s368 + $0x428] sm:$0xff]
        %v4125 = vld [vmem:[%s368 + $0x430] sm:$0xff]
        %v4126 = vld [vmem:[%s368 + $0x438] sm:$0xff]
        %v4127 = vld [vmem:[%s368 + $0x440] sm:$0xff]
        %v4128 = vld [vmem:[%s368 + $0x448] sm:$0xff]
        %v4129 = vld [vmem:[%s368 + $0x450] sm:$0xff]
        %v4130 = vld [vmem:[%s368 + $0x458] sm:$0xff]
        %v4131 = vld [vmem:[%s368 + $0x460] sm:$0xff]
        %v4132 = vld [vmem:[%s368 + $0x468] sm:$0xff]
        %v4133 = vld [vmem:[%s368 + $0x470] sm:$0xff]
        %v4134 = vld [vmem:[%s368 + $0x478] sm:$0xff]
        %v4135 = vld [vmem:[%s368 + $0x480] sm:$0xff]
        %v4136 = vld [vmem:[%s368 + $0x488] sm:$0xff]
        %v4137 = vld [vmem:[%s368 + $0x490] sm:$0xff]
        %v4138 = vld [vmem:[%s368 + $0x498] sm:$0xff]
        %v4139 = vld [vmem:[%s368 + $0x4a0] sm:$0xff]
        %v4140 = vld [vmem:[%s368 + $0x4a8] sm:$0xff]
        %v4141 = vld [vmem:[%s368 + $0x4b0] sm:$0xff]
        %v4142 = vld [vmem:[%s368 + $0x4b8] sm:$0xff]
        %v4143 = vld [vmem:[%s368 + $0x4c0] sm:$0xff]
        %v4144 = vld [vmem:[%s368 + $0x4c8] sm:$0xff]
        %v4145 = vld [vmem:[%s368 + $0x4d0] sm:$0xff]
        %v4146 = vld [vmem:[%s368 + $0x4d8] sm:$0xff]
        %v4147 = vld [vmem:[%s368 + $0x4e0] sm:$0xff]
        %v4148 = vld [vmem:[%s368 + $0x4e8] sm:$0xff]
        %v4149 = vld [vmem:[%s368 + $0x4f0] sm:$0xff]
        %v4150 = vld [vmem:[%s368 + $0x4f8] sm:$0xff]
        %v4151 = vld [vmem:[%s368 + $0x500] sm:$0xff]
        %v4152 = vld [vmem:[%s368 + $0x508] sm:$0xff]
        %v4153 = vld [vmem:[%s368 + $0x510] sm:$0xff]
        %v4154 = vld [vmem:[%s368 + $0x518] sm:$0xff]
        %v4155 = vld [vmem:[%s368 + $0x520] sm:$0xff]
        %v4156 = vld [vmem:[%s368 + $0x528] sm:$0xff]
        %v4157 = vld [vmem:[%s368 + $0x530] sm:$0xff]
        %v4158 = vld [vmem:[%s368 + $0x538] sm:$0xff]
        %v4159 = vld [vmem:[%s368 + $0x540] sm:$0xff]
        %v4160 = vld [vmem:[%s368 + $0x548] sm:$0xff]
        %v4161 = vld [vmem:[%s368 + $0x550] sm:$0xff]
        %v4162 = vld [vmem:[%s368 + $0x558] sm:$0xff]
        %v4163 = vld [vmem:[%s368 + $0x560] sm:$0xff]
        %v4164 = vld [vmem:[%s368 + $0x568] sm:$0xff]
        %v4165 = vld [vmem:[%s368 + $0x570] sm:$0xff]
        %v4166 = vld [vmem:[%s368 + $0x578] sm:$0xff]
        %v4167 = vld [vmem:[%s368 + $0x580] sm:$0xff]
        %v4168 = vld [vmem:[%s368 + $0x588] sm:$0xff]
        %v4169 = vld [vmem:[%s368 + $0x590] sm:$0xff]
        %v4170 = vld [vmem:[%s368 + $0x598] sm:$0xff]
        %v4171 = vld [vmem:[%s368 + $0x5a0] sm:$0xff]
        %v4172 = vld [vmem:[%s368 + $0x5a8] sm:$0xff]
        %v4173 = vld [vmem:[%s368 + $0x5b0] sm:$0xff]
        %v4174 = vld [vmem:[%s368 + $0x5b8] sm:$0xff]
        %v4175 = vld [vmem:[%s368 + $0x5c0] sm:$0xff]
        %v4176 = vld [vmem:[%s368 + $0x5c8] sm:$0xff]
        %v4177 = vld [vmem:[%s368 + $0x5d0] sm:$0xff]
        %v4178 = vld [vmem:[%s368 + $0x5d8] sm:$0xff]
        %v4179 = vld [vmem:[%s368 + $0x5e0] sm:$0xff]
        %v4180 = vld [vmem:[%s368 + $0x5e8] sm:$0xff]
        %v4181 = vld [vmem:[%s368 + $0x5f0] sm:$0xff]
        %v4182 = vld [vmem:[%s368 + $0x5f8] sm:$0xff]
        %v4183 = vld [vmem:[%s368 + $0x600] sm:$0xff]
        %v4184 = vld [vmem:[%s368 + $0x608] sm:$0xff]
        %v4185 = vld [vmem:[%s368 + $0x610] sm:$0xff]
        %v4186 = vld [vmem:[%s368 + $0x618] sm:$0xff]
        %v4187 = vld [vmem:[%s368 + $0x620] sm:$0xff]
        %v4188 = vld [vmem:[%s368 + $0x628] sm:$0xff]
        %v4189 = vld [vmem:[%s368 + $0x630] sm:$0xff]
        %v4190 = vld [vmem:[%s368 + $0x638] sm:$0xff]
        %v4191 = vld [vmem:[%s368 + $0x640] sm:$0xff]
        %v4192 = vld [vmem:[%s368 + $0x648] sm:$0xff]
        %v4193 = vld [vmem:[%s368 + $0x650] sm:$0xff]
        %v4194 = vld [vmem:[%s368 + $0x658] sm:$0xff]
        %v4195 = vld [vmem:[%s368 + $0x660] sm:$0xff]
        %v4196 = vld [vmem:[%s368 + $0x668] sm:$0xff]
        %v4197 = vld [vmem:[%s368 + $0x670] sm:$0xff]
        %v4198 = vld [vmem:[%s368 + $0x678] sm:$0xff]
        %v4199 = vld [vmem:[%s368 + $0x680] sm:$0xff]
        %v4200 = vld [vmem:[%s368 + $0x688] sm:$0xff]
        %v4201 = vld [vmem:[%s368 + $0x690] sm:$0xff]
        %v4202 = vld [vmem:[%s368 + $0x698] sm:$0xff]
        %v4203 = vld [vmem:[%s368 + $0x6a0] sm:$0xff]
        %v4204 = vld [vmem:[%s368 + $0x6a8] sm:$0xff]
        %v4205 = vld [vmem:[%s368 + $0x6b0] sm:$0xff]
        %v4206 = vld [vmem:[%s368 + $0x6b8] sm:$0xff]
        %v4207 = vld [vmem:[%s368 + $0x6c0] sm:$0xff]
        %v4208 = vld [vmem:[%s368 + $0x6c8] sm:$0xff]
        %v4209 = vld [vmem:[%s368 + $0x6d0] sm:$0xff]
        %v4210 = vld [vmem:[%s368 + $0x6d8] sm:$0xff]
        %v4211 = vld [vmem:[%s368 + $0x6e0] sm:$0xff]
        %v4212 = vld [vmem:[%s368 + $0x6e8] sm:$0xff]
        %v4213 = vld [vmem:[%s368 + $0x6f0] sm:$0xff]
        %v4214 = vld [vmem:[%s368 + $0x6f8] sm:$0xff]
        %v4215 = vld [vmem:[%s368 + $0x700] sm:$0xff]
        %v4216 = vld [vmem:[%s368 + $0x708] sm:$0xff]
        %v4217 = vld [vmem:[%s368 + $0x710] sm:$0xff]
        %v4218 = vld [vmem:[%s368 + $0x718] sm:$0xff]
        %v4219 = vld [vmem:[%s368 + $0x720] sm:$0xff]
        %v4220 = vld [vmem:[%s368 + $0x728] sm:$0xff]
        %v4221 = vld [vmem:[%s368 + $0x730] sm:$0xff]
        %v4222 = vld [vmem:[%s368 + $0x738] sm:$0xff]
        %v4223 = vld [vmem:[%s368 + $0x740] sm:$0xff]
        %v4224 = vld [vmem:[%s368 + $0x748] sm:$0xff]
        %v4225 = vld [vmem:[%s368 + $0x750] sm:$0xff]
        %v4226 = vld [vmem:[%s368 + $0x758] sm:$0xff]
        %v4227 = vld [vmem:[%s368 + $0x760] sm:$0xff]
        %v4228 = vld [vmem:[%s368 + $0x768] sm:$0xff]
        %v4229 = vld [vmem:[%s368 + $0x770] sm:$0xff]
        %v4230 = vld [vmem:[%s368 + $0x778] sm:$0xff]
        %v4231 = vld [vmem:[%s368 + $0x780] sm:$0xff]
        %v4232 = vld [vmem:[%s368 + $0x788] sm:$0xff]
        %v4233 = vld [vmem:[%s368 + $0x790] sm:$0xff]
        %v4234 = vld [vmem:[%s368 + $0x798] sm:$0xff]
        %v4235 = vld [vmem:[%s368 + $0x7a0] sm:$0xff]
        %v4236 = vld [vmem:[%s368 + $0x7a8] sm:$0xff]
        %v4237 = vld [vmem:[%s368 + $0x7b0] sm:$0xff]
        %v4238 = vld [vmem:[%s368 + $0x7b8] sm:$0xff]
        %v4239 = vld [vmem:[%s368 + $0x7c0] sm:$0xff]
        %v4240 = vld [vmem:[%s368 + $0x7c8] sm:$0xff]
        %v4241 = vld [vmem:[%s368 + $0x7d0] sm:$0xff]
        %v4242 = vld [vmem:[%s368 + $0x7d8] sm:$0xff]
        %v4243 = vld [vmem:[%s368 + $0x7e0] sm:$0xff]
        %v4244 = vld [vmem:[%s368 + $0x7e8] sm:$0xff]
        %v4245 = vld [vmem:[%s368 + $0x7f0] sm:$0xff]
        %v4246 = vld [vmem:[%s368 + $0x7f8] sm:$0xff]
        %v4247 = vld [vmem:[%s368 + $0x800] sm:$0xff]
        %v4248 = vld [vmem:[%s368 + $0x808] sm:$0xff]
        %v4249 = vld [vmem:[%s368 + $0x810] sm:$0xff]
        %v4250 = vld [vmem:[%s368 + $0x818] sm:$0xff]
        %v4251 = vld [vmem:[%s368 + $0x820] sm:$0xff]
        %v4252 = vld [vmem:[%s368 + $0x828] sm:$0xff]
        %v4253 = vld [vmem:[%s368 + $0x830] sm:$0xff]
        %v4254 = vld [vmem:[%s368 + $0x838] sm:$0xff]
        %v4255 = vld [vmem:[%s368 + $0x840] sm:$0xff]
        %v4256 = vld [vmem:[%s368 + $0x848] sm:$0xff]
        %v4257 = vld [vmem:[%s368 + $0x850] sm:$0xff]
        %v4258 = vld [vmem:[%s368 + $0x858] sm:$0xff]
        %v4259 = vld [vmem:[%s368 + $0x860] sm:$0xff]
        %v4260 = vld [vmem:[%s368 + $0x868] sm:$0xff]
        %v4261 = vld [vmem:[%s368 + $0x870] sm:$0xff]
        %v4262 = vld [vmem:[%s368 + $0x878] sm:$0xff]
        %v4263 = vld [vmem:[%s368 + $0x880] sm:$0xff]
        %v4264 = vld [vmem:[%s368 + $0x888] sm:$0xff]
        %v4265 = vld [vmem:[%s368 + $0x890] sm:$0xff]
        %v4266 = vld [vmem:[%s368 + $0x898] sm:$0xff]
        %v4267 = vld [vmem:[%s368 + $0x8a0] sm:$0xff]
        %v4268 = vld [vmem:[%s368 + $0x8a8] sm:$0xff]
        %v4269 = vld [vmem:[%s368 + $0x8b0] sm:$0xff]
        %v4270 = vld [vmem:[%s368 + $0x8b8] sm:$0xff]
        %v4271 = vld [vmem:[%s368 + $0x8c0] sm:$0xff]
        %v4272 = vld [vmem:[%s368 + $0x8c8] sm:$0xff]
        %v4273 = vld [vmem:[%s368 + $0x8d0] sm:$0xff]
        %v4274 = vld [vmem:[%s368 + $0x8d8] sm:$0xff]
        %v4275 = vld [vmem:[%s368 + $0x8e0] sm:$0xff]
        %v4276 = vld [vmem:[%s368 + $0x8e8] sm:$0xff]
        %v4277 = vld [vmem:[%s368 + $0x8f0] sm:$0xff]
        %v4278 = vld [vmem:[%s368 + $0x8f8] sm:$0xff]
        %v4279 = vld [vmem:[%s368 + $0x900] sm:$0xff]
        %v4280 = vld [vmem:[%s368 + $0x908] sm:$0xff]
        %v4281 = vld [vmem:[%s368 + $0x910] sm:$0xff]
        %v4282 = vld [vmem:[%s368 + $0x918] sm:$0xff]
        %v4283 = vld [vmem:[%s368 + $0x920] sm:$0xff]
        %v4284 = vld [vmem:[%s368 + $0x928] sm:$0xff]
        %v4285 = vld [vmem:[%s368 + $0x930] sm:$0xff]
        %v4286 = vld [vmem:[%s368 + $0x938] sm:$0xff]
        %v4287 = vld [vmem:[%s368 + $0x940] sm:$0xff]
        %v4288 = vld [vmem:[%s368 + $0x948] sm:$0xff]
        %v4289 = vld [vmem:[%s368 + $0x950] sm:$0xff]
        %v4290 = vld [vmem:[%s368 + $0x958] sm:$0xff]
        %v4291 = vld [vmem:[%s368 + $0x960] sm:$0xff]
        %v4292 = vld [vmem:[%s368 + $0x968] sm:$0xff]
        %v4293 = vld [vmem:[%s368 + $0x970] sm:$0xff]
        %v4294 = vld [vmem:[%s368 + $0x978] sm:$0xff]
        %v4295 = vld [vmem:[%s368 + $0x980] sm:$0xff]
        %v4296 = vld [vmem:[%s368 + $0x988] sm:$0xff]
        %v4297 = vld [vmem:[%s368 + $0x990] sm:$0xff]
        %v4298 = vld [vmem:[%s368 + $0x998] sm:$0xff]
        %v4299 = vld [vmem:[%s368 + $0x9a0] sm:$0xff]
        %v4300 = vld [vmem:[%s368 + $0x9a8] sm:$0xff]
        %v4301 = vld [vmem:[%s368 + $0x9b0] sm:$0xff]
        %v4302 = vld [vmem:[%s368 + $0x9b8] sm:$0xff]
        %v4303 = vld [vmem:[%s368 + $0x9c0] sm:$0xff]
        %v4304 = vld [vmem:[%s368 + $0x9c8] sm:$0xff]
        %v4305 = vld [vmem:[%s368 + $0x9d0] sm:$0xff]
        %v4306 = vld [vmem:[%s368 + $0x9d8] sm:$0xff]
        %v4307 = vld [vmem:[%s368 + $0x9e0] sm:$0xff]
        %v4308 = vld [vmem:[%s368 + $0x9e8] sm:$0xff]
        %v4309 = vld [vmem:[%s368 + $0x9f0] sm:$0xff]
        %v4310 = vld [vmem:[%s368 + $0x9f8] sm:$0xff]
        %v4311 = vld [vmem:[%s368 + $0xa00] sm:$0xff]
        %v4312 = vld [vmem:[%s368 + $0xa08] sm:$0xff]
        %v4313 = vld [vmem:[%s368 + $0xa10] sm:$0xff]
        %v4314 = vld [vmem:[%s368 + $0xa18] sm:$0xff]
        %v4315 = vld [vmem:[%s368 + $0xa20] sm:$0xff]
        %v4316 = vld [vmem:[%s368 + $0xa28] sm:$0xff]
        %v4317 = vld [vmem:[%s368 + $0xa30] sm:$0xff]
        %v4318 = vld [vmem:[%s368 + $0xa38] sm:$0xff]
        %v4319 = vld [vmem:[%s368 + $0xa40] sm:$0xff]
        %v4320 = vld [vmem:[%s368 + $0xa48] sm:$0xff]
        %v4321 = vld [vmem:[%s368 + $0xa50] sm:$0xff]
        %v4322 = vld [vmem:[%s368 + $0xa58] sm:$0xff]
        %v4323 = vld [vmem:[%s368 + $0xa60] sm:$0xff]
        %v4324 = vld [vmem:[%s368 + $0xa68] sm:$0xff]
        %v4325 = vld [vmem:[%s368 + $0xa70] sm:$0xff]
        %v4326 = vld [vmem:[%s368 + $0xa78] sm:$0xff]
        %v4327 = vld [vmem:[%s368 + $0xa80] sm:$0xff]
        %v4328 = vld [vmem:[%s368 + $0xa88] sm:$0xff]
        %v4329 = vld [vmem:[%s368 + $0xa90] sm:$0xff]
        %v4330 = vld [vmem:[%s368 + $0xa98] sm:$0xff]
        %v4331 = vld [vmem:[%s368 + $0xaa0] sm:$0xff]
        %v4332 = vld [vmem:[%s368 + $0xaa8] sm:$0xff]
        %v4333 = vld [vmem:[%s368 + $0xab0] sm:$0xff]
        %v4334 = vld [vmem:[%s368 + $0xab8] sm:$0xff]
        %v4335 = vld [vmem:[%s368 + $0xac0] sm:$0xff]
        %v4336 = vld [vmem:[%s368 + $0xac8] sm:$0xff]
        %v4337 = vld [vmem:[%s368 + $0xad0] sm:$0xff]
        %v4338 = vld [vmem:[%s368 + $0xad8] sm:$0xff]
        %v4339 = vld [vmem:[%s368 + $0xae0] sm:$0xff]
        %v4340 = vld [vmem:[%s368 + $0xae8] sm:$0xff]
        %v4341 = vld [vmem:[%s368 + $0xaf0] sm:$0xff]
        %v4342 = vld [vmem:[%s368 + $0xaf8] sm:$0xff]
        %v4343 = vld [vmem:[%s368 + $0xb00] sm:$0xff]
        %v4344 = vld [vmem:[%s368 + $0xb08] sm:$0xff]
        %v4345 = vld [vmem:[%s368 + $0xb10] sm:$0xff]
        %v4346 = vld [vmem:[%s368 + $0xb18] sm:$0xff]
        %v4347 = vld [vmem:[%s368 + $0xb20] sm:$0xff]
        %v4348 = vld [vmem:[%s368 + $0xb28] sm:$0xff]
        %v4349 = vld [vmem:[%s368 + $0xb30] sm:$0xff]
        %v4350 = vld [vmem:[%s368 + $0xb38] sm:$0xff]
        %v4351 = vld [vmem:[%s368 + $0xb40] sm:$0xff]
        %v4352 = vld [vmem:[%s368 + $0xb48] sm:$0xff]
        %v4353 = vld [vmem:[%s368 + $0xb50] sm:$0xff]
        %v4354 = vld [vmem:[%s368 + $0xb58] sm:$0xff]
        %v4355 = vld [vmem:[%s368 + $0xb60] sm:$0xff]
        %v4356 = vld [vmem:[%s368 + $0xb68] sm:$0xff]
        %v4357 = vld [vmem:[%s368 + $0xb70] sm:$0xff]
        %v4358 = vld [vmem:[%s368 + $0xb78] sm:$0xff]
        %v4359 = vld [vmem:[%s368 + $0xb80] sm:$0xff]
        %v4360 = vld [vmem:[%s368 + $0xb88] sm:$0xff]
        %v4361 = vld [vmem:[%s368 + $0xb90] sm:$0xff]
        %v4362 = vld [vmem:[%s368 + $0xb98] sm:$0xff]
        %v4363 = vld [vmem:[%s368 + $0xba0] sm:$0xff]
        %v4364 = vld [vmem:[%s368 + $0xba8] sm:$0xff]
        %v4365 = vld [vmem:[%s368 + $0xbb0] sm:$0xff]
        %v4366 = vld [vmem:[%s368 + $0xbb8] sm:$0xff]
        %v4367 = vld [vmem:[%s368 + $0xbc0] sm:$0xff]
        %v4368 = vld [vmem:[%s368 + $0xbc8] sm:$0xff]
        %v4369 = vld [vmem:[%s368 + $0xbd0] sm:$0xff]
        %v4370 = vld [vmem:[%s368 + $0xbd8] sm:$0xff]
        %v4371 = vld [vmem:[%s368 + $0xbe0] sm:$0xff]
        %v4372 = vld [vmem:[%s368 + $0xbe8] sm:$0xff]
        %v4373 = vld [vmem:[%s368 + $0xbf0] sm:$0xff]
        %v4374 = vld [vmem:[%s368 + $0xbf8] sm:$0xff]
        %v4375 = vld [vmem:[%s368 + $0xc00] sm:$0xff]
        %v4376 = vld [vmem:[%s368 + $0xc08] sm:$0xff]
        %v4377 = vld [vmem:[%s368 + $0xc10] sm:$0xff]
        %v4378 = vld [vmem:[%s368 + $0xc18] sm:$0xff]
        %v4379 = vld [vmem:[%s368 + $0xc20] sm:$0xff]
        %v4380 = vld [vmem:[%s368 + $0xc28] sm:$0xff]
        %v4381 = vld [vmem:[%s368 + $0xc30] sm:$0xff]
        %v4382 = vld [vmem:[%s368 + $0xc38] sm:$0xff]
        %v4383 = vld [vmem:[%s368 + $0xc40] sm:$0xff]
        %v4384 = vld [vmem:[%s368 + $0xc48] sm:$0xff]
        %v4385 = vld [vmem:[%s368 + $0xc50] sm:$0xff]
        %v4386 = vld [vmem:[%s368 + $0xc58] sm:$0xff]
        %v4387 = vld [vmem:[%s368 + $0xc60] sm:$0xff]
        %v4388 = vld [vmem:[%s368 + $0xc68] sm:$0xff]
        %v4389 = vld [vmem:[%s368 + $0xc70] sm:$0xff]
        %v4390 = vld [vmem:[%s368 + $0xc78] sm:$0xff]
        %v4395 = vcombine.high %v3987, %v3987
        %v4397 = vunpack.c.l.s4 1966171168
        %v4398 = vunpack.c.0.s8 %v4397
        %v4399 = vlaneseq
        %v4400 = vshrl.u32 %v4399, 7
        %v4401 = vsub.s32 %v4398, %v4400
        %v4402 = vrot.slane %v3987, %v4401
        %v4404 = vunpack.c.l.s4 1966171168
        %v4405 = vunpack.c.0.s8 %v4404
        %v4406 = vlaneseq
        %v4407 = vshrl.u32 %v4406, 7
        %v4408 = vsub.s32 %v4405, %v4407
        %v4409 = vrot.slane %v4395, %v4408
        %v4410 = vcombine.high %v4402, %v4402
        %v4411 = vcombine.high %v4409, %v4409
        %v4413 = vunpack.c.l.s4 1966171168
        %v4414 = vunpack.c.0.s8 %v4413
        %v4415 = vlaneseq
        %v4416 = vshrl.u32 %v4415, 7
        %v4417 = vsub.s32 %v4414, %v4416
        %v4418 = vrot.slane %v4402, %v4417
        %v4420 = vunpack.c.l.s4 1966171168
        %v4421 = vunpack.c.0.s8 %v4420
        %v4422 = vlaneseq
        %v4423 = vshrl.u32 %v4422, 7
        %v4424 = vsub.s32 %v4421, %v4423
        %v4425 = vrot.slane %v4409, %v4424
        %v4427 = vunpack.c.l.s4 1966171168
        %v4428 = vunpack.c.0.s8 %v4427
        %v4429 = vlaneseq
        %v4430 = vshrl.u32 %v4429, 7
        %v4431 = vsub.s32 %v4428, %v4430
        %v4432 = vrot.slane %v4410, %v4431
        %v4434 = vunpack.c.l.s4 1966171168
        %v4435 = vunpack.c.0.s8 %v4434
        %v4436 = vlaneseq
        %v4437 = vshrl.u32 %v4436, 7
        %v4438 = vsub.s32 %v4435, %v4437
        %v4439 = vrot.slane %v4411, %v4438
        %v4440 = vcombine.high %v4418, %v4418
        %v4441 = vcombine.high %v4425, %v4425
        %v4442 = vcombine.high %v4432, %v4432
        %v4443 = vcombine.high %v4439, %v4439
        %v4444 = vcombine.high %v3988, %v3988
        %v4446 = vunpack.c.l.s4 1966171168
        %v4447 = vunpack.c.0.s8 %v4446
        %v4448 = vlaneseq
        %v4449 = vshrl.u32 %v4448, 7
        %v4450 = vsub.s32 %v4447, %v4449
        %v4451 = vrot.slane %v3988, %v4450
        %v4453 = vunpack.c.l.s4 1966171168
        %v4454 = vunpack.c.0.s8 %v4453
        %v4455 = vlaneseq
        %v4456 = vshrl.u32 %v4455, 7
        %v4457 = vsub.s32 %v4454, %v4456
        %v4458 = vrot.slane %v4444, %v4457
        %v4459 = vcombine.high %v4451, %v4451
        %v4460 = vcombine.high %v4458, %v4458
        %v4462 = vunpack.c.l.s4 1966171168
        %v4463 = vunpack.c.0.s8 %v4462
        %v4464 = vlaneseq
        %v4465 = vshrl.u32 %v4464, 7
        %v4466 = vsub.s32 %v4463, %v4465
        %v4467 = vrot.slane %v4451, %v4466
        %v4469 = vunpack.c.l.s4 1966171168
        %v4470 = vunpack.c.0.s8 %v4469
        %v4471 = vlaneseq
        %v4472 = vshrl.u32 %v4471, 7
        %v4473 = vsub.s32 %v4470, %v4472
        %v4474 = vrot.slane %v4458, %v4473
        %v4476 = vunpack.c.l.s4 1966171168
        %v4477 = vunpack.c.0.s8 %v4476
        %v4478 = vlaneseq
        %v4479 = vshrl.u32 %v4478, 7
        %v4480 = vsub.s32 %v4477, %v4479
        %v4481 = vrot.slane %v4459, %v4480
        %v4483 = vunpack.c.l.s4 1966171168
        %v4484 = vunpack.c.0.s8 %v4483
        %v4485 = vlaneseq
        %v4486 = vshrl.u32 %v4485, 7
        %v4487 = vsub.s32 %v4484, %v4486
        %v4488 = vrot.slane %v4460, %v4487
        %v4489 = vcombine.high %v4467, %v4467
        %v4490 = vcombine.high %v4474, %v4474
        %v4491 = vcombine.high %v4481, %v4481
        %v4492 = vcombine.high %v4488, %v4488
        %v4493 = vcombine.high %v3989, %v3989
        %v4495 = vunpack.c.l.s4 1966171168
        %v4496 = vunpack.c.0.s8 %v4495
        %v4497 = vlaneseq
        %v4498 = vshrl.u32 %v4497, 7
        %v4499 = vsub.s32 %v4496, %v4498
        %v4500 = vrot.slane %v3989, %v4499
        %v4502 = vunpack.c.l.s4 1966171168
        %v4503 = vunpack.c.0.s8 %v4502
        %v4504 = vlaneseq
        %v4505 = vshrl.u32 %v4504, 7
        %v4506 = vsub.s32 %v4503, %v4505
        %v4507 = vrot.slane %v4493, %v4506
        %v4508 = vcombine.high %v4500, %v4500
        %v4509 = vcombine.high %v4507, %v4507
        %v4511 = vunpack.c.l.s4 1966171168
        %v4512 = vunpack.c.0.s8 %v4511
        %v4513 = vlaneseq
        %v4514 = vshrl.u32 %v4513, 7
        %v4515 = vsub.s32 %v4512, %v4514
        %v4516 = vrot.slane %v4500, %v4515
        %v4518 = vunpack.c.l.s4 1966171168
        %v4519 = vunpack.c.0.s8 %v4518
        %v4520 = vlaneseq
        %v4521 = vshrl.u32 %v4520, 7
        %v4522 = vsub.s32 %v4519, %v4521
        %v4523 = vrot.slane %v4507, %v4522
        %v4525 = vunpack.c.l.s4 1966171168
        %v4526 = vunpack.c.0.s8 %v4525
        %v4527 = vlaneseq
        %v4528 = vshrl.u32 %v4527, 7
        %v4529 = vsub.s32 %v4526, %v4528
        %v4530 = vrot.slane %v4508, %v4529
        %v4532 = vunpack.c.l.s4 1966171168
        %v4533 = vunpack.c.0.s8 %v4532
        %v4534 = vlaneseq
        %v4535 = vshrl.u32 %v4534, 7
        %v4536 = vsub.s32 %v4533, %v4535
        %v4537 = vrot.slane %v4509, %v4536
        %v4538 = vcombine.high %v4516, %v4516
        %v4539 = vcombine.high %v4523, %v4523
        %v4540 = vcombine.high %v4530, %v4530
        %v4541 = vcombine.high %v4537, %v4537
        %v4543 = vunpack.c.l.s4 1966171168
        %v4544 = vunpack.c.0.s8 %v4543
        %v4545 = vlaneseq
        %v4546 = vshrl.u32 %v4545, 7
        %v4547 = vsub.s32 %v4544, %v4546
        %v4548 = vrot.slane %v3990, %v4547
        %v4550 = vunpack.c.l.s4 1966171168
        %v4551 = vunpack.c.0.s8 %v4550
        %v4552 = vlaneseq
        %v4553 = vshrl.u32 %v4552, 7
        %v4554 = vsub.s32 %v4551, %v4553
        %v4555 = vrot.slane %v4548, %v4554
        %v4981 = vunpack.c.l.b16 %v3991
        %v4982 = vunpack.c.h.b16 %v3991
        %v4983 = vunpack.c.l.b16 %v3992
        %v4984 = vunpack.c.h.b16 %v3992
        %v4985 = vunpack.c.l.b16 %v3993
        %v4986 = vunpack.c.h.b16 %v3993
        %v4987 = vunpack.c.l.b16 %v3994
        %v4988 = vunpack.c.h.b16 %v3994
        %v4989 = vunpack.c.l.b16 %v3995
        %v4990 = vunpack.c.h.b16 %v3995
        %v4991 = vunpack.c.l.b16 %v3996
        %v4992 = vunpack.c.h.b16 %v3996
        %v4993 = vunpack.c.l.b16 %v3997
        %v4994 = vunpack.c.h.b16 %v3997
        %v4995 = vunpack.c.l.b16 %v3998
        %v4996 = vunpack.c.h.b16 %v3998
        %v4997 = vunpack.c.l.b16 %v3999
        %v4998 = vunpack.c.h.b16 %v3999
        %v4999 = vunpack.c.l.b16 %v4000
        %v5000 = vunpack.c.h.b16 %v4000
        %v5001 = vunpack.c.l.b16 %v4001
        %v5002 = vunpack.c.h.b16 %v4001
        %v5003 = vunpack.c.l.b16 %v4002
        %v5004 = vunpack.c.h.b16 %v4002
        %v5005 = vunpack.c.l.b16 %v4003
        %v5006 = vunpack.c.h.b16 %v4003
        %v5007 = vunpack.c.l.b16 %v4004
        %v5008 = vunpack.c.h.b16 %v4004
        %v5009 = vunpack.c.l.b16 %v4005
        %v5010 = vunpack.c.h.b16 %v4005
        %v5011 = vunpack.c.l.b16 %v4006
        %v5012 = vunpack.c.h.b16 %v4006
        %v5013 = vunpack.c.l.b16 %v4007
        %v5014 = vunpack.c.h.b16 %v4007
        %v5015 = vunpack.c.l.b16 %v4008
        %v5016 = vunpack.c.h.b16 %v4008
        %v5017 = vunpack.c.l.b16 %v4009
        %v5018 = vunpack.c.h.b16 %v4009
        %v5019 = vunpack.c.l.b16 %v4010
        %v5020 = vunpack.c.h.b16 %v4010
        %v5021 = vunpack.c.l.b16 %v4011
        %v5022 = vunpack.c.h.b16 %v4011
        %v5023 = vunpack.c.l.b16 %v4012
        %v5024 = vunpack.c.h.b16 %v4012
        %v5025 = vunpack.c.l.b16 %v4013
        %v5026 = vunpack.c.h.b16 %v4013
        %v5027 = vunpack.c.l.b16 %v4014
        %v5028 = vunpack.c.h.b16 %v4014
        %v5029 = vunpack.c.l.b16 %v4015
        %v5030 = vunpack.c.h.b16 %v4015
        %v5031 = vunpack.c.l.b16 %v4016
        %v5032 = vunpack.c.h.b16 %v4016
        %v5033 = vunpack.c.l.b16 %v4017
        %v5034 = vunpack.c.h.b16 %v4017
        %v5035 = vunpack.c.l.b16 %v4018
        %v5036 = vunpack.c.h.b16 %v4018
        %v5037 = vunpack.c.l.b16 %v4019
        %v5038 = vunpack.c.h.b16 %v4019
        %v5039 = vunpack.c.l.b16 %v4020
        %v5040 = vunpack.c.h.b16 %v4020
        %v5041 = vunpack.c.l.b16 %v4021
        %v5042 = vunpack.c.h.b16 %v4021
        %v5043 = vunpack.c.l.b16 %v4022
        %v5044 = vunpack.c.h.b16 %v4022
        %v5045 = vunpack.c.l.b16 %v4023
        %v5046 = vunpack.c.h.b16 %v4023
        %v5047 = vunpack.c.l.b16 %v4024
        %v5048 = vunpack.c.h.b16 %v4024
        %v5049 = vunpack.c.l.b16 %v4025
        %v5050 = vunpack.c.h.b16 %v4025
        %v5051 = vunpack.c.l.b16 %v4026
        %v5052 = vunpack.c.h.b16 %v4026
        %v5053 = vunpack.c.l.b16 %v4027
        %v5054 = vunpack.c.h.b16 %v4027
        %v5055 = vunpack.c.l.b16 %v4028
        %v5056 = vunpack.c.h.b16 %v4028
        %v5057 = vunpack.c.l.b16 %v4029
        %v5058 = vunpack.c.h.b16 %v4029
        %v5059 = vunpack.c.l.b16 %v4030
        %v5060 = vunpack.c.h.b16 %v4030
        %v5061 = vunpack.c.l.b16 %v4031
        %v5062 = vunpack.c.h.b16 %v4031
        %v5063 = vunpack.c.l.b16 %v4032
        %v5064 = vunpack.c.h.b16 %v4032
        %v5065 = vunpack.c.l.b16 %v4033
        %v5066 = vunpack.c.h.b16 %v4033
        %v5067 = vunpack.c.l.b16 %v4034
        %v5068 = vunpack.c.h.b16 %v4034
        %v5069 = vunpack.c.l.b16 %v4035
        %v5070 = vunpack.c.h.b16 %v4035
        %v5071 = vunpack.c.l.b16 %v4036
        %v5072 = vunpack.c.h.b16 %v4036
        %v5073 = vunpack.c.l.b16 %v4037
        %v5074 = vunpack.c.h.b16 %v4037
        %v5075 = vunpack.c.l.b16 %v4038
        %v5076 = vunpack.c.h.b16 %v4038
        %v5077 = vunpack.c.l.b16 %v4039
        %v5078 = vunpack.c.h.b16 %v4039
        %v5079 = vunpack.c.l.b16 %v4040
        %v5080 = vunpack.c.h.b16 %v4040
        %v5081 = vunpack.c.l.b16 %v4041
        %v5082 = vunpack.c.h.b16 %v4041
        %v5083 = vunpack.c.l.b16 %v4042
        %v5084 = vunpack.c.h.b16 %v4042
        %v5085 = vunpack.c.l.b16 %v4043
        %v5086 = vunpack.c.h.b16 %v4043
        %v5087 = vunpack.c.l.b16 %v4044
        %v5088 = vunpack.c.h.b16 %v4044
        %v5089 = vunpack.c.l.b16 %v4045
        %v5090 = vunpack.c.h.b16 %v4045
        %v5091 = vunpack.c.l.b16 %v4046
        %v5092 = vunpack.c.h.b16 %v4046
        %v5093 = vunpack.c.l.b16 %v4047
        %v5094 = vunpack.c.h.b16 %v4047
        %v5095 = vunpack.c.l.b16 %v4048
        %v5096 = vunpack.c.h.b16 %v4048
        %v5097 = vunpack.c.l.b16 %v4049
        %v5098 = vunpack.c.h.b16 %v4049
        %v5099 = vunpack.c.l.b16 %v4050
        %v5100 = vunpack.c.h.b16 %v4050
        %v5101 = vunpack.c.l.b16 %v4051
        %v5102 = vunpack.c.h.b16 %v4051
        %v5103 = vunpack.c.l.b16 %v4052
        %v5104 = vunpack.c.h.b16 %v4052
        %v5105 = vunpack.c.l.b16 %v4053
        %v5106 = vunpack.c.h.b16 %v4053
        %v5107 = vunpack.c.l.b16 %v4054
        %v5108 = vunpack.c.h.b16 %v4054
        %v5109 = vunpack.c.l.b16 %v4055
        %v5110 = vunpack.c.h.b16 %v4055
        %v5111 = vunpack.c.l.b16 %v4056
        %v5112 = vunpack.c.h.b16 %v4056
        %v5113 = vunpack.c.l.b16 %v4057
        %v5114 = vunpack.c.h.b16 %v4057
        %v5115 = vunpack.c.l.b16 %v4058
        %v5116 = vunpack.c.h.b16 %v4058
        %v5117 = vunpack.c.l.b16 %v4059
        %v5118 = vunpack.c.h.b16 %v4059
        %v5119 = vunpack.c.l.b16 %v4060
        %v5120 = vunpack.c.h.b16 %v4060
        %v5121 = vunpack.c.l.b16 %v4061
        %v5122 = vunpack.c.h.b16 %v4061
        %v5123 = vunpack.c.l.b16 %v4062
        %v5124 = vunpack.c.h.b16 %v4062
        %v5125 = vunpack.c.l.b16 %v4063
        %v5126 = vunpack.c.h.b16 %v4063
        %v5127 = vunpack.c.l.b16 %v4064
        %v5128 = vunpack.c.h.b16 %v4064
        %v5129 = vunpack.c.l.b16 %v4065
        %v5130 = vunpack.c.h.b16 %v4065
        %v5131 = vunpack.c.l.b16 %v4066
        %v5132 = vunpack.c.h.b16 %v4066
        %v5133 = vunpack.c.l.b16 %v4067
        %v5134 = vunpack.c.h.b16 %v4067
        %v5135 = vunpack.c.l.b16 %v4068
        %v5136 = vunpack.c.h.b16 %v4068
        %v5137 = vunpack.c.l.b16 %v4069
        %v5138 = vunpack.c.h.b16 %v4069
        %v5139 = vunpack.c.l.b16 %v4070
        %v5140 = vunpack.c.h.b16 %v4070
        %v5141 = vunpack.c.l.b16 %v4071
        %v5142 = vunpack.c.h.b16 %v4071
        %v5143 = vunpack.c.l.b16 %v4072
        %v5144 = vunpack.c.h.b16 %v4072
        %v5145 = vunpack.c.l.b16 %v4073
        %v5146 = vunpack.c.h.b16 %v4073
        %v5147 = vunpack.c.l.b16 %v4074
        %v5148 = vunpack.c.h.b16 %v4074
        %v5149 = vunpack.c.l.b16 %v4075
        %v5150 = vunpack.c.h.b16 %v4075
        %v5151 = vunpack.c.l.b16 %v4076
        %v5152 = vunpack.c.h.b16 %v4076
        %v5153 = vunpack.c.l.b16 %v4077
        %v5154 = vunpack.c.h.b16 %v4077
        %v5155 = vunpack.c.l.b16 %v4078
        %v5156 = vunpack.c.h.b16 %v4078
        %v5157 = vunpack.c.l.b16 %v4079
        %v5158 = vunpack.c.h.b16 %v4079
        %v5159 = vunpack.c.l.b16 %v4080
        %v5160 = vunpack.c.h.b16 %v4080
        %v5161 = vunpack.c.l.b16 %v4081
        %v5162 = vunpack.c.h.b16 %v4081
        %v5163 = vunpack.c.l.b16 %v4082
        %v5164 = vunpack.c.h.b16 %v4082
        %v5165 = vunpack.c.l.b16 %v4083
        %v5166 = vunpack.c.h.b16 %v4083
        %v5167 = vunpack.c.l.b16 %v4084
        %v5168 = vunpack.c.h.b16 %v4084
        %v5169 = vunpack.c.l.b16 %v4085
        %v5170 = vunpack.c.h.b16 %v4085
        %v5171 = vunpack.c.l.b16 %v4086
        %v5172 = vunpack.c.h.b16 %v4086
        %v5173 = vunpack.c.l.b16 %v4087
        %v5174 = vunpack.c.h.b16 %v4087
        %v5175 = vunpack.c.l.b16 %v4088
        %v5176 = vunpack.c.h.b16 %v4088
        %v5177 = vunpack.c.l.b16 %v4089
        %v5178 = vunpack.c.h.b16 %v4089
        %v5179 = vunpack.c.l.b16 %v4090
        %v5180 = vunpack.c.h.b16 %v4090
        %v5181 = vunpack.c.l.b16 %v4091
        %v5182 = vunpack.c.h.b16 %v4091
        %v5183 = vunpack.c.l.b16 %v4092
        %v5184 = vunpack.c.h.b16 %v4092
        %v5185 = vunpack.c.l.b16 %v4093
        %v5186 = vunpack.c.h.b16 %v4093
        %v5187 = vunpack.c.l.b16 %v4094
        %v5188 = vunpack.c.h.b16 %v4094
        %v5189 = vunpack.c.l.b16 %v4095
        %v5190 = vunpack.c.h.b16 %v4095
        %v5191 = vunpack.c.l.b16 %v4096
        %v5192 = vunpack.c.h.b16 %v4096
        %v5193 = vunpack.c.l.b16 %v4097
        %v5194 = vunpack.c.h.b16 %v4097
        %v5195 = vunpack.c.l.b16 %v4098
        %v5196 = vunpack.c.h.b16 %v4098
        %v5197 = vunpack.c.l.b16 %v4099
        %v5198 = vunpack.c.h.b16 %v4099
        %v5199 = vunpack.c.l.b16 %v4100
        %v5200 = vunpack.c.h.b16 %v4100
        %v5201 = vunpack.c.l.b16 %v4101
        %v5202 = vunpack.c.h.b16 %v4101
        %v5203 = vunpack.c.l.b16 %v4102
        %v5204 = vunpack.c.h.b16 %v4102
        %v5205 = vunpack.c.l.b16 %v4103
        %v5206 = vunpack.c.h.b16 %v4103
        %v5207 = vunpack.c.l.b16 %v4104
        %v5208 = vunpack.c.h.b16 %v4104
        %v5209 = vunpack.c.l.b16 %v4105
        %v5210 = vunpack.c.h.b16 %v4105
        %v5211 = vunpack.c.l.b16 %v4106
        %v5212 = vunpack.c.h.b16 %v4106
        %v5213 = vunpack.c.l.b16 %v4107
        %v5214 = vunpack.c.h.b16 %v4107
        %v5215 = vunpack.c.l.b16 %v4108
        %v5216 = vunpack.c.h.b16 %v4108
        %v5217 = vunpack.c.l.b16 %v4109
        %v5218 = vunpack.c.h.b16 %v4109
        %v5219 = vunpack.c.l.b16 %v4110
        %v5220 = vunpack.c.h.b16 %v4110
        %v5221 = vunpack.c.l.b16 %v4111
        %v5222 = vunpack.c.h.b16 %v4111
        %v5223 = vunpack.c.l.b16 %v4112
        %v5224 = vunpack.c.h.b16 %v4112
        %v5225 = vunpack.c.l.b16 %v4113
        %v5226 = vunpack.c.h.b16 %v4113
        %v5227 = vunpack.c.l.b16 %v4114
        %v5228 = vunpack.c.h.b16 %v4114
        %v5229 = vunpack.c.l.b16 %v4115
        %v5230 = vunpack.c.h.b16 %v4115
        %v5231 = vunpack.c.l.b16 %v4116
        %v5232 = vunpack.c.h.b16 %v4116
        %v5233 = vunpack.c.l.b16 %v4117
        %v5234 = vunpack.c.h.b16 %v4117
        %v5235 = vunpack.c.l.b16 %v4118
        %v5236 = vunpack.c.h.b16 %v4118
        %v5237 = vunpack.c.l.b16 %v4119
        %v5238 = vunpack.c.h.b16 %v4119
        %v5239 = vunpack.c.l.b16 %v4120
        %v5240 = vunpack.c.h.b16 %v4120
        %v5241 = vunpack.c.l.b16 %v4121
        %v5242 = vunpack.c.h.b16 %v4121
        %v5243 = vunpack.c.l.b16 %v4122
        %v5244 = vunpack.c.h.b16 %v4122
        %v5245 = vunpack.c.l.b16 %v4123
        %v5246 = vunpack.c.h.b16 %v4123
        %v5247 = vunpack.c.l.b16 %v4124
        %v5248 = vunpack.c.h.b16 %v4124
        %v5249 = vunpack.c.l.b16 %v4125
        %v5250 = vunpack.c.h.b16 %v4125
        %v5251 = vunpack.c.l.b16 %v4126
        %v5252 = vunpack.c.h.b16 %v4126
        %v5253 = vunpack.c.l.b16 %v4127
        %v5254 = vunpack.c.h.b16 %v4127
        %v5255 = vunpack.c.l.b16 %v4128
        %v5256 = vunpack.c.h.b16 %v4128
        %v5257 = vunpack.c.l.b16 %v4129
        %v5258 = vunpack.c.h.b16 %v4129
        %v5259 = vunpack.c.l.b16 %v4130
        %v5260 = vunpack.c.h.b16 %v4130
        %v5261 = vunpack.c.l.b16 %v4131
        %v5262 = vunpack.c.h.b16 %v4131
        %v5263 = vunpack.c.l.b16 %v4132
        %v5264 = vunpack.c.h.b16 %v4132
        %v5265 = vunpack.c.l.b16 %v4133
        %v5266 = vunpack.c.h.b16 %v4133
        %v5267 = vunpack.c.l.b16 %v4134
        %v5268 = vunpack.c.h.b16 %v4134
        %v5269 = vunpack.c.l.b16 %v4135
        %v5270 = vunpack.c.h.b16 %v4135
        %v5271 = vunpack.c.l.b16 %v4136
        %v5272 = vunpack.c.h.b16 %v4136
        %v5273 = vunpack.c.l.b16 %v4137
        %v5274 = vunpack.c.h.b16 %v4137
        %v5275 = vunpack.c.l.b16 %v4138
        %v5276 = vunpack.c.h.b16 %v4138
        %v5277 = vunpack.c.l.b16 %v4139
        %v5278 = vunpack.c.h.b16 %v4139
        %v5279 = vunpack.c.l.b16 %v4140
        %v5280 = vunpack.c.h.b16 %v4140
        %v5281 = vunpack.c.l.b16 %v4141
        %v5282 = vunpack.c.h.b16 %v4141
        %v5283 = vunpack.c.l.b16 %v4142
        %v5284 = vunpack.c.h.b16 %v4142
        %v5285 = vunpack.c.l.b16 %v4143
        %v5286 = vunpack.c.h.b16 %v4143
        %v5287 = vunpack.c.l.b16 %v4144
        %v5288 = vunpack.c.h.b16 %v4144
        %v5289 = vunpack.c.l.b16 %v4145
        %v5290 = vunpack.c.h.b16 %v4145
        %v5291 = vunpack.c.l.b16 %v4146
        %v5292 = vunpack.c.h.b16 %v4146
        %v5293 = vunpack.c.l.b16 %v4147
        %v5294 = vunpack.c.h.b16 %v4147
        %v5295 = vunpack.c.l.b16 %v4148
        %v5296 = vunpack.c.h.b16 %v4148
        %v5297 = vunpack.c.l.b16 %v4149
        %v5298 = vunpack.c.h.b16 %v4149
        %v5299 = vunpack.c.l.b16 %v4150
        %v5300 = vunpack.c.h.b16 %v4150
        %v5301 = vunpack.c.l.b16 %v4151
        %v5302 = vunpack.c.h.b16 %v4151
        %v5303 = vunpack.c.l.b16 %v4152
        %v5304 = vunpack.c.h.b16 %v4152
        %v5305 = vunpack.c.l.b16 %v4153
        %v5306 = vunpack.c.h.b16 %v4153
        %v5307 = vunpack.c.l.b16 %v4154
        %v5308 = vunpack.c.h.b16 %v4154
        %v5309 = vunpack.c.l.b16 %v4155
        %v5310 = vunpack.c.h.b16 %v4155
        %v5311 = vunpack.c.l.b16 %v4156
        %v5312 = vunpack.c.h.b16 %v4156
        %v5313 = vunpack.c.l.b16 %v4157
        %v5314 = vunpack.c.h.b16 %v4157
        %v5315 = vunpack.c.l.b16 %v4158
        %v5316 = vunpack.c.h.b16 %v4158
        %v5317 = vunpack.c.l.b16 %v4159
        %v5318 = vunpack.c.h.b16 %v4159
        %v5319 = vunpack.c.l.b16 %v4160
        %v5320 = vunpack.c.h.b16 %v4160
        %v5321 = vunpack.c.l.b16 %v4161
        %v5322 = vunpack.c.h.b16 %v4161
        %v5323 = vunpack.c.l.b16 %v4162
        %v5324 = vunpack.c.h.b16 %v4162
        %v5325 = vunpack.c.l.b16 %v4163
        %v5326 = vunpack.c.h.b16 %v4163
        %v5327 = vunpack.c.l.b16 %v4164
        %v5328 = vunpack.c.h.b16 %v4164
        %v5329 = vunpack.c.l.b16 %v4165
        %v5330 = vunpack.c.h.b16 %v4165
        %v5331 = vunpack.c.l.b16 %v4166
        %v5332 = vunpack.c.h.b16 %v4166
        %v5333 = vunpack.c.l.b16 %v4167
        %v5334 = vunpack.c.h.b16 %v4167
        %v5335 = vunpack.c.l.b16 %v4168
        %v5336 = vunpack.c.h.b16 %v4168
        %v5337 = vunpack.c.l.b16 %v4169
        %v5338 = vunpack.c.h.b16 %v4169
        %v5339 = vunpack.c.l.b16 %v4170
        %v5340 = vunpack.c.h.b16 %v4170
        %v5341 = vunpack.c.l.b16 %v4171
        %v5342 = vunpack.c.h.b16 %v4171
        %v5343 = vunpack.c.l.b16 %v4172
        %v5344 = vunpack.c.h.b16 %v4172
        %v5345 = vunpack.c.l.b16 %v4173
        %v5346 = vunpack.c.h.b16 %v4173
        %v5347 = vunpack.c.l.b16 %v4174
        %v5348 = vunpack.c.h.b16 %v4174
        %v5349 = vunpack.c.l.b16 %v4175
        %v5350 = vunpack.c.h.b16 %v4175
        %v5351 = vunpack.c.l.b16 %v4176
        %v5352 = vunpack.c.h.b16 %v4176
        %v5353 = vunpack.c.l.b16 %v4177
        %v5354 = vunpack.c.h.b16 %v4177
        %v5355 = vunpack.c.l.b16 %v4178
        %v5356 = vunpack.c.h.b16 %v4178
        %v5357 = vunpack.c.l.b16 %v4179
        %v5358 = vunpack.c.h.b16 %v4179
        %v5359 = vunpack.c.l.b16 %v4180
        %v5360 = vunpack.c.h.b16 %v4180
        %v5361 = vunpack.c.l.b16 %v4181
        %v5362 = vunpack.c.h.b16 %v4181
        %v5363 = vunpack.c.l.b16 %v4182
        %v5364 = vunpack.c.h.b16 %v4182
        %v5365 = vunpack.c.l.b16 %v4183
        %v5366 = vunpack.c.h.b16 %v4183
        %v5367 = vunpack.c.l.b16 %v4184
        %v5368 = vunpack.c.h.b16 %v4184
        %v5369 = vunpack.c.l.b16 %v4185
        %v5370 = vunpack.c.h.b16 %v4185
        %v5371 = vunpack.c.l.b16 %v4186
        %v5372 = vunpack.c.h.b16 %v4186
        %v5373 = vunpack.c.l.b16 %v4187
        %v5374 = vunpack.c.h.b16 %v4187
        %v5375 = vunpack.c.l.b16 %v4188
        %v5376 = vunpack.c.h.b16 %v4188
        %v5377 = vunpack.c.l.b16 %v4189
        %v5378 = vunpack.c.h.b16 %v4189
        %v5379 = vunpack.c.l.b16 %v4190
        %v5380 = vunpack.c.h.b16 %v4190
        %v5381 = vunpack.c.l.b16 %v4191
        %v5382 = vunpack.c.h.b16 %v4191
        %v5383 = vunpack.c.l.b16 %v4192
        %v5384 = vunpack.c.h.b16 %v4192
        %v5385 = vunpack.c.l.b16 %v4193
        %v5386 = vunpack.c.h.b16 %v4193
        %v5387 = vunpack.c.l.b16 %v4194
        %v5388 = vunpack.c.h.b16 %v4194
        %v5389 = vunpack.c.l.b16 %v4195
        %v5390 = vunpack.c.h.b16 %v4195
        %v5391 = vunpack.c.l.b16 %v4196
        %v5392 = vunpack.c.h.b16 %v4196
        %v5393 = vunpack.c.l.b16 %v4197
        %v5394 = vunpack.c.h.b16 %v4197
        %v5395 = vunpack.c.l.b16 %v4198
        %v5396 = vunpack.c.h.b16 %v4198
        %v5397 = vunpack.c.l.b16 %v4199
        %v5398 = vunpack.c.h.b16 %v4199
        %v5399 = vunpack.c.l.b16 %v4200
        %v5400 = vunpack.c.h.b16 %v4200
        %v5401 = vunpack.c.l.b16 %v4201
        %v5402 = vunpack.c.h.b16 %v4201
        %v5403 = vunpack.c.l.b16 %v4202
        %v5404 = vunpack.c.h.b16 %v4202
        %v5405 = vunpack.c.l.b16 %v4203
        %v5406 = vunpack.c.h.b16 %v4203
        %v5407 = vunpack.c.l.b16 %v4204
        %v5408 = vunpack.c.h.b16 %v4204
        %v5409 = vunpack.c.l.b16 %v4205
        %v5410 = vunpack.c.h.b16 %v4205
        %v5411 = vunpack.c.l.b16 %v4206
        %v5412 = vunpack.c.h.b16 %v4206
        %v5413 = vunpack.c.l.b16 %v4207
        %v5414 = vunpack.c.h.b16 %v4207
        %v5415 = vunpack.c.l.b16 %v4208
        %v5416 = vunpack.c.h.b16 %v4208
        %v5417 = vunpack.c.l.b16 %v4209
        %v5418 = vunpack.c.h.b16 %v4209
        %v5419 = vunpack.c.l.b16 %v4210
        %v5420 = vunpack.c.h.b16 %v4210
        %v5421 = vunpack.c.l.b16 %v4211
        %v5422 = vunpack.c.h.b16 %v4211
        %v5423 = vunpack.c.l.b16 %v4212
        %v5424 = vunpack.c.h.b16 %v4212
        %v5425 = vunpack.c.l.b16 %v4213
        %v5426 = vunpack.c.h.b16 %v4213
        %v5427 = vunpack.c.l.b16 %v4214
        %v5428 = vunpack.c.h.b16 %v4214
        %v5429 = vunpack.c.l.b16 %v4215
        %v5430 = vunpack.c.h.b16 %v4215
        %v5431 = vunpack.c.l.b16 %v4216
        %v5432 = vunpack.c.h.b16 %v4216
        %v5433 = vunpack.c.l.b16 %v4217
        %v5434 = vunpack.c.h.b16 %v4217
        %v5435 = vunpack.c.l.b16 %v4218
        %v5436 = vunpack.c.h.b16 %v4218
        %v5437 = vunpack.c.l.b16 %v4219
        %v5438 = vunpack.c.h.b16 %v4219
        %v5439 = vunpack.c.l.b16 %v4220
        %v5440 = vunpack.c.h.b16 %v4220
        %v5441 = vunpack.c.l.b16 %v4221
        %v5442 = vunpack.c.h.b16 %v4221
        %v5443 = vunpack.c.l.b16 %v4222
        %v5444 = vunpack.c.h.b16 %v4222
        %v5445 = vunpack.c.l.b16 %v4223
        %v5446 = vunpack.c.h.b16 %v4223
        %v5447 = vunpack.c.l.b16 %v4224
        %v5448 = vunpack.c.h.b16 %v4224
        %v5449 = vunpack.c.l.b16 %v4225
        %v5450 = vunpack.c.h.b16 %v4225
        %v5451 = vunpack.c.l.b16 %v4226
        %v5452 = vunpack.c.h.b16 %v4226
        %v5453 = vunpack.c.l.b16 %v4227
        %v5454 = vunpack.c.h.b16 %v4227
        %v5455 = vunpack.c.l.b16 %v4228
        %v5456 = vunpack.c.h.b16 %v4228
        %v5457 = vunpack.c.l.b16 %v4229
        %v5458 = vunpack.c.h.b16 %v4229
        %v5459 = vunpack.c.l.b16 %v4230
        %v5460 = vunpack.c.h.b16 %v4230
        %v5461 = vunpack.c.l.b16 %v4231
        %v5462 = vunpack.c.h.b16 %v4231
        %v5463 = vunpack.c.l.b16 %v4232
        %v5464 = vunpack.c.h.b16 %v4232
        %v5465 = vunpack.c.l.b16 %v4233
        %v5466 = vunpack.c.h.b16 %v4233
        %v5467 = vunpack.c.l.b16 %v4234
        %v5468 = vunpack.c.h.b16 %v4234
        %v5469 = vunpack.c.l.b16 %v4235
        %v5470 = vunpack.c.h.b16 %v4235
        %v5471 = vunpack.c.l.b16 %v4236
        %v5472 = vunpack.c.h.b16 %v4236
        %v5473 = vunpack.c.l.b16 %v4237
        %v5474 = vunpack.c.h.b16 %v4237
        %v5475 = vunpack.c.l.b16 %v4238
        %v5476 = vunpack.c.h.b16 %v4238
        %v5477 = vunpack.c.l.b16 %v4239
        %v5478 = vunpack.c.h.b16 %v4239
        %v5479 = vunpack.c.l.b16 %v4240
        %v5480 = vunpack.c.h.b16 %v4240
        %v5481 = vunpack.c.l.b16 %v4241
        %v5482 = vunpack.c.h.b16 %v4241
        %v5483 = vunpack.c.l.b16 %v4242
        %v5484 = vunpack.c.h.b16 %v4242
        %v5485 = vunpack.c.l.b16 %v4243
        %v5486 = vunpack.c.h.b16 %v4243
        %v5487 = vunpack.c.l.b16 %v4244
        %v5488 = vunpack.c.h.b16 %v4244
        %v5489 = vunpack.c.l.b16 %v4245
        %v5490 = vunpack.c.h.b16 %v4245
        %v5491 = vunpack.c.l.b16 %v4246
        %v5492 = vunpack.c.h.b16 %v4246
        %v5493 = vunpack.c.l.b16 %v4247
        %v5494 = vunpack.c.h.b16 %v4247
        %v5495 = vunpack.c.l.b16 %v4248
        %v5496 = vunpack.c.h.b16 %v4248
        %v5497 = vunpack.c.l.b16 %v4249
        %v5498 = vunpack.c.h.b16 %v4249
        %v5499 = vunpack.c.l.b16 %v4250
        %v5500 = vunpack.c.h.b16 %v4250
        %v5501 = vunpack.c.l.b16 %v4251
        %v5502 = vunpack.c.h.b16 %v4251
        %v5503 = vunpack.c.l.b16 %v4252
        %v5504 = vunpack.c.h.b16 %v4252
        %v5505 = vunpack.c.l.b16 %v4253
        %v5506 = vunpack.c.h.b16 %v4253
        %v5507 = vunpack.c.l.b16 %v4254
        %v5508 = vunpack.c.h.b16 %v4254
        %v5509 = vunpack.c.l.b16 %v4255
        %v5510 = vunpack.c.h.b16 %v4255
        %v5511 = vunpack.c.l.b16 %v4256
        %v5512 = vunpack.c.h.b16 %v4256
        %v5513 = vunpack.c.l.b16 %v4257
        %v5514 = vunpack.c.h.b16 %v4257
        %v5515 = vunpack.c.l.b16 %v4258
        %v5516 = vunpack.c.h.b16 %v4258
        %v5517 = vunpack.c.l.b16 %v4259
        %v5518 = vunpack.c.h.b16 %v4259
        %v5519 = vunpack.c.l.b16 %v4260
        %v5520 = vunpack.c.h.b16 %v4260
        %v5521 = vunpack.c.l.b16 %v4261
        %v5522 = vunpack.c.h.b16 %v4261
        %v5523 = vunpack.c.l.b16 %v4262
        %v5524 = vunpack.c.h.b16 %v4262
        %v5525 = vunpack.c.l.b16 %v4263
        %v5526 = vunpack.c.h.b16 %v4263
        %v5527 = vunpack.c.l.b16 %v4264
        %v5528 = vunpack.c.h.b16 %v4264
        %v5529 = vunpack.c.l.b16 %v4265
        %v5530 = vunpack.c.h.b16 %v4265
        %v5531 = vunpack.c.l.b16 %v4266
        %v5532 = vunpack.c.h.b16 %v4266
        %v5533 = vunpack.c.l.b16 %v4267
        %v5534 = vunpack.c.h.b16 %v4267
        %v5535 = vunpack.c.l.b16 %v4268
        %v5536 = vunpack.c.h.b16 %v4268
        %v5537 = vunpack.c.l.b16 %v4269
        %v5538 = vunpack.c.h.b16 %v4269
        %v5539 = vunpack.c.l.b16 %v4270
        %v5540 = vunpack.c.h.b16 %v4270
        %v5541 = vunpack.c.l.b16 %v4271
        %v5542 = vunpack.c.h.b16 %v4271
        %v5543 = vunpack.c.l.b16 %v4272
        %v5544 = vunpack.c.h.b16 %v4272
        %v5545 = vunpack.c.l.b16 %v4273
        %v5546 = vunpack.c.h.b16 %v4273
        %v5547 = vunpack.c.l.b16 %v4274
        %v5548 = vunpack.c.h.b16 %v4274
        %v5549 = vunpack.c.l.b16 %v4275
        %v5550 = vunpack.c.h.b16 %v4275
        %v5551 = vunpack.c.l.b16 %v4276
        %v5552 = vunpack.c.h.b16 %v4276
        %v5553 = vunpack.c.l.b16 %v4277
        %v5554 = vunpack.c.h.b16 %v4277
        %v5555 = vunpack.c.l.b16 %v4278
        %v5556 = vunpack.c.h.b16 %v4278
        %v5557 = vunpack.c.l.b16 %v4279
        %v5558 = vunpack.c.h.b16 %v4279
        %v5559 = vunpack.c.l.b16 %v4280
        %v5560 = vunpack.c.h.b16 %v4280
        %v5561 = vunpack.c.l.b16 %v4281
        %v5562 = vunpack.c.h.b16 %v4281
        %v5563 = vunpack.c.l.b16 %v4282
        %v5564 = vunpack.c.h.b16 %v4282
        %v5565 = vunpack.c.l.b16 %v4283
        %v5566 = vunpack.c.h.b16 %v4283
        %v5567 = vunpack.c.l.b16 %v4284
        %v5568 = vunpack.c.h.b16 %v4284
        %v5569 = vunpack.c.l.b16 %v4285
        %v5570 = vunpack.c.h.b16 %v4285
        %v5571 = vunpack.c.l.b16 %v4286
        %v5572 = vunpack.c.h.b16 %v4286
        %v5573 = vunpack.c.l.b16 %v4287
        %v5574 = vunpack.c.h.b16 %v4287
        %v5575 = vunpack.c.l.b16 %v4288
        %v5576 = vunpack.c.h.b16 %v4288
        %v5577 = vunpack.c.l.b16 %v4289
        %v5578 = vunpack.c.h.b16 %v4289
        %v5579 = vunpack.c.l.b16 %v4290
        %v5580 = vunpack.c.h.b16 %v4290
        %v5581 = vunpack.c.l.b16 %v4291
        %v5582 = vunpack.c.h.b16 %v4291
        %v5583 = vunpack.c.l.b16 %v4292
        %v5584 = vunpack.c.h.b16 %v4292
        %v5585 = vunpack.c.l.b16 %v4293
        %v5586 = vunpack.c.h.b16 %v4293
        %v5587 = vunpack.c.l.b16 %v4294
        %v5588 = vunpack.c.h.b16 %v4294
        %v5589 = vunpack.c.l.b16 %v4295
        %v5590 = vunpack.c.h.b16 %v4295
        %v5591 = vunpack.c.l.b16 %v4296
        %v5592 = vunpack.c.h.b16 %v4296
        %v5593 = vunpack.c.l.b16 %v4297
        %v5594 = vunpack.c.h.b16 %v4297
        %v5595 = vunpack.c.l.b16 %v4298
        %v5596 = vunpack.c.h.b16 %v4298
        %v5597 = vunpack.c.l.b16 %v4299
        %v5598 = vunpack.c.h.b16 %v4299
        %v5599 = vunpack.c.l.b16 %v4300
        %v5600 = vunpack.c.h.b16 %v4300
        %v5601 = vunpack.c.l.b16 %v4301
        %v5602 = vunpack.c.h.b16 %v4301
        %v5603 = vunpack.c.l.b16 %v4302
        %v5604 = vunpack.c.h.b16 %v4302
        %v5605 = vunpack.c.l.b16 %v4303
        %v5606 = vunpack.c.h.b16 %v4303
        %v5607 = vunpack.c.l.b16 %v4304
        %v5608 = vunpack.c.h.b16 %v4304
        %v5609 = vunpack.c.l.b16 %v4305
        %v5610 = vunpack.c.h.b16 %v4305
        %v5611 = vunpack.c.l.b16 %v4306
        %v5612 = vunpack.c.h.b16 %v4306
        %v5613 = vunpack.c.l.b16 %v4307
        %v5614 = vunpack.c.h.b16 %v4307
        %v5615 = vunpack.c.l.b16 %v4308
        %v5616 = vunpack.c.h.b16 %v4308
        %v5617 = vunpack.c.l.b16 %v4309
        %v5618 = vunpack.c.h.b16 %v4309
        %v5619 = vunpack.c.l.b16 %v4310
        %v5620 = vunpack.c.h.b16 %v4310
        %v5621 = vunpack.c.l.b16 %v4311
        %v5622 = vunpack.c.h.b16 %v4311
        %v5623 = vunpack.c.l.b16 %v4312
        %v5624 = vunpack.c.h.b16 %v4312
        %v5625 = vunpack.c.l.b16 %v4313
        %v5626 = vunpack.c.h.b16 %v4313
        %v5627 = vunpack.c.l.b16 %v4314
        %v5628 = vunpack.c.h.b16 %v4314
        %v5629 = vunpack.c.l.b16 %v4315
        %v5630 = vunpack.c.h.b16 %v4315
        %v5631 = vunpack.c.l.b16 %v4316
        %v5632 = vunpack.c.h.b16 %v4316
        %v5633 = vunpack.c.l.b16 %v4317
        %v5634 = vunpack.c.h.b16 %v4317
        %v5635 = vunpack.c.l.b16 %v4318
        %v5636 = vunpack.c.h.b16 %v4318
        %v5637 = vunpack.c.l.b16 %v4319
        %v5638 = vunpack.c.h.b16 %v4319
        %v5639 = vunpack.c.l.b16 %v4320
        %v5640 = vunpack.c.h.b16 %v4320
        %v5641 = vunpack.c.l.b16 %v4321
        %v5642 = vunpack.c.h.b16 %v4321
        %v5643 = vunpack.c.l.b16 %v4322
        %v5644 = vunpack.c.h.b16 %v4322
        %v5645 = vunpack.c.l.b16 %v4323
        %v5646 = vunpack.c.h.b16 %v4323
        %v5647 = vunpack.c.l.b16 %v4324
        %v5648 = vunpack.c.h.b16 %v4324
        %v5649 = vunpack.c.l.b16 %v4325
        %v5650 = vunpack.c.h.b16 %v4325
        %v5651 = vunpack.c.l.b16 %v4326
        %v5652 = vunpack.c.h.b16 %v4326
        %v5653 = vunpack.c.l.b16 %v4327
        %v5654 = vunpack.c.h.b16 %v4327
        %v5655 = vunpack.c.l.b16 %v4328
        %v5656 = vunpack.c.h.b16 %v4328
        %v5657 = vunpack.c.l.b16 %v4329
        %v5658 = vunpack.c.h.b16 %v4329
        %v5659 = vunpack.c.l.b16 %v4330
        %v5660 = vunpack.c.h.b16 %v4330
        %v5661 = vunpack.c.l.b16 %v4331
        %v5662 = vunpack.c.h.b16 %v4331
        %v5663 = vunpack.c.l.b16 %v4332
        %v5664 = vunpack.c.h.b16 %v4332
        %v5665 = vunpack.c.l.b16 %v4333
        %v5666 = vunpack.c.h.b16 %v4333
        %v5667 = vunpack.c.l.b16 %v4334
        %v5668 = vunpack.c.h.b16 %v4334
        %v5669 = vunpack.c.l.b16 %v4335
        %v5670 = vunpack.c.h.b16 %v4335
        %v5671 = vunpack.c.l.b16 %v4336
        %v5672 = vunpack.c.h.b16 %v4336
        %v5673 = vunpack.c.l.b16 %v4337
        %v5674 = vunpack.c.h.b16 %v4337
        %v5675 = vunpack.c.l.b16 %v4338
        %v5676 = vunpack.c.h.b16 %v4338
        %v5677 = vunpack.c.l.b16 %v4339
        %v5678 = vunpack.c.h.b16 %v4339
        %v5679 = vunpack.c.l.b16 %v4340
        %v5680 = vunpack.c.h.b16 %v4340
        %v5681 = vunpack.c.l.b16 %v4341
        %v5682 = vunpack.c.h.b16 %v4341
        %v5683 = vunpack.c.l.b16 %v4342
        %v5684 = vunpack.c.h.b16 %v4342
        %v5685 = vunpack.c.l.b16 %v4343
        %v5686 = vunpack.c.h.b16 %v4343
        %v5687 = vunpack.c.l.b16 %v4344
        %v5688 = vunpack.c.h.b16 %v4344
        %v5689 = vunpack.c.l.b16 %v4345
        %v5690 = vunpack.c.h.b16 %v4345
        %v5691 = vunpack.c.l.b16 %v4346
        %v5692 = vunpack.c.h.b16 %v4346
        %v5693 = vunpack.c.l.b16 %v4347
        %v5694 = vunpack.c.h.b16 %v4347
        %v5695 = vunpack.c.l.b16 %v4348
        %v5696 = vunpack.c.h.b16 %v4348
        %v5697 = vunpack.c.l.b16 %v4349
        %v5698 = vunpack.c.h.b16 %v4349
        %v5699 = vunpack.c.l.b16 %v4350
        %v5700 = vunpack.c.h.b16 %v4350
        %v5701 = vunpack.c.l.b16 %v4351
        %v5702 = vunpack.c.h.b16 %v4351
        %v5703 = vunpack.c.l.b16 %v4352
        %v5704 = vunpack.c.h.b16 %v4352
        %v5705 = vunpack.c.l.b16 %v4353
        %v5706 = vunpack.c.h.b16 %v4353
        %v5707 = vunpack.c.l.b16 %v4354
        %v5708 = vunpack.c.h.b16 %v4354
        %v5709 = vunpack.c.l.b16 %v4355
        %v5710 = vunpack.c.h.b16 %v4355
        %v5711 = vunpack.c.l.b16 %v4356
        %v5712 = vunpack.c.h.b16 %v4356
        %v5713 = vunpack.c.l.b16 %v4357
        %v5714 = vunpack.c.h.b16 %v4357
        %v5715 = vunpack.c.l.b16 %v4358
        %v5716 = vunpack.c.h.b16 %v4358
        %v5717 = vunpack.c.l.b16 %v4359
        %v5718 = vunpack.c.h.b16 %v4359
        %v5719 = vunpack.c.l.b16 %v4360
        %v5720 = vunpack.c.h.b16 %v4360
        %v5721 = vunpack.c.l.b16 %v4361
        %v5722 = vunpack.c.h.b16 %v4361
        %v5723 = vunpack.c.l.b16 %v4362
        %v5724 = vunpack.c.h.b16 %v4362
        %v5725 = vunpack.c.l.b16 %v4363
        %v5726 = vunpack.c.h.b16 %v4363
        %v5727 = vunpack.c.l.b16 %v4364
        %v5728 = vunpack.c.h.b16 %v4364
        %v5729 = vunpack.c.l.b16 %v4365
        %v5730 = vunpack.c.h.b16 %v4365
        %v5731 = vunpack.c.l.b16 %v4366
        %v5732 = vunpack.c.h.b16 %v4366
        %v5733 = vunpack.c.l.b16 %v4367
        %v5734 = vunpack.c.h.b16 %v4367
        %v5735 = vunpack.c.l.b16 %v4368
        %v5736 = vunpack.c.h.b16 %v4368
        %v5737 = vunpack.c.l.b16 %v4369
        %v5738 = vunpack.c.h.b16 %v4369
        %v5739 = vunpack.c.l.b16 %v4370
        %v5740 = vunpack.c.h.b16 %v4370
        %v5741 = vunpack.c.l.b16 %v4371
        %v5742 = vunpack.c.h.b16 %v4371
        %v5743 = vunpack.c.l.b16 %v4372
        %v5744 = vunpack.c.h.b16 %v4372
        %v5745 = vunpack.c.l.b16 %v4373
        %v5746 = vunpack.c.h.b16 %v4373
        %v5747 = vunpack.c.l.b16 %v4374
        %v5748 = vunpack.c.h.b16 %v4374
        %v5749 = vunpack.c.l.b16 %v4375
        %v5750 = vunpack.c.h.b16 %v4375
        %v5751 = vunpack.c.l.b16 %v4376
        %v5752 = vunpack.c.h.b16 %v4376
        %v5753 = vunpack.c.l.b16 %v4377
        %v5754 = vunpack.c.h.b16 %v4377
        %v5755 = vunpack.c.l.b16 %v4378
        %v5756 = vunpack.c.h.b16 %v4378
        %v5757 = vunpack.c.l.b16 %v4379
        %v5758 = vunpack.c.h.b16 %v4379
        %v5759 = vunpack.c.l.b16 %v4380
        %v5760 = vunpack.c.h.b16 %v4380
        %v5761 = vunpack.c.l.b16 %v4381
        %v5762 = vunpack.c.h.b16 %v4381
        %v5763 = vunpack.c.l.b16 %v4382
        %v5764 = vunpack.c.h.b16 %v4382
        %v5765 = vunpack.c.l.b16 %v4383
        %v5766 = vunpack.c.h.b16 %v4383
        %v5767 = vunpack.c.l.b16 %v4384
        %v5768 = vunpack.c.h.b16 %v4384
        %v5769 = vunpack.c.l.b16 %v4385
        %v5770 = vunpack.c.h.b16 %v4385
        %v5771 = vunpack.c.l.b16 %v4386
        %v5772 = vunpack.c.h.b16 %v4386
        %v5773 = vunpack.c.l.b16 %v4387
        %v5774 = vunpack.c.h.b16 %v4387
        %v5775 = vunpack.c.l.b16 %v4388
        %v5776 = vunpack.c.h.b16 %v4388
        %v5777 = vunpack.c.l.b16 %v4389
        %v5778 = vunpack.c.h.b16 %v4389
        %v5779 = vunpack.c.l.b16 %v4390
        %v5780 = vunpack.c.h.b16 %v4390
        %v5781 = vpack.c.b16 %v4983, %v4981
        %v5782 = vpack.c.b16 %v4984, %v4982
        %v5783 = vpack.c.b16 %v4987, %v4985
        %v5784 = vpack.c.b16 %v4988, %v4986
        %v5785 = vpack.c.b16 %v4991, %v4989
        %v5786 = vpack.c.b16 %v4992, %v4990
        %v5787 = vpack.c.b16 %v4995, %v4993
        %v5788 = vpack.c.b16 %v4996, %v4994
        %v5789 = vpack.c.b16 %v4999, %v4997
        %v5790 = vpack.c.b16 %v5000, %v4998
        %v5791 = vpack.c.b16 %v5003, %v5001
        %v5792 = vpack.c.b16 %v5004, %v5002
        %v5793 = vpack.c.b16 %v5007, %v5005
        %v5794 = vpack.c.b16 %v5008, %v5006
        %v5795 = vpack.c.b16 %v5011, %v5009
        %v5796 = vpack.c.b16 %v5012, %v5010
        %v5797 = vpack.c.b16 %v5015, %v5013
        %v5798 = vpack.c.b16 %v5016, %v5014
        %v5799 = vpack.c.b16 %v5019, %v5017
        %v5800 = vpack.c.b16 %v5020, %v5018
        %v5801 = vpack.c.b16 %v5023, %v5021
        %v5802 = vpack.c.b16 %v5024, %v5022
        %v5803 = vpack.c.b16 %v5027, %v5025
        %v5804 = vpack.c.b16 %v5028, %v5026
        %v5805 = vpack.c.b16 %v5031, %v5029
        %v5806 = vpack.c.b16 %v5032, %v5030
        %v5807 = vpack.c.b16 %v5035, %v5033
        %v5808 = vpack.c.b16 %v5036, %v5034
        %v5809 = vpack.c.b16 %v5039, %v5037
        %v5810 = vpack.c.b16 %v5040, %v5038
        %v5811 = vpack.c.b16 %v5043, %v5041
        %v5812 = vpack.c.b16 %v5044, %v5042
        %v5813 = vpack.c.b16 %v5047, %v5045
        %v5814 = vpack.c.b16 %v5048, %v5046
        %v5815 = vpack.c.b16 %v5051, %v5049
        %v5816 = vpack.c.b16 %v5052, %v5050
        %v5817 = vpack.c.b16 %v5055, %v5053
        %v5818 = vpack.c.b16 %v5056, %v5054
        %v5819 = vpack.c.b16 %v5059, %v5057
        %v5820 = vpack.c.b16 %v5060, %v5058
        %v5821 = vpack.c.b16 %v5063, %v5061
        %v5822 = vpack.c.b16 %v5064, %v5062
        %v5823 = vpack.c.b16 %v5067, %v5065
        %v5824 = vpack.c.b16 %v5068, %v5066
        %v5825 = vpack.c.b16 %v5071, %v5069
        %v5826 = vpack.c.b16 %v5072, %v5070
        %v5827 = vpack.c.b16 %v5075, %v5073
        %v5828 = vpack.c.b16 %v5076, %v5074
        %v5829 = vpack.c.b16 %v5079, %v5077
        %v5830 = vpack.c.b16 %v5080, %v5078
        %v5831 = vpack.c.b16 %v5083, %v5081
        %v5832 = vpack.c.b16 %v5084, %v5082
        %v5833 = vpack.c.b16 %v5087, %v5085
        %v5834 = vpack.c.b16 %v5088, %v5086
        %v5835 = vpack.c.b16 %v5091, %v5089
        %v5836 = vpack.c.b16 %v5092, %v5090
        %v5837 = vpack.c.b16 %v5095, %v5093
        %v5838 = vpack.c.b16 %v5096, %v5094
        %v5839 = vpack.c.b16 %v5099, %v5097
        %v5840 = vpack.c.b16 %v5100, %v5098
        %v5841 = vpack.c.b16 %v5103, %v5101
        %v5842 = vpack.c.b16 %v5104, %v5102
        %v5843 = vpack.c.b16 %v5107, %v5105
        %v5844 = vpack.c.b16 %v5108, %v5106
        %v5845 = vpack.c.b16 %v5111, %v5109
        %v5846 = vpack.c.b16 %v5112, %v5110
        %v5847 = vpack.c.b16 %v5115, %v5113
        %v5848 = vpack.c.b16 %v5116, %v5114
        %v5849 = vpack.c.b16 %v5119, %v5117
        %v5850 = vpack.c.b16 %v5120, %v5118
        %v5851 = vpack.c.b16 %v5123, %v5121
        %v5852 = vpack.c.b16 %v5124, %v5122
        %v5853 = vpack.c.b16 %v5127, %v5125
        %v5854 = vpack.c.b16 %v5128, %v5126
        %v5855 = vpack.c.b16 %v5131, %v5129
        %v5856 = vpack.c.b16 %v5132, %v5130
        %v5857 = vpack.c.b16 %v5135, %v5133
        %v5858 = vpack.c.b16 %v5136, %v5134
        %v5859 = vpack.c.b16 %v5139, %v5137
        %v5860 = vpack.c.b16 %v5140, %v5138
        %v5861 = vpack.c.b16 %v5143, %v5141
        %v5862 = vpack.c.b16 %v5144, %v5142
        %v5863 = vpack.c.b16 %v5147, %v5145
        %v5864 = vpack.c.b16 %v5148, %v5146
        %v5865 = vpack.c.b16 %v5151, %v5149
        %v5866 = vpack.c.b16 %v5152, %v5150
        %v5867 = vpack.c.b16 %v5155, %v5153
        %v5868 = vpack.c.b16 %v5156, %v5154
        %v5869 = vpack.c.b16 %v5159, %v5157
        %v5870 = vpack.c.b16 %v5160, %v5158
        %v5871 = vpack.c.b16 %v5163, %v5161
        %v5872 = vpack.c.b16 %v5164, %v5162
        %v5873 = vpack.c.b16 %v5167, %v5165
        %v5874 = vpack.c.b16 %v5168, %v5166
        %v5875 = vpack.c.b16 %v5171, %v5169
        %v5876 = vpack.c.b16 %v5172, %v5170
        %v5877 = vpack.c.b16 %v5175, %v5173
        %v5878 = vpack.c.b16 %v5176, %v5174
        %v5879 = vpack.c.b16 %v5179, %v5177
        %v5880 = vpack.c.b16 %v5180, %v5178
        %v5881 = vpack.c.b16 %v5183, %v5181
        %v5882 = vpack.c.b16 %v5184, %v5182
        %v5883 = vpack.c.b16 %v5187, %v5185
        %v5884 = vpack.c.b16 %v5188, %v5186
        %v5885 = vpack.c.b16 %v5191, %v5189
        %v5886 = vpack.c.b16 %v5192, %v5190
        %v5887 = vpack.c.b16 %v5195, %v5193
        %v5888 = vpack.c.b16 %v5196, %v5194
        %v5889 = vpack.c.b16 %v5199, %v5197
        %v5890 = vpack.c.b16 %v5200, %v5198
        %v5891 = vpack.c.b16 %v5203, %v5201
        %v5892 = vpack.c.b16 %v5204, %v5202
        %v5893 = vpack.c.b16 %v5207, %v5205
        %v5894 = vpack.c.b16 %v5208, %v5206
        %v5895 = vpack.c.b16 %v5211, %v5209
        %v5896 = vpack.c.b16 %v5212, %v5210
        %v5897 = vpack.c.b16 %v5215, %v5213
        %v5898 = vpack.c.b16 %v5216, %v5214
        %v5899 = vpack.c.b16 %v5219, %v5217
        %v5900 = vpack.c.b16 %v5220, %v5218
        %v5901 = vpack.c.b16 %v5223, %v5221
        %v5902 = vpack.c.b16 %v5224, %v5222
        %v5903 = vpack.c.b16 %v5227, %v5225
        %v5904 = vpack.c.b16 %v5228, %v5226
        %v5905 = vpack.c.b16 %v5231, %v5229
        %v5906 = vpack.c.b16 %v5232, %v5230
        %v5907 = vpack.c.b16 %v5235, %v5233
        %v5908 = vpack.c.b16 %v5236, %v5234
        %v5909 = vpack.c.b16 %v5239, %v5237
        %v5910 = vpack.c.b16 %v5240, %v5238
        %v5911 = vpack.c.b16 %v5243, %v5241
        %v5912 = vpack.c.b16 %v5244, %v5242
        %v5913 = vpack.c.b16 %v5247, %v5245
        %v5914 = vpack.c.b16 %v5248, %v5246
        %v5915 = vpack.c.b16 %v5251, %v5249
        %v5916 = vpack.c.b16 %v5252, %v5250
        %v5917 = vpack.c.b16 %v5255, %v5253
        %v5918 = vpack.c.b16 %v5256, %v5254
        %v5919 = vpack.c.b16 %v5259, %v5257
        %v5920 = vpack.c.b16 %v5260, %v5258
        %v5921 = vpack.c.b16 %v5263, %v5261
        %v5922 = vpack.c.b16 %v5264, %v5262
        %v5923 = vpack.c.b16 %v5267, %v5265
        %v5924 = vpack.c.b16 %v5268, %v5266
        %v5925 = vpack.c.b16 %v5271, %v5269
        %v5926 = vpack.c.b16 %v5272, %v5270
        %v5927 = vpack.c.b16 %v5275, %v5273
        %v5928 = vpack.c.b16 %v5276, %v5274
        %v5929 = vpack.c.b16 %v5279, %v5277
        %v5930 = vpack.c.b16 %v5280, %v5278
        %v5931 = vpack.c.b16 %v5283, %v5281
        %v5932 = vpack.c.b16 %v5284, %v5282
        %v5933 = vpack.c.b16 %v5287, %v5285
        %v5934 = vpack.c.b16 %v5288, %v5286
        %v5935 = vpack.c.b16 %v5291, %v5289
        %v5936 = vpack.c.b16 %v5292, %v5290
        %v5937 = vpack.c.b16 %v5295, %v5293
        %v5938 = vpack.c.b16 %v5296, %v5294
        %v5939 = vpack.c.b16 %v5299, %v5297
        %v5940 = vpack.c.b16 %v5300, %v5298
        %v5941 = vpack.c.b16 %v5303, %v5301
        %v5942 = vpack.c.b16 %v5304, %v5302
        %v5943 = vpack.c.b16 %v5307, %v5305
        %v5944 = vpack.c.b16 %v5308, %v5306
        %v5945 = vpack.c.b16 %v5311, %v5309
        %v5946 = vpack.c.b16 %v5312, %v5310
        %v5947 = vpack.c.b16 %v5315, %v5313
        %v5948 = vpack.c.b16 %v5316, %v5314
        %v5949 = vpack.c.b16 %v5319, %v5317
        %v5950 = vpack.c.b16 %v5320, %v5318
        %v5951 = vpack.c.b16 %v5323, %v5321
        %v5952 = vpack.c.b16 %v5324, %v5322
        %v5953 = vpack.c.b16 %v5327, %v5325
        %v5954 = vpack.c.b16 %v5328, %v5326
        %v5955 = vpack.c.b16 %v5331, %v5329
        %v5956 = vpack.c.b16 %v5332, %v5330
        %v5957 = vpack.c.b16 %v5335, %v5333
        %v5958 = vpack.c.b16 %v5336, %v5334
        %v5959 = vpack.c.b16 %v5339, %v5337
        %v5960 = vpack.c.b16 %v5340, %v5338
        %v5961 = vpack.c.b16 %v5343, %v5341
        %v5962 = vpack.c.b16 %v5344, %v5342
        %v5963 = vpack.c.b16 %v5347, %v5345
        %v5964 = vpack.c.b16 %v5348, %v5346
        %v5965 = vpack.c.b16 %v5351, %v5349
        %v5966 = vpack.c.b16 %v5352, %v5350
        %v5967 = vpack.c.b16 %v5355, %v5353
        %v5968 = vpack.c.b16 %v5356, %v5354
        %v5969 = vpack.c.b16 %v5359, %v5357
        %v5970 = vpack.c.b16 %v5360, %v5358
        %v5971 = vpack.c.b16 %v5363, %v5361
        %v5972 = vpack.c.b16 %v5364, %v5362
        %v5973 = vpack.c.b16 %v5367, %v5365
        %v5974 = vpack.c.b16 %v5368, %v5366
        %v5975 = vpack.c.b16 %v5371, %v5369
        %v5976 = vpack.c.b16 %v5372, %v5370
        %v5977 = vpack.c.b16 %v5375, %v5373
        %v5978 = vpack.c.b16 %v5376, %v5374
        %v5979 = vpack.c.b16 %v5379, %v5377
        %v5980 = vpack.c.b16 %v5380, %v5378
        %v5981 = vpack.c.b16 %v5383, %v5381
        %v5982 = vpack.c.b16 %v5384, %v5382
        %v5983 = vpack.c.b16 %v5387, %v5385
        %v5984 = vpack.c.b16 %v5388, %v5386
        %v5985 = vpack.c.b16 %v5391, %v5389
        %v5986 = vpack.c.b16 %v5392, %v5390
        %v5987 = vpack.c.b16 %v5395, %v5393
        %v5988 = vpack.c.b16 %v5396, %v5394
        %v5989 = vpack.c.b16 %v5399, %v5397
        %v5990 = vpack.c.b16 %v5400, %v5398
        %v5991 = vpack.c.b16 %v5403, %v5401
        %v5992 = vpack.c.b16 %v5404, %v5402
        %v5993 = vpack.c.b16 %v5407, %v5405
        %v5994 = vpack.c.b16 %v5408, %v5406
        %v5995 = vpack.c.b16 %v5411, %v5409
        %v5996 = vpack.c.b16 %v5412, %v5410
        %v5997 = vpack.c.b16 %v5415, %v5413
        %v5998 = vpack.c.b16 %v5416, %v5414
        %v5999 = vpack.c.b16 %v5419, %v5417
        %v6000 = vpack.c.b16 %v5420, %v5418
        %v6001 = vpack.c.b16 %v5423, %v5421
        %v6002 = vpack.c.b16 %v5424, %v5422
        %v6003 = vpack.c.b16 %v5427, %v5425
        %v6004 = vpack.c.b16 %v5428, %v5426
        %v6005 = vpack.c.b16 %v5431, %v5429
        %v6006 = vpack.c.b16 %v5432, %v5430
        %v6007 = vpack.c.b16 %v5435, %v5433
        %v6008 = vpack.c.b16 %v5436, %v5434
        %v6009 = vpack.c.b16 %v5439, %v5437
        %v6010 = vpack.c.b16 %v5440, %v5438
        %v6011 = vpack.c.b16 %v5443, %v5441
        %v6012 = vpack.c.b16 %v5444, %v5442
        %v6013 = vpack.c.b16 %v5447, %v5445
        %v6014 = vpack.c.b16 %v5448, %v5446
        %v6015 = vpack.c.b16 %v5451, %v5449
        %v6016 = vpack.c.b16 %v5452, %v5450
        %v6017 = vpack.c.b16 %v5455, %v5453
        %v6018 = vpack.c.b16 %v5456, %v5454
        %v6019 = vpack.c.b16 %v5459, %v5457
        %v6020 = vpack.c.b16 %v5460, %v5458
        %v6021 = vpack.c.b16 %v5463, %v5461
        %v6022 = vpack.c.b16 %v5464, %v5462
        %v6023 = vpack.c.b16 %v5467, %v5465
        %v6024 = vpack.c.b16 %v5468, %v5466
        %v6025 = vpack.c.b16 %v5471, %v5469
        %v6026 = vpack.c.b16 %v5472, %v5470
        %v6027 = vpack.c.b16 %v5475, %v5473
        %v6028 = vpack.c.b16 %v5476, %v5474
        %v6029 = vpack.c.b16 %v5479, %v5477
        %v6030 = vpack.c.b16 %v5480, %v5478
        %v6031 = vpack.c.b16 %v5483, %v5481
        %v6032 = vpack.c.b16 %v5484, %v5482
        %v6033 = vpack.c.b16 %v5487, %v5485
        %v6034 = vpack.c.b16 %v5488, %v5486
        %v6035 = vpack.c.b16 %v5491, %v5489
        %v6036 = vpack.c.b16 %v5492, %v5490
        %v6037 = vpack.c.b16 %v5495, %v5493
        %v6038 = vpack.c.b16 %v5496, %v5494
        %v6039 = vpack.c.b16 %v5499, %v5497
        %v6040 = vpack.c.b16 %v5500, %v5498
        %v6041 = vpack.c.b16 %v5503, %v5501
        %v6042 = vpack.c.b16 %v5504, %v5502
        %v6043 = vpack.c.b16 %v5507, %v5505
        %v6044 = vpack.c.b16 %v5508, %v5506
        %v6045 = vpack.c.b16 %v5511, %v5509
        %v6046 = vpack.c.b16 %v5512, %v5510
        %v6047 = vpack.c.b16 %v5515, %v5513
        %v6048 = vpack.c.b16 %v5516, %v5514
        %v6049 = vpack.c.b16 %v5519, %v5517
        %v6050 = vpack.c.b16 %v5520, %v5518
        %v6051 = vpack.c.b16 %v5523, %v5521
        %v6052 = vpack.c.b16 %v5524, %v5522
        %v6053 = vpack.c.b16 %v5527, %v5525
        %v6054 = vpack.c.b16 %v5528, %v5526
        %v6055 = vpack.c.b16 %v5531, %v5529
        %v6056 = vpack.c.b16 %v5532, %v5530
        %v6057 = vpack.c.b16 %v5535, %v5533
        %v6058 = vpack.c.b16 %v5536, %v5534
        %v6059 = vpack.c.b16 %v5539, %v5537
        %v6060 = vpack.c.b16 %v5540, %v5538
        %v6061 = vpack.c.b16 %v5543, %v5541
        %v6062 = vpack.c.b16 %v5544, %v5542
        %v6063 = vpack.c.b16 %v5547, %v5545
        %v6064 = vpack.c.b16 %v5548, %v5546
        %v6065 = vpack.c.b16 %v5551, %v5549
        %v6066 = vpack.c.b16 %v5552, %v5550
        %v6067 = vpack.c.b16 %v5555, %v5553
        %v6068 = vpack.c.b16 %v5556, %v5554
        %v6069 = vpack.c.b16 %v5559, %v5557
        %v6070 = vpack.c.b16 %v5560, %v5558
        %v6071 = vpack.c.b16 %v5563, %v5561
        %v6072 = vpack.c.b16 %v5564, %v5562
        %v6073 = vpack.c.b16 %v5567, %v5565
        %v6074 = vpack.c.b16 %v5568, %v5566
        %v6075 = vpack.c.b16 %v5571, %v5569
        %v6076 = vpack.c.b16 %v5572, %v5570
        %v6077 = vpack.c.b16 %v5575, %v5573
        %v6078 = vpack.c.b16 %v5576, %v5574
        %v6079 = vpack.c.b16 %v5579, %v5577
        %v6080 = vpack.c.b16 %v5580, %v5578
        %v6081 = vpack.c.b16 %v5583, %v5581
        %v6082 = vpack.c.b16 %v5584, %v5582
        %v6083 = vpack.c.b16 %v5587, %v5585
        %v6084 = vpack.c.b16 %v5588, %v5586
        %v6085 = vpack.c.b16 %v5591, %v5589
        %v6086 = vpack.c.b16 %v5592, %v5590
        %v6087 = vpack.c.b16 %v5595, %v5593
        %v6088 = vpack.c.b16 %v5596, %v5594
        %v6089 = vpack.c.b16 %v5599, %v5597
        %v6090 = vpack.c.b16 %v5600, %v5598
        %v6091 = vpack.c.b16 %v5603, %v5601
        %v6092 = vpack.c.b16 %v5604, %v5602
        %v6093 = vpack.c.b16 %v5607, %v5605
        %v6094 = vpack.c.b16 %v5608, %v5606
        %v6095 = vpack.c.b16 %v5611, %v5609
        %v6096 = vpack.c.b16 %v5612, %v5610
        %v6097 = vpack.c.b16 %v5615, %v5613
        %v6098 = vpack.c.b16 %v5616, %v5614
        %v6099 = vpack.c.b16 %v5619, %v5617
        %v6100 = vpack.c.b16 %v5620, %v5618
        %v6101 = vpack.c.b16 %v5623, %v5621
        %v6102 = vpack.c.b16 %v5624, %v5622
        %v6103 = vpack.c.b16 %v5627, %v5625
        %v6104 = vpack.c.b16 %v5628, %v5626
        %v6105 = vpack.c.b16 %v5631, %v5629
        %v6106 = vpack.c.b16 %v5632, %v5630
        %v6107 = vpack.c.b16 %v5635, %v5633
        %v6108 = vpack.c.b16 %v5636, %v5634
        %v6109 = vpack.c.b16 %v5639, %v5637
        %v6110 = vpack.c.b16 %v5640, %v5638
        %v6111 = vpack.c.b16 %v5643, %v5641
        %v6112 = vpack.c.b16 %v5644, %v5642
        %v6113 = vpack.c.b16 %v5647, %v5645
        %v6114 = vpack.c.b16 %v5648, %v5646
        %v6115 = vpack.c.b16 %v5651, %v5649
        %v6116 = vpack.c.b16 %v5652, %v5650
        %v6117 = vpack.c.b16 %v5655, %v5653
        %v6118 = vpack.c.b16 %v5656, %v5654
        %v6119 = vpack.c.b16 %v5659, %v5657
        %v6120 = vpack.c.b16 %v5660, %v5658
        %v6121 = vpack.c.b16 %v5663, %v5661
        %v6122 = vpack.c.b16 %v5664, %v5662
        %v6123 = vpack.c.b16 %v5667, %v5665
        %v6124 = vpack.c.b16 %v5668, %v5666
        %v6125 = vpack.c.b16 %v5671, %v5669
        %v6126 = vpack.c.b16 %v5672, %v5670
        %v6127 = vpack.c.b16 %v5675, %v5673
        %v6128 = vpack.c.b16 %v5676, %v5674
        %v6129 = vpack.c.b16 %v5679, %v5677
        %v6130 = vpack.c.b16 %v5680, %v5678
        %v6131 = vpack.c.b16 %v5683, %v5681
        %v6132 = vpack.c.b16 %v5684, %v5682
        %v6133 = vpack.c.b16 %v5687, %v5685
        %v6134 = vpack.c.b16 %v5688, %v5686
        %v6135 = vpack.c.b16 %v5691, %v5689
        %v6136 = vpack.c.b16 %v5692, %v5690
        %v6137 = vpack.c.b16 %v5695, %v5693
        %v6138 = vpack.c.b16 %v5696, %v5694
        %v6139 = vpack.c.b16 %v5699, %v5697
        %v6140 = vpack.c.b16 %v5700, %v5698
        %v6141 = vpack.c.b16 %v5703, %v5701
        %v6142 = vpack.c.b16 %v5704, %v5702
        %v6143 = vpack.c.b16 %v5707, %v5705
        %v6144 = vpack.c.b16 %v5708, %v5706
        %v6145 = vpack.c.b16 %v5711, %v5709
        %v6146 = vpack.c.b16 %v5712, %v5710
        %v6147 = vpack.c.b16 %v5715, %v5713
        %v6148 = vpack.c.b16 %v5716, %v5714
        %v6149 = vpack.c.b16 %v5719, %v5717
        %v6150 = vpack.c.b16 %v5720, %v5718
        %v6151 = vpack.c.b16 %v5723, %v5721
        %v6152 = vpack.c.b16 %v5724, %v5722
        %v6153 = vpack.c.b16 %v5727, %v5725
        %v6154 = vpack.c.b16 %v5728, %v5726
        %v6155 = vpack.c.b16 %v5731, %v5729
        %v6156 = vpack.c.b16 %v5732, %v5730
        %v6157 = vpack.c.b16 %v5735, %v5733
        %v6158 = vpack.c.b16 %v5736, %v5734
        %v6159 = vpack.c.b16 %v5739, %v5737
        %v6160 = vpack.c.b16 %v5740, %v5738
        %v6161 = vpack.c.b16 %v5743, %v5741
        %v6162 = vpack.c.b16 %v5744, %v5742
        %v6163 = vpack.c.b16 %v5747, %v5745
        %v6164 = vpack.c.b16 %v5748, %v5746
        %v6165 = vpack.c.b16 %v5751, %v5749
        %v6166 = vpack.c.b16 %v5752, %v5750
        %v6167 = vpack.c.b16 %v5755, %v5753
        %v6168 = vpack.c.b16 %v5756, %v5754
        %v6169 = vpack.c.b16 %v5759, %v5757
        %v6170 = vpack.c.b16 %v5760, %v5758
        %v6171 = vpack.c.b16 %v5763, %v5761
        %v6172 = vpack.c.b16 %v5764, %v5762
        %v6173 = vpack.c.b16 %v5767, %v5765
        %v6174 = vpack.c.b16 %v5768, %v5766
        %v6175 = vpack.c.b16 %v5771, %v5769
        %v6176 = vpack.c.b16 %v5772, %v5770
        %v6177 = vpack.c.b16 %v5775, %v5773
        %v6178 = vpack.c.b16 %v5776, %v5774
        %v6179 = vpack.c.b16 %v5779, %v5777
        %v6180 = vpack.c.b16 %v5780, %v5778
        %6581 = vmatprep.subr.bf16.mxu0 %v5796
        %6582 = vmatpush1.bf16.msra.mxu0 %v5795
        %6583 = vmatprep.subr.bf16.mxu0 %v5794
        %6584 = vmatpush1.bf16.msra.mxu0 %v5793
        %6585 = vmatprep.subr.bf16.mxu0 %v5792
        %6586 = vmatpush1.bf16.msra.mxu0 %v5791
        %6587 = vmatprep.subr.bf16.mxu0 %v5790
        %6588 = vmatpush1.bf16.msra.mxu0 %v5789
        %6589 = vmatprep.subr.bf16.mxu0 %v5788
        %6590 = vmatpush1.bf16.msra.mxu0 %v5787
        %6591 = vmatprep.subr.bf16.mxu0 %v5786
        %6592 = vmatpush1.bf16.msra.mxu0 %v5785
        %6593 = vmatprep.subr.bf16.mxu0 %v5784
        %6594 = vmatpush1.bf16.msra.mxu0 %v5783
        %6595 = vmatprep.subr.bf16.mxu0 %v5782
        %6596 = vmatpush1.bf16.msra.mxu0 %v5781
        %6597 = vmatprep.subr.bf16.mxu0 %v5812
        %6598 = vmatpush2.bf16.msra.mxu0 %v5811
        %6599 = vmatprep.subr.bf16.mxu0 %v5810
        %6600 = vmatpush2.bf16.msra.mxu0 %v5809
        %6601 = vmatprep.subr.bf16.mxu0 %v5808
        %6602 = vmatpush2.bf16.msra.mxu0 %v5807
        %6603 = vmatprep.subr.bf16.mxu0 %v5806
        %6604 = vmatpush2.bf16.msra.mxu0 %v5805
        %6605 = vmatprep.subr.bf16.mxu0 %v5804
        %6606 = vmatpush2.bf16.msra.mxu0 %v5803
        %6607 = vmatprep.subr.bf16.mxu0 %v5802
        %6608 = vmatpush2.bf16.msra.mxu0 %v5801
        %6609 = vmatprep.subr.bf16.mxu0 %v5800
        %6610 = vmatpush2.bf16.msra.mxu0 %v5799
        %6611 = vmatprep.subr.bf16.mxu0 %v5798
        %6612 = vmatpush2.bf16.msra.mxu0 %v5797
        %6613 = vmatprep.mubr.bf16.mxu0 %v4432
        %6614 = vmatmul.mubr.bf16.gmra.mxu0 %v4418
        %v6615 = vpop.f32.mrf.mxu0
        %v6616 = vadd.f32 0.0, %v6615
        %v6617 = vpop.f32.mrf.mxu0
        %v6618 = vadd.f32 0.0, %v6617
        %v6619 = vpop.f32.mrf.mxu0
        %v6620 = vpop.f32.mrf.mxu0
        %6621 = vdwg.mxu0
        %6622 = vmatprep.subr.bf16.mxu0 %v5828
        %6623 = vmatpush1.bf16.msra.mxu0 %v5827
        %6624 = vmatprep.subr.bf16.mxu0 %v5826
        %6625 = vmatpush1.bf16.msra.mxu0 %v5825
        %6626 = vmatprep.subr.bf16.mxu0 %v5824
        %6627 = vmatpush1.bf16.msra.mxu0 %v5823
        %6628 = vmatprep.subr.bf16.mxu0 %v5822
        %6629 = vmatpush1.bf16.msra.mxu0 %v5821
        %6630 = vmatprep.subr.bf16.mxu0 %v5820
        %6631 = vmatpush1.bf16.msra.mxu0 %v5819
        %6632 = vmatprep.subr.bf16.mxu0 %v5818
        %6633 = vmatpush1.bf16.msra.mxu0 %v5817
        %6634 = vmatprep.subr.bf16.mxu0 %v5816
        %6635 = vmatpush1.bf16.msra.mxu0 %v5815
        %6636 = vmatprep.subr.bf16.mxu0 %v5814
        %6637 = vmatpush1.bf16.msra.mxu0 %v5813
        %6638 = vmatprep.subr.bf16.mxu0 %v5844
        %6639 = vmatpush2.bf16.msra.mxu0 %v5843
        %6640 = vmatprep.subr.bf16.mxu0 %v5842
        %6641 = vmatpush2.bf16.msra.mxu0 %v5841
        %6642 = vmatprep.subr.bf16.mxu0 %v5840
        %6643 = vmatpush2.bf16.msra.mxu0 %v5839
        %6644 = vmatprep.subr.bf16.mxu0 %v5838
        %6645 = vmatpush2.bf16.msra.mxu0 %v5837
        %6646 = vmatprep.subr.bf16.mxu0 %v5836
        %6647 = vmatpush2.bf16.msra.mxu0 %v5835
        %6648 = vmatprep.subr.bf16.mxu0 %v5834
        %6649 = vmatpush2.bf16.msra.mxu0 %v5833
        %6650 = vmatprep.subr.bf16.mxu0 %v5832
        %6651 = vmatpush2.bf16.msra.mxu0 %v5831
        %6652 = vmatprep.subr.bf16.mxu0 %v5830
        %6653 = vmatpush2.bf16.msra.mxu0 %v5829
        %6654 = vmatprep.mubr.bf16.mxu0 %v4442
        %6655 = vmatmul.mubr.bf16.gmra.mxu0 %v4440
        %v6656 = vpop.f32.mrf.mxu0
        %v6657 = vadd.f32 %v6616, %v6656
        %v6658 = vpop.f32.mrf.mxu0
        %v6659 = vadd.f32 %v6618, %v6658
        %v6660 = vpop.f32.mrf.mxu0
        %v6661 = vpop.f32.mrf.mxu0
        %6662 = vdwg.mxu0
        %6663 = vmatprep.subr.bf16.mxu0 %v5860
        %6664 = vmatpush1.bf16.msra.mxu0 %v5859
        %6665 = vmatprep.subr.bf16.mxu0 %v5858
        %6666 = vmatpush1.bf16.msra.mxu0 %v5857
        %6667 = vmatprep.subr.bf16.mxu0 %v5856
        %6668 = vmatpush1.bf16.msra.mxu0 %v5855
        %6669 = vmatprep.subr.bf16.mxu0 %v5854
        %6670 = vmatpush1.bf16.msra.mxu0 %v5853
        %6671 = vmatprep.subr.bf16.mxu0 %v5852
        %6672 = vmatpush1.bf16.msra.mxu0 %v5851
        %6673 = vmatprep.subr.bf16.mxu0 %v5850
        %6674 = vmatpush1.bf16.msra.mxu0 %v5849
        %6675 = vmatprep.subr.bf16.mxu0 %v5848
        %6676 = vmatpush1.bf16.msra.mxu0 %v5847
        %6677 = vmatprep.subr.bf16.mxu0 %v5846
        %6678 = vmatpush1.bf16.msra.mxu0 %v5845
        %6679 = vmatprep.subr.bf16.mxu0 %v5876
        %6680 = vmatpush2.bf16.msra.mxu0 %v5875
        %6681 = vmatprep.subr.bf16.mxu0 %v5874
        %6682 = vmatpush2.bf16.msra.mxu0 %v5873
        %6683 = vmatprep.subr.bf16.mxu0 %v5872
        %6684 = vmatpush2.bf16.msra.mxu0 %v5871
        %6685 = vmatprep.subr.bf16.mxu0 %v5870
        %6686 = vmatpush2.bf16.msra.mxu0 %v5869
        %6687 = vmatprep.subr.bf16.mxu0 %v5868
        %6688 = vmatpush2.bf16.msra.mxu0 %v5867
        %6689 = vmatprep.subr.bf16.mxu0 %v5866
        %6690 = vmatpush2.bf16.msra.mxu0 %v5865
        %6691 = vmatprep.subr.bf16.mxu0 %v5864
        %6692 = vmatpush2.bf16.msra.mxu0 %v5863
        %6693 = vmatprep.subr.bf16.mxu0 %v5862
        %6694 = vmatpush2.bf16.msra.mxu0 %v5861
        %6695 = vmatprep.mubr.bf16.mxu0 %v4439
        %6696 = vmatmul.mubr.bf16.gmra.mxu0 %v4425
        %v6697 = vpop.f32.mrf.mxu0
        %v6698 = vadd.f32 %v6657, %v6697
        %v6699 = vpop.f32.mrf.mxu0
        %v6700 = vadd.f32 %v6659, %v6699
        %v6701 = vpop.f32.mrf.mxu0
        %v6702 = vpop.f32.mrf.mxu0
        %6703 = vdwg.mxu0
        %6704 = vmatprep.subr.bf16.mxu0 %v5892
        %6705 = vmatpush1.bf16.msra.mxu0 %v5891
        %6706 = vmatprep.subr.bf16.mxu0 %v5890
        %6707 = vmatpush1.bf16.msra.mxu0 %v5889
        %6708 = vmatprep.subr.bf16.mxu0 %v5888
        %6709 = vmatpush1.bf16.msra.mxu0 %v5887
        %6710 = vmatprep.subr.bf16.mxu0 %v5886
        %6711 = vmatpush1.bf16.msra.mxu0 %v5885
        %6712 = vmatprep.subr.bf16.mxu0 %v5884
        %6713 = vmatpush1.bf16.msra.mxu0 %v5883
        %6714 = vmatprep.subr.bf16.mxu0 %v5882
        %6715 = vmatpush1.bf16.msra.mxu0 %v5881
        %6716 = vmatprep.subr.bf16.mxu0 %v5880
        %6717 = vmatpush1.bf16.msra.mxu0 %v5879
        %6718 = vmatprep.subr.bf16.mxu0 %v5878
        %6719 = vmatpush1.bf16.msra.mxu0 %v5877
        %6720 = vmatprep.subr.bf16.mxu0 %v5908
        %6721 = vmatpush2.bf16.msra.mxu0 %v5907
        %6722 = vmatprep.subr.bf16.mxu0 %v5906
        %6723 = vmatpush2.bf16.msra.mxu0 %v5905
        %6724 = vmatprep.subr.bf16.mxu0 %v5904
        %6725 = vmatpush2.bf16.msra.mxu0 %v5903
        %6726 = vmatprep.subr.bf16.mxu0 %v5902
        %6727 = vmatpush2.bf16.msra.mxu0 %v5901
        %6728 = vmatprep.subr.bf16.mxu0 %v5900
        %6729 = vmatpush2.bf16.msra.mxu0 %v5899
        %6730 = vmatprep.subr.bf16.mxu0 %v5898
        %6731 = vmatpush2.bf16.msra.mxu0 %v5897
        %6732 = vmatprep.subr.bf16.mxu0 %v5896
        %6733 = vmatpush2.bf16.msra.mxu0 %v5895
        %6734 = vmatprep.subr.bf16.mxu0 %v5894
        %6735 = vmatpush2.bf16.msra.mxu0 %v5893
        %6736 = vmatprep.mubr.bf16.mxu0 %v4443
        %6737 = vmatmul.mubr.bf16.gmra.mxu0 %v4441
        %v6738 = vpop.f32.mrf.mxu0
        %v6739 = vadd.f32 %v6698, %v6738
        %v6740 = vpop.f32.mrf.mxu0
        %v6741 = vadd.f32 %v6700, %v6740
        %v6742 = vpop.f32.mrf.mxu0
        %v6743 = vpop.f32.mrf.mxu0
        %6744 = vdwg.mxu0
        %6745 = vmatprep.subr.bf16.mxu0 %v5924
        %6746 = vmatpush1.bf16.msra.mxu0 %v5923
        %6747 = vmatprep.subr.bf16.mxu0 %v5922
        %6748 = vmatpush1.bf16.msra.mxu0 %v5921
        %6749 = vmatprep.subr.bf16.mxu0 %v5920
        %6750 = vmatpush1.bf16.msra.mxu0 %v5919
        %6751 = vmatprep.subr.bf16.mxu0 %v5918
        %6752 = vmatpush1.bf16.msra.mxu0 %v5917
        %6753 = vmatprep.subr.bf16.mxu0 %v5916
        %6754 = vmatpush1.bf16.msra.mxu0 %v5915
        %6755 = vmatprep.subr.bf16.mxu0 %v5914
        %6756 = vmatpush1.bf16.msra.mxu0 %v5913
        %6757 = vmatprep.subr.bf16.mxu0 %v5912
        %6758 = vmatpush1.bf16.msra.mxu0 %v5911
        %6759 = vmatprep.subr.bf16.mxu0 %v5910
        %6760 = vmatpush1.bf16.msra.mxu0 %v5909
        %6761 = vmatprep.subr.bf16.mxu0 %v5940
        %6762 = vmatpush2.bf16.msra.mxu0 %v5939
        %6763 = vmatprep.subr.bf16.mxu0 %v5938
        %6764 = vmatpush2.bf16.msra.mxu0 %v5937
        %6765 = vmatprep.subr.bf16.mxu0 %v5936
        %6766 = vmatpush2.bf16.msra.mxu0 %v5935
        %6767 = vmatprep.subr.bf16.mxu0 %v5934
        %6768 = vmatpush2.bf16.msra.mxu0 %v5933
        %6769 = vmatprep.subr.bf16.mxu0 %v5932
        %6770 = vmatpush2.bf16.msra.mxu0 %v5931
        %6771 = vmatprep.subr.bf16.mxu0 %v5930
        %6772 = vmatpush2.bf16.msra.mxu0 %v5929
        %6773 = vmatprep.subr.bf16.mxu0 %v5928
        %6774 = vmatpush2.bf16.msra.mxu0 %v5927
        %6775 = vmatprep.subr.bf16.mxu0 %v5926
        %6776 = vmatpush2.bf16.msra.mxu0 %v5925
        %6777 = vmatprep.mubr.bf16.mxu0 %v4481
        %6778 = vmatmul.mubr.bf16.gmra.mxu0 %v4467
        %v6779 = vpop.f32.mrf.mxu0
        %v6780 = vadd.f32 %v6739, %v6779
        %v6781 = vpop.f32.mrf.mxu0
        %v6782 = vadd.f32 %v6741, %v6781
        %v6783 = vpop.f32.mrf.mxu0
        %v6784 = vpop.f32.mrf.mxu0
        %6785 = vdwg.mxu0
        %6786 = vmatprep.subr.bf16.mxu0 %v5956
        %6787 = vmatpush1.bf16.msra.mxu0 %v5955
        %6788 = vmatprep.subr.bf16.mxu0 %v5954
        %6789 = vmatpush1.bf16.msra.mxu0 %v5953
        %6790 = vmatprep.subr.bf16.mxu0 %v5952
        %6791 = vmatpush1.bf16.msra.mxu0 %v5951
        %6792 = vmatprep.subr.bf16.mxu0 %v5950
        %6793 = vmatpush1.bf16.msra.mxu0 %v5949
        %6794 = vmatprep.subr.bf16.mxu0 %v5948
        %6795 = vmatpush1.bf16.msra.mxu0 %v5947
        %6796 = vmatprep.subr.bf16.mxu0 %v5946
        %6797 = vmatpush1.bf16.msra.mxu0 %v5945
        %6798 = vmatprep.subr.bf16.mxu0 %v5944
        %6799 = vmatpush1.bf16.msra.mxu0 %v5943
        %6800 = vmatprep.subr.bf16.mxu0 %v5942
        %6801 = vmatpush1.bf16.msra.mxu0 %v5941
        %6802 = vmatprep.subr.bf16.mxu0 %v5972
        %6803 = vmatpush2.bf16.msra.mxu0 %v5971
        %6804 = vmatprep.subr.bf16.mxu0 %v5970
        %6805 = vmatpush2.bf16.msra.mxu0 %v5969
        %6806 = vmatprep.subr.bf16.mxu0 %v5968
        %6807 = vmatpush2.bf16.msra.mxu0 %v5967
        %6808 = vmatprep.subr.bf16.mxu0 %v5966
        %6809 = vmatpush2.bf16.msra.mxu0 %v5965
        %6810 = vmatprep.subr.bf16.mxu0 %v5964
        %6811 = vmatpush2.bf16.msra.mxu0 %v5963
        %6812 = vmatprep.subr.bf16.mxu0 %v5962
        %6813 = vmatpush2.bf16.msra.mxu0 %v5961
        %6814 = vmatprep.subr.bf16.mxu0 %v5960
        %6815 = vmatpush2.bf16.msra.mxu0 %v5959
        %6816 = vmatprep.subr.bf16.mxu0 %v5958
        %6817 = vmatpush2.bf16.msra.mxu0 %v5957
        %6818 = vmatprep.mubr.bf16.mxu0 %v4491
        %6819 = vmatmul.mubr.bf16.gmra.mxu0 %v4489
        %v6820 = vpop.f32.mrf.mxu0
        %v6821 = vadd.f32 %v6780, %v6820
        %v6822 = vpop.f32.mrf.mxu0
        %v6823 = vadd.f32 %v6782, %v6822
        %v6824 = vpop.f32.mrf.mxu0
        %v6825 = vpop.f32.mrf.mxu0
        %6826 = vdwg.mxu0
        %6827 = vmatprep.subr.bf16.mxu0 %v5988
        %6828 = vmatpush1.bf16.msra.mxu0 %v5987
        %6829 = vmatprep.subr.bf16.mxu0 %v5986
        %6830 = vmatpush1.bf16.msra.mxu0 %v5985
        %6831 = vmatprep.subr.bf16.mxu0 %v5984
        %6832 = vmatpush1.bf16.msra.mxu0 %v5983
        %6833 = vmatprep.subr.bf16.mxu0 %v5982
        %6834 = vmatpush1.bf16.msra.mxu0 %v5981
        %6835 = vmatprep.subr.bf16.mxu0 %v5980
        %6836 = vmatpush1.bf16.msra.mxu0 %v5979
        %6837 = vmatprep.subr.bf16.mxu0 %v5978
        %6838 = vmatpush1.bf16.msra.mxu0 %v5977
        %6839 = vmatprep.subr.bf16.mxu0 %v5976
        %6840 = vmatpush1.bf16.msra.mxu0 %v5975
        %6841 = vmatprep.subr.bf16.mxu0 %v5974
        %6842 = vmatpush1.bf16.msra.mxu0 %v5973
        %6843 = vmatprep.subr.bf16.mxu0 %v6004
        %6844 = vmatpush2.bf16.msra.mxu0 %v6003
        %6845 = vmatprep.subr.bf16.mxu0 %v6002
        %6846 = vmatpush2.bf16.msra.mxu0 %v6001
        %6847 = vmatprep.subr.bf16.mxu0 %v6000
        %6848 = vmatpush2.bf16.msra.mxu0 %v5999
        %6849 = vmatprep.subr.bf16.mxu0 %v5998
        %6850 = vmatpush2.bf16.msra.mxu0 %v5997
        %6851 = vmatprep.subr.bf16.mxu0 %v5996
        %6852 = vmatpush2.bf16.msra.mxu0 %v5995
        %6853 = vmatprep.subr.bf16.mxu0 %v5994
        %6854 = vmatpush2.bf16.msra.mxu0 %v5993
        %6855 = vmatprep.subr.bf16.mxu0 %v5992
        %6856 = vmatpush2.bf16.msra.mxu0 %v5991
        %6857 = vmatprep.subr.bf16.mxu0 %v5990
        %6858 = vmatpush2.bf16.msra.mxu0 %v5989
        %6859 = vmatprep.mubr.bf16.mxu0 %v4488
        %6860 = vmatmul.mubr.bf16.gmra.mxu0 %v4474
        %v6861 = vpop.f32.mrf.mxu0
        %v6862 = vadd.f32 %v6821, %v6861
        %v6863 = vpop.f32.mrf.mxu0
        %v6864 = vadd.f32 %v6823, %v6863
        %v6865 = vpop.f32.mrf.mxu0
        %v6866 = vpop.f32.mrf.mxu0
        %6867 = vdwg.mxu0
        %6868 = vmatprep.subr.bf16.mxu0 %v6020
        %6869 = vmatpush1.bf16.msra.mxu0 %v6019
        %6870 = vmatprep.subr.bf16.mxu0 %v6018
        %6871 = vmatpush1.bf16.msra.mxu0 %v6017
        %6872 = vmatprep.subr.bf16.mxu0 %v6016
        %6873 = vmatpush1.bf16.msra.mxu0 %v6015
        %6874 = vmatprep.subr.bf16.mxu0 %v6014
        %6875 = vmatpush1.bf16.msra.mxu0 %v6013
        %6876 = vmatprep.subr.bf16.mxu0 %v6012
        %6877 = vmatpush1.bf16.msra.mxu0 %v6011
        %6878 = vmatprep.subr.bf16.mxu0 %v6010
        %6879 = vmatpush1.bf16.msra.mxu0 %v6009
        %6880 = vmatprep.subr.bf16.mxu0 %v6008
        %6881 = vmatpush1.bf16.msra.mxu0 %v6007
        %6882 = vmatprep.subr.bf16.mxu0 %v6006
        %6883 = vmatpush1.bf16.msra.mxu0 %v6005
        %6884 = vmatprep.subr.bf16.mxu0 %v6036
        %6885 = vmatpush2.bf16.msra.mxu0 %v6035
        %6886 = vmatprep.subr.bf16.mxu0 %v6034
        %6887 = vmatpush2.bf16.msra.mxu0 %v6033
        %6888 = vmatprep.subr.bf16.mxu0 %v6032
        %6889 = vmatpush2.bf16.msra.mxu0 %v6031
        %6890 = vmatprep.subr.bf16.mxu0 %v6030
        %6891 = vmatpush2.bf16.msra.mxu0 %v6029
        %6892 = vmatprep.subr.bf16.mxu0 %v6028
        %6893 = vmatpush2.bf16.msra.mxu0 %v6027
        %6894 = vmatprep.subr.bf16.mxu0 %v6026
        %6895 = vmatpush2.bf16.msra.mxu0 %v6025
        %6896 = vmatprep.subr.bf16.mxu0 %v6024
        %6897 = vmatpush2.bf16.msra.mxu0 %v6023
        %6898 = vmatprep.subr.bf16.mxu0 %v6022
        %6899 = vmatpush2.bf16.msra.mxu0 %v6021
        %6900 = vmatprep.mubr.bf16.mxu0 %v4492
        %6901 = vmatmul.mubr.bf16.gmra.mxu0 %v4490
        %v6902 = vpop.f32.mrf.mxu0
        %v6903 = vadd.f32 %v6862, %v6902
        %v6904 = vpop.f32.mrf.mxu0
        %v6905 = vadd.f32 %v6864, %v6904
        %v6906 = vpop.f32.mrf.mxu0
        %v6907 = vpop.f32.mrf.mxu0
        %6908 = vdwg.mxu0
        %6909 = vmatprep.subr.bf16.mxu0 %v6052
        %6910 = vmatpush1.bf16.msra.mxu0 %v6051
        %6911 = vmatprep.subr.bf16.mxu0 %v6050
        %6912 = vmatpush1.bf16.msra.mxu0 %v6049
        %6913 = vmatprep.subr.bf16.mxu0 %v6048
        %6914 = vmatpush1.bf16.msra.mxu0 %v6047
        %6915 = vmatprep.subr.bf16.mxu0 %v6046
        %6916 = vmatpush1.bf16.msra.mxu0 %v6045
        %6917 = vmatprep.subr.bf16.mxu0 %v6044
        %6918 = vmatpush1.bf16.msra.mxu0 %v6043
        %6919 = vmatprep.subr.bf16.mxu0 %v6042
        %6920 = vmatpush1.bf16.msra.mxu0 %v6041
        %6921 = vmatprep.subr.bf16.mxu0 %v6040
        %6922 = vmatpush1.bf16.msra.mxu0 %v6039
        %6923 = vmatprep.subr.bf16.mxu0 %v6038
        %6924 = vmatpush1.bf16.msra.mxu0 %v6037
        %6925 = vmatprep.subr.bf16.mxu0 %v6068
        %6926 = vmatpush2.bf16.msra.mxu0 %v6067
        %6927 = vmatprep.subr.bf16.mxu0 %v6066
        %6928 = vmatpush2.bf16.msra.mxu0 %v6065
        %6929 = vmatprep.subr.bf16.mxu0 %v6064
        %6930 = vmatpush2.bf16.msra.mxu0 %v6063
        %6931 = vmatprep.subr.bf16.mxu0 %v6062
        %6932 = vmatpush2.bf16.msra.mxu0 %v6061
        %6933 = vmatprep.subr.bf16.mxu0 %v6060
        %6934 = vmatpush2.bf16.msra.mxu0 %v6059
        %6935 = vmatprep.subr.bf16.mxu0 %v6058
        %6936 = vmatpush2.bf16.msra.mxu0 %v6057
        %6937 = vmatprep.subr.bf16.mxu0 %v6056
        %6938 = vmatpush2.bf16.msra.mxu0 %v6055
        %6939 = vmatprep.subr.bf16.mxu0 %v6054
        %6940 = vmatpush2.bf16.msra.mxu0 %v6053
        %6941 = vmatprep.mubr.bf16.mxu0 %v4530
        %6942 = vmatmul.mubr.bf16.gmra.mxu0 %v4516
        %v6943 = vpop.f32.mrf.mxu0
        %v6944 = vadd.f32 %v6903, %v6943
        %v6945 = vpop.f32.mrf.mxu0
        %v6946 = vadd.f32 %v6905, %v6945
        %v6947 = vpop.f32.mrf.mxu0
        %v6948 = vpop.f32.mrf.mxu0
        %6949 = vdwg.mxu0
        %6950 = vmatprep.subr.bf16.mxu0 %v6084
        %6951 = vmatpush1.bf16.msra.mxu0 %v6083
        %6952 = vmatprep.subr.bf16.mxu0 %v6082
        %6953 = vmatpush1.bf16.msra.mxu0 %v6081
        %6954 = vmatprep.subr.bf16.mxu0 %v6080
        %6955 = vmatpush1.bf16.msra.mxu0 %v6079
        %6956 = vmatprep.subr.bf16.mxu0 %v6078
        %6957 = vmatpush1.bf16.msra.mxu0 %v6077
        %6958 = vmatprep.subr.bf16.mxu0 %v6076
        %6959 = vmatpush1.bf16.msra.mxu0 %v6075
        %6960 = vmatprep.subr.bf16.mxu0 %v6074
        %6961 = vmatpush1.bf16.msra.mxu0 %v6073
        %6962 = vmatprep.subr.bf16.mxu0 %v6072
        %6963 = vmatpush1.bf16.msra.mxu0 %v6071
        %6964 = vmatprep.subr.bf16.mxu0 %v6070
        %6965 = vmatpush1.bf16.msra.mxu0 %v6069
        %6966 = vmatprep.subr.bf16.mxu0 %v6100
        %6967 = vmatpush2.bf16.msra.mxu0 %v6099
        %6968 = vmatprep.subr.bf16.mxu0 %v6098
        %6969 = vmatpush2.bf16.msra.mxu0 %v6097
        %6970 = vmatprep.subr.bf16.mxu0 %v6096
        %6971 = vmatpush2.bf16.msra.mxu0 %v6095
        %6972 = vmatprep.subr.bf16.mxu0 %v6094
        %6973 = vmatpush2.bf16.msra.mxu0 %v6093
        %6974 = vmatprep.subr.bf16.mxu0 %v6092
        %6975 = vmatpush2.bf16.msra.mxu0 %v6091
        %6976 = vmatprep.subr.bf16.mxu0 %v6090
        %6977 = vmatpush2.bf16.msra.mxu0 %v6089
        %6978 = vmatprep.subr.bf16.mxu0 %v6088
        %6979 = vmatpush2.bf16.msra.mxu0 %v6087
        %6980 = vmatprep.subr.bf16.mxu0 %v6086
        %6981 = vmatpush2.bf16.msra.mxu0 %v6085
        %6982 = vmatprep.mubr.bf16.mxu0 %v4540
        %6983 = vmatmul.mubr.bf16.gmra.mxu0 %v4538
        %v6984 = vpop.f32.mrf.mxu0
        %v6985 = vadd.f32 %v6944, %v6984
        %v6986 = vpop.f32.mrf.mxu0
        %v6987 = vadd.f32 %v6946, %v6986
        %v6988 = vpop.f32.mrf.mxu0
        %v6989 = vpop.f32.mrf.mxu0
        %6990 = vdwg.mxu0
        %6991 = vmatprep.subr.bf16.mxu0 %v6116
        %6992 = vmatpush1.bf16.msra.mxu0 %v6115
        %6993 = vmatprep.subr.bf16.mxu0 %v6114
        %6994 = vmatpush1.bf16.msra.mxu0 %v6113
        %6995 = vmatprep.subr.bf16.mxu0 %v6112
        %6996 = vmatpush1.bf16.msra.mxu0 %v6111
        %6997 = vmatprep.subr.bf16.mxu0 %v6110
        %6998 = vmatpush1.bf16.msra.mxu0 %v6109
        %6999 = vmatprep.subr.bf16.mxu0 %v6108
        %7000 = vmatpush1.bf16.msra.mxu0 %v6107
        %7001 = vmatprep.subr.bf16.mxu0 %v6106
        %7002 = vmatpush1.bf16.msra.mxu0 %v6105
        %7003 = vmatprep.subr.bf16.mxu0 %v6104
        %7004 = vmatpush1.bf16.msra.mxu0 %v6103
        %7005 = vmatprep.subr.bf16.mxu0 %v6102
        %7006 = vmatpush1.bf16.msra.mxu0 %v6101
        %7007 = vmatprep.subr.bf16.mxu0 %v6132
        %7008 = vmatpush2.bf16.msra.mxu0 %v6131
        %7009 = vmatprep.subr.bf16.mxu0 %v6130
        %7010 = vmatpush2.bf16.msra.mxu0 %v6129
        %7011 = vmatprep.subr.bf16.mxu0 %v6128
        %7012 = vmatpush2.bf16.msra.mxu0 %v6127
        %7013 = vmatprep.subr.bf16.mxu0 %v6126
        %7014 = vmatpush2.bf16.msra.mxu0 %v6125
        %7015 = vmatprep.subr.bf16.mxu0 %v6124
        %7016 = vmatpush2.bf16.msra.mxu0 %v6123
        %7017 = vmatprep.subr.bf16.mxu0 %v6122
        %7018 = vmatpush2.bf16.msra.mxu0 %v6121
        %7019 = vmatprep.subr.bf16.mxu0 %v6120
        %7020 = vmatpush2.bf16.msra.mxu0 %v6119
        %7021 = vmatprep.subr.bf16.mxu0 %v6118
        %7022 = vmatpush2.bf16.msra.mxu0 %v6117
        %7023 = vmatprep.mubr.bf16.mxu0 %v4537
        %7024 = vmatmul.mubr.bf16.gmra.mxu0 %v4523
        %v7025 = vpop.f32.mrf.mxu0
        %v7026 = vadd.f32 %v6985, %v7025
        %v7027 = vpop.f32.mrf.mxu0
        %v7028 = vadd.f32 %v6987, %v7027
        %v7029 = vpop.f32.mrf.mxu0
        %v7030 = vpop.f32.mrf.mxu0
        %7031 = vdwg.mxu0
        %7032 = vmatprep.subr.bf16.mxu0 %v6148
        %7033 = vmatpush1.bf16.msra.mxu0 %v6147
        %7034 = vmatprep.subr.bf16.mxu0 %v6146
        %7035 = vmatpush1.bf16.msra.mxu0 %v6145
        %7036 = vmatprep.subr.bf16.mxu0 %v6144
        %7037 = vmatpush1.bf16.msra.mxu0 %v6143
        %7038 = vmatprep.subr.bf16.mxu0 %v6142
        %7039 = vmatpush1.bf16.msra.mxu0 %v6141
        %7040 = vmatprep.subr.bf16.mxu0 %v6140
        %7041 = vmatpush1.bf16.msra.mxu0 %v6139
        %7042 = vmatprep.subr.bf16.mxu0 %v6138
        %7043 = vmatpush1.bf16.msra.mxu0 %v6137
        %7044 = vmatprep.subr.bf16.mxu0 %v6136
        %7045 = vmatpush1.bf16.msra.mxu0 %v6135
        %7046 = vmatprep.subr.bf16.mxu0 %v6134
        %7047 = vmatpush1.bf16.msra.mxu0 %v6133
        %7048 = vmatprep.subr.bf16.mxu0 %v6164
        %7049 = vmatpush2.bf16.msra.mxu0 %v6163
        %7050 = vmatprep.subr.bf16.mxu0 %v6162
        %7051 = vmatpush2.bf16.msra.mxu0 %v6161
        %7052 = vmatprep.subr.bf16.mxu0 %v6160
        %7053 = vmatpush2.bf16.msra.mxu0 %v6159
        %7054 = vmatprep.subr.bf16.mxu0 %v6158
        %7055 = vmatpush2.bf16.msra.mxu0 %v6157
        %7056 = vmatprep.subr.bf16.mxu0 %v6156
        %7057 = vmatpush2.bf16.msra.mxu0 %v6155
        %7058 = vmatprep.subr.bf16.mxu0 %v6154
        %7059 = vmatpush2.bf16.msra.mxu0 %v6153
        %7060 = vmatprep.subr.bf16.mxu0 %v6152
        %7061 = vmatpush2.bf16.msra.mxu0 %v6151
        %7062 = vmatprep.subr.bf16.mxu0 %v6150
        %7063 = vmatpush2.bf16.msra.mxu0 %v6149
        %7064 = vmatprep.mubr.bf16.mxu0 %v4541
        %7065 = vmatmul.mubr.bf16.gmra.mxu0 %v4539
        %v7066 = vpop.f32.mrf.mxu0
        %v7067 = vadd.f32 %v7026, %v7066
        %v7068 = vpop.f32.mrf.mxu0
        %v7069 = vadd.f32 %v7028, %v7068
        %v7070 = vpop.f32.mrf.mxu0
        %v7071 = vpop.f32.mrf.mxu0
        %7072 = vdwg.mxu0
        %7073 = vmatprep.subr.bf16.mxu0 %v6180
        %7074 = vmatpush1.bf16.msra.mxu0 %v6179
        %7075 = vmatprep.subr.bf16.mxu0 %v6178
        %7076 = vmatpush1.bf16.msra.mxu0 %v6177
        %7077 = vmatprep.subr.bf16.mxu0 %v6176
        %7078 = vmatpush1.bf16.msra.mxu0 %v6175
        %7079 = vmatprep.subr.bf16.mxu0 %v6174
        %7080 = vmatpush1.bf16.msra.mxu0 %v6173
        %7081 = vmatprep.subr.bf16.mxu0 %v6172
        %7082 = vmatpush1.bf16.msra.mxu0 %v6171
        %7083 = vmatprep.subr.bf16.mxu0 %v6170
        %7084 = vmatpush1.bf16.msra.mxu0 %v6169
        %7085 = vmatprep.subr.bf16.mxu0 %v6168
        %7086 = vmatpush1.bf16.msra.mxu0 %v6167
        %7087 = vmatprep.subr.bf16.mxu0 %v6166
        %7088 = vmatpush1.bf16.msra.mxu0 %v6165
        %7089 = vmatprep.subr.bf16.mxu0 0
        %7090 = vmatpush2.bf16.msra.mxu0 0
        %7091 = vmatprep.subr.bf16.mxu0 0
        %7092 = vmatpush2.bf16.msra.mxu0 0
        %7093 = vmatprep.subr.bf16.mxu0 0
        %7094 = vmatpush2.bf16.msra.mxu0 0
        %7095 = vmatprep.subr.bf16.mxu0 0
        %7096 = vmatpush2.bf16.msra.mxu0 0
        %7097 = vmatprep.subr.bf16.mxu0 0
        %7098 = vmatpush2.bf16.msra.mxu0 0
        %7099 = vmatprep.subr.bf16.mxu0 0
        %7100 = vmatpush2.bf16.msra.mxu0 0
        %7101 = vmatprep.subr.bf16.mxu0 0
        %7102 = vmatpush2.bf16.msra.mxu0 0
        %7103 = vmatprep.subr.bf16.mxu0 0
        %7104 = vmatpush2.bf16.msra.mxu0 0
        %7105 = vmatprep.mubr.bf16.mxu0 0
        %7106 = vmatmul.mubr.bf16.gmra.mxu0 %v4555
        %v7107 = vpop.f32.mrf.mxu0
        %v7108 = vadd.f32 %v7067, %v7107
        %v7109 = vpop.f32.mrf.mxu0
        %v7110 = vadd.f32 %v7069, %v7109
        %v7111 = vpop.f32.mrf.mxu0
        %v7112 = vpop.f32.mrf.mxu0
        %7113 = vdwg.mxu0
        %v7116 = vcombine.low %v7108, %v7110
        %v7118 = vunpack.c.l.s4 1983009808
        %v7119 = vunpack.c.0.s8 %v7118
        %v7120 = vlaneseq
        %v7121 = vshrl.u32 %v7120, 7
        %v7122 = vsub.s32 %v7119, %v7121
        %v7123 = vrot.slane %v7116, %v7122
        %v7125 = vadd.f32 %v3986, %v7123
        %7126 = vst [vmem:[#allocation2] sm:$0xf] %v7125
        %p7127 = scmp.eq.s32.totalorder %s22, 1
        // Predicated region
        $region65: #{multimodal_spoof_net.1} parent=59 // pred_check
          %p7128 = pneg %p7127
        $region66: #{multimodal_spoof_net.1} parent=59 // pred_check_branch
          %7130 = sbr.rel (%p7128) target = $region68
        $region67: #{multimodal_spoof_net.1} parent=59 // pred_region
          %v7131 = vld [vmem:[#allocation2] sm:$0xf]
          %v7132 = vmax.f32 %v7131, 0.0
          %v7133 = vld [vmem:[#allocation3] sm:$0xf]
          %v7134 = vld [vmem:[#allocation4] sm:$0xf]
          %v7135 = vld [vmem:[%s9 + $0x100] sm:$0x7]
          %v7136 = vld [vmem:[%s9 + $0x108] sm:$0x7]
          %v7137 = vld [vmem:[%s9 + $0x110] sm:$0x7]
          %v7138 = vld [vmem:[%s9 + $0x118] sm:$0x7]
          %v7139 = vld [vmem:[%s9 + $0x120] sm:$0x7]
          %v7140 = vld [vmem:[%s9 + $0x128] sm:$0x7]
          %v7141 = vld [vmem:[%s9 + $0x142] ss:$0 sm:$0xff]
          %v7144 = vunpack.c.l.s4 1983009808
          %v7145 = vunpack.c.0.s8 %v7144
          %v7146 = vlaneseq
          %v7147 = vshrl.u32 %v7146, 7
          %v7148 = vsub.s32 %v7145, %v7147
          %v7149 = vrot.slane %v7132, %v7148
          %v7150 = vcombine.high %v7149, %v7149
          %7153 = vmatprep.subr.mxu0 0.0
          %7154 = vmatpush1.xpose.msra.mxu0 0.0
          %7155 = vmatprep.subr.mxu0 0.0
          %7156 = vmatpush1.xpose.msra.mxu0 0.0
          %7157 = vmatprep.subr.mxu0 0.0
          %7158 = vmatpush1.xpose.msra.mxu0 0.0
          %7159 = vmatprep.subr.mxu0 0.0
          %7160 = vmatpush1.xpose.msra.mxu0 0.0
          %7161 = vmatprep.subr.mxu0 0.0
          %7162 = vmatpush1.xpose.msra.mxu0 0.0
          %7163 = vmatprep.subr.mxu0 0.0
          %7164 = vmatpush1.xpose.msra.mxu0 0.0
          %7165 = vmatprep.subr.mxu0 0.0
          %7166 = vmatpush1.xpose.msra.mxu0 0.0
          %7167 = vmatprep.subr.mxu0 0.0
          %7168 = vmatpush1.xpose.msra.mxu0 0.0
          %7169 = vmatprep.subr.mxu0 0.0
          %7170 = vmatpush1.xpose.msra.mxu0 0.0
          %7171 = vmatprep.subr.mxu0 0.0
          %7172 = vmatpush1.xpose.msra.mxu0 0.0
          %7173 = vmatprep.subr.mxu0 0.0
          %7174 = vmatpush1.xpose.msra.mxu0 0.0
          %7175 = vmatprep.subr.mxu0 0.0
          %7176 = vmatpush1.xpose.msra.mxu0 0.0
          %7177 = vmatprep.subr.mxu0 0.0
          %7178 = vmatpush1.xpose.msra.mxu0 0.0
          %7179 = vmatprep.subr.mxu0 0.0
          %7180 = vmatpush1.xpose.msra.mxu0 0.0
          %7181 = vmatprep.subr.mxu0 0.0
          %7182 = vmatpush1.xpose.msra.mxu0 0.0
          %7183 = vmatprep.subr.mxu0 %v7138
          %7184 = vmatpush1.xpose.msra.mxu0 %v7137
          %7185 = vmatprep.subr.mxu0 0.0
          %7186 = vmatpush2.xpose.msra.mxu0 0.0
          %7187 = vmatprep.subr.mxu0 0.0
          %7188 = vmatpush2.xpose.msra.mxu0 0.0
          %7189 = vmatprep.subr.mxu0 0.0
          %7190 = vmatpush2.xpose.msra.mxu0 0.0
          %7191 = vmatprep.subr.mxu0 0.0
          %7192 = vmatpush2.xpose.msra.mxu0 0.0
          %7193 = vmatprep.subr.mxu0 0.0
          %7194 = vmatpush2.xpose.msra.mxu0 0.0
          %7195 = vmatprep.subr.mxu0 0.0
          %7196 = vmatpush2.xpose.msra.mxu0 0.0
          %7197 = vmatprep.subr.mxu0 0.0
          %7198 = vmatpush2.xpose.msra.mxu0 0.0
          %7199 = vmatprep.subr.mxu0 0.0
          %7200 = vmatpush2.xpose.msra.mxu0 0.0
          %7201 = vmatprep.subr.mxu0 0.0
          %7202 = vmatpush2.xpose.msra.mxu0 0.0
          %7203 = vmatprep.subr.mxu0 0.0
          %7204 = vmatpush2.xpose.msra.mxu0 0.0
          %7205 = vmatprep.subr.mxu0 0.0
          %7206 = vmatpush2.xpose.msra.mxu0 0.0
          %7207 = vmatprep.subr.mxu0 0.0
          %7208 = vmatpush2.xpose.msra.mxu0 0.0
          %7209 = vmatprep.subr.mxu0 0.0
          %7210 = vmatpush2.xpose.msra.mxu0 0.0
          %7211 = vmatprep.subr.mxu0 0.0
          %7212 = vmatpush2.xpose.msra.mxu0 0.0
          %7213 = vmatprep.subr.mxu0 0.0
          %7214 = vmatpush2.xpose.msra.mxu0 0.0
          %7215 = vmatprep.subr.mxu0 0.0
          %7216 = vmatpush2.xpose.msra.mxu0 0.0
          %7217 = vmatprep.mubr.f32.mxu0 %v7150
          %7218 = vmatmul.mubr.f32.gmra.mxu0 %v7149
          %v7219 = vpop.f32.mrf.mxu0
          %v7220 = vadd.f32 0.0, %v7219
          %v7221 = vpop.f32.mrf.mxu0
          %7222 = vdwg.mxu0
          %v7225 = vunpack.c.l.s4 1983009808
          %v7226 = vunpack.c.0.s8 %v7225
          %v7227 = vlaneseq
          %v7228 = vshrl.u32 %v7227, 7
          %v7229 = vsub.s32 %v7226, %v7228
          %v7230 = vrot.slane %v7133, %v7229
          %v7231 = vcombine.high %v7230, %v7230
          %7234 = vmatprep.subr.mxu0 0.0
          %7235 = vmatpush1.xpose.msra.mxu0 0.0
          %7236 = vmatprep.subr.mxu0 0.0
          %7237 = vmatpush1.xpose.msra.mxu0 0.0
          %7238 = vmatprep.subr.mxu0 0.0
          %7239 = vmatpush1.xpose.msra.mxu0 0.0
          %7240 = vmatprep.subr.mxu0 0.0
          %7241 = vmatpush1.xpose.msra.mxu0 0.0
          %7242 = vmatprep.subr.mxu0 0.0
          %7243 = vmatpush1.xpose.msra.mxu0 0.0
          %7244 = vmatprep.subr.mxu0 0.0
          %7245 = vmatpush1.xpose.msra.mxu0 0.0
          %7246 = vmatprep.subr.mxu0 0.0
          %7247 = vmatpush1.xpose.msra.mxu0 0.0
          %7248 = vmatprep.subr.mxu0 0.0
          %7249 = vmatpush1.xpose.msra.mxu0 0.0
          %7250 = vmatprep.subr.mxu0 0.0
          %7251 = vmatpush1.xpose.msra.mxu0 0.0
          %7252 = vmatprep.subr.mxu0 0.0
          %7253 = vmatpush1.xpose.msra.mxu0 0.0
          %7254 = vmatprep.subr.mxu0 0.0
          %7255 = vmatpush1.xpose.msra.mxu0 0.0
          %7256 = vmatprep.subr.mxu0 0.0
          %7257 = vmatpush1.xpose.msra.mxu0 0.0
          %7258 = vmatprep.subr.mxu0 0.0
          %7259 = vmatpush1.xpose.msra.mxu0 0.0
          %7260 = vmatprep.subr.mxu0 0.0
          %7261 = vmatpush1.xpose.msra.mxu0 0.0
          %7262 = vmatprep.subr.mxu0 0.0
          %7263 = vmatpush1.xpose.msra.mxu0 0.0
          %7264 = vmatprep.subr.mxu0 %v7136
          %7265 = vmatpush1.xpose.msra.mxu0 %v7135
          %7266 = vmatprep.subr.mxu0 0.0
          %7267 = vmatpush2.xpose.msra.mxu0 0.0
          %7268 = vmatprep.subr.mxu0 0.0
          %7269 = vmatpush2.xpose.msra.mxu0 0.0
          %7270 = vmatprep.subr.mxu0 0.0
          %7271 = vmatpush2.xpose.msra.mxu0 0.0
          %7272 = vmatprep.subr.mxu0 0.0
          %7273 = vmatpush2.xpose.msra.mxu0 0.0
          %7274 = vmatprep.subr.mxu0 0.0
          %7275 = vmatpush2.xpose.msra.mxu0 0.0
          %7276 = vmatprep.subr.mxu0 0.0
          %7277 = vmatpush2.xpose.msra.mxu0 0.0
          %7278 = vmatprep.subr.mxu0 0.0
          %7279 = vmatpush2.xpose.msra.mxu0 0.0
          %7280 = vmatprep.subr.mxu0 0.0
          %7281 = vmatpush2.xpose.msra.mxu0 0.0
          %7282 = vmatprep.subr.mxu0 0.0
          %7283 = vmatpush2.xpose.msra.mxu0 0.0
          %7284 = vmatprep.subr.mxu0 0.0
          %7285 = vmatpush2.xpose.msra.mxu0 0.0
          %7286 = vmatprep.subr.mxu0 0.0
          %7287 = vmatpush2.xpose.msra.mxu0 0.0
          %7288 = vmatprep.subr.mxu0 0.0
          %7289 = vmatpush2.xpose.msra.mxu0 0.0
          %7290 = vmatprep.subr.mxu0 0.0
          %7291 = vmatpush2.xpose.msra.mxu0 0.0
          %7292 = vmatprep.subr.mxu0 0.0
          %7293 = vmatpush2.xpose.msra.mxu0 0.0
          %7294 = vmatprep.subr.mxu0 0.0
          %7295 = vmatpush2.xpose.msra.mxu0 0.0
          %7296 = vmatprep.subr.mxu0 0.0
          %7297 = vmatpush2.xpose.msra.mxu0 0.0
          %7298 = vmatprep.mubr.f32.mxu0 %v7231
          %7299 = vmatmul.mubr.f32.gmra.mxu0 %v7230
          %v7300 = vpop.f32.mrf.mxu0
          %v7301 = vadd.f32 %v7220, %v7300
          %v7302 = vpop.f32.mrf.mxu0
          %7303 = vdwg.mxu0
          %v7306 = vunpack.c.l.s4 1983009808
          %v7307 = vunpack.c.0.s8 %v7306
          %v7308 = vlaneseq
          %v7309 = vshrl.u32 %v7308, 7
          %v7310 = vsub.s32 %v7307, %v7309
          %v7311 = vrot.slane %v7134, %v7310
          %v7312 = vcombine.high %v7311, %v7311
          %7315 = vmatprep.subr.mxu0 0.0
          %7316 = vmatpush1.xpose.msra.mxu0 0.0
          %7317 = vmatprep.subr.mxu0 0.0
          %7318 = vmatpush1.xpose.msra.mxu0 0.0
          %7319 = vmatprep.subr.mxu0 0.0
          %7320 = vmatpush1.xpose.msra.mxu0 0.0
          %7321 = vmatprep.subr.mxu0 0.0
          %7322 = vmatpush1.xpose.msra.mxu0 0.0
          %7323 = vmatprep.subr.mxu0 0.0
          %7324 = vmatpush1.xpose.msra.mxu0 0.0
          %7325 = vmatprep.subr.mxu0 0.0
          %7326 = vmatpush1.xpose.msra.mxu0 0.0
          %7327 = vmatprep.subr.mxu0 0.0
          %7328 = vmatpush1.xpose.msra.mxu0 0.0
          %7329 = vmatprep.subr.mxu0 0.0
          %7330 = vmatpush1.xpose.msra.mxu0 0.0
          %7331 = vmatprep.subr.mxu0 0.0
          %7332 = vmatpush1.xpose.msra.mxu0 0.0
          %7333 = vmatprep.subr.mxu0 0.0
          %7334 = vmatpush1.xpose.msra.mxu0 0.0
          %7335 = vmatprep.subr.mxu0 0.0
          %7336 = vmatpush1.xpose.msra.mxu0 0.0
          %7337 = vmatprep.subr.mxu0 0.0
          %7338 = vmatpush1.xpose.msra.mxu0 0.0
          %7339 = vmatprep.subr.mxu0 0.0
          %7340 = vmatpush1.xpose.msra.mxu0 0.0
          %7341 = vmatprep.subr.mxu0 0.0
          %7342 = vmatpush1.xpose.msra.mxu0 0.0
          %7343 = vmatprep.subr.mxu0 0.0
          %7344 = vmatpush1.xpose.msra.mxu0 0.0
          %7345 = vmatprep.subr.mxu0 %v7140
          %7346 = vmatpush1.xpose.msra.mxu0 %v7139
          %7347 = vmatprep.subr.mxu0 0.0
          %7348 = vmatpush2.xpose.msra.mxu0 0.0
          %7349 = vmatprep.subr.mxu0 0.0
          %7350 = vmatpush2.xpose.msra.mxu0 0.0
          %7351 = vmatprep.subr.mxu0 0.0
          %7352 = vmatpush2.xpose.msra.mxu0 0.0
          %7353 = vmatprep.subr.mxu0 0.0
          %7354 = vmatpush2.xpose.msra.mxu0 0.0
          %7355 = vmatprep.subr.mxu0 0.0
          %7356 = vmatpush2.xpose.msra.mxu0 0.0
          %7357 = vmatprep.subr.mxu0 0.0
          %7358 = vmatpush2.xpose.msra.mxu0 0.0
          %7359 = vmatprep.subr.mxu0 0.0
          %7360 = vmatpush2.xpose.msra.mxu0 0.0
          %7361 = vmatprep.subr.mxu0 0.0
          %7362 = vmatpush2.xpose.msra.mxu0 0.0
          %7363 = vmatprep.subr.mxu0 0.0
          %7364 = vmatpush2.xpose.msra.mxu0 0.0
          %7365 = vmatprep.subr.mxu0 0.0
          %7366 = vmatpush2.xpose.msra.mxu0 0.0
          %7367 = vmatprep.subr.mxu0 0.0
          %7368 = vmatpush2.xpose.msra.mxu0 0.0
          %7369 = vmatprep.subr.mxu0 0.0
          %7370 = vmatpush2.xpose.msra.mxu0 0.0
          %7371 = vmatprep.subr.mxu0 0.0
          %7372 = vmatpush2.xpose.msra.mxu0 0.0
          %7373 = vmatprep.subr.mxu0 0.0
          %7374 = vmatpush2.xpose.msra.mxu0 0.0
          %7375 = vmatprep.subr.mxu0 0.0
          %7376 = vmatpush2.xpose.msra.mxu0 0.0
          %7377 = vmatprep.subr.mxu0 0.0
          %7378 = vmatpush2.xpose.msra.mxu0 0.0
          %7379 = vmatprep.mubr.f32.mxu0 %v7312
          %7380 = vmatmul.mubr.f32.gmra.mxu0 %v7311
          %v7381 = vpop.f32.mrf.mxu0
          %v7382 = vadd.f32 0.0, %v7381
          %v7383 = vpop.f32.mrf.mxu0
          %7384 = vdwg.mxu0
          %v7385 = vadd.f32 %v7301, %v7382
          %v7386 = vadd.f32 %v7385, %v7141
          %v7387 = vxor.u32 %v7386, 2147483648
          %v7388 = vmul.f32 %v7387, 1.442695
          %v7389 = vpow.pop %v7388
          %v7390 = vadd.f32 %v7389, 1.0
          %v7391 = vrcp.pop %v7390
          %v7392 = vmul.f32 1.0, %v7391
          %7394 = vset.pattern.permute.xlu0 0
          %7395 = vperm.xlu0 %7394, %v7392
          %v7396 = vpop.permute.xlu0 %7395
          %v7398 = vmul.f32 %v7396, %v7230
          %v7399 = vmul.f32 %v7396, %v7231
          %7400 = vset.pattern.permute.xlu0 1
          %7401 = vperm.xlu0 %7400, %v7392
          %v7402 = vpop.permute.xlu0 %7401
          %v7404 = vmul.f32 %v7402, %v7149
          %v7405 = vmul.f32 %v7402, %v7150
          %v7406 = vadd.f32 %v7398, %v7404
          %v7407 = vadd.f32 %v7399, %v7405
          %7408 = vset.pattern.permute.xlu0 2
          %7409 = vperm.xlu0 %7408, %v7392
          %v7410 = vpop.permute.xlu0 %7409
          %v7412 = vmul.f32 %v7410, %v7311
          %v7413 = vmul.f32 %v7410, %v7312
          %v7414 = vadd.f32 %v7406, %v7412
          %v7415 = vadd.f32 %v7407, %v7413
          %v7416 = vld [vmem:[%s9 + $0x130] sm:$0x3]
          %v7417 = vld [vmem:[%s9 + $0x138] sm:$0x3]
          %v7418 = vld [vmem:[%s9 + $0x143] ss:$0 sm:$0xff]
          %7419 = vmatprep.subr.mxu0 0.0
          %7420 = vmatpush1.xpose.msra.mxu0 0.0
          %7421 = vmatprep.subr.mxu0 0.0
          %7422 = vmatpush1.xpose.msra.mxu0 0.0
          %7423 = vmatprep.subr.mxu0 0.0
          %7424 = vmatpush1.xpose.msra.mxu0 0.0
          %7425 = vmatprep.subr.mxu0 0.0
          %7426 = vmatpush1.xpose.msra.mxu0 0.0
          %7427 = vmatprep.subr.mxu0 0.0
          %7428 = vmatpush1.xpose.msra.mxu0 0.0
          %7429 = vmatprep.subr.mxu0 0.0
          %7430 = vmatpush1.xpose.msra.mxu0 0.0
          %7431 = vmatprep.subr.mxu0 0.0
          %7432 = vmatpush1.xpose.msra.mxu0 0.0
          %7433 = vmatprep.subr.mxu0 0.0
          %7434 = vmatpush1.xpose.msra.mxu0 0.0
          %7435 = vmatprep.subr.mxu0 0.0
          %7436 = vmatpush1.xpose.msra.mxu0 0.0
          %7437 = vmatprep.subr.mxu0 0.0
          %7438 = vmatpush1.xpose.msra.mxu0 0.0
          %7439 = vmatprep.subr.mxu0 0.0
          %7440 = vmatpush1.xpose.msra.mxu0 0.0
          %7441 = vmatprep.subr.mxu0 0.0
          %7442 = vmatpush1.xpose.msra.mxu0 0.0
          %7443 = vmatprep.subr.mxu0 0.0
          %7444 = vmatpush1.xpose.msra.mxu0 0.0
          %7445 = vmatprep.subr.mxu0 0.0
          %7446 = vmatpush1.xpose.msra.mxu0 0.0
          %7447 = vmatprep.subr.mxu0 0.0
          %7448 = vmatpush1.xpose.msra.mxu0 0.0
          %7449 = vmatprep.subr.mxu0 %v7417
          %7450 = vmatpush1.xpose.msra.mxu0 %v7416
          %7451 = vmatprep.subr.mxu0 0.0
          %7452 = vmatpush2.xpose.msra.mxu0 0.0
          %7453 = vmatprep.subr.mxu0 0.0
          %7454 = vmatpush2.xpose.msra.mxu0 0.0
          %7455 = vmatprep.subr.mxu0 0.0
          %7456 = vmatpush2.xpose.msra.mxu0 0.0
          %7457 = vmatprep.subr.mxu0 0.0
          %7458 = vmatpush2.xpose.msra.mxu0 0.0
          %7459 = vmatprep.subr.mxu0 0.0
          %7460 = vmatpush2.xpose.msra.mxu0 0.0
          %7461 = vmatprep.subr.mxu0 0.0
          %7462 = vmatpush2.xpose.msra.mxu0 0.0
          %7463 = vmatprep.subr.mxu0 0.0
          %7464 = vmatpush2.xpose.msra.mxu0 0.0
          %7465 = vmatprep.subr.mxu0 0.0
          %7466 = vmatpush2.xpose.msra.mxu0 0.0
          %7467 = vmatprep.subr.mxu0 0.0
          %7468 = vmatpush2.xpose.msra.mxu0 0.0
          %7469 = vmatprep.subr.mxu0 0.0
          %7470 = vmatpush2.xpose.msra.mxu0 0.0
          %7471 = vmatprep.subr.mxu0 0.0
          %7472 = vmatpush2.xpose.msra.mxu0 0.0
          %7473 = vmatprep.subr.mxu0 0.0
          %7474 = vmatpush2.xpose.msra.mxu0 0.0
          %7475 = vmatprep.subr.mxu0 0.0
          %7476 = vmatpush2.xpose.msra.mxu0 0.0
          %7477 = vmatprep.subr.mxu0 0.0
          %7478 = vmatpush2.xpose.msra.mxu0 0.0
          %7479 = vmatprep.subr.mxu0 0.0
          %7480 = vmatpush2.xpose.msra.mxu0 0.0
          %7481 = vmatprep.subr.mxu0 0.0
          %7482 = vmatpush2.xpose.msra.mxu0 0.0
          %7483 = vmatprep.mubr.f32.mxu0 %v7415
          %7484 = vmatmul.mubr.f32.gmra.mxu0 %v7414
          %v7485 = vpop.f32.mrf.mxu0
          %v7486 = vadd.f32 %v7418, %v7485
          %v7487 = vpop.f32.mrf.mxu0
          %7488 = vdwg.mxu0
          %vm7489 = vcmask 9216
          %7490 = vst.msk [vmem:[#allocation5] sm:$0x3] %vm7489, %v7486
        $region68: #{multimodal_spoof_net.1} parent=59 // pred_fallthru
          _
        // Predicated region
        $region69: #{multimodal_spoof_net.1} parent=59 // pred_check
          %p7491 = pneg %p255
        $region70: #{multimodal_spoof_net.1} parent=59 // pred_check_branch
          %7493 = sbr.rel (%p7491) target = $region72
        $region71: #{multimodal_spoof_net.1} parent=59 // pred_region
          %s7495 = ssub.s32 32, 32
          %7496 = vsyncadd [#allocation6], %s7495
          %s7498 = sshll.u32 [#allocation5], 4
          %s7499 = int_to_ptr.vmem [resolvable:$true] %s7498
          %7501 = dma.vmem_to_hbm [thread:$0]  %s7499, 32, %s10, [#allocation6]
        $region72: #{multimodal_spoof_net.1} parent=59 // pred_fallthru
          _
        // Predicated region
        $region73: #{multimodal_spoof_net.1} parent=59 // pred_check
          %p7502 = pneg %p255
        $region74: #{multimodal_spoof_net.1} parent=59 // pred_check_branch
          %7504 = sbr.rel (%p7502) target = $region76
        $region75: #{multimodal_spoof_net.1} parent=59 // pred_region
          %7505 = dma.done [#allocation6], 32
        $region76: #{multimodal_spoof_net.1} parent=59 // pred_fallthru
          _
      $region60: #{multimodal_spoof_net.1} parent=5 // pred_fallthru
        _
      %p7506 = scmp.le.s32.totalorder 2, %s17
      // Predicated region
      $region77: #{multimodal_spoof_net.1} parent=5 // pred_check
        %p7507 = pneg %p7506
      $region78: #{multimodal_spoof_net.1} parent=5 // pred_check_branch
        %7509 = sbr.rel (%p7507) target = $region80
      $region79: #{multimodal_spoof_net.1} parent=5 // pred_region
        %s7510 = ssub.s32 %s17, 2
      $region80: #{multimodal_spoof_net.1} parent=5 // pred_fallthru
        _
    $region6: #{multimodal_spoof_net.1} parent=1 // loop_footer
      %s21 = sadd.s32 1, %s17
    $region7: #{multimodal_spoof_net.1} parent=1 // loop_footer_branch
      %16 = sbr.rel target = $region3
    $region8: #{multimodal_spoof_net.1} parent=1 // loop_exit
      _
    %7511 = vsyncpa [#allocation6], 1
    %s7512 = scalar_lea.sflag [#allocation6], 1
    %7513 = vsyncpa %s7512, 1

</llo_original>
